<compile_context>
chip_gen: v5e
topology: v5e:2x2
jax: 0.10.0
libtpu: 0.0.40
codegen_flags: <defaults>
</compile_context>

<pallas_src>
import math
import numpy as np

import jax
import jax.numpy as jnp
from jax.experimental import pallas as pl
from jax.experimental.pallas import tpu as pltpu

TB = 8  # images per grid step (output block's row dim must be a multiple of 8)


def _round_up(n, m):
    return ((n + m - 1) // m) * m


# ------------------------------- Pallas kernel -------------------------------

def _rnet_kernel(x_ref, s1_ref, t1_ref, b1_ref, p1_ref,
                 s2_ref, t2_ref, b2_ref, p2_ref,
                 e3_ref, t3_ref, b3_ref,
                 w4_ref, b4_ref, w5_ref, b5_ref, al_ref, o_ref):
    """Whole RNet forward for one batch tile of TB images.

    Activation layout: 2-D matrices with rows = (image, spatial row) and
    lanes = (spatial col, channel).  Conv row taps (s1/s2), pool row taps (p1/p2) and
    the conv3 row gather (e3) are constant block-diagonal 0/1 selection matrices;
    pool column taps are pre-folded into the conv weight matrices (t1/t2), and the
    torch NCHW flatten is pre-folded into t3.  The body is therefore only 2-D f32
    matmuls + elementwise max / PReLU / sigmoid.
    """
    dot = lambda a, b: jnp.dot(a, b, preferred_element_type=jnp.float32)

    def prelu(h, a):
        return jnp.maximum(h, 0.0) + a * jnp.minimum(h, 0.0)

    def max3(a, b, c):
        return jnp.maximum(a, jnp.maximum(b, c))

    a1 = al_ref[0, 0]
    a2 = al_ref[0, 1]
    a3 = al_ref[0, 2]
    a4 = al_ref[0, 3]

    x = x_ref[...]                                   # (TB*24, 72): rows=(b,h), lanes=(w,c)

    # conv1 (3x3, 3->28) + PReLU; pool1 column taps pre-folded into t1.
    xs = [dot(s1_ref[di], x) for di in range(3)]     # conv row taps: 3 x (TB*22, 72)
    c1 = [prelu(dot(xs[0], t1_ref[dj]) + dot(xs[1], t1_ref[3 + dj])
                + dot(xs[2], t1_ref[6 + dj]) + b1_ref[...], a1)
          for dj in range(3)]                        # 3 x (TB*22, 280)
    v1 = max3(*c1)                                   # max over pool1 column taps
    h1p = max3(dot(p1_ref[0], v1), dot(p1_ref[1], v1), dot(p1_ref[2], v1))
    # h1p (TB*10, 280): pooled conv1 map, rows=(b,ph), lanes=(pw, c)

    # conv2 (3x3, 28->48) + PReLU; pool2 column taps pre-folded into t2.
    ys = [dot(s2_ref[di], h1p) for di in range(3)]   # 3 x (TB*8, 280)
    c2 = [prelu(dot(ys[0], t2_ref[dj]) + dot(ys[1], t2_ref[3 + dj])
                + dot(ys[2], t2_ref[6 + dj]) + b2_ref[...], a2)
          for dj in range(3)]                        # 3 x (TB*8, 144)
    v2 = max3(*c2)
    h2p = max3(dot(p2_ref[0], v2), dot(p2_ref[1], v2), dot(p2_ref[2], v2))
    # h2p (TB*3, 144): pooled conv2 map, rows=(b,h), lanes=(w, c)

    # conv3 (2x2, 48->64) + PReLU, flattened straight into torch (co, oh, ow) order.
    feat = (dot(dot(e3_ref[0], h2p), t3_ref[0])
            + dot(dot(e3_ref[1], h2p), t3_ref[1])
            + dot(dot(e3_ref[2], h2p), t3_ref[2]))   # (TB, 256)
    feat = prelu(feat + b3_ref[...], a3)

    # conv4 (Linear 256->128) + PReLU4.
    h4 = prelu(dot(feat, w4_ref[...]) + b4_ref[...], a4)        # (TB, 128)

    # conv5_1 (sigmoid) || conv5_2, single lane-dense 128-wide store.
    z = dot(h4, w5_ref[...]) + b5_ref[...]                      # (TB, 128)
    sig = 1.0 / (1.0 + jnp.exp(-z))                             # exact f32 sigmoid
    lane = jax.lax.broadcasted_iota(jnp.int32, z.shape, 1)
    o_ref[...] = jnp.where(lane == 0, sig, z)        # lane 0 = det, lanes 1..4 = box


# --------------------------- one-time weight packing --------------------------

def pack_params(p, tb=TB):
    """Pack torch-layout parameters into matmul-ready constants (f32).

    Host-side numpy; run ONCE at model-load time, NOT inside the forward pass.
    """
    w1 = np.asarray(p["w1"], np.float32); b1 = np.asarray(p["b1"], np.float32)
    w2 = np.asarray(p["w2"], np.float32); b2 = np.asarray(p["b2"], np.float32)
    w3 = np.asarray(p["w3"], np.float32); b3 = np.asarray(p["b3"], np.float32)
    w4 = np.asarray(p["w4"], np.float32); b4 = np.asarray(p["b4"], np.float32)
    w51 = np.asarray(p["w51"], np.float32); b51 = np.asarray(p["b51"], np.float32)
    w52 = np.asarray(p["w52"], np.float32); b52 = np.asarray(p["b52"], np.float32)

    def row_select(n_out, n_in, fn):
        """(3, tb*n_out, tb*n_in) block-diagonal 0/1 row-selection, one per tap."""
        m = np.zeros((3, tb * n_out, tb * n_in), np.float32)
        for t in range(3):
            for b in range(tb):
                for o in range(n_out):
                    m[t, b * n_out + o, b * n_in + fn(o, t)] = 1.0
        return m

    s1 = row_select(22, 24, lambda o, t: o + t)       # conv1 row taps   24 -> 22
    p1 = row_select(10, 22, lambda o, t: 2 * o + t)   # pool1 row taps   22 -> 10
    s2 = row_select(8, 10, lambda o, t: o + t)        # conv2 row taps   10 ->  8
    p2 = row_select(3, 8, lambda o, t: 2 * o + t)     # pool2 row taps    8 ->  3
    e3 = row_select(1, 3, lambda o, t: t)             # conv3 row gather  3 ->  1 per tap

    # conv1 weights with pool1 column taps folded in:
    #   t1[di*3+dj][w*3+c, pw*28+co] = w1[co, c, di, w - (2*pw + dj)]
    t1 = np.zeros((3, 3, 72, 280), np.float32)
    for di in range(3):
        for dj in range(3):
            for pw in range(10):
                for kw in range(3):
                    w = 2 * pw + dj + kw
                    t1[di, dj, w * 3:w * 3 + 3, pw * 28:(pw + 1) * 28] = w1[:, :, di, kw].T
    t1 = t1.reshape(9, 72, 280)
    b1p = np.tile(b1, 10).reshape(1, 280)

    # conv2 weights with pool2 column taps folded in:
    #   t2[di*3+dj][w*28+ci, pw*48+co] = w2[co, ci, di, w - (2*pw + dj)]
    t2 = np.zeros((3, 3, 280, 144), np.float32)
    for di in range(3):
        for dj in range(3):
            for pw in range(3):
                for kw in range(3):
                    w = 2 * pw + dj + kw
                    t2[di, dj, w * 28:(w + 1) * 28, pw * 48:(pw + 1) * 48] = w2[:, :, di, kw].T
    t2 = t2.reshape(9, 280, 144)
    b2p = np.tile(b2, 3).reshape(1, 144)

    # conv3 (2x2 on the 3x3 map) folded with torch's NCHW .view(B, -1) flatten:
    #   t3[h][w*48+ci, co*4 + oh*2 + ow] = w3[co, ci, h-oh, w-ow]
    t3 = np.zeros((3, 144, 256), np.float32)
    for h in range(3):
        for oh in range(2):
            kh = h - oh
            if not 0 <= kh < 2:
                continue
            for ow in range(2):
                for kw in range(2):
                    w = ow + kw
                    t3[h, w * 48:(w + 1) * 48, (oh * 2 + ow)::4] = w3[:, :, kh, kw].T
    b3p = np.repeat(b3, 4).reshape(1, 256)

    # fc head.
    w4m = np.ascontiguousarray(w4.T)                  # (256, 128)
    b4p = b4.reshape(1, 128)
    w5m = np.zeros((128, 128), np.float32)            # lane 0 = det, lanes 1..4 = box
    w5m[:, 0] = w51[0]
    w5m[:, 1:5] = w52.T
    b5p = np.zeros((1, 128), np.float32)
    b5p[0, 0] = b51[0]
    b5p[0, 1:5] = b52

    alphas = np.array([[float(np.asarray(p["a1"]).reshape(-1)[0]),
                        float(np.asarray(p["a2"]).reshape(-1)[0]),
                        float(np.asarray(p["a3"]).reshape(-1)[0]),
                        float(np.asarray(p["a4"]).reshape(-1)[0])]], np.float32)

    packed = dict(s1=s1, t1=t1, b1=b1p, p1=p1,
                  s2=s2, t2=t2, b2=b2p, p2=p2,
                  e3=e3, t3=t3, b3=b3p,
                  w4=w4m, b4=b4p, w5=w5m, b5=b5p, al=alphas)
    return {k: jnp.asarray(v) for k, v in packed.items()}


# ------------------------------- forward pass --------------------------------

def rnet_forward(x, packed):
    """x: (B, 3, 24, 24) float32 NCHW -> (det (B, 1), box (B, 4)) float32."""
    bsz = x.shape[0]
    bp = _round_up(bsz, TB)
    # One tiny NHWC transpose of the 7 KB/image input in the wrapper (lane order w*3+c).
    xn = jnp.transpose(x, (0, 2, 3, 1)).reshape(bsz, 24, 72).astype(jnp.float32)
    if bp != bsz:
        xn = jnp.pad(xn, ((0, bp - bsz), (0, 0), (0, 0)))
    x2d = xn.reshape(bp * 24, 72)

    q = packed
    const = lambda a: pl.BlockSpec(a.shape, lambda i, _n=a.ndim: (0,) * _n)

    out = pl.pallas_call(
        _rnet_kernel,
        out_shape=jax.ShapeDtypeStruct((bp, 128), jnp.float32),
        grid=(bp // TB,),
        in_specs=[
            pl.BlockSpec((TB * 24, 72), lambda i: (i, 0)),
            const(q["s1"]), const(q["t1"]), const(q["b1"]), const(q["p1"]),
            const(q["s2"]), const(q["t2"]), const(q["b2"]), const(q["p2"]),
            const(q["e3"]), const(q["t3"]), const(q["b3"]),
            const(q["w4"]), const(q["b4"]), const(q["w5"]), const(q["b5"]),
            pl.BlockSpec(memory_space=pltpu.MemorySpace.SMEM),
        ],
        out_specs=pl.BlockSpec((TB, 128), lambda i: (i, 0)),
        compiler_params=pltpu.CompilerParams(
            dimension_semantics=("parallel",),
            vmem_limit_bytes=32 * 1024 * 1024,
        ),
    )(x2d, q["s1"], q["t1"], q["b1"], q["p1"],
      q["s2"], q["t2"], q["b2"], q["p2"],
      q["e3"], q["t3"], q["b3"],
      q["w4"], q["b4"], q["w5"], q["b5"], q["al"])

    det = out[:bsz, 0:1]
    box = out[:bsz, 1:5]
    return det, box


# ------------------------------- init & reference ----------------------------

def _xavier_uniform(key, shape, fan_in, fan_out):
    a = math.sqrt(6.0 / (fan_in + fan_out))
    return jax.random.uniform(key, shape, jnp.float32, -a, a)


def init_params(key):
    ks = jax.random.split(key, 8)
    pr = lambda: jnp.full((1, 1), 0.25, jnp.float32)   # nn.PReLU() default alpha
    return {
        "w1": _xavier_uniform(ks[0], (28, 3, 3, 3), 3 * 9, 28 * 9),
        "b1": jnp.full((28,), 0.1, jnp.float32), "a1": pr(),
        "w2": _xavier_uniform(ks[1], (48, 28, 3, 3), 28 * 9, 48 * 9),
        "b2": jnp.full((48,), 0.1, jnp.float32), "a2": pr(),
        "w3": _xavier_uniform(ks[2], (64, 48, 2, 2), 48 * 4, 64 * 4),
        "b3": jnp.full((64,), 0.1, jnp.float32), "a3": pr(),
        "w4": _xavier_uniform(ks[3], (128, 256), 256, 128),
        "b4": jnp.full((128,), 0.1, jnp.float32), "a4": pr(),
        "w51": _xavier_uniform(ks[4], (1, 128), 128, 1),
        "b51": jnp.full((1,), 0.1, jnp.float32),
        "w52": _xavier_uniform(ks[5], (4, 128), 128, 4),
        "b52": jnp.full((4,), 0.1, jnp.float32),
        # conv5_3 (landmark head) exists in __init__ but is unused by forward():
        "w53": _xavier_uniform(ks[6], (10, 128), 128, 10),
        "b53": jnp.full((10,), 0.1, jnp.float32),
    }


def rnet_reference(x, p):
    """Pure-JAX f32 reference (no Pallas) matching the PyTorch module."""
    dn = ("NCHW", "OIHW", "NCHW")
    hi = jax.lax.Precision.HIGHEST

    def conv(h, w, b):
        y = jax.lax.conv_general_dilated(h, w, (1, 1), "VALID",
                                         dimension_numbers=dn, precision=hi)
        return y + b.reshape(1, -1, 1, 1)

    def prelu(h, a):
        return jnp.maximum(h, 0.0) + a[0, 0] * jnp.minimum(h, 0.0)

    def pool(h):
        return jax.lax.reduce_window(h, -jnp.inf, jax.lax.max,
                                     (1, 1, 3, 3), (1, 1, 2, 2), "VALID")

    h = pool(prelu(conv(x, p["w1"], p["b1"]), p["a1"]))
    h = pool(prelu(conv(h, p["w2"], p["b2"]), p["a2"]))
    h = prelu(conv(h, p["w3"], p["b3"]), p["a3"])
    h = h.reshape(h.shape[0], -1)
    h = prelu(jnp.dot(h, p["w4"].T, precision=hi) + p["b4"], p["a4"])
    det = jax.nn.sigmoid(jnp.dot(h, p["w51"].T, precision=hi) + p["b51"])
    box = jnp.dot(h, p["w52"].T, precision=hi) + p["b52"]
    return det, box


# ----------------------------------- main -------------------------------------

if __name__ == "__main__":
    key = jax.random.PRNGKey(0)
    kx, kp = jax.random.split(key)
    # RNet's Linear(64*2*2, 128) + floor-mode pools imply a 3x24x24 input.
    x = jax.random.normal(kx, (2, 3, 24, 24), jnp.float32)
    params = init_params(kp)

    packed = pack_params(params)          # one-time packing, hoisted out of forward
    fwd = jax.jit(lambda inp: rnet_forward(inp, packed))
    det, box = fwd(x)
    jax.block_until_ready((det, box))

    assert det.shape == (2, 1) and box.shape == (2, 4)
    assert det.dtype == jnp.float32 and box.dtype == jnp.float32
    assert bool(jnp.all(jnp.isfinite(det))) and bool(jnp.all(jnp.isfinite(box)))
    assert bool(jnp.all((det > 0.0) & (det < 1.0)))     # sigmoid range

    # correctness vs. pure-JAX reference (everything is f32 now -> tight tolerance)
    det_ref, box_ref = jax.jit(lambda inp: rnet_reference(inp, params))(x)
    assert bool(jnp.allclose(det, det_ref, rtol=1e-2, atol=1e-2))
    assert bool(jnp.allclose(box, box_ref, rtol=1e-2, atol=1e-2))

    print("KERNEL_OK")
</pallas_src>

<mosaic_0001>
module attributes {stable_mosaic.version = 11 : i64} {
  func.func @_rnet_kernel(%arg0: i32, %arg1: memref<192x72xf32, #tpu.memory_space<vmem>>, %arg2: memref<3x176x192xf32, #tpu.memory_space<vmem>>, %arg3: memref<9x72x280xf32, #tpu.memory_space<vmem>>, %arg4: memref<1x280xf32, #tpu.memory_space<vmem>>, %arg5: memref<3x80x176xf32, #tpu.memory_space<vmem>>, %arg6: memref<3x64x80xf32, #tpu.memory_space<vmem>>, %arg7: memref<9x280x144xf32, #tpu.memory_space<vmem>>, %arg8: memref<1x144xf32, #tpu.memory_space<vmem>>, %arg9: memref<3x24x64xf32, #tpu.memory_space<vmem>>, %arg10: memref<3x8x24xf32, #tpu.memory_space<vmem>>, %arg11: memref<3x144x256xf32, #tpu.memory_space<vmem>>, %arg12: memref<1x256xf32, #tpu.memory_space<vmem>>, %arg13: memref<256x128xf32, #tpu.memory_space<vmem>>, %arg14: memref<1x128xf32, #tpu.memory_space<vmem>>, %arg15: memref<128x128xf32, #tpu.memory_space<vmem>>, %arg16: memref<1x128xf32, #tpu.memory_space<vmem>>, %arg17: memref<1x4xf32, #tpu.memory_space<smem>>, %arg18: memref<8x128xf32, #tpu.memory_space<vmem>>) attributes {dimension_semantics = [#tpu.dimension_semantics<parallel>], iteration_bounds = array<i64: 1>, scalar_prefetch = 0 : i64, scratch_operands = 0 : i64, tpu.core_type = #tpu.core_type<tc>, window_params = [{transform_indices = @transform_0, window_bounds = array<i64: 192, 72>}, {pipeline_mode = #tpu.pipeline_mode<synchronous>, transform_indices = @transform_1, window_bounds = array<i64: 3, 176, 192>}, {pipeline_mode = #tpu.pipeline_mode<synchronous>, transform_indices = @transform_2, window_bounds = array<i64: 9, 72, 280>}, {pipeline_mode = #tpu.pipeline_mode<synchronous>, transform_indices = @transform_3, window_bounds = array<i64: 1, 280>}, {pipeline_mode = #tpu.pipeline_mode<synchronous>, transform_indices = @transform_4, window_bounds = array<i64: 3, 80, 176>}, {pipeline_mode = #tpu.pipeline_mode<synchronous>, transform_indices = @transform_5, window_bounds = array<i64: 3, 64, 80>}, {pipeline_mode = #tpu.pipeline_mode<synchronous>, transform_indices = @transform_6, window_bounds = array<i64: 9, 280, 144>}, {pipeline_mode = #tpu.pipeline_mode<synchronous>, transform_indices = @transform_7, window_bounds = array<i64: 1, 144>}, {pipeline_mode = #tpu.pipeline_mode<synchronous>, transform_indices = @transform_8, window_bounds = array<i64: 3, 24, 64>}, {pipeline_mode = #tpu.pipeline_mode<synchronous>, transform_indices = @transform_9, window_bounds = array<i64: 3, 8, 24>}, {pipeline_mode = #tpu.pipeline_mode<synchronous>, transform_indices = @transform_10, window_bounds = array<i64: 3, 144, 256>}, {pipeline_mode = #tpu.pipeline_mode<synchronous>, transform_indices = @transform_11, window_bounds = array<i64: 1, 256>}, {pipeline_mode = #tpu.pipeline_mode<synchronous>, transform_indices = @transform_12, window_bounds = array<i64: 256, 128>}, {pipeline_mode = #tpu.pipeline_mode<synchronous>, transform_indices = @transform_13, window_bounds = array<i64: 1, 128>}, {pipeline_mode = #tpu.pipeline_mode<synchronous>, transform_indices = @transform_14, window_bounds = array<i64: 128, 128>}, {pipeline_mode = #tpu.pipeline_mode<synchronous>, transform_indices = @transform_15, window_bounds = array<i64: 1, 128>}, {transform_indices = @transform_16, window_bounds = array<i64: 1, 4>}, {transform_indices = @transform_17, window_bounds = array<i64: 8, 128>}]} {
    %c0 = arith.constant 0 : index
    %c0_0 = arith.constant 0 : index
    %0 = memref.load %arg17[%c0, %c0_0] : memref<1x4xf32, #tpu.memory_space<smem>>
    %c0_1 = arith.constant 0 : index
    %c1 = arith.constant 1 : index
    %1 = memref.load %arg17[%c0_1, %c1] : memref<1x4xf32, #tpu.memory_space<smem>>
    %c0_2 = arith.constant 0 : index
    %c2 = arith.constant 2 : index
    %2 = memref.load %arg17[%c0_2, %c2] : memref<1x4xf32, #tpu.memory_space<smem>>
    %c0_3 = arith.constant 0 : index
    %c3 = arith.constant 3 : index
    %3 = memref.load %arg17[%c0_3, %c3] : memref<1x4xf32, #tpu.memory_space<smem>>
    %c0_4 = arith.constant 0 : index
    %c0_5 = arith.constant 0 : index
    %4 = vector.load %arg1[%c0_4, %c0_5] : memref<192x72xf32, #tpu.memory_space<vmem>>, vector<192x72xf32>
    %c0_6 = arith.constant 0 : index
    %c0_7 = arith.constant 0 : index
    %c0_8 = arith.constant 0 : index
    %5 = vector.load %arg2[%c0_6, %c0_7, %c0_8] : memref<3x176x192xf32, #tpu.memory_space<vmem>>, vector<1x176x192xf32>
    %6 = vector.shape_cast %5 : vector<1x176x192xf32> to vector<176x192xf32>
    %cst = arith.constant dense<0.000000e+00> : vector<176x72xf32>
    %7 = tpu.matmul %6, %4, %cst {dimension_numbers = #tpu.dot_dimension_numbers<[1], [0], [0], [1], [0, 0, 1, 1], [], []>} : vector<176x192xf32>, vector<192x72xf32>, vector<176x72xf32> -> vector<176x72xf32>
    %c1_9 = arith.constant 1 : index
    %c0_10 = arith.constant 0 : index
    %c0_11 = arith.constant 0 : index
    %8 = vector.load %arg2[%c1_9, %c0_10, %c0_11] : memref<3x176x192xf32, #tpu.memory_space<vmem>>, vector<1x176x192xf32>
    %9 = vector.shape_cast %8 : vector<1x176x192xf32> to vector<176x192xf32>
    %cst_12 = arith.constant dense<0.000000e+00> : vector<176x72xf32>
    %10 = tpu.matmul %9, %4, %cst_12 {dimension_numbers = #tpu.dot_dimension_numbers<[1], [0], [0], [1], [0, 0, 1, 1], [], []>} : vector<176x192xf32>, vector<192x72xf32>, vector<176x72xf32> -> vector<176x72xf32>
    %c2_13 = arith.constant 2 : index
    %c0_14 = arith.constant 0 : index
    %c0_15 = arith.constant 0 : index
    %11 = vector.load %arg2[%c2_13, %c0_14, %c0_15] : memref<3x176x192xf32, #tpu.memory_space<vmem>>, vector<1x176x192xf32>
    %12 = vector.shape_cast %11 : vector<1x176x192xf32> to vector<176x192xf32>
    %cst_16 = arith.constant dense<0.000000e+00> : vector<176x72xf32>
    %13 = tpu.matmul %12, %4, %cst_16 {dimension_numbers = #tpu.dot_dimension_numbers<[1], [0], [0], [1], [0, 0, 1, 1], [], []>} : vector<176x192xf32>, vector<192x72xf32>, vector<176x72xf32> -> vector<176x72xf32>
    %c0_17 = arith.constant 0 : index
    %c0_18 = arith.constant 0 : index
    %c0_19 = arith.constant 0 : index
    %14 = vector.load %arg3[%c0_17, %c0_18, %c0_19] : memref<9x72x280xf32, #tpu.memory_space<vmem>>, vector<1x72x280xf32>
    %15 = vector.shape_cast %14 : vector<1x72x280xf32> to vector<72x280xf32>
    %cst_20 = arith.constant dense<0.000000e+00> : vector<176x280xf32>
    %16 = tpu.matmul %7, %15, %cst_20 {dimension_numbers = #tpu.dot_dimension_numbers<[1], [0], [0], [1], [0, 0, 1, 1], [], []>} : vector<176x72xf32>, vector<72x280xf32>, vector<176x280xf32> -> vector<176x280xf32>
    %c3_21 = arith.constant 3 : index
    %c0_22 = arith.constant 0 : index
    %c0_23 = arith.constant 0 : index
    %17 = vector.load %arg3[%c3_21, %c0_22, %c0_23] : memref<9x72x280xf32, #tpu.memory_space<vmem>>, vector<1x72x280xf32>
    %18 = vector.shape_cast %17 : vector<1x72x280xf32> to vector<72x280xf32>
    %cst_24 = arith.constant dense<0.000000e+00> : vector<176x280xf32>
    %19 = tpu.matmul %10, %18, %cst_24 {dimension_numbers = #tpu.dot_dimension_numbers<[1], [0], [0], [1], [0, 0, 1, 1], [], []>} : vector<176x72xf32>, vector<72x280xf32>, vector<176x280xf32> -> vector<176x280xf32>
    %20 = arith.addf %16, %19 : vector<176x280xf32>
    %c6 = arith.constant 6 : index
    %c0_25 = arith.constant 0 : index
    %c0_26 = arith.constant 0 : index
    %21 = vector.load %arg3[%c6, %c0_25, %c0_26] : memref<9x72x280xf32, #tpu.memory_space<vmem>>, vector<1x72x280xf32>
    %22 = vector.shape_cast %21 : vector<1x72x280xf32> to vector<72x280xf32>
    %cst_27 = arith.constant dense<0.000000e+00> : vector<176x280xf32>
    %23 = tpu.matmul %13, %22, %cst_27 {dimension_numbers = #tpu.dot_dimension_numbers<[1], [0], [0], [1], [0, 0, 1, 1], [], []>} : vector<176x72xf32>, vector<72x280xf32>, vector<176x280xf32> -> vector<176x280xf32>
    %24 = arith.addf %20, %23 : vector<176x280xf32>
    %c0_28 = arith.constant 0 : index
    %c0_29 = arith.constant 0 : index
    %25 = vector.load %arg4[%c0_28, %c0_29] : memref<1x280xf32, #tpu.memory_space<vmem>>, vector<1x280xf32>
    %26 = vector.broadcast %25 : vector<1x280xf32> to vector<176x280xf32>
    %27 = arith.addf %24, %26 : vector<176x280xf32>
    %cst_30 = arith.constant 0.000000e+00 : f32
    %28 = vector.broadcast %cst_30 : f32 to vector<176x280xf32>
    %29 = arith.maximumf %27, %28 : vector<176x280xf32>
    %cst_31 = arith.constant 0.000000e+00 : f32
    %30 = vector.broadcast %cst_31 : f32 to vector<176x280xf32>
    %31 = arith.minimumf %27, %30 : vector<176x280xf32>
    %32 = vector.broadcast %0 : f32 to vector<176x280xf32>
    %33 = arith.mulf %32, %31 : vector<176x280xf32>
    %34 = arith.addf %29, %33 : vector<176x280xf32>
    %c1_32 = arith.constant 1 : index
    %c0_33 = arith.constant 0 : index
    %c0_34 = arith.constant 0 : index
    %35 = vector.load %arg3[%c1_32, %c0_33, %c0_34] : memref<9x72x280xf32, #tpu.memory_space<vmem>>, vector<1x72x280xf32>
    %36 = vector.shape_cast %35 : vector<1x72x280xf32> to vector<72x280xf32>
    %cst_35 = arith.constant dense<0.000000e+00> : vector<176x280xf32>
    %37 = tpu.matmul %7, %36, %cst_35 {dimension_numbers = #tpu.dot_dimension_numbers<[1], [0], [0], [1], [0, 0, 1, 1], [], []>} : vector<176x72xf32>, vector<72x280xf32>, vector<176x280xf32> -> vector<176x280xf32>
    %c4 = arith.constant 4 : index
    %c0_36 = arith.constant 0 : index
    %c0_37 = arith.constant 0 : index
    %38 = vector.load %arg3[%c4, %c0_36, %c0_37] : memref<9x72x280xf32, #tpu.memory_space<vmem>>, vector<1x72x280xf32>
    %39 = vector.shape_cast %38 : vector<1x72x280xf32> to vector<72x280xf32>
    %cst_38 = arith.constant dense<0.000000e+00> : vector<176x280xf32>
    %40 = tpu.matmul %10, %39, %cst_38 {dimension_numbers = #tpu.dot_dimension_numbers<[1], [0], [0], [1], [0, 0, 1, 1], [], []>} : vector<176x72xf32>, vector<72x280xf32>, vector<176x280xf32> -> vector<176x280xf32>
    %41 = arith.addf %37, %40 : vector<176x280xf32>
    %c7 = arith.constant 7 : index
    %c0_39 = arith.constant 0 : index
    %c0_40 = arith.constant 0 : index
    %42 = vector.load %arg3[%c7, %c0_39, %c0_40] : memref<9x72x280xf32, #tpu.memory_space<vmem>>, vector<1x72x280xf32>
    %43 = vector.shape_cast %42 : vector<1x72x280xf32> to vector<72x280xf32>
    %cst_41 = arith.constant dense<0.000000e+00> : vector<176x280xf32>
    %44 = tpu.matmul %13, %43, %cst_41 {dimension_numbers = #tpu.dot_dimension_numbers<[1], [0], [0], [1], [0, 0, 1, 1], [], []>} : vector<176x72xf32>, vector<72x280xf32>, vector<176x280xf32> -> vector<176x280xf32>
    %45 = arith.addf %41, %44 : vector<176x280xf32>
    %c0_42 = arith.constant 0 : index
    %c0_43 = arith.constant 0 : index
    %46 = vector.load %arg4[%c0_42, %c0_43] : memref<1x280xf32, #tpu.memory_space<vmem>>, vector<1x280xf32>
    %47 = vector.broadcast %46 : vector<1x280xf32> to vector<176x280xf32>
    %48 = arith.addf %45, %47 : vector<176x280xf32>
    %cst_44 = arith.constant 0.000000e+00 : f32
    %49 = vector.broadcast %cst_44 : f32 to vector<176x280xf32>
    %50 = arith.maximumf %48, %49 : vector<176x280xf32>
    %cst_45 = arith.constant 0.000000e+00 : f32
    %51 = vector.broadcast %cst_45 : f32 to vector<176x280xf32>
    %52 = arith.minimumf %48, %51 : vector<176x280xf32>
    %53 = vector.broadcast %0 : f32 to vector<176x280xf32>
    %54 = arith.mulf %53, %52 : vector<176x280xf32>
    %55 = arith.addf %50, %54 : vector<176x280xf32>
    %c2_46 = arith.constant 2 : index
    %c0_47 = arith.constant 0 : index
    %c0_48 = arith.constant 0 : index
    %56 = vector.load %arg3[%c2_46, %c0_47, %c0_48] : memref<9x72x280xf32, #tpu.memory_space<vmem>>, vector<1x72x280xf32>
    %57 = vector.shape_cast %56 : vector<1x72x280xf32> to vector<72x280xf32>
    %cst_49 = arith.constant dense<0.000000e+00> : vector<176x280xf32>
    %58 = tpu.matmul %7, %57, %cst_49 {dimension_numbers = #tpu.dot_dimension_numbers<[1], [0], [0], [1], [0, 0, 1, 1], [], []>} : vector<176x72xf32>, vector<72x280xf32>, vector<176x280xf32> -> vector<176x280xf32>
    %c5 = arith.constant 5 : index
    %c0_50 = arith.constant 0 : index
    %c0_51 = arith.constant 0 : index
    %59 = vector.load %arg3[%c5, %c0_50, %c0_51] : memref<9x72x280xf32, #tpu.memory_space<vmem>>, vector<1x72x280xf32>
    %60 = vector.shape_cast %59 : vector<1x72x280xf32> to vector<72x280xf32>
    %cst_52 = arith.constant dense<0.000000e+00> : vector<176x280xf32>
    %61 = tpu.matmul %10, %60, %cst_52 {dimension_numbers = #tpu.dot_dimension_numbers<[1], [0], [0], [1], [0, 0, 1, 1], [], []>} : vector<176x72xf32>, vector<72x280xf32>, vector<176x280xf32> -> vector<176x280xf32>
    %62 = arith.addf %58, %61 : vector<176x280xf32>
    %c8 = arith.constant 8 : index
    %c0_53 = arith.constant 0 : index
    %c0_54 = arith.constant 0 : index
    %63 = vector.load %arg3[%c8, %c0_53, %c0_54] : memref<9x72x280xf32, #tpu.memory_space<vmem>>, vector<1x72x280xf32>
    %64 = vector.shape_cast %63 : vector<1x72x280xf32> to vector<72x280xf32>
    %cst_55 = arith.constant dense<0.000000e+00> : vector<176x280xf32>
    %65 = tpu.matmul %13, %64, %cst_55 {dimension_numbers = #tpu.dot_dimension_numbers<[1], [0], [0], [1], [0, 0, 1, 1], [], []>} : vector<176x72xf32>, vector<72x280xf32>, vector<176x280xf32> -> vector<176x280xf32>
    %66 = arith.addf %62, %65 : vector<176x280xf32>
    %c0_56 = arith.constant 0 : index
    %c0_57 = arith.constant 0 : index
    %67 = vector.load %arg4[%c0_56, %c0_57] : memref<1x280xf32, #tpu.memory_space<vmem>>, vector<1x280xf32>
    %68 = vector.broadcast %67 : vector<1x280xf32> to vector<176x280xf32>
    %69 = arith.addf %66, %68 : vector<176x280xf32>
    %cst_58 = arith.constant 0.000000e+00 : f32
    %70 = vector.broadcast %cst_58 : f32 to vector<176x280xf32>
    %71 = arith.maximumf %69, %70 : vector<176x280xf32>
    %cst_59 = arith.constant 0.000000e+00 : f32
    %72 = vector.broadcast %cst_59 : f32 to vector<176x280xf32>
    %73 = arith.minimumf %69, %72 : vector<176x280xf32>
    %74 = vector.broadcast %0 : f32 to vector<176x280xf32>
    %75 = arith.mulf %74, %73 : vector<176x280xf32>
    %76 = arith.addf %71, %75 : vector<176x280xf32>
    %77 = arith.maximumf %55, %76 : vector<176x280xf32>
    %78 = arith.maximumf %34, %77 : vector<176x280xf32>
    %c0_60 = arith.constant 0 : index
    %c0_61 = arith.constant 0 : index
    %c0_62 = arith.constant 0 : index
    %79 = vector.load %arg5[%c0_60, %c0_61, %c0_62] : memref<3x80x176xf32, #tpu.memory_space<vmem>>, vector<1x80x176xf32>
    %80 = vector.shape_cast %79 : vector<1x80x176xf32> to vector<80x176xf32>
    %cst_63 = arith.constant dense<0.000000e+00> : vector<80x280xf32>
    %81 = tpu.matmul %80, %78, %cst_63 {dimension_numbers = #tpu.dot_dimension_numbers<[1], [0], [0], [1], [0, 0, 1, 1], [], []>} : vector<80x176xf32>, vector<176x280xf32>, vector<80x280xf32> -> vector<80x280xf32>
    %c1_64 = arith.constant 1 : index
    %c0_65 = arith.constant 0 : index
    %c0_66 = arith.constant 0 : index
    %82 = vector.load %arg5[%c1_64, %c0_65, %c0_66] : memref<3x80x176xf32, #tpu.memory_space<vmem>>, vector<1x80x176xf32>
    %83 = vector.shape_cast %82 : vector<1x80x176xf32> to vector<80x176xf32>
    %cst_67 = arith.constant dense<0.000000e+00> : vector<80x280xf32>
    %84 = tpu.matmul %83, %78, %cst_67 {dimension_numbers = #tpu.dot_dimension_numbers<[1], [0], [0], [1], [0, 0, 1, 1], [], []>} : vector<80x176xf32>, vector<176x280xf32>, vector<80x280xf32> -> vector<80x280xf32>
    %c2_68 = arith.constant 2 : index
    %c0_69 = arith.constant 0 : index
    %c0_70 = arith.constant 0 : index
    %85 = vector.load %arg5[%c2_68, %c0_69, %c0_70] : memref<3x80x176xf32, #tpu.memory_space<vmem>>, vector<1x80x176xf32>
    %86 = vector.shape_cast %85 : vector<1x80x176xf32> to vector<80x176xf32>
    %cst_71 = arith.constant dense<0.000000e+00> : vector<80x280xf32>
    %87 = tpu.matmul %86, %78, %cst_71 {dimension_numbers = #tpu.dot_dimension_numbers<[1], [0], [0], [1], [0, 0, 1, 1], [], []>} : vector<80x176xf32>, vector<176x280xf32>, vector<80x280xf32> -> vector<80x280xf32>
    %88 = arith.maximumf %84, %87 : vector<80x280xf32>
    %89 = arith.maximumf %81, %88 : vector<80x280xf32>
    %c0_72 = arith.constant 0 : index
    %c0_73 = arith.constant 0 : index
    %c0_74 = arith.constant 0 : index
    %90 = vector.load %arg6[%c0_72, %c0_73, %c0_74] : memref<3x64x80xf32, #tpu.memory_space<vmem>>, vector<1x64x80xf32>
    %91 = vector.shape_cast %90 : vector<1x64x80xf32> to vector<64x80xf32>
    %cst_75 = arith.constant dense<0.000000e+00> : vector<64x280xf32>
    %92 = tpu.matmul %91, %89, %cst_75 {dimension_numbers = #tpu.dot_dimension_numbers<[1], [0], [0], [1], [0, 0, 1, 1], [], []>} : vector<64x80xf32>, vector<80x280xf32>, vector<64x280xf32> -> vector<64x280xf32>
    %c1_76 = arith.constant 1 : index
    %c0_77 = arith.constant 0 : index
    %c0_78 = arith.constant 0 : index
    %93 = vector.load %arg6[%c1_76, %c0_77, %c0_78] : memref<3x64x80xf32, #tpu.memory_space<vmem>>, vector<1x64x80xf32>
    %94 = vector.shape_cast %93 : vector<1x64x80xf32> to vector<64x80xf32>
    %cst_79 = arith.constant dense<0.000000e+00> : vector<64x280xf32>
    %95 = tpu.matmul %94, %89, %cst_79 {dimension_numbers = #tpu.dot_dimension_numbers<[1], [0], [0], [1], [0, 0, 1, 1], [], []>} : vector<64x80xf32>, vector<80x280xf32>, vector<64x280xf32> -> vector<64x280xf32>
    %c2_80 = arith.constant 2 : index
    %c0_81 = arith.constant 0 : index
    %c0_82 = arith.constant 0 : index
    %96 = vector.load %arg6[%c2_80, %c0_81, %c0_82] : memref<3x64x80xf32, #tpu.memory_space<vmem>>, vector<1x64x80xf32>
    %97 = vector.shape_cast %96 : vector<1x64x80xf32> to vector<64x80xf32>
    %cst_83 = arith.constant dense<0.000000e+00> : vector<64x280xf32>
    %98 = tpu.matmul %97, %89, %cst_83 {dimension_numbers = #tpu.dot_dimension_numbers<[1], [0], [0], [1], [0, 0, 1, 1], [], []>} : vector<64x80xf32>, vector<80x280xf32>, vector<64x280xf32> -> vector<64x280xf32>
    %c0_84 = arith.constant 0 : index
    %c0_85 = arith.constant 0 : index
    %c0_86 = arith.constant 0 : index
    %99 = vector.load %arg7[%c0_84, %c0_85, %c0_86] : memref<9x280x144xf32, #tpu.memory_space<vmem>>, vector<1x280x144xf32>
    %100 = vector.shape_cast %99 : vector<1x280x144xf32> to vector<280x144xf32>
    %cst_87 = arith.constant dense<0.000000e+00> : vector<64x144xf32>
    %101 = tpu.matmul %92, %100, %cst_87 {dimension_numbers = #tpu.dot_dimension_numbers<[1], [0], [0], [1], [0, 0, 1, 1], [], []>} : vector<64x280xf32>, vector<280x144xf32>, vector<64x144xf32> -> vector<64x144xf32>
    %c3_88 = arith.constant 3 : index
    %c0_89 = arith.constant 0 : index
    %c0_90 = arith.constant 0 : index
    %102 = vector.load %arg7[%c3_88, %c0_89, %c0_90] : memref<9x280x144xf32, #tpu.memory_space<vmem>>, vector<1x280x144xf32>
    %103 = vector.shape_cast %102 : vector<1x280x144xf32> to vector<280x144xf32>
    %cst_91 = arith.constant dense<0.000000e+00> : vector<64x144xf32>
    %104 = tpu.matmul %95, %103, %cst_91 {dimension_numbers = #tpu.dot_dimension_numbers<[1], [0], [0], [1], [0, 0, 1, 1], [], []>} : vector<64x280xf32>, vector<280x144xf32>, vector<64x144xf32> -> vector<64x144xf32>
    %105 = arith.addf %101, %104 : vector<64x144xf32>
    %c6_92 = arith.constant 6 : index
    %c0_93 = arith.constant 0 : index
    %c0_94 = arith.constant 0 : index
    %106 = vector.load %arg7[%c6_92, %c0_93, %c0_94] : memref<9x280x144xf32, #tpu.memory_space<vmem>>, vector<1x280x144xf32>
    %107 = vector.shape_cast %106 : vector<1x280x144xf32> to vector<280x144xf32>
    %cst_95 = arith.constant dense<0.000000e+00> : vector<64x144xf32>
    %108 = tpu.matmul %98, %107, %cst_95 {dimension_numbers = #tpu.dot_dimension_numbers<[1], [0], [0], [1], [0, 0, 1, 1], [], []>} : vector<64x280xf32>, vector<280x144xf32>, vector<64x144xf32> -> vector<64x144xf32>
    %109 = arith.addf %105, %108 : vector<64x144xf32>
    %c0_96 = arith.constant 0 : index
    %c0_97 = arith.constant 0 : index
    %110 = vector.load %arg8[%c0_96, %c0_97] : memref<1x144xf32, #tpu.memory_space<vmem>>, vector<1x144xf32>
    %111 = vector.broadcast %110 : vector<1x144xf32> to vector<64x144xf32>
    %112 = arith.addf %109, %111 : vector<64x144xf32>
    %cst_98 = arith.constant 0.000000e+00 : f32
    %113 = vector.broadcast %cst_98 : f32 to vector<64x144xf32>
    %114 = arith.maximumf %112, %113 : vector<64x144xf32>
    %cst_99 = arith.constant 0.000000e+00 : f32
    %115 = vector.broadcast %cst_99 : f32 to vector<64x144xf32>
    %116 = arith.minimumf %112, %115 : vector<64x144xf32>
    %117 = vector.broadcast %1 : f32 to vector<64x144xf32>
    %118 = arith.mulf %117, %116 : vector<64x144xf32>
    %119 = arith.addf %114, %118 : vector<64x144xf32>
    %c1_100 = arith.constant 1 : index
    %c0_101 = arith.constant 0 : index
    %c0_102 = arith.constant 0 : index
    %120 = vector.load %arg7[%c1_100, %c0_101, %c0_102] : memref<9x280x144xf32, #tpu.memory_space<vmem>>, vector<1x280x144xf32>
    %121 = vector.shape_cast %120 : vector<1x280x144xf32> to vector<280x144xf32>
    %cst_103 = arith.constant dense<0.000000e+00> : vector<64x144xf32>
    %122 = tpu.matmul %92, %121, %cst_103 {dimension_numbers = #tpu.dot_dimension_numbers<[1], [0], [0], [1], [0, 0, 1, 1], [], []>} : vector<64x280xf32>, vector<280x144xf32>, vector<64x144xf32> -> vector<64x144xf32>
    %c4_104 = arith.constant 4 : index
    %c0_105 = arith.constant 0 : index
    %c0_106 = arith.constant 0 : index
    %123 = vector.load %arg7[%c4_104, %c0_105, %c0_106] : memref<9x280x144xf32, #tpu.memory_space<vmem>>, vector<1x280x144xf32>
    %124 = vector.shape_cast %123 : vector<1x280x144xf32> to vector<280x144xf32>
    %cst_107 = arith.constant dense<0.000000e+00> : vector<64x144xf32>
    %125 = tpu.matmul %95, %124, %cst_107 {dimension_numbers = #tpu.dot_dimension_numbers<[1], [0], [0], [1], [0, 0, 1, 1], [], []>} : vector<64x280xf32>, vector<280x144xf32>, vector<64x144xf32> -> vector<64x144xf32>
    %126 = arith.addf %122, %125 : vector<64x144xf32>
    %c7_108 = arith.constant 7 : index
    %c0_109 = arith.constant 0 : index
    %c0_110 = arith.constant 0 : index
    %127 = vector.load %arg7[%c7_108, %c0_109, %c0_110] : memref<9x280x144xf32, #tpu.memory_space<vmem>>, vector<1x280x144xf32>
    %128 = vector.shape_cast %127 : vector<1x280x144xf32> to vector<280x144xf32>
    %cst_111 = arith.constant dense<0.000000e+00> : vector<64x144xf32>
    %129 = tpu.matmul %98, %128, %cst_111 {dimension_numbers = #tpu.dot_dimension_numbers<[1], [0], [0], [1], [0, 0, 1, 1], [], []>} : vector<64x280xf32>, vector<280x144xf32>, vector<64x144xf32> -> vector<64x144xf32>
    %130 = arith.addf %126, %129 : vector<64x144xf32>
    %c0_112 = arith.constant 0 : index
    %c0_113 = arith.constant 0 : index
    %131 = vector.load %arg8[%c0_112, %c0_113] : memref<1x144xf32, #tpu.memory_space<vmem>>, vector<1x144xf32>
    %132 = vector.broadcast %131 : vector<1x144xf32> to vector<64x144xf32>
    %133 = arith.addf %130, %132 : vector<64x144xf32>
    %cst_114 = arith.constant 0.000000e+00 : f32
    %134 = vector.broadcast %cst_114 : f32 to vector<64x144xf32>
    %135 = arith.maximumf %133, %134 : vector<64x144xf32>
    %cst_115 = arith.constant 0.000000e+00 : f32
    %136 = vector.broadcast %cst_115 : f32 to vector<64x144xf32>
    %137 = arith.minimumf %133, %136 : vector<64x144xf32>
    %138 = vector.broadcast %1 : f32 to vector<64x144xf32>
    %139 = arith.mulf %138, %137 : vector<64x144xf32>
    %140 = arith.addf %135, %139 : vector<64x144xf32>
    %c2_116 = arith.constant 2 : index
    %c0_117 = arith.constant 0 : index
    %c0_118 = arith.constant 0 : index
    %141 = vector.load %arg7[%c2_116, %c0_117, %c0_118] : memref<9x280x144xf32, #tpu.memory_space<vmem>>, vector<1x280x144xf32>
    %142 = vector.shape_cast %141 : vector<1x280x144xf32> to vector<280x144xf32>
    %cst_119 = arith.constant dense<0.000000e+00> : vector<64x144xf32>
    %143 = tpu.matmul %92, %142, %cst_119 {dimension_numbers = #tpu.dot_dimension_numbers<[1], [0], [0], [1], [0, 0, 1, 1], [], []>} : vector<64x280xf32>, vector<280x144xf32>, vector<64x144xf32> -> vector<64x144xf32>
    %c5_120 = arith.constant 5 : index
    %c0_121 = arith.constant 0 : index
    %c0_122 = arith.constant 0 : index
    %144 = vector.load %arg7[%c5_120, %c0_121, %c0_122] : memref<9x280x144xf32, #tpu.memory_space<vmem>>, vector<1x280x144xf32>
    %145 = vector.shape_cast %144 : vector<1x280x144xf32> to vector<280x144xf32>
    %cst_123 = arith.constant dense<0.000000e+00> : vector<64x144xf32>
    %146 = tpu.matmul %95, %145, %cst_123 {dimension_numbers = #tpu.dot_dimension_numbers<[1], [0], [0], [1], [0, 0, 1, 1], [], []>} : vector<64x280xf32>, vector<280x144xf32>, vector<64x144xf32> -> vector<64x144xf32>
    %147 = arith.addf %143, %146 : vector<64x144xf32>
    %c8_124 = arith.constant 8 : index
    %c0_125 = arith.constant 0 : index
    %c0_126 = arith.constant 0 : index
    %148 = vector.load %arg7[%c8_124, %c0_125, %c0_126] : memref<9x280x144xf32, #tpu.memory_space<vmem>>, vector<1x280x144xf32>
    %149 = vector.shape_cast %148 : vector<1x280x144xf32> to vector<280x144xf32>
    %cst_127 = arith.constant dense<0.000000e+00> : vector<64x144xf32>
    %150 = tpu.matmul %98, %149, %cst_127 {dimension_numbers = #tpu.dot_dimension_numbers<[1], [0], [0], [1], [0, 0, 1, 1], [], []>} : vector<64x280xf32>, vector<280x144xf32>, vector<64x144xf32> -> vector<64x144xf32>
    %151 = arith.addf %147, %150 : vector<64x144xf32>
    %c0_128 = arith.constant 0 : index
    %c0_129 = arith.constant 0 : index
    %152 = vector.load %arg8[%c0_128, %c0_129] : memref<1x144xf32, #tpu.memory_space<vmem>>, vector<1x144xf32>
    %153 = vector.broadcast %152 : vector<1x144xf32> to vector<64x144xf32>
    %154 = arith.addf %151, %153 : vector<64x144xf32>
    %cst_130 = arith.constant 0.000000e+00 : f32
    %155 = vector.broadcast %cst_130 : f32 to vector<64x144xf32>
    %156 = arith.maximumf %154, %155 : vector<64x144xf32>
    %cst_131 = arith.constant 0.000000e+00 : f32
    %157 = vector.broadcast %cst_131 : f32 to vector<64x144xf32>
    %158 = arith.minimumf %154, %157 : vector<64x144xf32>
    %159 = vector.broadcast %1 : f32 to vector<64x144xf32>
    %160 = arith.mulf %159, %158 : vector<64x144xf32>
    %161 = arith.addf %156, %160 : vector<64x144xf32>
    %162 = arith.maximumf %140, %161 : vector<64x144xf32>
    %163 = arith.maximumf %119, %162 : vector<64x144xf32>
    %c0_132 = arith.constant 0 : index
    %c0_133 = arith.constant 0 : index
    %c0_134 = arith.constant 0 : index
    %164 = vector.load %arg9[%c0_132, %c0_133, %c0_134] : memref<3x24x64xf32, #tpu.memory_space<vmem>>, vector<1x24x64xf32>
    %165 = vector.shape_cast %164 : vector<1x24x64xf32> to vector<24x64xf32>
    %cst_135 = arith.constant dense<0.000000e+00> : vector<24x144xf32>
    %166 = tpu.matmul %165, %163, %cst_135 {dimension_numbers = #tpu.dot_dimension_numbers<[1], [0], [0], [1], [0, 0, 1, 1], [], []>} : vector<24x64xf32>, vector<64x144xf32>, vector<24x144xf32> -> vector<24x144xf32>
    %c1_136 = arith.constant 1 : index
    %c0_137 = arith.constant 0 : index
    %c0_138 = arith.constant 0 : index
    %167 = vector.load %arg9[%c1_136, %c0_137, %c0_138] : memref<3x24x64xf32, #tpu.memory_space<vmem>>, vector<1x24x64xf32>
    %168 = vector.shape_cast %167 : vector<1x24x64xf32> to vector<24x64xf32>
    %cst_139 = arith.constant dense<0.000000e+00> : vector<24x144xf32>
    %169 = tpu.matmul %168, %163, %cst_139 {dimension_numbers = #tpu.dot_dimension_numbers<[1], [0], [0], [1], [0, 0, 1, 1], [], []>} : vector<24x64xf32>, vector<64x144xf32>, vector<24x144xf32> -> vector<24x144xf32>
    %c2_140 = arith.constant 2 : index
    %c0_141 = arith.constant 0 : index
    %c0_142 = arith.constant 0 : index
    %170 = vector.load %arg9[%c2_140, %c0_141, %c0_142] : memref<3x24x64xf32, #tpu.memory_space<vmem>>, vector<1x24x64xf32>
    %171 = vector.shape_cast %170 : vector<1x24x64xf32> to vector<24x64xf32>
    %cst_143 = arith.constant dense<0.000000e+00> : vector<24x144xf32>
    %172 = tpu.matmul %171, %163, %cst_143 {dimension_numbers = #tpu.dot_dimension_numbers<[1], [0], [0], [1], [0, 0, 1, 1], [], []>} : vector<24x64xf32>, vector<64x144xf32>, vector<24x144xf32> -> vector<24x144xf32>
    %173 = arith.maximumf %169, %172 : vector<24x144xf32>
    %174 = arith.maximumf %166, %173 : vector<24x144xf32>
    %c0_144 = arith.constant 0 : index
    %c0_145 = arith.constant 0 : index
    %c0_146 = arith.constant 0 : index
    %175 = vector.load %arg10[%c0_144, %c0_145, %c0_146] : memref<3x8x24xf32, #tpu.memory_space<vmem>>, vector<1x8x24xf32>
    %176 = vector.shape_cast %175 : vector<1x8x24xf32> to vector<8x24xf32>
    %cst_147 = arith.constant dense<0.000000e+00> : vector<8x144xf32>
    %177 = tpu.matmul %176, %174, %cst_147 {dimension_numbers = #tpu.dot_dimension_numbers<[1], [0], [0], [1], [0, 0, 1, 1], [], []>} : vector<8x24xf32>, vector<24x144xf32>, vector<8x144xf32> -> vector<8x144xf32>
    %c0_148 = arith.constant 0 : index
    %c0_149 = arith.constant 0 : index
    %c0_150 = arith.constant 0 : index
    %178 = vector.load %arg11[%c0_148, %c0_149, %c0_150] : memref<3x144x256xf32, #tpu.memory_space<vmem>>, vector<1x144x256xf32>
    %179 = vector.shape_cast %178 : vector<1x144x256xf32> to vector<144x256xf32>
    %cst_151 = arith.constant dense<0.000000e+00> : vector<8x256xf32>
    %180 = tpu.matmul %177, %179, %cst_151 {dimension_numbers = #tpu.dot_dimension_numbers<[1], [0], [0], [1], [0, 0, 1, 1], [], []>} : vector<8x144xf32>, vector<144x256xf32>, vector<8x256xf32> -> vector<8x256xf32>
    %c1_152 = arith.constant 1 : index
    %c0_153 = arith.constant 0 : index
    %c0_154 = arith.constant 0 : index
    %181 = vector.load %arg10[%c1_152, %c0_153, %c0_154] : memref<3x8x24xf32, #tpu.memory_space<vmem>>, vector<1x8x24xf32>
    %182 = vector.shape_cast %181 : vector<1x8x24xf32> to vector<8x24xf32>
    %cst_155 = arith.constant dense<0.000000e+00> : vector<8x144xf32>
    %183 = tpu.matmul %182, %174, %cst_155 {dimension_numbers = #tpu.dot_dimension_numbers<[1], [0], [0], [1], [0, 0, 1, 1], [], []>} : vector<8x24xf32>, vector<24x144xf32>, vector<8x144xf32> -> vector<8x144xf32>
    %c1_156 = arith.constant 1 : index
    %c0_157 = arith.constant 0 : index
    %c0_158 = arith.constant 0 : index
    %184 = vector.load %arg11[%c1_156, %c0_157, %c0_158] : memref<3x144x256xf32, #tpu.memory_space<vmem>>, vector<1x144x256xf32>
    %185 = vector.shape_cast %184 : vector<1x144x256xf32> to vector<144x256xf32>
    %cst_159 = arith.constant dense<0.000000e+00> : vector<8x256xf32>
    %186 = tpu.matmul %183, %185, %cst_159 {dimension_numbers = #tpu.dot_dimension_numbers<[1], [0], [0], [1], [0, 0, 1, 1], [], []>} : vector<8x144xf32>, vector<144x256xf32>, vector<8x256xf32> -> vector<8x256xf32>
    %187 = arith.addf %180, %186 : vector<8x256xf32>
    %c2_160 = arith.constant 2 : index
    %c0_161 = arith.constant 0 : index
    %c0_162 = arith.constant 0 : index
    %188 = vector.load %arg10[%c2_160, %c0_161, %c0_162] : memref<3x8x24xf32, #tpu.memory_space<vmem>>, vector<1x8x24xf32>
    %189 = vector.shape_cast %188 : vector<1x8x24xf32> to vector<8x24xf32>
    %cst_163 = arith.constant dense<0.000000e+00> : vector<8x144xf32>
    %190 = tpu.matmul %189, %174, %cst_163 {dimension_numbers = #tpu.dot_dimension_numbers<[1], [0], [0], [1], [0, 0, 1, 1], [], []>} : vector<8x24xf32>, vector<24x144xf32>, vector<8x144xf32> -> vector<8x144xf32>
    %c2_164 = arith.constant 2 : index
    %c0_165 = arith.constant 0 : index
    %c0_166 = arith.constant 0 : index
    %191 = vector.load %arg11[%c2_164, %c0_165, %c0_166] : memref<3x144x256xf32, #tpu.memory_space<vmem>>, vector<1x144x256xf32>
    %192 = vector.shape_cast %191 : vector<1x144x256xf32> to vector<144x256xf32>
    %cst_167 = arith.constant dense<0.000000e+00> : vector<8x256xf32>
    %193 = tpu.matmul %190, %192, %cst_167 {dimension_numbers = #tpu.dot_dimension_numbers<[1], [0], [0], [1], [0, 0, 1, 1], [], []>} : vector<8x144xf32>, vector<144x256xf32>, vector<8x256xf32> -> vector<8x256xf32>
    %194 = arith.addf %187, %193 : vector<8x256xf32>
    %c0_168 = arith.constant 0 : index
    %c0_169 = arith.constant 0 : index
    %195 = vector.load %arg12[%c0_168, %c0_169] : memref<1x256xf32, #tpu.memory_space<vmem>>, vector<1x256xf32>
    %196 = vector.broadcast %195 : vector<1x256xf32> to vector<8x256xf32>
    %197 = arith.addf %194, %196 : vector<8x256xf32>
    %cst_170 = arith.constant 0.000000e+00 : f32
    %198 = vector.broadcast %cst_170 : f32 to vector<8x256xf32>
    %199 = arith.maximumf %197, %198 : vector<8x256xf32>
    %cst_171 = arith.constant 0.000000e+00 : f32
    %200 = vector.broadcast %cst_171 : f32 to vector<8x256xf32>
    %201 = arith.minimumf %197, %200 : vector<8x256xf32>
    %202 = vector.broadcast %2 : f32 to vector<8x256xf32>
    %203 = arith.mulf %202, %201 : vector<8x256xf32>
    %204 = arith.addf %199, %203 : vector<8x256xf32>
    %c0_172 = arith.constant 0 : index
    %c0_173 = arith.constant 0 : index
    %205 = vector.load %arg13[%c0_172, %c0_173] : memref<256x128xf32, #tpu.memory_space<vmem>>, vector<256x128xf32>
    %cst_174 = arith.constant dense<0.000000e+00> : vector<8x128xf32>
    %206 = tpu.matmul %204, %205, %cst_174 {dimension_numbers = #tpu.dot_dimension_numbers<[1], [0], [0], [1], [0, 0, 1, 1], [], []>} : vector<8x256xf32>, vector<256x128xf32>, vector<8x128xf32> -> vector<8x128xf32>
    %c0_175 = arith.constant 0 : index
    %c0_176 = arith.constant 0 : index
    %207 = vector.load %arg14[%c0_175, %c0_176] : memref<1x128xf32, #tpu.memory_space<vmem>>, vector<1x128xf32>
    %208 = vector.broadcast %207 : vector<1x128xf32> to vector<8x128xf32>
    %209 = arith.addf %206, %208 : vector<8x128xf32>
    %cst_177 = arith.constant 0.000000e+00 : f32
    %210 = vector.broadcast %cst_177 : f32 to vector<8x128xf32>
    %211 = arith.maximumf %209, %210 : vector<8x128xf32>
    %cst_178 = arith.constant 0.000000e+00 : f32
    %212 = vector.broadcast %cst_178 : f32 to vector<8x128xf32>
    %213 = arith.minimumf %209, %212 : vector<8x128xf32>
    %214 = vector.broadcast %3 : f32 to vector<8x128xf32>
    %215 = arith.mulf %214, %213 : vector<8x128xf32>
    %216 = arith.addf %211, %215 : vector<8x128xf32>
    %c0_179 = arith.constant 0 : index
    %c0_180 = arith.constant 0 : index
    %217 = vector.load %arg15[%c0_179, %c0_180] : memref<128x128xf32, #tpu.memory_space<vmem>>, vector<128x128xf32>
    %cst_181 = arith.constant dense<0.000000e+00> : vector<8x128xf32>
    %218 = tpu.matmul %216, %217, %cst_181 {dimension_numbers = #tpu.dot_dimension_numbers<[1], [0], [0], [1], [0, 0, 1, 1], [], []>} : vector<8x128xf32>, vector<128x128xf32>, vector<8x128xf32> -> vector<8x128xf32>
    %c0_182 = arith.constant 0 : index
    %c0_183 = arith.constant 0 : index
    %219 = vector.load %arg16[%c0_182, %c0_183] : memref<1x128xf32, #tpu.memory_space<vmem>>, vector<1x128xf32>
    %220 = vector.broadcast %219 : vector<1x128xf32> to vector<8x128xf32>
    %221 = arith.addf %218, %220 : vector<8x128xf32>
    %cst_184 = arith.constant 0.000000e+00 : f32
    %222 = vector.broadcast %cst_184 : f32 to vector<8x128xf32>
    %223 = arith.subf %222, %221 : vector<8x128xf32>
    %224 = math.exp %223 : vector<8x128xf32>
    %cst_185 = arith.constant 1.000000e+00 : f32
    %225 = vector.broadcast %cst_185 : f32 to vector<8x128xf32>
    %226 = arith.addf %225, %224 : vector<8x128xf32>
    %cst_186 = arith.constant 1.000000e+00 : f32
    %227 = vector.broadcast %cst_186 : f32 to vector<8x128xf32>
    %228 = arith.divf %227, %226 : vector<8x128xf32>
    %229 = tpu.iota {dimensions = array<i32: 1>} : vector<8x128xi32>
    %c0_i32 = arith.constant 0 : i32
    %230 = vector.broadcast %c0_i32 : i32 to vector<8x128xi32>
    %231 = arith.cmpi eq, %229, %230 : vector<8x128xi32>
    %232 = arith.select %231, %228, %221 : vector<8x128xi1>, vector<8x128xf32>
    %c0_187 = arith.constant 0 : index
    %c0_188 = arith.constant 0 : index
    %233 = vector.load %arg18[%c0_187, %c0_188] : memref<8x128xf32, #tpu.memory_space<vmem>>, vector<8x128xf32>
    tpu.vector_store %arg18[%c0_187, %c0_188], %232 {strides = array<i32>} : memref<8x128xf32, #tpu.memory_space<vmem>>, vector<8x128xf32>,
    return
  }
  func.func @transform_0(%arg0: i32) -> (i32, i32) {
    %c0_i32 = arith.constant 0 : i32
    %c0_i32_0 = arith.constant 0 : i32
    return %arg0, %c0_i32 : i32, i32
  }
  func.func @transform_1(%arg0: i32) -> (i32, i32, i32) {
    %c0_i32 = arith.constant 0 : i32
    %c0_i32_0 = arith.constant 0 : i32
    %c0_i32_1 = arith.constant 0 : i32
    %c0_i32_2 = arith.constant 0 : i32
    return %c0_i32, %c0_i32_0, %c0_i32_1 : i32, i32, i32
  }
  func.func @transform_2(%arg0: i32) -> (i32, i32, i32) {
    %c0_i32 = arith.constant 0 : i32
    %c0_i32_0 = arith.constant 0 : i32
    %c0_i32_1 = arith.constant 0 : i32
    %c0_i32_2 = arith.constant 0 : i32
    return %c0_i32, %c0_i32_0, %c0_i32_1 : i32, i32, i32
  }
  func.func @transform_3(%arg0: i32) -> (i32, i32) {
    %c0_i32 = arith.constant 0 : i32
    %c0_i32_0 = arith.constant 0 : i32
    %c0_i32_1 = arith.constant 0 : i32
    return %c0_i32, %c0_i32_0 : i32, i32
  }
  func.func @transform_4(%arg0: i32) -> (i32, i32, i32) {
    %c0_i32 = arith.constant 0 : i32
    %c0_i32_0 = arith.constant 0 : i32
    %c0_i32_1 = arith.constant 0 : i32
    %c0_i32_2 = arith.constant 0 : i32
    return %c0_i32, %c0_i32_0, %c0_i32_1 : i32, i32, i32
  }
  func.func @transform_5(%arg0: i32) -> (i32, i32, i32) {
    %c0_i32 = arith.constant 0 : i32
    %c0_i32_0 = arith.constant 0 : i32
    %c0_i32_1 = arith.constant 0 : i32
    %c0_i32_2 = arith.constant 0 : i32
    return %c0_i32, %c0_i32_0, %c0_i32_1 : i32, i32, i32
  }
  func.func @transform_6(%arg0: i32) -> (i32, i32, i32) {
    %c0_i32 = arith.constant 0 : i32
    %c0_i32_0 = arith.constant 0 : i32
    %c0_i32_1 = arith.constant 0 : i32
    %c0_i32_2 = arith.constant 0 : i32
    return %c0_i32, %c0_i32_0, %c0_i32_1 : i32, i32, i32
  }
  func.func @transform_7(%arg0: i32) -> (i32, i32) {
    %c0_i32 = arith.constant 0 : i32
    %c0_i32_0 = arith.constant 0 : i32
    %c0_i32_1 = arith.constant 0 : i32
    return %c0_i32, %c0_i32_0 : i32, i32
  }
  func.func @transform_8(%arg0: i32) -> (i32, i32, i32) {
    %c0_i32 = arith.constant 0 : i32
    %c0_i32_0 = arith.constant 0 : i32
    %c0_i32_1 = arith.constant 0 : i32
    %c0_i32_2 = arith.constant 0 : i32
    return %c0_i32, %c0_i32_0, %c0_i32_1 : i32, i32, i32
  }
  func.func @transform_9(%arg0: i32) -> (i32, i32, i32) {
    %c0_i32 = arith.constant 0 : i32
    %c0_i32_0 = arith.constant 0 : i32
    %c0_i32_1 = arith.constant 0 : i32
    %c0_i32_2 = arith.constant 0 : i32
    return %c0_i32, %c0_i32_0, %c0_i32_1 : i32, i32, i32
  }
  func.func @transform_10(%arg0: i32) -> (i32, i32, i32) {
    %c0_i32 = arith.constant 0 : i32
    %c0_i32_0 = arith.constant 0 : i32
    %c0_i32_1 = arith.constant 0 : i32
    %c0_i32_2 = arith.constant 0 : i32
    return %c0_i32, %c0_i32_0, %c0_i32_1 : i32, i32, i32
  }
  func.func @transform_11(%arg0: i32) -> (i32, i32) {
    %c0_i32 = arith.constant 0 : i32
    %c0_i32_0 = arith.constant 0 : i32
    %c0_i32_1 = arith.constant 0 : i32
    return %c0_i32, %c0_i32_0 : i32, i32
  }
  func.func @transform_12(%arg0: i32) -> (i32, i32) {
    %c0_i32 = arith.constant 0 : i32
    %c0_i32_0 = arith.constant 0 : i32
    %c0_i32_1 = arith.constant 0 : i32
    return %c0_i32, %c0_i32_0 : i32, i32
  }
  func.func @transform_13(%arg0: i32) -> (i32, i32) {
    %c0_i32 = arith.constant 0 : i32
    %c0_i32_0 = arith.constant 0 : i32
    %c0_i32_1 = arith.constant 0 : i32
    return %c0_i32, %c0_i32_0 : i32, i32
  }
  func.func @transform_14(%arg0: i32) -> (i32, i32) {
    %c0_i32 = arith.constant 0 : i32
    %c0_i32_0 = arith.constant 0 : i32
    %c0_i32_1 = arith.constant 0 : i32
    return %c0_i32, %c0_i32_0 : i32, i32
  }
  func.func @transform_15(%arg0: i32) -> (i32, i32) {
    %c0_i32 = arith.constant 0 : i32
    %c0_i32_0 = arith.constant 0 : i32
    %c0_i32_1 = arith.constant 0 : i32
    return %c0_i32, %c0_i32_0 : i32, i32
  }
  func.func @transform_16(%arg0: i32) -> (i32, i32) {
    %c0_i32 = arith.constant 0 : i32
    %c0_i32_0 = arith.constant 0 : i32
    %c0_i32_1 = arith.constant 0 : i32
    return %c0_i32, %c0_i32_0 : i32, i32
  }
  func.func @transform_17(%arg0: i32) -> (i32, i32) {
    %c0_i32 = arith.constant 0 : i32
    %c0_i32_0 = arith.constant 0 : i32
    return %arg0, %c0_i32 : i32, i32
  }
}

</mosaic_0001>

<llo_original>
// kernel: _lambda_.1
$region0: #{_lambda_.1}
  #allocation0 [shape = 'u32[]', space=smem, size = 0x4, offset = 0x4, fixed_abs, tag = 'smem constant byte address 0x4 - core index']
  #allocation1 [shape = 'u32[72,128]{1,0:T(1,128)}', space=vmem, size = 0x9000, scoped, tag = 'internal scratch']
  %s0 = inlined_call_operand.vmem [shape: f32[192,72], index: 0, kind: input, shape index: {}]
  %s1 = inlined_call_operand.hbm [shape: f32[3,176,192], index: 1, kind: input, shape index: {}]
  %s2 = inlined_call_operand.hbm [shape: f32[9,72,280], index: 2, kind: input, shape index: {}]
  %s3 = inlined_call_operand.vmem [shape: f32[1,280], index: 3, kind: input, shape index: {}]
  %s4 = inlined_call_operand.hbm [shape: f32[3,80,176], index: 4, kind: input, shape index: {}]
  %s5 = inlined_call_operand.hbm [shape: f32[3,64,80], index: 5, kind: input, shape index: {}]
  %s6 = inlined_call_operand.hbm [shape: f32[9,280,144], index: 6, kind: input, shape index: {}]
  %s7 = inlined_call_operand.vmem [shape: f32[1,144], index: 7, kind: input, shape index: {}]
  %s8 = inlined_call_operand.hbm [shape: f32[3,24,64], index: 8, kind: input, shape index: {}]
  %s9 = inlined_call_operand.hbm [shape: f32[3,8,24], index: 9, kind: input, shape index: {}]
  %s10 = inlined_call_operand.hbm [shape: f32[3,144,256], index: 10, kind: input, shape index: {}]
  %s11 = inlined_call_operand.vmem [shape: f32[1,256], index: 11, kind: input, shape index: {}]
  %s12 = inlined_call_operand.hbm [shape: f32[256,128], index: 12, kind: input, shape index: {}]
  %s13 = inlined_call_operand.vmem [shape: f32[1,128], index: 13, kind: input, shape index: {}]
  %s14 = inlined_call_operand.hbm [shape: f32[128,128], index: 14, kind: input, shape index: {}]
  %s15 = inlined_call_operand.hbm [shape: f32[1,128], index: 15, kind: input, shape index: {}]
  %s16 = inlined_call_operand.vmem [shape: f32[1,4], index: 16, kind: input, shape index: {}]
  %s17 = inlined_call_operand.vmem [shape: f32[8,128], index: 17, kind: output, shape index: {}]
  %s18 = sld [smem:[#allocation0]]
  $region126: #{_lambda_.1} parent=0
    _
  %s20 = ssub.s32 1, %s18
  %s21 = scalar_select 0, %s20, %s18
  $region1: #{_lambda_.1} parent=0
    #allocation2 [shape = 'u8[540672]{0}', space=vmem, size = 0x84000, scoped, tag = 'input window, operand 1, single buffered']
    #allocation3 [shape = 's32[1]{0}', space=sflag, size = 0x4, scoped, tag = 'scoped memory for _lambda_.1']
    #allocation4 [shape = 's32[1]{0}', space=sflag, size = 0x4, scoped, tag = 'scoped memory for _lambda_.1']
    #allocation5 [shape = 'u8[995328]{0}', space=vmem, size = 0xf3000, scoped, tag = 'input window, operand 2, single buffered']
    #allocation6 [shape = 's32[1]{0}', space=sflag, size = 0x4, scoped, tag = 'scoped memory for _lambda_.1']
    #allocation7 [shape = 'u8[245760]{0}', space=vmem, size = 0x3c000, scoped, tag = 'input window, operand 4, single buffered']
    #allocation8 [shape = 'u8[98304]{0}', space=vmem, size = 0x18000, scoped, tag = 'input window, operand 5, single buffered']
    #allocation9 [shape = 's32[1]{0}', space=sflag, size = 0x4, scoped, tag = 'scoped memory for _lambda_.1']
    #allocation10 [shape = 'u8[2580480]{0}', space=vmem, size = 0x276000, scoped, tag = 'input window, operand 6, single buffered']
    #allocation11 [shape = 'u8[36864]{0}', space=vmem, size = 0x9000, scoped, tag = 'input window, operand 8, single buffered']
    #allocation12 [shape = 's32[1]{0}', space=sflag, size = 0x4, scoped, tag = 'scoped memory for _lambda_.1']
    #allocation13 [shape = 'u8[12288]{0}', space=vmem, size = 0x3000, scoped, tag = 'input window, operand 9, single buffered']
    #allocation14 [shape = 'u8[442368]{0}', space=vmem, size = 0x6c000, scoped, tag = 'input window, operand 10, single buffered']
    #allocation15 [shape = 's32[1]{0}', space=sflag, size = 0x4, scoped, tag = 'scoped memory for _lambda_.1']
    #allocation16 [shape = 'u8[131072]{0}', space=vmem, size = 0x20000, scoped, tag = 'input window, operand 12, single buffered']
    #allocation17 [shape = 'u8[65536]{0}', space=vmem, size = 0x10000, scoped, tag = 'input window, operand 14, single buffered']
    #allocation18 [shape = 's32[1]{0}', space=sflag, size = 0x4, scoped, tag = 'scoped memory for _lambda_.1']
    #allocation19 [shape = 'u8[512]{0}', space=vmem, size = 0x400, scoped, tag = 'input window, operand 15, single buffered']
    #allocation20 [shape = 'u8[512]{0}', space=smem, size = 0x200, scoped, tag = 'input window, operand 16, single buffered']
    %22 = vsyncpa [#allocation3], 0
    %23 = vsyncpa [#allocation6], 0
    %24 = vsyncpa [#allocation9], 0
    %25 = vsyncpa [#allocation12], 0
    %26 = vsyncpa [#allocation15], 0
    %27 = vsyncpa [#allocation18], 0
    %28 = vsyncpa [#allocation4], 0
    // Predicated region
    $region2: #{_lambda_.1} parent=1 // pred_check
      _
    $region3: #{_lambda_.1} parent=1 // pred_check_branch
      %30 = sbr.rel (0) target = $region5
    $region4: #{_lambda_.1} parent=1 // pred_region
      _
    $region5: #{_lambda_.1} parent=1 // pred_fallthru
      _
    // Predicated region
    $region6: #{_lambda_.1} parent=1 // pred_check
      _
    $region7: #{_lambda_.1} parent=1 // pred_check_branch
      %32 = sbr.rel (0) target = $region9
    $region8: #{_lambda_.1} parent=1 // pred_region
      %34 = vsyncadd [#allocation3], 0
      %s35 = sshll.u32 %s1, 4
      %s36 = int_to_ptr.hbm [resolvable:$true] %s35
      %s37 = sshll.u32 [#allocation2], 4
      %s38 = int_to_ptr.vmem [resolvable:$true] %s37
      %43 = dma.hbm_to_vmem [thread:$0]  %s36, 16896, %s38, [#allocation3], 256, 256, 16
    $region9: #{_lambda_.1} parent=1 // pred_fallthru
      _
    // Predicated region
    $region10: #{_lambda_.1} parent=1 // pred_check
      _
    $region11: #{_lambda_.1} parent=1 // pred_check_branch
      %45 = sbr.rel (0) target = $region13
    $region12: #{_lambda_.1} parent=1 // pred_region
      %47 = vsyncadd [#allocation6], 0
      %s48 = sshll.u32 %s2, 4
      %s49 = int_to_ptr.hbm [resolvable:$true] %s48
      %s50 = sshll.u32 [#allocation5], 4
      %s51 = int_to_ptr.vmem [resolvable:$true] %s50
      %56 = dma.hbm_to_vmem [thread:$0]  %s49, 31104, %s51, [#allocation6], 384, 384, 24
    $region13: #{_lambda_.1} parent=1 // pred_fallthru
      _
    // Predicated region
    $region14: #{_lambda_.1} parent=1 // pred_check
      _
    $region15: #{_lambda_.1} parent=1 // pred_check_branch
      %58 = sbr.rel (0) target = $region17
    $region16: #{_lambda_.1} parent=1 // pred_region
      _
    $region17: #{_lambda_.1} parent=1 // pred_fallthru
      _
    // Predicated region
    $region18: #{_lambda_.1} parent=1 // pred_check
      _
    $region19: #{_lambda_.1} parent=1 // pred_check_branch
      %60 = sbr.rel (0) target = $region21
    $region20: #{_lambda_.1} parent=1 // pred_region
      %62 = vsyncadd [#allocation6], 0
      %s63 = sshll.u32 %s4, 4
      %s64 = int_to_ptr.hbm [resolvable:$true] %s63
      %s65 = sshll.u32 [#allocation7], 4
      %s66 = int_to_ptr.vmem [resolvable:$true] %s65
      %71 = dma.hbm_to_vmem [thread:$0]  %s64, 7680, %s66, [#allocation6], 256, 256, 16
    $region21: #{_lambda_.1} parent=1 // pred_fallthru
      _
    // Predicated region
    $region22: #{_lambda_.1} parent=1 // pred_check
      _
    $region23: #{_lambda_.1} parent=1 // pred_check_branch
      %73 = sbr.rel (0) target = $region25
    $region24: #{_lambda_.1} parent=1 // pred_region
      %75 = vsyncadd [#allocation9], 0
      %s76 = sshll.u32 %s5, 4
      %s77 = int_to_ptr.hbm [resolvable:$true] %s76
      %s78 = sshll.u32 [#allocation8], 4
      %s79 = int_to_ptr.vmem [resolvable:$true] %s78
      %84 = dma.hbm_to_vmem [thread:$0]  %s77, 3072, %s79, [#allocation9], 128, 128, 8
    $region25: #{_lambda_.1} parent=1 // pred_fallthru
      _
    // Predicated region
    $region26: #{_lambda_.1} parent=1 // pred_check
      _
    $region27: #{_lambda_.1} parent=1 // pred_check_branch
      %86 = sbr.rel (0) target = $region29
    $region28: #{_lambda_.1} parent=1 // pred_region
      %88 = vsyncadd [#allocation9], 0
      %s89 = sshll.u32 %s6, 4
      %s90 = int_to_ptr.hbm [resolvable:$true] %s89
      %s91 = sshll.u32 [#allocation10], 4
      %s92 = int_to_ptr.vmem [resolvable:$true] %s91
      %97 = dma.hbm_to_vmem [thread:$0]  %s90, 80640, %s92, [#allocation9], 256, 256, 16
    $region29: #{_lambda_.1} parent=1 // pred_fallthru
      _
    // Predicated region
    $region30: #{_lambda_.1} parent=1 // pred_check
      _
    $region31: #{_lambda_.1} parent=1 // pred_check_branch
      %99 = sbr.rel (0) target = $region33
    $region32: #{_lambda_.1} parent=1 // pred_region
      _
    $region33: #{_lambda_.1} parent=1 // pred_fallthru
      _
    // Predicated region
    $region34: #{_lambda_.1} parent=1 // pred_check
      _
    $region35: #{_lambda_.1} parent=1 // pred_check_branch
      %101 = sbr.rel (0) target = $region37
    $region36: #{_lambda_.1} parent=1 // pred_region
      %103 = vsyncadd [#allocation12], 0
      %s104 = sshll.u32 %s8, 4
      %s105 = int_to_ptr.hbm [resolvable:$true] %s104
      %s106 = sshll.u32 [#allocation11], 4
      %s107 = int_to_ptr.vmem [resolvable:$true] %s106
      %112 = dma.hbm_to_vmem [thread:$0]  %s105, 1152, %s107, [#allocation12], 128, 128, 8
    $region37: #{_lambda_.1} parent=1 // pred_fallthru
      _
    // Predicated region
    $region38: #{_lambda_.1} parent=1 // pred_check
      _
    $region39: #{_lambda_.1} parent=1 // pred_check_branch
      %114 = sbr.rel (0) target = $region41
    $region40: #{_lambda_.1} parent=1 // pred_region
      %116 = vsyncadd [#allocation12], 0
      %s117 = sshll.u32 %s9, 4
      %s118 = int_to_ptr.hbm [resolvable:$true] %s117
      %s119 = sshll.u32 [#allocation13], 4
      %s120 = int_to_ptr.vmem [resolvable:$true] %s119
      %125 = dma.hbm_to_vmem [thread:$0]  %s118, 384, %s120, [#allocation12], 128, 128, 8
    $region41: #{_lambda_.1} parent=1 // pred_fallthru
      _
    // Predicated region
    $region42: #{_lambda_.1} parent=1 // pred_check
      _
    $region43: #{_lambda_.1} parent=1 // pred_check_branch
      %127 = sbr.rel (0) target = $region45
    $region44: #{_lambda_.1} parent=1 // pred_region
      %129 = vsyncadd [#allocation15], 0
      %s130 = sshll.u32 %s10, 4
      %s131 = int_to_ptr.hbm [resolvable:$true] %s130
      %s132 = sshll.u32 [#allocation14], 4
      %s133 = int_to_ptr.vmem [resolvable:$true] %s132
      %138 = dma.hbm_to_vmem [thread:$0]  %s131, 13824, %s133, [#allocation15], 256, 256, 16
    $region45: #{_lambda_.1} parent=1 // pred_fallthru
      _
    // Predicated region
    $region46: #{_lambda_.1} parent=1 // pred_check
      _
    $region47: #{_lambda_.1} parent=1 // pred_check_branch
      %140 = sbr.rel (0) target = $region49
    $region48: #{_lambda_.1} parent=1 // pred_region
      _
    $region49: #{_lambda_.1} parent=1 // pred_fallthru
      _
    // Predicated region
    $region50: #{_lambda_.1} parent=1 // pred_check
      _
    $region51: #{_lambda_.1} parent=1 // pred_check_branch
      %142 = sbr.rel (0) target = $region53
    $region52: #{_lambda_.1} parent=1 // pred_region
      %144 = vsyncadd [#allocation15], 0
      %s145 = sshll.u32 %s12, 4
      %s146 = int_to_ptr.hbm [resolvable:$true] %s145
      %s147 = sshll.u32 [#allocation16], 4
      %s148 = int_to_ptr.vmem [resolvable:$true] %s147
      %153 = dma.hbm_to_vmem [thread:$0]  %s146, 4096, %s148, [#allocation15], 128, 128, 8
    $region53: #{_lambda_.1} parent=1 // pred_fallthru
      _
    // Predicated region
    $region54: #{_lambda_.1} parent=1 // pred_check
      _
    $region55: #{_lambda_.1} parent=1 // pred_check_branch
      %155 = sbr.rel (0) target = $region57
    $region56: #{_lambda_.1} parent=1 // pred_region
      _
    $region57: #{_lambda_.1} parent=1 // pred_fallthru
      _
    // Predicated region
    $region58: #{_lambda_.1} parent=1 // pred_check
      _
    $region59: #{_lambda_.1} parent=1 // pred_check_branch
      %157 = sbr.rel (0) target = $region61
    $region60: #{_lambda_.1} parent=1 // pred_region
      %159 = vsyncadd [#allocation18], 0
      %s160 = sshll.u32 %s14, 4
      %s161 = int_to_ptr.hbm [resolvable:$true] %s160
      %s162 = sshll.u32 [#allocation17], 4
      %s163 = int_to_ptr.vmem [resolvable:$true] %s162
      %168 = dma.hbm_to_vmem [thread:$0]  %s161, 2048, %s163, [#allocation18], 128, 128, 8
    $region61: #{_lambda_.1} parent=1 // pred_fallthru
      _
    // Predicated region
    $region62: #{_lambda_.1} parent=1 // pred_check
      _
    $region63: #{_lambda_.1} parent=1 // pred_check_branch
      %170 = sbr.rel (0) target = $region65
    $region64: #{_lambda_.1} parent=1 // pred_region
      %172 = vsyncadd [#allocation18], 0
      %s174 = sshll.u32 %s15, 4
      %s175 = int_to_ptr.hbm [resolvable:$true] %s174
      %s176 = sshll.u32 [#allocation19], 4
      %s177 = int_to_ptr.vmem [resolvable:$true] %s176
      %179 = dma.hbm_to_vmem [thread:$0]  %s175, 16, %s177, [#allocation18]
    $region65: #{_lambda_.1} parent=1 // pred_fallthru
      _
    // Predicated region
    $region66: #{_lambda_.1} parent=1 // pred_check
      _
    $region67: #{_lambda_.1} parent=1 // pred_check_branch
      %181 = sbr.rel (0) target = $region69
    $region68: #{_lambda_.1} parent=1 // pred_region
      %183 = vsyncadd [#allocation4], 0
      %s185 = sshll.u32 %s16, 4
      %s186 = int_to_ptr.vmem [resolvable:$true] %s185
      %188 = dma.vmem_to_smem %s186, 16, [#allocation20], [#allocation4]
    $region69: #{_lambda_.1} parent=1 // pred_fallthru
      _
    // Predicated region
    $region70: #{_lambda_.1} parent=1 // pred_check
      _
    $region71: #{_lambda_.1} parent=1 // pred_check_branch
      %190 = sbr.rel (0) target = $region73
    $region72: #{_lambda_.1} parent=1 // pred_region
      %192 = dma.done [#allocation3], 16896
    $region73: #{_lambda_.1} parent=1 // pred_fallthru
      _
    // Predicated region
    $region74: #{_lambda_.1} parent=1 // pred_check
      _
    $region75: #{_lambda_.1} parent=1 // pred_check_branch
      %194 = sbr.rel (0) target = $region77
    $region76: #{_lambda_.1} parent=1 // pred_region
      %196 = dma.done [#allocation6], 31104
    $region77: #{_lambda_.1} parent=1 // pred_fallthru
      _
    // Predicated region
    $region78: #{_lambda_.1} parent=1 // pred_check
      _
    $region79: #{_lambda_.1} parent=1 // pred_check_branch
      %198 = sbr.rel (0) target = $region81
    $region80: #{_lambda_.1} parent=1 // pred_region
      %200 = dma.done [#allocation6], 7680
    $region81: #{_lambda_.1} parent=1 // pred_fallthru
      _
    // Predicated region
    $region82: #{_lambda_.1} parent=1 // pred_check
      _
    $region83: #{_lambda_.1} parent=1 // pred_check_branch
      %202 = sbr.rel (0) target = $region85
    $region84: #{_lambda_.1} parent=1 // pred_region
      %204 = dma.done [#allocation9], 3072
    $region85: #{_lambda_.1} parent=1 // pred_fallthru
      _
    // Predicated region
    $region86: #{_lambda_.1} parent=1 // pred_check
      _
    $region87: #{_lambda_.1} parent=1 // pred_check_branch
      %206 = sbr.rel (0) target = $region89
    $region88: #{_lambda_.1} parent=1 // pred_region
      %208 = dma.done [#allocation9], 80640
    $region89: #{_lambda_.1} parent=1 // pred_fallthru
      _
    // Predicated region
    $region90: #{_lambda_.1} parent=1 // pred_check
      _
    $region91: #{_lambda_.1} parent=1 // pred_check_branch
      %210 = sbr.rel (0) target = $region93
    $region92: #{_lambda_.1} parent=1 // pred_region
      %212 = dma.done [#allocation12], 1152
    $region93: #{_lambda_.1} parent=1 // pred_fallthru
      _
    // Predicated region
    $region94: #{_lambda_.1} parent=1 // pred_check
      _
    $region95: #{_lambda_.1} parent=1 // pred_check_branch
      %214 = sbr.rel (0) target = $region97
    $region96: #{_lambda_.1} parent=1 // pred_region
      %216 = dma.done [#allocation12], 384
    $region97: #{_lambda_.1} parent=1 // pred_fallthru
      _
    // Predicated region
    $region98: #{_lambda_.1} parent=1 // pred_check
      _
    $region99: #{_lambda_.1} parent=1 // pred_check_branch
      %218 = sbr.rel (0) target = $region101
    $region100: #{_lambda_.1} parent=1 // pred_region
      %220 = dma.done [#allocation15], 13824
    $region101: #{_lambda_.1} parent=1 // pred_fallthru
      _
    // Predicated region
    $region102: #{_lambda_.1} parent=1 // pred_check
      _
    $region103: #{_lambda_.1} parent=1 // pred_check_branch
      %222 = sbr.rel (0) target = $region105
    $region104: #{_lambda_.1} parent=1 // pred_region
      %224 = dma.done [#allocation15], 4096
    $region105: #{_lambda_.1} parent=1 // pred_fallthru
      _
    // Predicated region
    $region106: #{_lambda_.1} parent=1 // pred_check
      _
    $region107: #{_lambda_.1} parent=1 // pred_check_branch
      %226 = sbr.rel (0) target = $region109
    $region108: #{_lambda_.1} parent=1 // pred_region
      %228 = dma.done [#allocation18], 2048
    $region109: #{_lambda_.1} parent=1 // pred_fallthru
      _
    // Predicated region
    $region110: #{_lambda_.1} parent=1 // pred_check
      _
    $region111: #{_lambda_.1} parent=1 // pred_check_branch
      %230 = sbr.rel (0) target = $region113
    $region112: #{_lambda_.1} parent=1 // pred_region
      %232 = dma.done [#allocation18], 16
    $region113: #{_lambda_.1} parent=1 // pred_fallthru
      _
    // Predicated region
    $region114: #{_lambda_.1} parent=1 // pred_check
      _
    $region115: #{_lambda_.1} parent=1 // pred_check_branch
      %234 = sbr.rel (0) target = $region117
    $region116: #{_lambda_.1} parent=1 // pred_region
      %236 = dma.done [#allocation4], 16
    $region117: #{_lambda_.1} parent=1 // pred_fallthru
      _
    %237 = sfence
    %s238 = sld [smem:[#allocation20]]
    %s239 = sld [smem:[#allocation20 + $0x1]]
    %s240 = sld [smem:[#allocation20 + $0x2]]
    %s241 = sld [smem:[#allocation20 + $0x3]]
    %v242 = vld [vmem:[%s0] sm:$0xff]
    %v243 = vld [vmem:[%s0 + $0x8] sm:$0xff]
    %v244 = vld [vmem:[%s0 + $0x10] sm:$0xff]
    %v245 = vld [vmem:[%s0 + $0x18] sm:$0xff]
    %v246 = vld [vmem:[%s0 + $0x20] sm:$0xff]
    %v247 = vld [vmem:[%s0 + $0x28] sm:$0xff]
    %v248 = vld [vmem:[%s0 + $0x30] sm:$0xff]
    %v249 = vld [vmem:[%s0 + $0x38] sm:$0xff]
    %v250 = vld [vmem:[%s0 + $0x40] sm:$0xff]
    %v251 = vld [vmem:[%s0 + $0x48] sm:$0xff]
    %v252 = vld [vmem:[%s0 + $0x50] sm:$0xff]
    %v253 = vld [vmem:[%s0 + $0x58] sm:$0xff]
    %v254 = vld [vmem:[%s0 + $0x60] sm:$0xff]
    %v255 = vld [vmem:[%s0 + $0x68] sm:$0xff]
    %v256 = vld [vmem:[%s0 + $0x70] sm:$0xff]
    %v257 = vld [vmem:[%s0 + $0x78] sm:$0xff]
    %v258 = vld [vmem:[%s0 + $0x80] sm:$0xff]
    %v259 = vld [vmem:[%s0 + $0x88] sm:$0xff]
    %v260 = vld [vmem:[%s0 + $0x90] sm:$0xff]
    %v261 = vld [vmem:[%s0 + $0x98] sm:$0xff]
    %v262 = vld [vmem:[%s0 + $0xa0] sm:$0xff]
    %v263 = vld [vmem:[%s0 + $0xa8] sm:$0xff]
    %v264 = vld [vmem:[%s0 + $0xb0] sm:$0xff]
    %v265 = vld [vmem:[%s0 + $0xb8] sm:$0xff]
    %v266 = vld [vmem:[#allocation2] sm:$0xff]
    %v267 = vld [vmem:[#allocation2 + $0x8] sm:$0xff]
    %v268 = vld [vmem:[#allocation2 + $0x10] sm:$0xff]
    %v269 = vld [vmem:[#allocation2 + $0x18] sm:$0xff]
    %v270 = vld [vmem:[#allocation2 + $0x20] sm:$0xff]
    %v271 = vld [vmem:[#allocation2 + $0x28] sm:$0xff]
    %v272 = vld [vmem:[#allocation2 + $0x30] sm:$0xff]
    %v273 = vld [vmem:[#allocation2 + $0x38] sm:$0xff]
    %v274 = vld [vmem:[#allocation2 + $0x40] sm:$0xff]
    %v275 = vld [vmem:[#allocation2 + $0x48] sm:$0xff]
    %v276 = vld [vmem:[#allocation2 + $0x50] sm:$0xff]
    %v277 = vld [vmem:[#allocation2 + $0x58] sm:$0xff]
    %v278 = vld [vmem:[#allocation2 + $0x60] sm:$0xff]
    %v279 = vld [vmem:[#allocation2 + $0x68] sm:$0xff]
    %v280 = vld [vmem:[#allocation2 + $0x70] sm:$0xff]
    %v281 = vld [vmem:[#allocation2 + $0x78] sm:$0xff]
    %v282 = vld [vmem:[#allocation2 + $0x80] sm:$0xff]
    %v283 = vld [vmem:[#allocation2 + $0x88] sm:$0xff]
    %v284 = vld [vmem:[#allocation2 + $0x90] sm:$0xff]
    %v285 = vld [vmem:[#allocation2 + $0x98] sm:$0xff]
    %v286 = vld [vmem:[#allocation2 + $0xa0] sm:$0xff]
    %v287 = vld [vmem:[#allocation2 + $0xa8] sm:$0xff]
    %v288 = vld [vmem:[#allocation2 + $0xb0] sm:$0xff]
    %v289 = vld [vmem:[#allocation2 + $0xb8] sm:$0xff]
    %v290 = vld [vmem:[#allocation2 + $0xc0] sm:$0xff]
    %v291 = vld [vmem:[#allocation2 + $0xc8] sm:$0xff]
    %v292 = vld [vmem:[#allocation2 + $0xd0] sm:$0xff]
    %v293 = vld [vmem:[#allocation2 + $0xd8] sm:$0xff]
    %v294 = vld [vmem:[#allocation2 + $0xe0] sm:$0xff]
    %v295 = vld [vmem:[#allocation2 + $0xe8] sm:$0xff]
    %v296 = vld [vmem:[#allocation2 + $0xf0] sm:$0xff]
    %v297 = vld [vmem:[#allocation2 + $0xf8] sm:$0xff]
    %v298 = vld [vmem:[#allocation2 + $0x100] sm:$0xff]
    %v299 = vld [vmem:[#allocation2 + $0x108] sm:$0xff]
    %v300 = vld [vmem:[#allocation2 + $0x110] sm:$0xff]
    %v301 = vld [vmem:[#allocation2 + $0x118] sm:$0xff]
    %v302 = vld [vmem:[#allocation2 + $0x120] sm:$0xff]
    %v303 = vld [vmem:[#allocation2 + $0x128] sm:$0xff]
    %v304 = vld [vmem:[#allocation2 + $0x130] sm:$0xff]
    %v305 = vld [vmem:[#allocation2 + $0x138] sm:$0xff]
    %v306 = vld [vmem:[#allocation2 + $0x140] sm:$0xff]
    %v307 = vld [vmem:[#allocation2 + $0x148] sm:$0xff]
    %v308 = vld [vmem:[#allocation2 + $0x150] sm:$0xff]
    %v309 = vld [vmem:[#allocation2 + $0x158] sm:$0xff]
    %vm310 = vcmask 523264
    %v312 = vsel %vm310, %v267, 0
    %v315 = vsel %vm310, %v269, 0
    %v318 = vsel %vm310, %v271, 0
    %v321 = vsel %vm310, %v273, 0
    %v324 = vsel %vm310, %v275, 0
    %v327 = vsel %vm310, %v277, 0
    %v330 = vsel %vm310, %v279, 0
    %v333 = vsel %vm310, %v281, 0
    %v336 = vsel %vm310, %v283, 0
    %v339 = vsel %vm310, %v285, 0
    %v342 = vsel %vm310, %v287, 0
    %v345 = vsel %vm310, %v289, 0
    %v348 = vsel %vm310, %v291, 0
    %v351 = vsel %vm310, %v293, 0
    %v354 = vsel %vm310, %v295, 0
    %v357 = vsel %vm310, %v297, 0
    %v360 = vsel %vm310, %v299, 0
    %v363 = vsel %vm310, %v301, 0
    %v366 = vsel %vm310, %v303, 0
    %v369 = vsel %vm310, %v305, 0
    %v372 = vsel %vm310, %v307, 0
    %v375 = vsel %vm310, %v309, 0
    %377 = vmatpush.msra.mxu0 %v257
    %378 = vmatpush.msra.mxu0 %v256
    %379 = vmatpush.msra.mxu0 %v255
    %380 = vmatpush.msra.mxu0 %v254
    %381 = vmatpush.msra.mxu0 %v253
    %382 = vmatpush.msra.mxu0 %v252
    %383 = vmatpush.msra.mxu0 %v251
    %384 = vmatpush.msra.mxu0 %v250
    %385 = vmatpush.msra.mxu0 %v249
    %386 = vmatpush.msra.mxu0 %v248
    %387 = vmatpush.msra.mxu0 %v247
    %388 = vmatpush.msra.mxu0 %v246
    %389 = vmatpush.msra.mxu0 %v245
    %390 = vmatpush.msra.mxu0 %v244
    %391 = vmatpush.msra.mxu0 %v243
    %392 = vmatpush.msra.mxu0 %v242
    %393 = vmatmul.f32.gmra.mxu0 %v266
    %v394 = vpop.f32.mrf.mxu0
    %v395 = vadd.f32 0.0, %v394
    %396 = vmatmul.f32.gmra.mxu0 %v268
    %v397 = vpop.f32.mrf.mxu0
    %v398 = vadd.f32 0.0, %v397
    %399 = vmatmul.f32.gmra.mxu0 %v270
    %v400 = vpop.f32.mrf.mxu0
    %v401 = vadd.f32 0.0, %v400
    %402 = vmatmul.f32.gmra.mxu0 %v272
    %v403 = vpop.f32.mrf.mxu0
    %v404 = vadd.f32 0.0, %v403
    %405 = vmatmul.f32.gmra.mxu0 %v274
    %v406 = vpop.f32.mrf.mxu0
    %v407 = vadd.f32 0.0, %v406
    %408 = vmatmul.f32.gmra.mxu0 %v276
    %v409 = vpop.f32.mrf.mxu0
    %v410 = vadd.f32 0.0, %v409
    %411 = vmatmul.f32.gmra.mxu0 %v278
    %v412 = vpop.f32.mrf.mxu0
    %v413 = vadd.f32 0.0, %v412
    %414 = vmatmul.f32.gmra.mxu0 %v280
    %v415 = vpop.f32.mrf.mxu0
    %v416 = vadd.f32 0.0, %v415
    %417 = vmatmul.f32.gmra.mxu0 %v282
    %v418 = vpop.f32.mrf.mxu0
    %v419 = vadd.f32 0.0, %v418
    %420 = vmatmul.f32.gmra.mxu0 %v284
    %v421 = vpop.f32.mrf.mxu0
    %v422 = vadd.f32 0.0, %v421
    %423 = vmatmul.f32.gmra.mxu0 %v286
    %v424 = vpop.f32.mrf.mxu0
    %v425 = vadd.f32 0.0, %v424
    %426 = vmatmul.f32.gmra.mxu0 %v288
    %v427 = vpop.f32.mrf.mxu0
    %v428 = vadd.f32 0.0, %v427
    %429 = vmatmul.f32.gmra.mxu0 %v290
    %v430 = vpop.f32.mrf.mxu0
    %v431 = vadd.f32 0.0, %v430
    %432 = vmatmul.f32.gmra.mxu0 %v292
    %v433 = vpop.f32.mrf.mxu0
    %v434 = vadd.f32 0.0, %v433
    %435 = vmatmul.f32.gmra.mxu0 %v294
    %v436 = vpop.f32.mrf.mxu0
    %v437 = vadd.f32 0.0, %v436
    %438 = vmatmul.f32.gmra.mxu0 %v296
    %v439 = vpop.f32.mrf.mxu0
    %v440 = vadd.f32 0.0, %v439
    %441 = vmatmul.f32.gmra.mxu0 %v298
    %v442 = vpop.f32.mrf.mxu0
    %v443 = vadd.f32 0.0, %v442
    %444 = vmatmul.f32.gmra.mxu0 %v300
    %v445 = vpop.f32.mrf.mxu0
    %v446 = vadd.f32 0.0, %v445
    %447 = vmatmul.f32.gmra.mxu0 %v302
    %v448 = vpop.f32.mrf.mxu0
    %v449 = vadd.f32 0.0, %v448
    %450 = vmatmul.f32.gmra.mxu0 %v304
    %v451 = vpop.f32.mrf.mxu0
    %v452 = vadd.f32 0.0, %v451
    %453 = vmatmul.f32.gmra.mxu0 %v306
    %v454 = vpop.f32.mrf.mxu0
    %v455 = vadd.f32 0.0, %v454
    %456 = vmatmul.f32.gmra.mxu0 %v308
    %v457 = vpop.f32.mrf.mxu0
    %v458 = vadd.f32 0.0, %v457
    %459 = vdwg.mxu0
    %460 = vmatpush.msra.mxu0 0.0
    %461 = vmatpush.msra.mxu0 0.0
    %462 = vmatpush.msra.mxu0 0.0
    %463 = vmatpush.msra.mxu0 0.0
    %464 = vmatpush.msra.mxu0 0.0
    %465 = vmatpush.msra.mxu0 0.0
    %466 = vmatpush.msra.mxu0 0.0
    %467 = vmatpush.msra.mxu0 0.0
    %468 = vmatpush.msra.mxu0 %v265
    %469 = vmatpush.msra.mxu0 %v264
    %470 = vmatpush.msra.mxu0 %v263
    %471 = vmatpush.msra.mxu0 %v262
    %472 = vmatpush.msra.mxu0 %v261
    %473 = vmatpush.msra.mxu0 %v260
    %474 = vmatpush.msra.mxu0 %v259
    %475 = vmatpush.msra.mxu0 %v258
    %476 = vmatmul.f32.gmra.mxu0 %v312
    %v477 = vpop.f32.mrf.mxu0
    %v478 = vadd.f32 %v395, %v477
    %479 = vmatmul.f32.gmra.mxu0 %v315
    %v480 = vpop.f32.mrf.mxu0
    %v481 = vadd.f32 %v398, %v480
    %482 = vmatmul.f32.gmra.mxu0 %v318
    %v483 = vpop.f32.mrf.mxu0
    %v484 = vadd.f32 %v401, %v483
    %485 = vmatmul.f32.gmra.mxu0 %v321
    %v486 = vpop.f32.mrf.mxu0
    %v487 = vadd.f32 %v404, %v486
    %488 = vmatmul.f32.gmra.mxu0 %v324
    %v489 = vpop.f32.mrf.mxu0
    %v490 = vadd.f32 %v407, %v489
    %491 = vmatmul.f32.gmra.mxu0 %v327
    %v492 = vpop.f32.mrf.mxu0
    %v493 = vadd.f32 %v410, %v492
    %494 = vmatmul.f32.gmra.mxu0 %v330
    %v495 = vpop.f32.mrf.mxu0
    %v496 = vadd.f32 %v413, %v495
    %497 = vmatmul.f32.gmra.mxu0 %v333
    %v498 = vpop.f32.mrf.mxu0
    %v499 = vadd.f32 %v416, %v498
    %500 = vmatmul.f32.gmra.mxu0 %v336
    %v501 = vpop.f32.mrf.mxu0
    %v502 = vadd.f32 %v419, %v501
    %503 = vmatmul.f32.gmra.mxu0 %v339
    %v504 = vpop.f32.mrf.mxu0
    %v505 = vadd.f32 %v422, %v504
    %506 = vmatmul.f32.gmra.mxu0 %v342
    %v507 = vpop.f32.mrf.mxu0
    %v508 = vadd.f32 %v425, %v507
    %509 = vmatmul.f32.gmra.mxu0 %v345
    %v510 = vpop.f32.mrf.mxu0
    %v511 = vadd.f32 %v428, %v510
    %512 = vmatmul.f32.gmra.mxu0 %v348
    %v513 = vpop.f32.mrf.mxu0
    %v514 = vadd.f32 %v431, %v513
    %515 = vmatmul.f32.gmra.mxu0 %v351
    %v516 = vpop.f32.mrf.mxu0
    %v517 = vadd.f32 %v434, %v516
    %518 = vmatmul.f32.gmra.mxu0 %v354
    %v519 = vpop.f32.mrf.mxu0
    %v520 = vadd.f32 %v437, %v519
    %521 = vmatmul.f32.gmra.mxu0 %v357
    %v522 = vpop.f32.mrf.mxu0
    %v523 = vadd.f32 %v440, %v522
    %524 = vmatmul.f32.gmra.mxu0 %v360
    %v525 = vpop.f32.mrf.mxu0
    %v526 = vadd.f32 %v443, %v525
    %527 = vmatmul.f32.gmra.mxu0 %v363
    %v528 = vpop.f32.mrf.mxu0
    %v529 = vadd.f32 %v446, %v528
    %530 = vmatmul.f32.gmra.mxu0 %v366
    %v531 = vpop.f32.mrf.mxu0
    %v532 = vadd.f32 %v449, %v531
    %533 = vmatmul.f32.gmra.mxu0 %v369
    %v534 = vpop.f32.mrf.mxu0
    %v535 = vadd.f32 %v452, %v534
    %536 = vmatmul.f32.gmra.mxu0 %v372
    %v537 = vpop.f32.mrf.mxu0
    %v538 = vadd.f32 %v455, %v537
    %539 = vmatmul.f32.gmra.mxu0 %v375
    %v540 = vpop.f32.mrf.mxu0
    %v541 = vadd.f32 %v458, %v540
    %542 = vdwg.mxu0
    %s543 = scalar_lea.vmem [#allocation2], 352
    %v544 = vld [vmem:[%s543] sm:$0xff]
    %v545 = vld [vmem:[%s543 + $0x8] sm:$0xff]
    %v546 = vld [vmem:[%s543 + $0x10] sm:$0xff]
    %v547 = vld [vmem:[%s543 + $0x18] sm:$0xff]
    %v548 = vld [vmem:[%s543 + $0x20] sm:$0xff]
    %v549 = vld [vmem:[%s543 + $0x28] sm:$0xff]
    %v550 = vld [vmem:[%s543 + $0x30] sm:$0xff]
    %v551 = vld [vmem:[%s543 + $0x38] sm:$0xff]
    %v552 = vld [vmem:[%s543 + $0x40] sm:$0xff]
    %v553 = vld [vmem:[%s543 + $0x48] sm:$0xff]
    %v554 = vld [vmem:[%s543 + $0x50] sm:$0xff]
    %v555 = vld [vmem:[%s543 + $0x58] sm:$0xff]
    %v556 = vld [vmem:[%s543 + $0x60] sm:$0xff]
    %v557 = vld [vmem:[%s543 + $0x68] sm:$0xff]
    %v558 = vld [vmem:[%s543 + $0x70] sm:$0xff]
    %v559 = vld [vmem:[%s543 + $0x78] sm:$0xff]
    %v560 = vld [vmem:[%s543 + $0x80] sm:$0xff]
    %v561 = vld [vmem:[%s543 + $0x88] sm:$0xff]
    %v562 = vld [vmem:[%s543 + $0x90] sm:$0xff]
    %v563 = vld [vmem:[%s543 + $0x98] sm:$0xff]
    %v564 = vld [vmem:[%s543 + $0xa0] sm:$0xff]
    %v565 = vld [vmem:[%s543 + $0xa8] sm:$0xff]
    %v566 = vld [vmem:[%s543 + $0xb0] sm:$0xff]
    %v567 = vld [vmem:[%s543 + $0xb8] sm:$0xff]
    %v568 = vld [vmem:[%s543 + $0xc0] sm:$0xff]
    %v569 = vld [vmem:[%s543 + $0xc8] sm:$0xff]
    %v570 = vld [vmem:[%s543 + $0xd0] sm:$0xff]
    %v571 = vld [vmem:[%s543 + $0xd8] sm:$0xff]
    %v572 = vld [vmem:[%s543 + $0xe0] sm:$0xff]
    %v573 = vld [vmem:[%s543 + $0xe8] sm:$0xff]
    %v574 = vld [vmem:[%s543 + $0xf0] sm:$0xff]
    %v575 = vld [vmem:[%s543 + $0xf8] sm:$0xff]
    %v576 = vld [vmem:[%s543 + $0x100] sm:$0xff]
    %v577 = vld [vmem:[%s543 + $0x108] sm:$0xff]
    %v578 = vld [vmem:[%s543 + $0x110] sm:$0xff]
    %v579 = vld [vmem:[%s543 + $0x118] sm:$0xff]
    %v580 = vld [vmem:[%s543 + $0x120] sm:$0xff]
    %v581 = vld [vmem:[%s543 + $0x128] sm:$0xff]
    %v582 = vld [vmem:[%s543 + $0x130] sm:$0xff]
    %v583 = vld [vmem:[%s543 + $0x138] sm:$0xff]
    %v584 = vld [vmem:[%s543 + $0x140] sm:$0xff]
    %v585 = vld [vmem:[%s543 + $0x148] sm:$0xff]
    %v586 = vld [vmem:[%s543 + $0x150] sm:$0xff]
    %v587 = vld [vmem:[%s543 + $0x158] sm:$0xff]
    %v589 = vsel %vm310, %v545, 0
    %v592 = vsel %vm310, %v547, 0
    %v595 = vsel %vm310, %v549, 0
    %v598 = vsel %vm310, %v551, 0
    %v601 = vsel %vm310, %v553, 0
    %v604 = vsel %vm310, %v555, 0
    %v607 = vsel %vm310, %v557, 0
    %v610 = vsel %vm310, %v559, 0
    %v613 = vsel %vm310, %v561, 0
    %v616 = vsel %vm310, %v563, 0
    %v619 = vsel %vm310, %v565, 0
    %v622 = vsel %vm310, %v567, 0
    %v625 = vsel %vm310, %v569, 0
    %v628 = vsel %vm310, %v571, 0
    %v631 = vsel %vm310, %v573, 0
    %v634 = vsel %vm310, %v575, 0
    %v637 = vsel %vm310, %v577, 0
    %v640 = vsel %vm310, %v579, 0
    %v643 = vsel %vm310, %v581, 0
    %v646 = vsel %vm310, %v583, 0
    %v649 = vsel %vm310, %v585, 0
    %v652 = vsel %vm310, %v587, 0
    %654 = vmatpush.msra.mxu0 %v257
    %655 = vmatpush.msra.mxu0 %v256
    %656 = vmatpush.msra.mxu0 %v255
    %657 = vmatpush.msra.mxu0 %v254
    %658 = vmatpush.msra.mxu0 %v253
    %659 = vmatpush.msra.mxu0 %v252
    %660 = vmatpush.msra.mxu0 %v251
    %661 = vmatpush.msra.mxu0 %v250
    %662 = vmatpush.msra.mxu0 %v249
    %663 = vmatpush.msra.mxu0 %v248
    %664 = vmatpush.msra.mxu0 %v247
    %665 = vmatpush.msra.mxu0 %v246
    %666 = vmatpush.msra.mxu0 %v245
    %667 = vmatpush.msra.mxu0 %v244
    %668 = vmatpush.msra.mxu0 %v243
    %669 = vmatpush.msra.mxu0 %v242
    %670 = vmatmul.f32.gmra.mxu0 %v544
    %v671 = vpop.f32.mrf.mxu0
    %v672 = vadd.f32 0.0, %v671
    %673 = vmatmul.f32.gmra.mxu0 %v546
    %v674 = vpop.f32.mrf.mxu0
    %v675 = vadd.f32 0.0, %v674
    %676 = vmatmul.f32.gmra.mxu0 %v548
    %v677 = vpop.f32.mrf.mxu0
    %v678 = vadd.f32 0.0, %v677
    %679 = vmatmul.f32.gmra.mxu0 %v550
    %v680 = vpop.f32.mrf.mxu0
    %v681 = vadd.f32 0.0, %v680
    %682 = vmatmul.f32.gmra.mxu0 %v552
    %v683 = vpop.f32.mrf.mxu0
    %v684 = vadd.f32 0.0, %v683
    %685 = vmatmul.f32.gmra.mxu0 %v554
    %v686 = vpop.f32.mrf.mxu0
    %v687 = vadd.f32 0.0, %v686
    %688 = vmatmul.f32.gmra.mxu0 %v556
    %v689 = vpop.f32.mrf.mxu0
    %v690 = vadd.f32 0.0, %v689
    %691 = vmatmul.f32.gmra.mxu0 %v558
    %v692 = vpop.f32.mrf.mxu0
    %v693 = vadd.f32 0.0, %v692
    %694 = vmatmul.f32.gmra.mxu0 %v560
    %v695 = vpop.f32.mrf.mxu0
    %v696 = vadd.f32 0.0, %v695
    %697 = vmatmul.f32.gmra.mxu0 %v562
    %v698 = vpop.f32.mrf.mxu0
    %v699 = vadd.f32 0.0, %v698
    %700 = vmatmul.f32.gmra.mxu0 %v564
    %v701 = vpop.f32.mrf.mxu0
    %v702 = vadd.f32 0.0, %v701
    %703 = vmatmul.f32.gmra.mxu0 %v566
    %v704 = vpop.f32.mrf.mxu0
    %v705 = vadd.f32 0.0, %v704
    %706 = vmatmul.f32.gmra.mxu0 %v568
    %v707 = vpop.f32.mrf.mxu0
    %v708 = vadd.f32 0.0, %v707
    %709 = vmatmul.f32.gmra.mxu0 %v570
    %v710 = vpop.f32.mrf.mxu0
    %v711 = vadd.f32 0.0, %v710
    %712 = vmatmul.f32.gmra.mxu0 %v572
    %v713 = vpop.f32.mrf.mxu0
    %v714 = vadd.f32 0.0, %v713
    %715 = vmatmul.f32.gmra.mxu0 %v574
    %v716 = vpop.f32.mrf.mxu0
    %v717 = vadd.f32 0.0, %v716
    %718 = vmatmul.f32.gmra.mxu0 %v576
    %v719 = vpop.f32.mrf.mxu0
    %v720 = vadd.f32 0.0, %v719
    %721 = vmatmul.f32.gmra.mxu0 %v578
    %v722 = vpop.f32.mrf.mxu0
    %v723 = vadd.f32 0.0, %v722
    %724 = vmatmul.f32.gmra.mxu0 %v580
    %v725 = vpop.f32.mrf.mxu0
    %v726 = vadd.f32 0.0, %v725
    %727 = vmatmul.f32.gmra.mxu0 %v582
    %v728 = vpop.f32.mrf.mxu0
    %v729 = vadd.f32 0.0, %v728
    %730 = vmatmul.f32.gmra.mxu0 %v584
    %v731 = vpop.f32.mrf.mxu0
    %v732 = vadd.f32 0.0, %v731
    %733 = vmatmul.f32.gmra.mxu0 %v586
    %v734 = vpop.f32.mrf.mxu0
    %v735 = vadd.f32 0.0, %v734
    %736 = vdwg.mxu0
    %737 = vmatpush.msra.mxu0 0.0
    %738 = vmatpush.msra.mxu0 0.0
    %739 = vmatpush.msra.mxu0 0.0
    %740 = vmatpush.msra.mxu0 0.0
    %741 = vmatpush.msra.mxu0 0.0
    %742 = vmatpush.msra.mxu0 0.0
    %743 = vmatpush.msra.mxu0 0.0
    %744 = vmatpush.msra.mxu0 0.0
    %745 = vmatpush.msra.mxu0 %v265
    %746 = vmatpush.msra.mxu0 %v264
    %747 = vmatpush.msra.mxu0 %v263
    %748 = vmatpush.msra.mxu0 %v262
    %749 = vmatpush.msra.mxu0 %v261
    %750 = vmatpush.msra.mxu0 %v260
    %751 = vmatpush.msra.mxu0 %v259
    %752 = vmatpush.msra.mxu0 %v258
    %753 = vmatmul.f32.gmra.mxu0 %v589
    %v754 = vpop.f32.mrf.mxu0
    %v755 = vadd.f32 %v672, %v754
    %756 = vmatmul.f32.gmra.mxu0 %v592
    %v757 = vpop.f32.mrf.mxu0
    %v758 = vadd.f32 %v675, %v757
    %759 = vmatmul.f32.gmra.mxu0 %v595
    %v760 = vpop.f32.mrf.mxu0
    %v761 = vadd.f32 %v678, %v760
    %762 = vmatmul.f32.gmra.mxu0 %v598
    %v763 = vpop.f32.mrf.mxu0
    %v764 = vadd.f32 %v681, %v763
    %765 = vmatmul.f32.gmra.mxu0 %v601
    %v766 = vpop.f32.mrf.mxu0
    %v767 = vadd.f32 %v684, %v766
    %768 = vmatmul.f32.gmra.mxu0 %v604
    %v769 = vpop.f32.mrf.mxu0
    %v770 = vadd.f32 %v687, %v769
    %771 = vmatmul.f32.gmra.mxu0 %v607
    %v772 = vpop.f32.mrf.mxu0
    %v773 = vadd.f32 %v690, %v772
    %774 = vmatmul.f32.gmra.mxu0 %v610
    %v775 = vpop.f32.mrf.mxu0
    %v776 = vadd.f32 %v693, %v775
    %777 = vmatmul.f32.gmra.mxu0 %v613
    %v778 = vpop.f32.mrf.mxu0
    %v779 = vadd.f32 %v696, %v778
    %780 = vmatmul.f32.gmra.mxu0 %v616
    %v781 = vpop.f32.mrf.mxu0
    %v782 = vadd.f32 %v699, %v781
    %783 = vmatmul.f32.gmra.mxu0 %v619
    %v784 = vpop.f32.mrf.mxu0
    %v785 = vadd.f32 %v702, %v784
    %786 = vmatmul.f32.gmra.mxu0 %v622
    %v787 = vpop.f32.mrf.mxu0
    %v788 = vadd.f32 %v705, %v787
    %789 = vmatmul.f32.gmra.mxu0 %v625
    %v790 = vpop.f32.mrf.mxu0
    %v791 = vadd.f32 %v708, %v790
    %792 = vmatmul.f32.gmra.mxu0 %v628
    %v793 = vpop.f32.mrf.mxu0
    %v794 = vadd.f32 %v711, %v793
    %795 = vmatmul.f32.gmra.mxu0 %v631
    %v796 = vpop.f32.mrf.mxu0
    %v797 = vadd.f32 %v714, %v796
    %798 = vmatmul.f32.gmra.mxu0 %v634
    %v799 = vpop.f32.mrf.mxu0
    %v800 = vadd.f32 %v717, %v799
    %801 = vmatmul.f32.gmra.mxu0 %v637
    %v802 = vpop.f32.mrf.mxu0
    %v803 = vadd.f32 %v720, %v802
    %804 = vmatmul.f32.gmra.mxu0 %v640
    %v805 = vpop.f32.mrf.mxu0
    %v806 = vadd.f32 %v723, %v805
    %807 = vmatmul.f32.gmra.mxu0 %v643
    %v808 = vpop.f32.mrf.mxu0
    %v809 = vadd.f32 %v726, %v808
    %810 = vmatmul.f32.gmra.mxu0 %v646
    %v811 = vpop.f32.mrf.mxu0
    %v812 = vadd.f32 %v729, %v811
    %813 = vmatmul.f32.gmra.mxu0 %v649
    %v814 = vpop.f32.mrf.mxu0
    %v815 = vadd.f32 %v732, %v814
    %816 = vmatmul.f32.gmra.mxu0 %v652
    %v817 = vpop.f32.mrf.mxu0
    %v818 = vadd.f32 %v735, %v817
    %819 = vdwg.mxu0
    %s820 = scalar_lea.vmem [#allocation2], 704
    %v821 = vld [vmem:[%s820] sm:$0xff]
    %v822 = vld [vmem:[%s820 + $0x8] sm:$0xff]
    %v823 = vld [vmem:[%s820 + $0x10] sm:$0xff]
    %v824 = vld [vmem:[%s820 + $0x18] sm:$0xff]
    %v825 = vld [vmem:[%s820 + $0x20] sm:$0xff]
    %v826 = vld [vmem:[%s820 + $0x28] sm:$0xff]
    %v827 = vld [vmem:[%s820 + $0x30] sm:$0xff]
    %v828 = vld [vmem:[%s820 + $0x38] sm:$0xff]
    %v829 = vld [vmem:[%s820 + $0x40] sm:$0xff]
    %v830 = vld [vmem:[%s820 + $0x48] sm:$0xff]
    %v831 = vld [vmem:[%s820 + $0x50] sm:$0xff]
    %v832 = vld [vmem:[%s820 + $0x58] sm:$0xff]
    %v833 = vld [vmem:[%s820 + $0x60] sm:$0xff]
    %v834 = vld [vmem:[%s820 + $0x68] sm:$0xff]
    %v835 = vld [vmem:[%s820 + $0x70] sm:$0xff]
    %v836 = vld [vmem:[%s820 + $0x78] sm:$0xff]
    %v837 = vld [vmem:[%s820 + $0x80] sm:$0xff]
    %v838 = vld [vmem:[%s820 + $0x88] sm:$0xff]
    %v839 = vld [vmem:[%s820 + $0x90] sm:$0xff]
    %v840 = vld [vmem:[%s820 + $0x98] sm:$0xff]
    %v841 = vld [vmem:[%s820 + $0xa0] sm:$0xff]
    %v842 = vld [vmem:[%s820 + $0xa8] sm:$0xff]
    %v843 = vld [vmem:[%s820 + $0xb0] sm:$0xff]
    %v844 = vld [vmem:[%s820 + $0xb8] sm:$0xff]
    %v845 = vld [vmem:[%s820 + $0xc0] sm:$0xff]
    %v846 = vld [vmem:[%s820 + $0xc8] sm:$0xff]
    %v847 = vld [vmem:[%s820 + $0xd0] sm:$0xff]
    %v848 = vld [vmem:[%s820 + $0xd8] sm:$0xff]
    %v849 = vld [vmem:[%s820 + $0xe0] sm:$0xff]
    %v850 = vld [vmem:[%s820 + $0xe8] sm:$0xff]
    %v851 = vld [vmem:[%s820 + $0xf0] sm:$0xff]
    %v852 = vld [vmem:[%s820 + $0xf8] sm:$0xff]
    %v853 = vld [vmem:[%s820 + $0x100] sm:$0xff]
    %v854 = vld [vmem:[%s820 + $0x108] sm:$0xff]
    %v855 = vld [vmem:[%s820 + $0x110] sm:$0xff]
    %v856 = vld [vmem:[%s820 + $0x118] sm:$0xff]
    %v857 = vld [vmem:[%s820 + $0x120] sm:$0xff]
    %v858 = vld [vmem:[%s820 + $0x128] sm:$0xff]
    %v859 = vld [vmem:[%s820 + $0x130] sm:$0xff]
    %v860 = vld [vmem:[%s820 + $0x138] sm:$0xff]
    %v861 = vld [vmem:[%s820 + $0x140] sm:$0xff]
    %v862 = vld [vmem:[%s820 + $0x148] sm:$0xff]
    %v863 = vld [vmem:[%s820 + $0x150] sm:$0xff]
    %v864 = vld [vmem:[%s820 + $0x158] sm:$0xff]
    %v866 = vsel %vm310, %v822, 0
    %v869 = vsel %vm310, %v824, 0
    %v872 = vsel %vm310, %v826, 0
    %v875 = vsel %vm310, %v828, 0
    %v878 = vsel %vm310, %v830, 0
    %v881 = vsel %vm310, %v832, 0
    %v884 = vsel %vm310, %v834, 0
    %v887 = vsel %vm310, %v836, 0
    %v890 = vsel %vm310, %v838, 0
    %v893 = vsel %vm310, %v840, 0
    %v896 = vsel %vm310, %v842, 0
    %v899 = vsel %vm310, %v844, 0
    %v902 = vsel %vm310, %v846, 0
    %v905 = vsel %vm310, %v848, 0
    %v908 = vsel %vm310, %v850, 0
    %v911 = vsel %vm310, %v852, 0
    %v914 = vsel %vm310, %v854, 0
    %v917 = vsel %vm310, %v856, 0
    %v920 = vsel %vm310, %v858, 0
    %v923 = vsel %vm310, %v860, 0
    %v926 = vsel %vm310, %v862, 0
    %v929 = vsel %vm310, %v864, 0
    %931 = vmatpush.msra.mxu0 %v257
    %932 = vmatpush.msra.mxu0 %v256
    %933 = vmatpush.msra.mxu0 %v255
    %934 = vmatpush.msra.mxu0 %v254
    %935 = vmatpush.msra.mxu0 %v253
    %936 = vmatpush.msra.mxu0 %v252
    %937 = vmatpush.msra.mxu0 %v251
    %938 = vmatpush.msra.mxu0 %v250
    %939 = vmatpush.msra.mxu0 %v249
    %940 = vmatpush.msra.mxu0 %v248
    %941 = vmatpush.msra.mxu0 %v247
    %942 = vmatpush.msra.mxu0 %v246
    %943 = vmatpush.msra.mxu0 %v245
    %944 = vmatpush.msra.mxu0 %v244
    %945 = vmatpush.msra.mxu0 %v243
    %946 = vmatpush.msra.mxu0 %v242
    %947 = vmatmul.f32.gmra.mxu0 %v821
    %v948 = vpop.f32.mrf.mxu0
    %v949 = vadd.f32 0.0, %v948
    %950 = vmatmul.f32.gmra.mxu0 %v823
    %v951 = vpop.f32.mrf.mxu0
    %v952 = vadd.f32 0.0, %v951
    %953 = vmatmul.f32.gmra.mxu0 %v825
    %v954 = vpop.f32.mrf.mxu0
    %v955 = vadd.f32 0.0, %v954
    %956 = vmatmul.f32.gmra.mxu0 %v827
    %v957 = vpop.f32.mrf.mxu0
    %v958 = vadd.f32 0.0, %v957
    %959 = vmatmul.f32.gmra.mxu0 %v829
    %v960 = vpop.f32.mrf.mxu0
    %v961 = vadd.f32 0.0, %v960
    %962 = vmatmul.f32.gmra.mxu0 %v831
    %v963 = vpop.f32.mrf.mxu0
    %v964 = vadd.f32 0.0, %v963
    %965 = vmatmul.f32.gmra.mxu0 %v833
    %v966 = vpop.f32.mrf.mxu0
    %v967 = vadd.f32 0.0, %v966
    %968 = vmatmul.f32.gmra.mxu0 %v835
    %v969 = vpop.f32.mrf.mxu0
    %v970 = vadd.f32 0.0, %v969
    %971 = vmatmul.f32.gmra.mxu0 %v837
    %v972 = vpop.f32.mrf.mxu0
    %v973 = vadd.f32 0.0, %v972
    %974 = vmatmul.f32.gmra.mxu0 %v839
    %v975 = vpop.f32.mrf.mxu0
    %v976 = vadd.f32 0.0, %v975
    %977 = vmatmul.f32.gmra.mxu0 %v841
    %v978 = vpop.f32.mrf.mxu0
    %v979 = vadd.f32 0.0, %v978
    %980 = vmatmul.f32.gmra.mxu0 %v843
    %v981 = vpop.f32.mrf.mxu0
    %v982 = vadd.f32 0.0, %v981
    %983 = vmatmul.f32.gmra.mxu0 %v845
    %v984 = vpop.f32.mrf.mxu0
    %v985 = vadd.f32 0.0, %v984
    %986 = vmatmul.f32.gmra.mxu0 %v847
    %v987 = vpop.f32.mrf.mxu0
    %v988 = vadd.f32 0.0, %v987
    %989 = vmatmul.f32.gmra.mxu0 %v849
    %v990 = vpop.f32.mrf.mxu0
    %v991 = vadd.f32 0.0, %v990
    %992 = vmatmul.f32.gmra.mxu0 %v851
    %v993 = vpop.f32.mrf.mxu0
    %v994 = vadd.f32 0.0, %v993
    %995 = vmatmul.f32.gmra.mxu0 %v853
    %v996 = vpop.f32.mrf.mxu0
    %v997 = vadd.f32 0.0, %v996
    %998 = vmatmul.f32.gmra.mxu0 %v855
    %v999 = vpop.f32.mrf.mxu0
    %v1000 = vadd.f32 0.0, %v999
    %1001 = vmatmul.f32.gmra.mxu0 %v857
    %v1002 = vpop.f32.mrf.mxu0
    %v1003 = vadd.f32 0.0, %v1002
    %1004 = vmatmul.f32.gmra.mxu0 %v859
    %v1005 = vpop.f32.mrf.mxu0
    %v1006 = vadd.f32 0.0, %v1005
    %1007 = vmatmul.f32.gmra.mxu0 %v861
    %v1008 = vpop.f32.mrf.mxu0
    %v1009 = vadd.f32 0.0, %v1008
    %1010 = vmatmul.f32.gmra.mxu0 %v863
    %v1011 = vpop.f32.mrf.mxu0
    %v1012 = vadd.f32 0.0, %v1011
    %1013 = vdwg.mxu0
    %1014 = vmatpush.msra.mxu0 0.0
    %1015 = vmatpush.msra.mxu0 0.0
    %1016 = vmatpush.msra.mxu0 0.0
    %1017 = vmatpush.msra.mxu0 0.0
    %1018 = vmatpush.msra.mxu0 0.0
    %1019 = vmatpush.msra.mxu0 0.0
    %1020 = vmatpush.msra.mxu0 0.0
    %1021 = vmatpush.msra.mxu0 0.0
    %1022 = vmatpush.msra.mxu0 %v265
    %1023 = vmatpush.msra.mxu0 %v264
    %1024 = vmatpush.msra.mxu0 %v263
    %1025 = vmatpush.msra.mxu0 %v262
    %1026 = vmatpush.msra.mxu0 %v261
    %1027 = vmatpush.msra.mxu0 %v260
    %1028 = vmatpush.msra.mxu0 %v259
    %1029 = vmatpush.msra.mxu0 %v258
    %1030 = vmatmul.f32.gmra.mxu0 %v866
    %v1031 = vpop.f32.mrf.mxu0
    %v1032 = vadd.f32 %v949, %v1031
    %1033 = vmatmul.f32.gmra.mxu0 %v869
    %v1034 = vpop.f32.mrf.mxu0
    %v1035 = vadd.f32 %v952, %v1034
    %1036 = vmatmul.f32.gmra.mxu0 %v872
    %v1037 = vpop.f32.mrf.mxu0
    %v1038 = vadd.f32 %v955, %v1037
    %1039 = vmatmul.f32.gmra.mxu0 %v875
    %v1040 = vpop.f32.mrf.mxu0
    %v1041 = vadd.f32 %v958, %v1040
    %1042 = vmatmul.f32.gmra.mxu0 %v878
    %v1043 = vpop.f32.mrf.mxu0
    %v1044 = vadd.f32 %v961, %v1043
    %1045 = vmatmul.f32.gmra.mxu0 %v881
    %v1046 = vpop.f32.mrf.mxu0
    %v1047 = vadd.f32 %v964, %v1046
    %1048 = vmatmul.f32.gmra.mxu0 %v884
    %v1049 = vpop.f32.mrf.mxu0
    %v1050 = vadd.f32 %v967, %v1049
    %1051 = vmatmul.f32.gmra.mxu0 %v887
    %v1052 = vpop.f32.mrf.mxu0
    %v1053 = vadd.f32 %v970, %v1052
    %1054 = vmatmul.f32.gmra.mxu0 %v890
    %v1055 = vpop.f32.mrf.mxu0
    %v1056 = vadd.f32 %v973, %v1055
    %1057 = vmatmul.f32.gmra.mxu0 %v893
    %v1058 = vpop.f32.mrf.mxu0
    %v1059 = vadd.f32 %v976, %v1058
    %1060 = vmatmul.f32.gmra.mxu0 %v896
    %v1061 = vpop.f32.mrf.mxu0
    %v1062 = vadd.f32 %v979, %v1061
    %1063 = vmatmul.f32.gmra.mxu0 %v899
    %v1064 = vpop.f32.mrf.mxu0
    %v1065 = vadd.f32 %v982, %v1064
    %1066 = vmatmul.f32.gmra.mxu0 %v902
    %v1067 = vpop.f32.mrf.mxu0
    %v1068 = vadd.f32 %v985, %v1067
    %1069 = vmatmul.f32.gmra.mxu0 %v905
    %v1070 = vpop.f32.mrf.mxu0
    %v1071 = vadd.f32 %v988, %v1070
    %1072 = vmatmul.f32.gmra.mxu0 %v908
    %v1073 = vpop.f32.mrf.mxu0
    %v1074 = vadd.f32 %v991, %v1073
    %1075 = vmatmul.f32.gmra.mxu0 %v911
    %v1076 = vpop.f32.mrf.mxu0
    %v1077 = vadd.f32 %v994, %v1076
    %1078 = vmatmul.f32.gmra.mxu0 %v914
    %v1079 = vpop.f32.mrf.mxu0
    %v1080 = vadd.f32 %v997, %v1079
    %1081 = vmatmul.f32.gmra.mxu0 %v917
    %v1082 = vpop.f32.mrf.mxu0
    %v1083 = vadd.f32 %v1000, %v1082
    %1084 = vmatmul.f32.gmra.mxu0 %v920
    %v1085 = vpop.f32.mrf.mxu0
    %v1086 = vadd.f32 %v1003, %v1085
    %1087 = vmatmul.f32.gmra.mxu0 %v923
    %v1088 = vpop.f32.mrf.mxu0
    %v1089 = vadd.f32 %v1006, %v1088
    %1090 = vmatmul.f32.gmra.mxu0 %v926
    %v1091 = vpop.f32.mrf.mxu0
    %v1092 = vadd.f32 %v1009, %v1091
    %1093 = vmatmul.f32.gmra.mxu0 %v929
    %v1094 = vpop.f32.mrf.mxu0
    %v1095 = vadd.f32 %v1012, %v1094
    %1096 = vdwg.mxu0
    %v1097 = vld [vmem:[#allocation5] sm:$0xff]
    %v1098 = vld [vmem:[#allocation5 + $0x8] sm:$0xff]
    %v1099 = vld [vmem:[#allocation5 + $0x10] sm:$0xff]
    %v1100 = vld [vmem:[#allocation5 + $0x18] sm:$0xff]
    %v1101 = vld [vmem:[#allocation5 + $0x20] sm:$0xff]
    %v1102 = vld [vmem:[#allocation5 + $0x28] sm:$0xff]
    %v1103 = vld [vmem:[#allocation5 + $0x30] sm:$0xff]
    %v1104 = vld [vmem:[#allocation5 + $0x38] sm:$0xff]
    %v1105 = vld [vmem:[#allocation5 + $0x40] sm:$0xff]
    %v1106 = vld [vmem:[#allocation5 + $0x48] sm:$0xff]
    %v1107 = vld [vmem:[#allocation5 + $0x50] sm:$0xff]
    %v1108 = vld [vmem:[#allocation5 + $0x58] sm:$0xff]
    %v1109 = vld [vmem:[#allocation5 + $0x60] sm:$0xff]
    %v1110 = vld [vmem:[#allocation5 + $0x68] sm:$0xff]
    %v1111 = vld [vmem:[#allocation5 + $0x70] sm:$0xff]
    %v1112 = vld [vmem:[#allocation5 + $0x78] sm:$0xff]
    %v1113 = vld [vmem:[#allocation5 + $0x80] sm:$0xff]
    %v1114 = vld [vmem:[#allocation5 + $0x88] sm:$0xff]
    %v1115 = vld [vmem:[#allocation5 + $0x90] sm:$0xff]
    %v1116 = vld [vmem:[#allocation5 + $0x98] sm:$0xff]
    %v1117 = vld [vmem:[#allocation5 + $0xa0] sm:$0xff]
    %v1118 = vld [vmem:[#allocation5 + $0xa8] sm:$0xff]
    %v1119 = vld [vmem:[#allocation5 + $0xb0] sm:$0xff]
    %v1120 = vld [vmem:[#allocation5 + $0xb8] sm:$0xff]
    %v1121 = vld [vmem:[#allocation5 + $0xc0] sm:$0xff]
    %v1122 = vld [vmem:[#allocation5 + $0xc8] sm:$0xff]
    %v1123 = vld [vmem:[#allocation5 + $0xd0] sm:$0xff]
    %s1124 = scalar_lea.vmem [#allocation5], 648
    %v1125 = vld [vmem:[%s1124] sm:$0xff]
    %v1126 = vld [vmem:[%s1124 + $0x8] sm:$0xff]
    %v1127 = vld [vmem:[%s1124 + $0x10] sm:$0xff]
    %v1128 = vld [vmem:[%s1124 + $0x18] sm:$0xff]
    %v1129 = vld [vmem:[%s1124 + $0x20] sm:$0xff]
    %v1130 = vld [vmem:[%s1124 + $0x28] sm:$0xff]
    %v1131 = vld [vmem:[%s1124 + $0x30] sm:$0xff]
    %v1132 = vld [vmem:[%s1124 + $0x38] sm:$0xff]
    %v1133 = vld [vmem:[%s1124 + $0x40] sm:$0xff]
    %v1134 = vld [vmem:[%s1124 + $0x48] sm:$0xff]
    %v1135 = vld [vmem:[%s1124 + $0x50] sm:$0xff]
    %v1136 = vld [vmem:[%s1124 + $0x58] sm:$0xff]
    %v1137 = vld [vmem:[%s1124 + $0x60] sm:$0xff]
    %v1138 = vld [vmem:[%s1124 + $0x68] sm:$0xff]
    %v1139 = vld [vmem:[%s1124 + $0x70] sm:$0xff]
    %v1140 = vld [vmem:[%s1124 + $0x78] sm:$0xff]
    %v1141 = vld [vmem:[%s1124 + $0x80] sm:$0xff]
    %v1142 = vld [vmem:[%s1124 + $0x88] sm:$0xff]
    %v1143 = vld [vmem:[%s1124 + $0x90] sm:$0xff]
    %v1144 = vld [vmem:[%s1124 + $0x98] sm:$0xff]
    %v1145 = vld [vmem:[%s1124 + $0xa0] sm:$0xff]
    %v1146 = vld [vmem:[%s1124 + $0xa8] sm:$0xff]
    %v1147 = vld [vmem:[%s1124 + $0xb0] sm:$0xff]
    %v1148 = vld [vmem:[%s1124 + $0xb8] sm:$0xff]
    %v1149 = vld [vmem:[%s1124 + $0xc0] sm:$0xff]
    %v1150 = vld [vmem:[%s1124 + $0xc8] sm:$0xff]
    %v1151 = vld [vmem:[%s1124 + $0xd0] sm:$0xff]
    %vm1152 = vcmask 588800
    %v1154 = vsel %vm1152, %v755, 0
    %v1157 = vsel %vm1152, %v758, 0
    %v1160 = vsel %vm1152, %v761, 0
    %v1163 = vsel %vm1152, %v764, 0
    %v1166 = vsel %vm1152, %v767, 0
    %v1169 = vsel %vm1152, %v770, 0
    %v1172 = vsel %vm1152, %v773, 0
    %v1175 = vsel %vm1152, %v776, 0
    %v1178 = vsel %vm1152, %v779, 0
    %v1181 = vsel %vm1152, %v782, 0
    %v1184 = vsel %vm1152, %v785, 0
    %v1187 = vsel %vm1152, %v788, 0
    %v1190 = vsel %vm1152, %v791, 0
    %v1193 = vsel %vm1152, %v794, 0
    %v1196 = vsel %vm1152, %v797, 0
    %v1199 = vsel %vm1152, %v800, 0
    %v1202 = vsel %vm1152, %v803, 0
    %v1205 = vsel %vm1152, %v806, 0
    %v1208 = vsel %vm1152, %v809, 0
    %v1211 = vsel %vm1152, %v812, 0
    %v1214 = vsel %vm1152, %v815, 0
    %v1217 = vsel %vm1152, %v818, 0
    %1219 = vmatpush.msra.mxu0 0.0
    %1220 = vmatpush.msra.mxu0 0.0
    %1221 = vmatpush.msra.mxu0 0.0
    %1222 = vmatpush.msra.mxu0 0.0
    %1223 = vmatpush.msra.mxu0 0.0
    %1224 = vmatpush.msra.mxu0 0.0
    %1225 = vmatpush.msra.mxu0 0.0
    %1226 = vmatpush.msra.mxu0 %v1149
    %1227 = vmatpush.msra.mxu0 %v1146
    %1228 = vmatpush.msra.mxu0 %v1143
    %1229 = vmatpush.msra.mxu0 %v1140
    %1230 = vmatpush.msra.mxu0 %v1137
    %1231 = vmatpush.msra.mxu0 %v1134
    %1232 = vmatpush.msra.mxu0 %v1131
    %1233 = vmatpush.msra.mxu0 %v1128
    %1234 = vmatpush.msra.mxu0 %v1125
    %1235 = vmatmul.f32.gmra.mxu0 %v1154
    %v1236 = vpop.f32.mrf.mxu0
    %v1237 = vadd.f32 0.0, %v1236
    %1238 = vmatmul.f32.gmra.mxu0 %v1157
    %v1239 = vpop.f32.mrf.mxu0
    %v1240 = vadd.f32 0.0, %v1239
    %1241 = vmatmul.f32.gmra.mxu0 %v1160
    %v1242 = vpop.f32.mrf.mxu0
    %v1243 = vadd.f32 0.0, %v1242
    %1244 = vmatmul.f32.gmra.mxu0 %v1163
    %v1245 = vpop.f32.mrf.mxu0
    %v1246 = vadd.f32 0.0, %v1245
    %1247 = vmatmul.f32.gmra.mxu0 %v1166
    %v1248 = vpop.f32.mrf.mxu0
    %v1249 = vadd.f32 0.0, %v1248
    %1250 = vmatmul.f32.gmra.mxu0 %v1169
    %v1251 = vpop.f32.mrf.mxu0
    %v1252 = vadd.f32 0.0, %v1251
    %1253 = vmatmul.f32.gmra.mxu0 %v1172
    %v1254 = vpop.f32.mrf.mxu0
    %v1255 = vadd.f32 0.0, %v1254
    %1256 = vmatmul.f32.gmra.mxu0 %v1175
    %v1257 = vpop.f32.mrf.mxu0
    %v1258 = vadd.f32 0.0, %v1257
    %1259 = vmatmul.f32.gmra.mxu0 %v1178
    %v1260 = vpop.f32.mrf.mxu0
    %v1261 = vadd.f32 0.0, %v1260
    %1262 = vmatmul.f32.gmra.mxu0 %v1181
    %v1263 = vpop.f32.mrf.mxu0
    %v1264 = vadd.f32 0.0, %v1263
    %1265 = vmatmul.f32.gmra.mxu0 %v1184
    %v1266 = vpop.f32.mrf.mxu0
    %v1267 = vadd.f32 0.0, %v1266
    %1268 = vmatmul.f32.gmra.mxu0 %v1187
    %v1269 = vpop.f32.mrf.mxu0
    %v1270 = vadd.f32 0.0, %v1269
    %1271 = vmatmul.f32.gmra.mxu0 %v1190
    %v1272 = vpop.f32.mrf.mxu0
    %v1273 = vadd.f32 0.0, %v1272
    %1274 = vmatmul.f32.gmra.mxu0 %v1193
    %v1275 = vpop.f32.mrf.mxu0
    %v1276 = vadd.f32 0.0, %v1275
    %1277 = vmatmul.f32.gmra.mxu0 %v1196
    %v1278 = vpop.f32.mrf.mxu0
    %v1279 = vadd.f32 0.0, %v1278
    %1280 = vmatmul.f32.gmra.mxu0 %v1199
    %v1281 = vpop.f32.mrf.mxu0
    %v1282 = vadd.f32 0.0, %v1281
    %1283 = vmatmul.f32.gmra.mxu0 %v1202
    %v1284 = vpop.f32.mrf.mxu0
    %v1285 = vadd.f32 0.0, %v1284
    %1286 = vmatmul.f32.gmra.mxu0 %v1205
    %v1287 = vpop.f32.mrf.mxu0
    %v1288 = vadd.f32 0.0, %v1287
    %1289 = vmatmul.f32.gmra.mxu0 %v1208
    %v1290 = vpop.f32.mrf.mxu0
    %v1291 = vadd.f32 0.0, %v1290
    %1292 = vmatmul.f32.gmra.mxu0 %v1211
    %v1293 = vpop.f32.mrf.mxu0
    %v1294 = vadd.f32 0.0, %v1293
    %1295 = vmatmul.f32.gmra.mxu0 %v1214
    %v1296 = vpop.f32.mrf.mxu0
    %v1297 = vadd.f32 0.0, %v1296
    %1298 = vmatmul.f32.gmra.mxu0 %v1217
    %v1299 = vpop.f32.mrf.mxu0
    %v1300 = vadd.f32 0.0, %v1299
    %1301 = vdwg.mxu0
    %1302 = vmatpush.msra.mxu0 0.0
    %1303 = vmatpush.msra.mxu0 0.0
    %1304 = vmatpush.msra.mxu0 0.0
    %1305 = vmatpush.msra.mxu0 0.0
    %1306 = vmatpush.msra.mxu0 0.0
    %1307 = vmatpush.msra.mxu0 0.0
    %1308 = vmatpush.msra.mxu0 0.0
    %1309 = vmatpush.msra.mxu0 %v1150
    %1310 = vmatpush.msra.mxu0 %v1147
    %1311 = vmatpush.msra.mxu0 %v1144
    %1312 = vmatpush.msra.mxu0 %v1141
    %1313 = vmatpush.msra.mxu0 %v1138
    %1314 = vmatpush.msra.mxu0 %v1135
    %1315 = vmatpush.msra.mxu0 %v1132
    %1316 = vmatpush.msra.mxu0 %v1129
    %1317 = vmatpush.msra.mxu0 %v1126
    %1318 = vmatmul.f32.gmra.mxu0 %v1154
    %v1319 = vpop.f32.mrf.mxu0
    %v1320 = vadd.f32 0.0, %v1319
    %1321 = vmatmul.f32.gmra.mxu0 %v1157
    %v1322 = vpop.f32.mrf.mxu0
    %v1323 = vadd.f32 0.0, %v1322
    %1324 = vmatmul.f32.gmra.mxu0 %v1160
    %v1325 = vpop.f32.mrf.mxu0
    %v1326 = vadd.f32 0.0, %v1325
    %1327 = vmatmul.f32.gmra.mxu0 %v1163
    %v1328 = vpop.f32.mrf.mxu0
    %v1329 = vadd.f32 0.0, %v1328
    %1330 = vmatmul.f32.gmra.mxu0 %v1166
    %v1331 = vpop.f32.mrf.mxu0
    %v1332 = vadd.f32 0.0, %v1331
    %1333 = vmatmul.f32.gmra.mxu0 %v1169
    %v1334 = vpop.f32.mrf.mxu0
    %v1335 = vadd.f32 0.0, %v1334
    %1336 = vmatmul.f32.gmra.mxu0 %v1172
    %v1337 = vpop.f32.mrf.mxu0
    %v1338 = vadd.f32 0.0, %v1337
    %1339 = vmatmul.f32.gmra.mxu0 %v1175
    %v1340 = vpop.f32.mrf.mxu0
    %v1341 = vadd.f32 0.0, %v1340
    %1342 = vmatmul.f32.gmra.mxu0 %v1178
    %v1343 = vpop.f32.mrf.mxu0
    %v1344 = vadd.f32 0.0, %v1343
    %1345 = vmatmul.f32.gmra.mxu0 %v1181
    %v1346 = vpop.f32.mrf.mxu0
    %v1347 = vadd.f32 0.0, %v1346
    %1348 = vmatmul.f32.gmra.mxu0 %v1184
    %v1349 = vpop.f32.mrf.mxu0
    %v1350 = vadd.f32 0.0, %v1349
    %1351 = vmatmul.f32.gmra.mxu0 %v1187
    %v1352 = vpop.f32.mrf.mxu0
    %v1353 = vadd.f32 0.0, %v1352
    %1354 = vmatmul.f32.gmra.mxu0 %v1190
    %v1355 = vpop.f32.mrf.mxu0
    %v1356 = vadd.f32 0.0, %v1355
    %1357 = vmatmul.f32.gmra.mxu0 %v1193
    %v1358 = vpop.f32.mrf.mxu0
    %v1359 = vadd.f32 0.0, %v1358
    %1360 = vmatmul.f32.gmra.mxu0 %v1196
    %v1361 = vpop.f32.mrf.mxu0
    %v1362 = vadd.f32 0.0, %v1361
    %1363 = vmatmul.f32.gmra.mxu0 %v1199
    %v1364 = vpop.f32.mrf.mxu0
    %v1365 = vadd.f32 0.0, %v1364
    %1366 = vmatmul.f32.gmra.mxu0 %v1202
    %v1367 = vpop.f32.mrf.mxu0
    %v1368 = vadd.f32 0.0, %v1367
    %1369 = vmatmul.f32.gmra.mxu0 %v1205
    %v1370 = vpop.f32.mrf.mxu0
    %v1371 = vadd.f32 0.0, %v1370
    %1372 = vmatmul.f32.gmra.mxu0 %v1208
    %v1373 = vpop.f32.mrf.mxu0
    %v1374 = vadd.f32 0.0, %v1373
    %1375 = vmatmul.f32.gmra.mxu0 %v1211
    %v1376 = vpop.f32.mrf.mxu0
    %v1377 = vadd.f32 0.0, %v1376
    %1378 = vmatmul.f32.gmra.mxu0 %v1214
    %v1379 = vpop.f32.mrf.mxu0
    %v1380 = vadd.f32 0.0, %v1379
    %1381 = vmatmul.f32.gmra.mxu0 %v1217
    %v1382 = vpop.f32.mrf.mxu0
    %v1383 = vadd.f32 0.0, %v1382
    %1384 = vdwg.mxu0
    %1385 = vmatpush.msra.mxu0 0.0
    %1386 = vmatpush.msra.mxu0 0.0
    %1387 = vmatpush.msra.mxu0 0.0
    %1388 = vmatpush.msra.mxu0 0.0
    %1389 = vmatpush.msra.mxu0 0.0
    %1390 = vmatpush.msra.mxu0 0.0
    %1391 = vmatpush.msra.mxu0 0.0
    %1392 = vmatpush.msra.mxu0 %v1151
    %1393 = vmatpush.msra.mxu0 %v1148
    %1394 = vmatpush.msra.mxu0 %v1145
    %1395 = vmatpush.msra.mxu0 %v1142
    %1396 = vmatpush.msra.mxu0 %v1139
    %1397 = vmatpush.msra.mxu0 %v1136
    %1398 = vmatpush.msra.mxu0 %v1133
    %1399 = vmatpush.msra.mxu0 %v1130
    %1400 = vmatpush.msra.mxu0 %v1127
    %1401 = vmatmul.f32.gmra.mxu0 %v1154
    %v1402 = vpop.f32.mrf.mxu0
    %v1403 = vadd.f32 0.0, %v1402
    %1404 = vmatmul.f32.gmra.mxu0 %v1157
    %v1405 = vpop.f32.mrf.mxu0
    %v1406 = vadd.f32 0.0, %v1405
    %1407 = vmatmul.f32.gmra.mxu0 %v1160
    %v1408 = vpop.f32.mrf.mxu0
    %v1409 = vadd.f32 0.0, %v1408
    %1410 = vmatmul.f32.gmra.mxu0 %v1163
    %v1411 = vpop.f32.mrf.mxu0
    %v1412 = vadd.f32 0.0, %v1411
    %1413 = vmatmul.f32.gmra.mxu0 %v1166
    %v1414 = vpop.f32.mrf.mxu0
    %v1415 = vadd.f32 0.0, %v1414
    %1416 = vmatmul.f32.gmra.mxu0 %v1169
    %v1417 = vpop.f32.mrf.mxu0
    %v1418 = vadd.f32 0.0, %v1417
    %1419 = vmatmul.f32.gmra.mxu0 %v1172
    %v1420 = vpop.f32.mrf.mxu0
    %v1421 = vadd.f32 0.0, %v1420
    %1422 = vmatmul.f32.gmra.mxu0 %v1175
    %v1423 = vpop.f32.mrf.mxu0
    %v1424 = vadd.f32 0.0, %v1423
    %1425 = vmatmul.f32.gmra.mxu0 %v1178
    %v1426 = vpop.f32.mrf.mxu0
    %v1427 = vadd.f32 0.0, %v1426
    %1428 = vmatmul.f32.gmra.mxu0 %v1181
    %v1429 = vpop.f32.mrf.mxu0
    %v1430 = vadd.f32 0.0, %v1429
    %1431 = vmatmul.f32.gmra.mxu0 %v1184
    %v1432 = vpop.f32.mrf.mxu0
    %v1433 = vadd.f32 0.0, %v1432
    %1434 = vmatmul.f32.gmra.mxu0 %v1187
    %v1435 = vpop.f32.mrf.mxu0
    %v1436 = vadd.f32 0.0, %v1435
    %1437 = vmatmul.f32.gmra.mxu0 %v1190
    %v1438 = vpop.f32.mrf.mxu0
    %v1439 = vadd.f32 0.0, %v1438
    %1440 = vmatmul.f32.gmra.mxu0 %v1193
    %v1441 = vpop.f32.mrf.mxu0
    %v1442 = vadd.f32 0.0, %v1441
    %1443 = vmatmul.f32.gmra.mxu0 %v1196
    %v1444 = vpop.f32.mrf.mxu0
    %v1445 = vadd.f32 0.0, %v1444
    %1446 = vmatmul.f32.gmra.mxu0 %v1199
    %v1447 = vpop.f32.mrf.mxu0
    %v1448 = vadd.f32 0.0, %v1447
    %1449 = vmatmul.f32.gmra.mxu0 %v1202
    %v1450 = vpop.f32.mrf.mxu0
    %v1451 = vadd.f32 0.0, %v1450
    %1452 = vmatmul.f32.gmra.mxu0 %v1205
    %v1453 = vpop.f32.mrf.mxu0
    %v1454 = vadd.f32 0.0, %v1453
    %1455 = vmatmul.f32.gmra.mxu0 %v1208
    %v1456 = vpop.f32.mrf.mxu0
    %v1457 = vadd.f32 0.0, %v1456
    %1458 = vmatmul.f32.gmra.mxu0 %v1211
    %v1459 = vpop.f32.mrf.mxu0
    %v1460 = vadd.f32 0.0, %v1459
    %1461 = vmatmul.f32.gmra.mxu0 %v1214
    %v1462 = vpop.f32.mrf.mxu0
    %v1463 = vadd.f32 0.0, %v1462
    %1464 = vmatmul.f32.gmra.mxu0 %v1217
    %v1465 = vpop.f32.mrf.mxu0
    %v1466 = vadd.f32 0.0, %v1465
    %1467 = vdwg.mxu0
    %v1469 = vsel %vm1152, %v478, 0
    %v1472 = vsel %vm1152, %v481, 0
    %v1475 = vsel %vm1152, %v484, 0
    %v1478 = vsel %vm1152, %v487, 0
    %v1481 = vsel %vm1152, %v490, 0
    %v1484 = vsel %vm1152, %v493, 0
    %v1487 = vsel %vm1152, %v496, 0
    %v1490 = vsel %vm1152, %v499, 0
    %v1493 = vsel %vm1152, %v502, 0
    %v1496 = vsel %vm1152, %v505, 0
    %v1499 = vsel %vm1152, %v508, 0
    %v1502 = vsel %vm1152, %v511, 0
    %v1505 = vsel %vm1152, %v514, 0
    %v1508 = vsel %vm1152, %v517, 0
    %v1511 = vsel %vm1152, %v520, 0
    %v1514 = vsel %vm1152, %v523, 0
    %v1517 = vsel %vm1152, %v526, 0
    %v1520 = vsel %vm1152, %v529, 0
    %v1523 = vsel %vm1152, %v532, 0
    %v1526 = vsel %vm1152, %v535, 0
    %v1529 = vsel %vm1152, %v538, 0
    %v1532 = vsel %vm1152, %v541, 0
    %1534 = vmatpush.msra.mxu0 0.0
    %1535 = vmatpush.msra.mxu0 0.0
    %1536 = vmatpush.msra.mxu0 0.0
    %1537 = vmatpush.msra.mxu0 0.0
    %1538 = vmatpush.msra.mxu0 0.0
    %1539 = vmatpush.msra.mxu0 0.0
    %1540 = vmatpush.msra.mxu0 0.0
    %1541 = vmatpush.msra.mxu0 %v1121
    %1542 = vmatpush.msra.mxu0 %v1118
    %1543 = vmatpush.msra.mxu0 %v1115
    %1544 = vmatpush.msra.mxu0 %v1112
    %1545 = vmatpush.msra.mxu0 %v1109
    %1546 = vmatpush.msra.mxu0 %v1106
    %1547 = vmatpush.msra.mxu0 %v1103
    %1548 = vmatpush.msra.mxu0 %v1100
    %1549 = vmatpush.msra.mxu0 %v1097
    %1550 = vmatmul.f32.gmra.mxu0 %v1469
    %v1551 = vpop.f32.mrf.mxu0
    %v1552 = vadd.f32 %v1237, %v1551
    %1553 = vmatmul.f32.gmra.mxu0 %v1472
    %v1554 = vpop.f32.mrf.mxu0
    %v1555 = vadd.f32 %v1240, %v1554
    %1556 = vmatmul.f32.gmra.mxu0 %v1475
    %v1557 = vpop.f32.mrf.mxu0
    %v1558 = vadd.f32 %v1243, %v1557
    %1559 = vmatmul.f32.gmra.mxu0 %v1478
    %v1560 = vpop.f32.mrf.mxu0
    %v1561 = vadd.f32 %v1246, %v1560
    %1562 = vmatmul.f32.gmra.mxu0 %v1481
    %v1563 = vpop.f32.mrf.mxu0
    %v1564 = vadd.f32 %v1249, %v1563
    %1565 = vmatmul.f32.gmra.mxu0 %v1484
    %v1566 = vpop.f32.mrf.mxu0
    %v1567 = vadd.f32 %v1252, %v1566
    %1568 = vmatmul.f32.gmra.mxu0 %v1487
    %v1569 = vpop.f32.mrf.mxu0
    %v1570 = vadd.f32 %v1255, %v1569
    %1571 = vmatmul.f32.gmra.mxu0 %v1490
    %v1572 = vpop.f32.mrf.mxu0
    %v1573 = vadd.f32 %v1258, %v1572
    %1574 = vmatmul.f32.gmra.mxu0 %v1493
    %v1575 = vpop.f32.mrf.mxu0
    %v1576 = vadd.f32 %v1261, %v1575
    %1577 = vmatmul.f32.gmra.mxu0 %v1496
    %v1578 = vpop.f32.mrf.mxu0
    %v1579 = vadd.f32 %v1264, %v1578
    %1580 = vmatmul.f32.gmra.mxu0 %v1499
    %v1581 = vpop.f32.mrf.mxu0
    %v1582 = vadd.f32 %v1267, %v1581
    %1583 = vmatmul.f32.gmra.mxu0 %v1502
    %v1584 = vpop.f32.mrf.mxu0
    %v1585 = vadd.f32 %v1270, %v1584
    %1586 = vmatmul.f32.gmra.mxu0 %v1505
    %v1587 = vpop.f32.mrf.mxu0
    %v1588 = vadd.f32 %v1273, %v1587
    %1589 = vmatmul.f32.gmra.mxu0 %v1508
    %v1590 = vpop.f32.mrf.mxu0
    %v1591 = vadd.f32 %v1276, %v1590
    %1592 = vmatmul.f32.gmra.mxu0 %v1511
    %v1593 = vpop.f32.mrf.mxu0
    %v1594 = vadd.f32 %v1279, %v1593
    %1595 = vmatmul.f32.gmra.mxu0 %v1514
    %v1596 = vpop.f32.mrf.mxu0
    %v1597 = vadd.f32 %v1282, %v1596
    %1598 = vmatmul.f32.gmra.mxu0 %v1517
    %v1599 = vpop.f32.mrf.mxu0
    %v1600 = vadd.f32 %v1285, %v1599
    %1601 = vmatmul.f32.gmra.mxu0 %v1520
    %v1602 = vpop.f32.mrf.mxu0
    %v1603 = vadd.f32 %v1288, %v1602
    %1604 = vmatmul.f32.gmra.mxu0 %v1523
    %v1605 = vpop.f32.mrf.mxu0
    %v1606 = vadd.f32 %v1291, %v1605
    %1607 = vmatmul.f32.gmra.mxu0 %v1526
    %v1608 = vpop.f32.mrf.mxu0
    %v1609 = vadd.f32 %v1294, %v1608
    %1610 = vmatmul.f32.gmra.mxu0 %v1529
    %v1611 = vpop.f32.mrf.mxu0
    %v1612 = vadd.f32 %v1297, %v1611
    %1613 = vmatmul.f32.gmra.mxu0 %v1532
    %v1614 = vpop.f32.mrf.mxu0
    %v1615 = vadd.f32 %v1300, %v1614
    %1616 = vdwg.mxu0
    %1617 = vmatpush.msra.mxu0 0.0
    %1618 = vmatpush.msra.mxu0 0.0
    %1619 = vmatpush.msra.mxu0 0.0
    %1620 = vmatpush.msra.mxu0 0.0
    %1621 = vmatpush.msra.mxu0 0.0
    %1622 = vmatpush.msra.mxu0 0.0
    %1623 = vmatpush.msra.mxu0 0.0
    %1624 = vmatpush.msra.mxu0 %v1122
    %1625 = vmatpush.msra.mxu0 %v1119
    %1626 = vmatpush.msra.mxu0 %v1116
    %1627 = vmatpush.msra.mxu0 %v1113
    %1628 = vmatpush.msra.mxu0 %v1110
    %1629 = vmatpush.msra.mxu0 %v1107
    %1630 = vmatpush.msra.mxu0 %v1104
    %1631 = vmatpush.msra.mxu0 %v1101
    %1632 = vmatpush.msra.mxu0 %v1098
    %1633 = vmatmul.f32.gmra.mxu0 %v1469
    %v1634 = vpop.f32.mrf.mxu0
    %v1635 = vadd.f32 %v1320, %v1634
    %1636 = vmatmul.f32.gmra.mxu0 %v1472
    %v1637 = vpop.f32.mrf.mxu0
    %v1638 = vadd.f32 %v1323, %v1637
    %1639 = vmatmul.f32.gmra.mxu0 %v1475
    %v1640 = vpop.f32.mrf.mxu0
    %v1641 = vadd.f32 %v1326, %v1640
    %1642 = vmatmul.f32.gmra.mxu0 %v1478
    %v1643 = vpop.f32.mrf.mxu0
    %v1644 = vadd.f32 %v1329, %v1643
    %1645 = vmatmul.f32.gmra.mxu0 %v1481
    %v1646 = vpop.f32.mrf.mxu0
    %v1647 = vadd.f32 %v1332, %v1646
    %1648 = vmatmul.f32.gmra.mxu0 %v1484
    %v1649 = vpop.f32.mrf.mxu0
    %v1650 = vadd.f32 %v1335, %v1649
    %1651 = vmatmul.f32.gmra.mxu0 %v1487
    %v1652 = vpop.f32.mrf.mxu0
    %v1653 = vadd.f32 %v1338, %v1652
    %1654 = vmatmul.f32.gmra.mxu0 %v1490
    %v1655 = vpop.f32.mrf.mxu0
    %v1656 = vadd.f32 %v1341, %v1655
    %1657 = vmatmul.f32.gmra.mxu0 %v1493
    %v1658 = vpop.f32.mrf.mxu0
    %v1659 = vadd.f32 %v1344, %v1658
    %1660 = vmatmul.f32.gmra.mxu0 %v1496
    %v1661 = vpop.f32.mrf.mxu0
    %v1662 = vadd.f32 %v1347, %v1661
    %1663 = vmatmul.f32.gmra.mxu0 %v1499
    %v1664 = vpop.f32.mrf.mxu0
    %v1665 = vadd.f32 %v1350, %v1664
    %1666 = vmatmul.f32.gmra.mxu0 %v1502
    %v1667 = vpop.f32.mrf.mxu0
    %v1668 = vadd.f32 %v1353, %v1667
    %1669 = vmatmul.f32.gmra.mxu0 %v1505
    %v1670 = vpop.f32.mrf.mxu0
    %v1671 = vadd.f32 %v1356, %v1670
    %1672 = vmatmul.f32.gmra.mxu0 %v1508
    %v1673 = vpop.f32.mrf.mxu0
    %v1674 = vadd.f32 %v1359, %v1673
    %1675 = vmatmul.f32.gmra.mxu0 %v1511
    %v1676 = vpop.f32.mrf.mxu0
    %v1677 = vadd.f32 %v1362, %v1676
    %1678 = vmatmul.f32.gmra.mxu0 %v1514
    %v1679 = vpop.f32.mrf.mxu0
    %v1680 = vadd.f32 %v1365, %v1679
    %1681 = vmatmul.f32.gmra.mxu0 %v1517
    %v1682 = vpop.f32.mrf.mxu0
    %v1683 = vadd.f32 %v1368, %v1682
    %1684 = vmatmul.f32.gmra.mxu0 %v1520
    %v1685 = vpop.f32.mrf.mxu0
    %v1686 = vadd.f32 %v1371, %v1685
    %1687 = vmatmul.f32.gmra.mxu0 %v1523
    %v1688 = vpop.f32.mrf.mxu0
    %v1689 = vadd.f32 %v1374, %v1688
    %1690 = vmatmul.f32.gmra.mxu0 %v1526
    %v1691 = vpop.f32.mrf.mxu0
    %v1692 = vadd.f32 %v1377, %v1691
    %1693 = vmatmul.f32.gmra.mxu0 %v1529
    %v1694 = vpop.f32.mrf.mxu0
    %v1695 = vadd.f32 %v1380, %v1694
    %1696 = vmatmul.f32.gmra.mxu0 %v1532
    %v1697 = vpop.f32.mrf.mxu0
    %v1698 = vadd.f32 %v1383, %v1697
    %1699 = vdwg.mxu0
    %1700 = vmatpush.msra.mxu0 0.0
    %1701 = vmatpush.msra.mxu0 0.0
    %1702 = vmatpush.msra.mxu0 0.0
    %1703 = vmatpush.msra.mxu0 0.0
    %1704 = vmatpush.msra.mxu0 0.0
    %1705 = vmatpush.msra.mxu0 0.0
    %1706 = vmatpush.msra.mxu0 0.0
    %1707 = vmatpush.msra.mxu0 %v1123
    %1708 = vmatpush.msra.mxu0 %v1120
    %1709 = vmatpush.msra.mxu0 %v1117
    %1710 = vmatpush.msra.mxu0 %v1114
    %1711 = vmatpush.msra.mxu0 %v1111
    %1712 = vmatpush.msra.mxu0 %v1108
    %1713 = vmatpush.msra.mxu0 %v1105
    %1714 = vmatpush.msra.mxu0 %v1102
    %1715 = vmatpush.msra.mxu0 %v1099
    %1716 = vmatmul.f32.gmra.mxu0 %v1469
    %v1717 = vpop.f32.mrf.mxu0
    %v1718 = vadd.f32 %v1403, %v1717
    %1719 = vmatmul.f32.gmra.mxu0 %v1472
    %v1720 = vpop.f32.mrf.mxu0
    %v1721 = vadd.f32 %v1406, %v1720
    %1722 = vmatmul.f32.gmra.mxu0 %v1475
    %v1723 = vpop.f32.mrf.mxu0
    %v1724 = vadd.f32 %v1409, %v1723
    %1725 = vmatmul.f32.gmra.mxu0 %v1478
    %v1726 = vpop.f32.mrf.mxu0
    %v1727 = vadd.f32 %v1412, %v1726
    %1728 = vmatmul.f32.gmra.mxu0 %v1481
    %v1729 = vpop.f32.mrf.mxu0
    %v1730 = vadd.f32 %v1415, %v1729
    %1731 = vmatmul.f32.gmra.mxu0 %v1484
    %v1732 = vpop.f32.mrf.mxu0
    %v1733 = vadd.f32 %v1418, %v1732
    %1734 = vmatmul.f32.gmra.mxu0 %v1487
    %v1735 = vpop.f32.mrf.mxu0
    %v1736 = vadd.f32 %v1421, %v1735
    %1737 = vmatmul.f32.gmra.mxu0 %v1490
    %v1738 = vpop.f32.mrf.mxu0
    %v1739 = vadd.f32 %v1424, %v1738
    %1740 = vmatmul.f32.gmra.mxu0 %v1493
    %v1741 = vpop.f32.mrf.mxu0
    %v1742 = vadd.f32 %v1427, %v1741
    %1743 = vmatmul.f32.gmra.mxu0 %v1496
    %v1744 = vpop.f32.mrf.mxu0
    %v1745 = vadd.f32 %v1430, %v1744
    %1746 = vmatmul.f32.gmra.mxu0 %v1499
    %v1747 = vpop.f32.mrf.mxu0
    %v1748 = vadd.f32 %v1433, %v1747
    %1749 = vmatmul.f32.gmra.mxu0 %v1502
    %v1750 = vpop.f32.mrf.mxu0
    %v1751 = vadd.f32 %v1436, %v1750
    %1752 = vmatmul.f32.gmra.mxu0 %v1505
    %v1753 = vpop.f32.mrf.mxu0
    %v1754 = vadd.f32 %v1439, %v1753
    %1755 = vmatmul.f32.gmra.mxu0 %v1508
    %v1756 = vpop.f32.mrf.mxu0
    %v1757 = vadd.f32 %v1442, %v1756
    %1758 = vmatmul.f32.gmra.mxu0 %v1511
    %v1759 = vpop.f32.mrf.mxu0
    %v1760 = vadd.f32 %v1445, %v1759
    %1761 = vmatmul.f32.gmra.mxu0 %v1514
    %v1762 = vpop.f32.mrf.mxu0
    %v1763 = vadd.f32 %v1448, %v1762
    %1764 = vmatmul.f32.gmra.mxu0 %v1517
    %v1765 = vpop.f32.mrf.mxu0
    %v1766 = vadd.f32 %v1451, %v1765
    %1767 = vmatmul.f32.gmra.mxu0 %v1520
    %v1768 = vpop.f32.mrf.mxu0
    %v1769 = vadd.f32 %v1454, %v1768
    %1770 = vmatmul.f32.gmra.mxu0 %v1523
    %v1771 = vpop.f32.mrf.mxu0
    %v1772 = vadd.f32 %v1457, %v1771
    %1773 = vmatmul.f32.gmra.mxu0 %v1526
    %v1774 = vpop.f32.mrf.mxu0
    %v1775 = vadd.f32 %v1460, %v1774
    %1776 = vmatmul.f32.gmra.mxu0 %v1529
    %v1777 = vpop.f32.mrf.mxu0
    %v1778 = vadd.f32 %v1463, %v1777
    %1779 = vmatmul.f32.gmra.mxu0 %v1532
    %v1780 = vpop.f32.mrf.mxu0
    %v1781 = vadd.f32 %v1466, %v1780
    %1782 = vdwg.mxu0
    %s1783 = scalar_lea.vmem [#allocation5], 1296
    %v1784 = vld [vmem:[%s1783] sm:$0xff]
    %v1785 = vld [vmem:[%s1783 + $0x8] sm:$0xff]
    %v1786 = vld [vmem:[%s1783 + $0x10] sm:$0xff]
    %v1787 = vld [vmem:[%s1783 + $0x18] sm:$0xff]
    %v1788 = vld [vmem:[%s1783 + $0x20] sm:$0xff]
    %v1789 = vld [vmem:[%s1783 + $0x28] sm:$0xff]
    %v1790 = vld [vmem:[%s1783 + $0x30] sm:$0xff]
    %v1791 = vld [vmem:[%s1783 + $0x38] sm:$0xff]
    %v1792 = vld [vmem:[%s1783 + $0x40] sm:$0xff]
    %v1793 = vld [vmem:[%s1783 + $0x48] sm:$0xff]
    %v1794 = vld [vmem:[%s1783 + $0x50] sm:$0xff]
    %v1795 = vld [vmem:[%s1783 + $0x58] sm:$0xff]
    %v1796 = vld [vmem:[%s1783 + $0x60] sm:$0xff]
    %v1797 = vld [vmem:[%s1783 + $0x68] sm:$0xff]
    %v1798 = vld [vmem:[%s1783 + $0x70] sm:$0xff]
    %v1799 = vld [vmem:[%s1783 + $0x78] sm:$0xff]
    %v1800 = vld [vmem:[%s1783 + $0x80] sm:$0xff]
    %v1801 = vld [vmem:[%s1783 + $0x88] sm:$0xff]
    %v1802 = vld [vmem:[%s1783 + $0x90] sm:$0xff]
    %v1803 = vld [vmem:[%s1783 + $0x98] sm:$0xff]
    %v1804 = vld [vmem:[%s1783 + $0xa0] sm:$0xff]
    %v1805 = vld [vmem:[%s1783 + $0xa8] sm:$0xff]
    %v1806 = vld [vmem:[%s1783 + $0xb0] sm:$0xff]
    %v1807 = vld [vmem:[%s1783 + $0xb8] sm:$0xff]
    %v1808 = vld [vmem:[%s1783 + $0xc0] sm:$0xff]
    %v1809 = vld [vmem:[%s1783 + $0xc8] sm:$0xff]
    %v1810 = vld [vmem:[%s1783 + $0xd0] sm:$0xff]
    %v1812 = vsel %vm1152, %v1032, 0
    %v1815 = vsel %vm1152, %v1035, 0
    %v1818 = vsel %vm1152, %v1038, 0
    %v1821 = vsel %vm1152, %v1041, 0
    %v1824 = vsel %vm1152, %v1044, 0
    %v1827 = vsel %vm1152, %v1047, 0
    %v1830 = vsel %vm1152, %v1050, 0
    %v1833 = vsel %vm1152, %v1053, 0
    %v1836 = vsel %vm1152, %v1056, 0
    %v1839 = vsel %vm1152, %v1059, 0
    %v1842 = vsel %vm1152, %v1062, 0
    %v1845 = vsel %vm1152, %v1065, 0
    %v1848 = vsel %vm1152, %v1068, 0
    %v1851 = vsel %vm1152, %v1071, 0
    %v1854 = vsel %vm1152, %v1074, 0
    %v1857 = vsel %vm1152, %v1077, 0
    %v1860 = vsel %vm1152, %v1080, 0
    %v1863 = vsel %vm1152, %v1083, 0
    %v1866 = vsel %vm1152, %v1086, 0
    %v1869 = vsel %vm1152, %v1089, 0
    %v1872 = vsel %vm1152, %v1092, 0
    %v1875 = vsel %vm1152, %v1095, 0
    %1877 = vmatpush.msra.mxu0 0.0
    %1878 = vmatpush.msra.mxu0 0.0
    %1879 = vmatpush.msra.mxu0 0.0
    %1880 = vmatpush.msra.mxu0 0.0
    %1881 = vmatpush.msra.mxu0 0.0
    %1882 = vmatpush.msra.mxu0 0.0
    %1883 = vmatpush.msra.mxu0 0.0
    %1884 = vmatpush.msra.mxu0 %v1808
    %1885 = vmatpush.msra.mxu0 %v1805
    %1886 = vmatpush.msra.mxu0 %v1802
    %1887 = vmatpush.msra.mxu0 %v1799
    %1888 = vmatpush.msra.mxu0 %v1796
    %1889 = vmatpush.msra.mxu0 %v1793
    %1890 = vmatpush.msra.mxu0 %v1790
    %1891 = vmatpush.msra.mxu0 %v1787
    %1892 = vmatpush.msra.mxu0 %v1784
    %1893 = vmatmul.f32.gmra.mxu0 %v1812
    %v1894 = vpop.f32.mrf.mxu0
    %v1895 = vadd.f32 0.0, %v1894
    %1896 = vmatmul.f32.gmra.mxu0 %v1815
    %v1897 = vpop.f32.mrf.mxu0
    %v1898 = vadd.f32 0.0, %v1897
    %1899 = vmatmul.f32.gmra.mxu0 %v1818
    %v1900 = vpop.f32.mrf.mxu0
    %v1901 = vadd.f32 0.0, %v1900
    %1902 = vmatmul.f32.gmra.mxu0 %v1821
    %v1903 = vpop.f32.mrf.mxu0
    %v1904 = vadd.f32 0.0, %v1903
    %1905 = vmatmul.f32.gmra.mxu0 %v1824
    %v1906 = vpop.f32.mrf.mxu0
    %v1907 = vadd.f32 0.0, %v1906
    %1908 = vmatmul.f32.gmra.mxu0 %v1827
    %v1909 = vpop.f32.mrf.mxu0
    %v1910 = vadd.f32 0.0, %v1909
    %1911 = vmatmul.f32.gmra.mxu0 %v1830
    %v1912 = vpop.f32.mrf.mxu0
    %v1913 = vadd.f32 0.0, %v1912
    %1914 = vmatmul.f32.gmra.mxu0 %v1833
    %v1915 = vpop.f32.mrf.mxu0
    %v1916 = vadd.f32 0.0, %v1915
    %1917 = vmatmul.f32.gmra.mxu0 %v1836
    %v1918 = vpop.f32.mrf.mxu0
    %v1919 = vadd.f32 0.0, %v1918
    %1920 = vmatmul.f32.gmra.mxu0 %v1839
    %v1921 = vpop.f32.mrf.mxu0
    %v1922 = vadd.f32 0.0, %v1921
    %1923 = vmatmul.f32.gmra.mxu0 %v1842
    %v1924 = vpop.f32.mrf.mxu0
    %v1925 = vadd.f32 0.0, %v1924
    %1926 = vmatmul.f32.gmra.mxu0 %v1845
    %v1927 = vpop.f32.mrf.mxu0
    %v1928 = vadd.f32 0.0, %v1927
    %1929 = vmatmul.f32.gmra.mxu0 %v1848
    %v1930 = vpop.f32.mrf.mxu0
    %v1931 = vadd.f32 0.0, %v1930
    %1932 = vmatmul.f32.gmra.mxu0 %v1851
    %v1933 = vpop.f32.mrf.mxu0
    %v1934 = vadd.f32 0.0, %v1933
    %1935 = vmatmul.f32.gmra.mxu0 %v1854
    %v1936 = vpop.f32.mrf.mxu0
    %v1937 = vadd.f32 0.0, %v1936
    %1938 = vmatmul.f32.gmra.mxu0 %v1857
    %v1939 = vpop.f32.mrf.mxu0
    %v1940 = vadd.f32 0.0, %v1939
    %1941 = vmatmul.f32.gmra.mxu0 %v1860
    %v1942 = vpop.f32.mrf.mxu0
    %v1943 = vadd.f32 0.0, %v1942
    %1944 = vmatmul.f32.gmra.mxu0 %v1863
    %v1945 = vpop.f32.mrf.mxu0
    %v1946 = vadd.f32 0.0, %v1945
    %1947 = vmatmul.f32.gmra.mxu0 %v1866
    %v1948 = vpop.f32.mrf.mxu0
    %v1949 = vadd.f32 0.0, %v1948
    %1950 = vmatmul.f32.gmra.mxu0 %v1869
    %v1951 = vpop.f32.mrf.mxu0
    %v1952 = vadd.f32 0.0, %v1951
    %1953 = vmatmul.f32.gmra.mxu0 %v1872
    %v1954 = vpop.f32.mrf.mxu0
    %v1955 = vadd.f32 0.0, %v1954
    %1956 = vmatmul.f32.gmra.mxu0 %v1875
    %v1957 = vpop.f32.mrf.mxu0
    %v1958 = vadd.f32 0.0, %v1957
    %1959 = vdwg.mxu0
    %1960 = vmatpush.msra.mxu0 0.0
    %1961 = vmatpush.msra.mxu0 0.0
    %1962 = vmatpush.msra.mxu0 0.0
    %1963 = vmatpush.msra.mxu0 0.0
    %1964 = vmatpush.msra.mxu0 0.0
    %1965 = vmatpush.msra.mxu0 0.0
    %1966 = vmatpush.msra.mxu0 0.0
    %1967 = vmatpush.msra.mxu0 %v1809
    %1968 = vmatpush.msra.mxu0 %v1806
    %1969 = vmatpush.msra.mxu0 %v1803
    %1970 = vmatpush.msra.mxu0 %v1800
    %1971 = vmatpush.msra.mxu0 %v1797
    %1972 = vmatpush.msra.mxu0 %v1794
    %1973 = vmatpush.msra.mxu0 %v1791
    %1974 = vmatpush.msra.mxu0 %v1788
    %1975 = vmatpush.msra.mxu0 %v1785
    %1976 = vmatmul.f32.gmra.mxu0 %v1812
    %v1977 = vpop.f32.mrf.mxu0
    %v1978 = vadd.f32 0.0, %v1977
    %1979 = vmatmul.f32.gmra.mxu0 %v1815
    %v1980 = vpop.f32.mrf.mxu0
    %v1981 = vadd.f32 0.0, %v1980
    %1982 = vmatmul.f32.gmra.mxu0 %v1818
    %v1983 = vpop.f32.mrf.mxu0
    %v1984 = vadd.f32 0.0, %v1983
    %1985 = vmatmul.f32.gmra.mxu0 %v1821
    %v1986 = vpop.f32.mrf.mxu0
    %v1987 = vadd.f32 0.0, %v1986
    %1988 = vmatmul.f32.gmra.mxu0 %v1824
    %v1989 = vpop.f32.mrf.mxu0
    %v1990 = vadd.f32 0.0, %v1989
    %1991 = vmatmul.f32.gmra.mxu0 %v1827
    %v1992 = vpop.f32.mrf.mxu0
    %v1993 = vadd.f32 0.0, %v1992
    %1994 = vmatmul.f32.gmra.mxu0 %v1830
    %v1995 = vpop.f32.mrf.mxu0
    %v1996 = vadd.f32 0.0, %v1995
    %1997 = vmatmul.f32.gmra.mxu0 %v1833
    %v1998 = vpop.f32.mrf.mxu0
    %v1999 = vadd.f32 0.0, %v1998
    %2000 = vmatmul.f32.gmra.mxu0 %v1836
    %v2001 = vpop.f32.mrf.mxu0
    %v2002 = vadd.f32 0.0, %v2001
    %2003 = vmatmul.f32.gmra.mxu0 %v1839
    %v2004 = vpop.f32.mrf.mxu0
    %v2005 = vadd.f32 0.0, %v2004
    %2006 = vmatmul.f32.gmra.mxu0 %v1842
    %v2007 = vpop.f32.mrf.mxu0
    %v2008 = vadd.f32 0.0, %v2007
    %2009 = vmatmul.f32.gmra.mxu0 %v1845
    %v2010 = vpop.f32.mrf.mxu0
    %v2011 = vadd.f32 0.0, %v2010
    %2012 = vmatmul.f32.gmra.mxu0 %v1848
    %v2013 = vpop.f32.mrf.mxu0
    %v2014 = vadd.f32 0.0, %v2013
    %2015 = vmatmul.f32.gmra.mxu0 %v1851
    %v2016 = vpop.f32.mrf.mxu0
    %v2017 = vadd.f32 0.0, %v2016
    %2018 = vmatmul.f32.gmra.mxu0 %v1854
    %v2019 = vpop.f32.mrf.mxu0
    %v2020 = vadd.f32 0.0, %v2019
    %2021 = vmatmul.f32.gmra.mxu0 %v1857
    %v2022 = vpop.f32.mrf.mxu0
    %v2023 = vadd.f32 0.0, %v2022
    %2024 = vmatmul.f32.gmra.mxu0 %v1860
    %v2025 = vpop.f32.mrf.mxu0
    %v2026 = vadd.f32 0.0, %v2025
    %2027 = vmatmul.f32.gmra.mxu0 %v1863
    %v2028 = vpop.f32.mrf.mxu0
    %v2029 = vadd.f32 0.0, %v2028
    %2030 = vmatmul.f32.gmra.mxu0 %v1866
    %v2031 = vpop.f32.mrf.mxu0
    %v2032 = vadd.f32 0.0, %v2031
    %2033 = vmatmul.f32.gmra.mxu0 %v1869
    %v2034 = vpop.f32.mrf.mxu0
    %v2035 = vadd.f32 0.0, %v2034
    %2036 = vmatmul.f32.gmra.mxu0 %v1872
    %v2037 = vpop.f32.mrf.mxu0
    %v2038 = vadd.f32 0.0, %v2037
    %2039 = vmatmul.f32.gmra.mxu0 %v1875
    %v2040 = vpop.f32.mrf.mxu0
    %v2041 = vadd.f32 0.0, %v2040
    %2042 = vdwg.mxu0
    %2043 = vmatpush.msra.mxu0 0.0
    %2044 = vmatpush.msra.mxu0 0.0
    %2045 = vmatpush.msra.mxu0 0.0
    %2046 = vmatpush.msra.mxu0 0.0
    %2047 = vmatpush.msra.mxu0 0.0
    %2048 = vmatpush.msra.mxu0 0.0
    %2049 = vmatpush.msra.mxu0 0.0
    %2050 = vmatpush.msra.mxu0 %v1810
    %2051 = vmatpush.msra.mxu0 %v1807
    %2052 = vmatpush.msra.mxu0 %v1804
    %2053 = vmatpush.msra.mxu0 %v1801
    %2054 = vmatpush.msra.mxu0 %v1798
    %2055 = vmatpush.msra.mxu0 %v1795
    %2056 = vmatpush.msra.mxu0 %v1792
    %2057 = vmatpush.msra.mxu0 %v1789
    %2058 = vmatpush.msra.mxu0 %v1786
    %2059 = vmatmul.f32.gmra.mxu0 %v1812
    %v2060 = vpop.f32.mrf.mxu0
    %v2061 = vadd.f32 0.0, %v2060
    %2062 = vmatmul.f32.gmra.mxu0 %v1815
    %v2063 = vpop.f32.mrf.mxu0
    %v2064 = vadd.f32 0.0, %v2063
    %2065 = vmatmul.f32.gmra.mxu0 %v1818
    %v2066 = vpop.f32.mrf.mxu0
    %v2067 = vadd.f32 0.0, %v2066
    %2068 = vmatmul.f32.gmra.mxu0 %v1821
    %v2069 = vpop.f32.mrf.mxu0
    %v2070 = vadd.f32 0.0, %v2069
    %2071 = vmatmul.f32.gmra.mxu0 %v1824
    %v2072 = vpop.f32.mrf.mxu0
    %v2073 = vadd.f32 0.0, %v2072
    %2074 = vmatmul.f32.gmra.mxu0 %v1827
    %v2075 = vpop.f32.mrf.mxu0
    %v2076 = vadd.f32 0.0, %v2075
    %2077 = vmatmul.f32.gmra.mxu0 %v1830
    %v2078 = vpop.f32.mrf.mxu0
    %v2079 = vadd.f32 0.0, %v2078
    %2080 = vmatmul.f32.gmra.mxu0 %v1833
    %v2081 = vpop.f32.mrf.mxu0
    %v2082 = vadd.f32 0.0, %v2081
    %2083 = vmatmul.f32.gmra.mxu0 %v1836
    %v2084 = vpop.f32.mrf.mxu0
    %v2085 = vadd.f32 0.0, %v2084
    %2086 = vmatmul.f32.gmra.mxu0 %v1839
    %v2087 = vpop.f32.mrf.mxu0
    %v2088 = vadd.f32 0.0, %v2087
    %2089 = vmatmul.f32.gmra.mxu0 %v1842
    %v2090 = vpop.f32.mrf.mxu0
    %v2091 = vadd.f32 0.0, %v2090
    %2092 = vmatmul.f32.gmra.mxu0 %v1845
    %v2093 = vpop.f32.mrf.mxu0
    %v2094 = vadd.f32 0.0, %v2093
    %2095 = vmatmul.f32.gmra.mxu0 %v1848
    %v2096 = vpop.f32.mrf.mxu0
    %v2097 = vadd.f32 0.0, %v2096
    %2098 = vmatmul.f32.gmra.mxu0 %v1851
    %v2099 = vpop.f32.mrf.mxu0
    %v2100 = vadd.f32 0.0, %v2099
    %2101 = vmatmul.f32.gmra.mxu0 %v1854
    %v2102 = vpop.f32.mrf.mxu0
    %v2103 = vadd.f32 0.0, %v2102
    %2104 = vmatmul.f32.gmra.mxu0 %v1857
    %v2105 = vpop.f32.mrf.mxu0
    %v2106 = vadd.f32 0.0, %v2105
    %2107 = vmatmul.f32.gmra.mxu0 %v1860
    %v2108 = vpop.f32.mrf.mxu0
    %v2109 = vadd.f32 0.0, %v2108
    %2110 = vmatmul.f32.gmra.mxu0 %v1863
    %v2111 = vpop.f32.mrf.mxu0
    %v2112 = vadd.f32 0.0, %v2111
    %2113 = vmatmul.f32.gmra.mxu0 %v1866
    %v2114 = vpop.f32.mrf.mxu0
    %v2115 = vadd.f32 0.0, %v2114
    %2116 = vmatmul.f32.gmra.mxu0 %v1869
    %v2117 = vpop.f32.mrf.mxu0
    %v2118 = vadd.f32 0.0, %v2117
    %2119 = vmatmul.f32.gmra.mxu0 %v1872
    %v2120 = vpop.f32.mrf.mxu0
    %v2121 = vadd.f32 0.0, %v2120
    %2122 = vmatmul.f32.gmra.mxu0 %v1875
    %v2123 = vpop.f32.mrf.mxu0
    %v2124 = vadd.f32 0.0, %v2123
    %2125 = vdwg.mxu0
    %v2126 = vadd.f32 %v1552, %v1895
    %v2127 = vadd.f32 %v1635, %v1978
    %v2128 = vadd.f32 %v1718, %v2061
    %v2129 = vadd.f32 %v1555, %v1898
    %v2130 = vadd.f32 %v1638, %v1981
    %v2131 = vadd.f32 %v1721, %v2064
    %v2132 = vadd.f32 %v1558, %v1901
    %v2133 = vadd.f32 %v1641, %v1984
    %v2134 = vadd.f32 %v1724, %v2067
    %v2135 = vadd.f32 %v1561, %v1904
    %v2136 = vadd.f32 %v1644, %v1987
    %v2137 = vadd.f32 %v1727, %v2070
    %v2138 = vadd.f32 %v1564, %v1907
    %v2139 = vadd.f32 %v1647, %v1990
    %v2140 = vadd.f32 %v1730, %v2073
    %v2141 = vadd.f32 %v1567, %v1910
    %v2142 = vadd.f32 %v1650, %v1993
    %v2143 = vadd.f32 %v1733, %v2076
    %v2144 = vadd.f32 %v1570, %v1913
    %v2145 = vadd.f32 %v1653, %v1996
    %v2146 = vadd.f32 %v1736, %v2079
    %v2147 = vadd.f32 %v1573, %v1916
    %v2148 = vadd.f32 %v1656, %v1999
    %v2149 = vadd.f32 %v1739, %v2082
    %v2150 = vadd.f32 %v1576, %v1919
    %v2151 = vadd.f32 %v1659, %v2002
    %v2152 = vadd.f32 %v1742, %v2085
    %v2153 = vadd.f32 %v1579, %v1922
    %v2154 = vadd.f32 %v1662, %v2005
    %v2155 = vadd.f32 %v1745, %v2088
    %v2156 = vadd.f32 %v1582, %v1925
    %v2157 = vadd.f32 %v1665, %v2008
    %v2158 = vadd.f32 %v1748, %v2091
    %v2159 = vadd.f32 %v1585, %v1928
    %v2160 = vadd.f32 %v1668, %v2011
    %v2161 = vadd.f32 %v1751, %v2094
    %v2162 = vadd.f32 %v1588, %v1931
    %v2163 = vadd.f32 %v1671, %v2014
    %v2164 = vadd.f32 %v1754, %v2097
    %v2165 = vadd.f32 %v1591, %v1934
    %v2166 = vadd.f32 %v1674, %v2017
    %v2167 = vadd.f32 %v1757, %v2100
    %v2168 = vadd.f32 %v1594, %v1937
    %v2169 = vadd.f32 %v1677, %v2020
    %v2170 = vadd.f32 %v1760, %v2103
    %v2171 = vadd.f32 %v1597, %v1940
    %v2172 = vadd.f32 %v1680, %v2023
    %v2173 = vadd.f32 %v1763, %v2106
    %v2174 = vadd.f32 %v1600, %v1943
    %v2175 = vadd.f32 %v1683, %v2026
    %v2176 = vadd.f32 %v1766, %v2109
    %v2177 = vadd.f32 %v1603, %v1946
    %v2178 = vadd.f32 %v1686, %v2029
    %v2179 = vadd.f32 %v1769, %v2112
    %v2180 = vadd.f32 %v1606, %v1949
    %v2181 = vadd.f32 %v1689, %v2032
    %v2182 = vadd.f32 %v1772, %v2115
    %v2183 = vadd.f32 %v1609, %v1952
    %v2184 = vadd.f32 %v1692, %v2035
    %v2185 = vadd.f32 %v1775, %v2118
    %v2186 = vadd.f32 %v1612, %v1955
    %v2187 = vadd.f32 %v1695, %v2038
    %v2188 = vadd.f32 %v1778, %v2121
    %v2189 = vadd.f32 %v1615, %v1958
    %v2190 = vadd.f32 %v1698, %v2041
    %v2191 = vadd.f32 %v1781, %v2124
    %v2192 = vld [vmem:[%s3] sm:$0x7]
    %v2194 = vperm.slane %v2192, 0
    %v2195 = vperm.slane %v2192, 1
    %v2196 = vperm.slane %v2192, 2
    %v2200 = vadd.f32 %v2126, %v2194
    %v2201 = vadd.f32 %v2127, %v2195
    %v2202 = vadd.f32 %v2128, %v2196
    %v2203 = vadd.f32 %v2129, %v2194
    %v2204 = vadd.f32 %v2130, %v2195
    %v2205 = vadd.f32 %v2131, %v2196
    %v2206 = vadd.f32 %v2132, %v2194
    %v2207 = vadd.f32 %v2133, %v2195
    %v2208 = vadd.f32 %v2134, %v2196
    %v2209 = vadd.f32 %v2135, %v2194
    %v2210 = vadd.f32 %v2136, %v2195
    %v2211 = vadd.f32 %v2137, %v2196
    %v2212 = vadd.f32 %v2138, %v2194
    %v2213 = vadd.f32 %v2139, %v2195
    %v2214 = vadd.f32 %v2140, %v2196
    %v2215 = vadd.f32 %v2141, %v2194
    %v2216 = vadd.f32 %v2142, %v2195
    %v2217 = vadd.f32 %v2143, %v2196
    %v2218 = vadd.f32 %v2144, %v2194
    %v2219 = vadd.f32 %v2145, %v2195
    %v2220 = vadd.f32 %v2146, %v2196
    %v2221 = vadd.f32 %v2147, %v2194
    %v2222 = vadd.f32 %v2148, %v2195
    %v2223 = vadd.f32 %v2149, %v2196
    %v2224 = vadd.f32 %v2150, %v2194
    %v2225 = vadd.f32 %v2151, %v2195
    %v2226 = vadd.f32 %v2152, %v2196
    %v2227 = vadd.f32 %v2153, %v2194
    %v2228 = vadd.f32 %v2154, %v2195
    %v2229 = vadd.f32 %v2155, %v2196
    %v2230 = vadd.f32 %v2156, %v2194
    %v2231 = vadd.f32 %v2157, %v2195
    %v2232 = vadd.f32 %v2158, %v2196
    %v2233 = vadd.f32 %v2159, %v2194
    %v2234 = vadd.f32 %v2160, %v2195
    %v2235 = vadd.f32 %v2161, %v2196
    %v2236 = vadd.f32 %v2162, %v2194
    %v2237 = vadd.f32 %v2163, %v2195
    %v2238 = vadd.f32 %v2164, %v2196
    %v2239 = vadd.f32 %v2165, %v2194
    %v2240 = vadd.f32 %v2166, %v2195
    %v2241 = vadd.f32 %v2167, %v2196
    %v2242 = vadd.f32 %v2168, %v2194
    %v2243 = vadd.f32 %v2169, %v2195
    %v2244 = vadd.f32 %v2170, %v2196
    %v2245 = vadd.f32 %v2171, %v2194
    %v2246 = vadd.f32 %v2172, %v2195
    %v2247 = vadd.f32 %v2173, %v2196
    %v2248 = vadd.f32 %v2174, %v2194
    %v2249 = vadd.f32 %v2175, %v2195
    %v2250 = vadd.f32 %v2176, %v2196
    %v2251 = vadd.f32 %v2177, %v2194
    %v2252 = vadd.f32 %v2178, %v2195
    %v2253 = vadd.f32 %v2179, %v2196
    %v2254 = vadd.f32 %v2180, %v2194
    %v2255 = vadd.f32 %v2181, %v2195
    %v2256 = vadd.f32 %v2182, %v2196
    %v2257 = vadd.f32 %v2183, %v2194
    %v2258 = vadd.f32 %v2184, %v2195
    %v2259 = vadd.f32 %v2185, %v2196
    %v2260 = vadd.f32 %v2186, %v2194
    %v2261 = vadd.f32 %v2187, %v2195
    %v2262 = vadd.f32 %v2188, %v2196
    %v2263 = vadd.f32 %v2189, %v2194
    %v2264 = vadd.f32 %v2190, %v2195
    %v2265 = vadd.f32 %v2191, %v2196
    %v2266 = vmax.f32 %v2200, 0.0
    %v2267 = vmax.f32 %v2201, 0.0
    %v2268 = vmax.f32 %v2202, 0.0
    %v2269 = vmax.f32 %v2203, 0.0
    %v2270 = vmax.f32 %v2204, 0.0
    %v2271 = vmax.f32 %v2205, 0.0
    %v2272 = vmax.f32 %v2206, 0.0
    %v2273 = vmax.f32 %v2207, 0.0
    %v2274 = vmax.f32 %v2208, 0.0
    %v2275 = vmax.f32 %v2209, 0.0
    %v2276 = vmax.f32 %v2210, 0.0
    %v2277 = vmax.f32 %v2211, 0.0
    %v2278 = vmax.f32 %v2212, 0.0
    %v2279 = vmax.f32 %v2213, 0.0
    %v2280 = vmax.f32 %v2214, 0.0
    %v2281 = vmax.f32 %v2215, 0.0
    %v2282 = vmax.f32 %v2216, 0.0
    %v2283 = vmax.f32 %v2217, 0.0
    %v2284 = vmax.f32 %v2218, 0.0
    %v2285 = vmax.f32 %v2219, 0.0
    %v2286 = vmax.f32 %v2220, 0.0
    %v2287 = vmax.f32 %v2221, 0.0
    %v2288 = vmax.f32 %v2222, 0.0
    %v2289 = vmax.f32 %v2223, 0.0
    %v2290 = vmax.f32 %v2224, 0.0
    %v2291 = vmax.f32 %v2225, 0.0
    %v2292 = vmax.f32 %v2226, 0.0
    %v2293 = vmax.f32 %v2227, 0.0
    %v2294 = vmax.f32 %v2228, 0.0
    %v2295 = vmax.f32 %v2229, 0.0
    %v2296 = vmax.f32 %v2230, 0.0
    %v2297 = vmax.f32 %v2231, 0.0
    %v2298 = vmax.f32 %v2232, 0.0
    %v2299 = vmax.f32 %v2233, 0.0
    %v2300 = vmax.f32 %v2234, 0.0
    %v2301 = vmax.f32 %v2235, 0.0
    %v2302 = vmax.f32 %v2236, 0.0
    %v2303 = vmax.f32 %v2237, 0.0
    %v2304 = vmax.f32 %v2238, 0.0
    %v2305 = vmax.f32 %v2239, 0.0
    %v2306 = vmax.f32 %v2240, 0.0
    %v2307 = vmax.f32 %v2241, 0.0
    %v2308 = vmax.f32 %v2242, 0.0
    %v2309 = vmax.f32 %v2243, 0.0
    %v2310 = vmax.f32 %v2244, 0.0
    %v2311 = vmax.f32 %v2245, 0.0
    %v2312 = vmax.f32 %v2246, 0.0
    %v2313 = vmax.f32 %v2247, 0.0
    %v2314 = vmax.f32 %v2248, 0.0
    %v2315 = vmax.f32 %v2249, 0.0
    %v2316 = vmax.f32 %v2250, 0.0
    %v2317 = vmax.f32 %v2251, 0.0
    %v2318 = vmax.f32 %v2252, 0.0
    %v2319 = vmax.f32 %v2253, 0.0
    %v2320 = vmax.f32 %v2254, 0.0
    %v2321 = vmax.f32 %v2255, 0.0
    %v2322 = vmax.f32 %v2256, 0.0
    %v2323 = vmax.f32 %v2257, 0.0
    %v2324 = vmax.f32 %v2258, 0.0
    %v2325 = vmax.f32 %v2259, 0.0
    %v2326 = vmax.f32 %v2260, 0.0
    %v2327 = vmax.f32 %v2261, 0.0
    %v2328 = vmax.f32 %v2262, 0.0
    %v2329 = vmax.f32 %v2263, 0.0
    %v2330 = vmax.f32 %v2264, 0.0
    %v2331 = vmax.f32 %v2265, 0.0
    %v2332 = vmin.f32 %v2200, 0.0
    %v2333 = vmin.f32 %v2201, 0.0
    %v2334 = vmin.f32 %v2202, 0.0
    %v2335 = vmin.f32 %v2203, 0.0
    %v2336 = vmin.f32 %v2204, 0.0
    %v2337 = vmin.f32 %v2205, 0.0
    %v2338 = vmin.f32 %v2206, 0.0
    %v2339 = vmin.f32 %v2207, 0.0
    %v2340 = vmin.f32 %v2208, 0.0
    %v2341 = vmin.f32 %v2209, 0.0
    %v2342 = vmin.f32 %v2210, 0.0
    %v2343 = vmin.f32 %v2211, 0.0
    %v2344 = vmin.f32 %v2212, 0.0
    %v2345 = vmin.f32 %v2213, 0.0
    %v2346 = vmin.f32 %v2214, 0.0
    %v2347 = vmin.f32 %v2215, 0.0
    %v2348 = vmin.f32 %v2216, 0.0
    %v2349 = vmin.f32 %v2217, 0.0
    %v2350 = vmin.f32 %v2218, 0.0
    %v2351 = vmin.f32 %v2219, 0.0
    %v2352 = vmin.f32 %v2220, 0.0
    %v2353 = vmin.f32 %v2221, 0.0
    %v2354 = vmin.f32 %v2222, 0.0
    %v2355 = vmin.f32 %v2223, 0.0
    %v2356 = vmin.f32 %v2224, 0.0
    %v2357 = vmin.f32 %v2225, 0.0
    %v2358 = vmin.f32 %v2226, 0.0
    %v2359 = vmin.f32 %v2227, 0.0
    %v2360 = vmin.f32 %v2228, 0.0
    %v2361 = vmin.f32 %v2229, 0.0
    %v2362 = vmin.f32 %v2230, 0.0
    %v2363 = vmin.f32 %v2231, 0.0
    %v2364 = vmin.f32 %v2232, 0.0
    %v2365 = vmin.f32 %v2233, 0.0
    %v2366 = vmin.f32 %v2234, 0.0
    %v2367 = vmin.f32 %v2235, 0.0
    %v2368 = vmin.f32 %v2236, 0.0
    %v2369 = vmin.f32 %v2237, 0.0
    %v2370 = vmin.f32 %v2238, 0.0
    %v2371 = vmin.f32 %v2239, 0.0
    %v2372 = vmin.f32 %v2240, 0.0
    %v2373 = vmin.f32 %v2241, 0.0
    %v2374 = vmin.f32 %v2242, 0.0
    %v2375 = vmin.f32 %v2243, 0.0
    %v2376 = vmin.f32 %v2244, 0.0
    %v2377 = vmin.f32 %v2245, 0.0
    %v2378 = vmin.f32 %v2246, 0.0
    %v2379 = vmin.f32 %v2247, 0.0
    %v2380 = vmin.f32 %v2248, 0.0
    %v2381 = vmin.f32 %v2249, 0.0
    %v2382 = vmin.f32 %v2250, 0.0
    %v2383 = vmin.f32 %v2251, 0.0
    %v2384 = vmin.f32 %v2252, 0.0
    %v2385 = vmin.f32 %v2253, 0.0
    %v2386 = vmin.f32 %v2254, 0.0
    %v2387 = vmin.f32 %v2255, 0.0
    %v2388 = vmin.f32 %v2256, 0.0
    %v2389 = vmin.f32 %v2257, 0.0
    %v2390 = vmin.f32 %v2258, 0.0
    %v2391 = vmin.f32 %v2259, 0.0
    %v2392 = vmin.f32 %v2260, 0.0
    %v2393 = vmin.f32 %v2261, 0.0
    %v2394 = vmin.f32 %v2262, 0.0
    %v2395 = vmin.f32 %v2263, 0.0
    %v2396 = vmin.f32 %v2264, 0.0
    %v2397 = vmin.f32 %v2265, 0.0
    %v2398 = vstv %s238
    %v2399 = vmul.f32 %v2398, %v2332
    %v2400 = vmul.f32 %v2398, %v2333
    %v2401 = vmul.f32 %v2398, %v2334
    %v2402 = vmul.f32 %v2398, %v2335
    %v2403 = vmul.f32 %v2398, %v2336
    %v2404 = vmul.f32 %v2398, %v2337
    %v2405 = vmul.f32 %v2398, %v2338
    %v2406 = vmul.f32 %v2398, %v2339
    %v2407 = vmul.f32 %v2398, %v2340
    %v2408 = vmul.f32 %v2398, %v2341
    %v2409 = vmul.f32 %v2398, %v2342
    %v2410 = vmul.f32 %v2398, %v2343
    %v2411 = vmul.f32 %v2398, %v2344
    %v2412 = vmul.f32 %v2398, %v2345
    %v2413 = vmul.f32 %v2398, %v2346
    %v2414 = vmul.f32 %v2398, %v2347
    %v2415 = vmul.f32 %v2398, %v2348
    %v2416 = vmul.f32 %v2398, %v2349
    %v2417 = vmul.f32 %v2398, %v2350
    %v2418 = vmul.f32 %v2398, %v2351
    %v2419 = vmul.f32 %v2398, %v2352
    %v2420 = vmul.f32 %v2398, %v2353
    %v2421 = vmul.f32 %v2398, %v2354
    %v2422 = vmul.f32 %v2398, %v2355
    %v2423 = vmul.f32 %v2398, %v2356
    %v2424 = vmul.f32 %v2398, %v2357
    %v2425 = vmul.f32 %v2398, %v2358
    %v2426 = vmul.f32 %v2398, %v2359
    %v2427 = vmul.f32 %v2398, %v2360
    %v2428 = vmul.f32 %v2398, %v2361
    %v2429 = vmul.f32 %v2398, %v2362
    %v2430 = vmul.f32 %v2398, %v2363
    %v2431 = vmul.f32 %v2398, %v2364
    %v2432 = vmul.f32 %v2398, %v2365
    %v2433 = vmul.f32 %v2398, %v2366
    %v2434 = vmul.f32 %v2398, %v2367
    %v2435 = vmul.f32 %v2398, %v2368
    %v2436 = vmul.f32 %v2398, %v2369
    %v2437 = vmul.f32 %v2398, %v2370
    %v2438 = vmul.f32 %v2398, %v2371
    %v2439 = vmul.f32 %v2398, %v2372
    %v2440 = vmul.f32 %v2398, %v2373
    %v2441 = vmul.f32 %v2398, %v2374
    %v2442 = vmul.f32 %v2398, %v2375
    %v2443 = vmul.f32 %v2398, %v2376
    %v2444 = vmul.f32 %v2398, %v2377
    %v2445 = vmul.f32 %v2398, %v2378
    %v2446 = vmul.f32 %v2398, %v2379
    %v2447 = vmul.f32 %v2398, %v2380
    %v2448 = vmul.f32 %v2398, %v2381
    %v2449 = vmul.f32 %v2398, %v2382
    %v2450 = vmul.f32 %v2398, %v2383
    %v2451 = vmul.f32 %v2398, %v2384
    %v2452 = vmul.f32 %v2398, %v2385
    %v2453 = vmul.f32 %v2398, %v2386
    %v2454 = vmul.f32 %v2398, %v2387
    %v2455 = vmul.f32 %v2398, %v2388
    %v2456 = vmul.f32 %v2398, %v2389
    %v2457 = vmul.f32 %v2398, %v2390
    %v2458 = vmul.f32 %v2398, %v2391
    %v2459 = vmul.f32 %v2398, %v2392
    %v2460 = vmul.f32 %v2398, %v2393
    %v2461 = vmul.f32 %v2398, %v2394
    %v2462 = vmul.f32 %v2398, %v2395
    %v2463 = vmul.f32 %v2398, %v2396
    %v2464 = vmul.f32 %v2398, %v2397
    %v2465 = vadd.f32 %v2266, %v2399
    %v2466 = vadd.f32 %v2267, %v2400
    %v2467 = vadd.f32 %v2268, %v2401
    %v2468 = vadd.f32 %v2269, %v2402
    %v2469 = vadd.f32 %v2270, %v2403
    %v2470 = vadd.f32 %v2271, %v2404
    %v2471 = vadd.f32 %v2272, %v2405
    %v2472 = vadd.f32 %v2273, %v2406
    %v2473 = vadd.f32 %v2274, %v2407
    %v2474 = vadd.f32 %v2275, %v2408
    %v2475 = vadd.f32 %v2276, %v2409
    %v2476 = vadd.f32 %v2277, %v2410
    %v2477 = vadd.f32 %v2278, %v2411
    %v2478 = vadd.f32 %v2279, %v2412
    %v2479 = vadd.f32 %v2280, %v2413
    %v2480 = vadd.f32 %v2281, %v2414
    %v2481 = vadd.f32 %v2282, %v2415
    %v2482 = vadd.f32 %v2283, %v2416
    %v2483 = vadd.f32 %v2284, %v2417
    %v2484 = vadd.f32 %v2285, %v2418
    %v2485 = vadd.f32 %v2286, %v2419
    %v2486 = vadd.f32 %v2287, %v2420
    %v2487 = vadd.f32 %v2288, %v2421
    %v2488 = vadd.f32 %v2289, %v2422
    %v2489 = vadd.f32 %v2290, %v2423
    %v2490 = vadd.f32 %v2291, %v2424
    %v2491 = vadd.f32 %v2292, %v2425
    %v2492 = vadd.f32 %v2293, %v2426
    %v2493 = vadd.f32 %v2294, %v2427
    %v2494 = vadd.f32 %v2295, %v2428
    %v2495 = vadd.f32 %v2296, %v2429
    %v2496 = vadd.f32 %v2297, %v2430
    %v2497 = vadd.f32 %v2298, %v2431
    %v2498 = vadd.f32 %v2299, %v2432
    %v2499 = vadd.f32 %v2300, %v2433
    %v2500 = vadd.f32 %v2301, %v2434
    %v2501 = vadd.f32 %v2302, %v2435
    %v2502 = vadd.f32 %v2303, %v2436
    %v2503 = vadd.f32 %v2304, %v2437
    %v2504 = vadd.f32 %v2305, %v2438
    %v2505 = vadd.f32 %v2306, %v2439
    %v2506 = vadd.f32 %v2307, %v2440
    %v2507 = vadd.f32 %v2308, %v2441
    %v2508 = vadd.f32 %v2309, %v2442
    %v2509 = vadd.f32 %v2310, %v2443
    %v2510 = vadd.f32 %v2311, %v2444
    %v2511 = vadd.f32 %v2312, %v2445
    %v2512 = vadd.f32 %v2313, %v2446
    %v2513 = vadd.f32 %v2314, %v2447
    %v2514 = vadd.f32 %v2315, %v2448
    %v2515 = vadd.f32 %v2316, %v2449
    %v2516 = vadd.f32 %v2317, %v2450
    %v2517 = vadd.f32 %v2318, %v2451
    %v2518 = vadd.f32 %v2319, %v2452
    %v2519 = vadd.f32 %v2320, %v2453
    %v2520 = vadd.f32 %v2321, %v2454
    %v2521 = vadd.f32 %v2322, %v2455
    %v2522 = vadd.f32 %v2323, %v2456
    %v2523 = vadd.f32 %v2324, %v2457
    %v2524 = vadd.f32 %v2325, %v2458
    %v2525 = vadd.f32 %v2326, %v2459
    %v2526 = vadd.f32 %v2327, %v2460
    %v2527 = vadd.f32 %v2328, %v2461
    %v2528 = vadd.f32 %v2329, %v2462
    %v2529 = vadd.f32 %v2330, %v2463
    %v2530 = vadd.f32 %v2331, %v2464
    %s2531 = scalar_lea.vmem [#allocation5], 216
    %v2532 = vld [vmem:[%s2531] sm:$0xff]
    %v2533 = vld [vmem:[%s2531 + $0x8] sm:$0xff]
    %v2534 = vld [vmem:[%s2531 + $0x10] sm:$0xff]
    %v2535 = vld [vmem:[%s2531 + $0x18] sm:$0xff]
    %v2536 = vld [vmem:[%s2531 + $0x20] sm:$0xff]
    %v2537 = vld [vmem:[%s2531 + $0x28] sm:$0xff]
    %v2538 = vld [vmem:[%s2531 + $0x30] sm:$0xff]
    %v2539 = vld [vmem:[%s2531 + $0x38] sm:$0xff]
    %v2540 = vld [vmem:[%s2531 + $0x40] sm:$0xff]
    %v2541 = vld [vmem:[%s2531 + $0x48] sm:$0xff]
    %v2542 = vld [vmem:[%s2531 + $0x50] sm:$0xff]
    %v2543 = vld [vmem:[%s2531 + $0x58] sm:$0xff]
    %v2544 = vld [vmem:[%s2531 + $0x60] sm:$0xff]
    %v2545 = vld [vmem:[%s2531 + $0x68] sm:$0xff]
    %v2546 = vld [vmem:[%s2531 + $0x70] sm:$0xff]
    %v2547 = vld [vmem:[%s2531 + $0x78] sm:$0xff]
    %v2548 = vld [vmem:[%s2531 + $0x80] sm:$0xff]
    %v2549 = vld [vmem:[%s2531 + $0x88] sm:$0xff]
    %v2550 = vld [vmem:[%s2531 + $0x90] sm:$0xff]
    %v2551 = vld [vmem:[%s2531 + $0x98] sm:$0xff]
    %v2552 = vld [vmem:[%s2531 + $0xa0] sm:$0xff]
    %v2553 = vld [vmem:[%s2531 + $0xa8] sm:$0xff]
    %v2554 = vld [vmem:[%s2531 + $0xb0] sm:$0xff]
    %v2555 = vld [vmem:[%s2531 + $0xb8] sm:$0xff]
    %v2556 = vld [vmem:[%s2531 + $0xc0] sm:$0xff]
    %v2557 = vld [vmem:[%s2531 + $0xc8] sm:$0xff]
    %v2558 = vld [vmem:[%s2531 + $0xd0] sm:$0xff]
    %s2559 = scalar_lea.vmem [#allocation5], 864
    %v2560 = vld [vmem:[%s2559] sm:$0xff]
    %v2561 = vld [vmem:[%s2559 + $0x8] sm:$0xff]
    %v2562 = vld [vmem:[%s2559 + $0x10] sm:$0xff]
    %v2563 = vld [vmem:[%s2559 + $0x18] sm:$0xff]
    %v2564 = vld [vmem:[%s2559 + $0x20] sm:$0xff]
    %v2565 = vld [vmem:[%s2559 + $0x28] sm:$0xff]
    %v2566 = vld [vmem:[%s2559 + $0x30] sm:$0xff]
    %v2567 = vld [vmem:[%s2559 + $0x38] sm:$0xff]
    %v2568 = vld [vmem:[%s2559 + $0x40] sm:$0xff]
    %v2569 = vld [vmem:[%s2559 + $0x48] sm:$0xff]
    %v2570 = vld [vmem:[%s2559 + $0x50] sm:$0xff]
    %v2571 = vld [vmem:[%s2559 + $0x58] sm:$0xff]
    %v2572 = vld [vmem:[%s2559 + $0x60] sm:$0xff]
    %v2573 = vld [vmem:[%s2559 + $0x68] sm:$0xff]
    %v2574 = vld [vmem:[%s2559 + $0x70] sm:$0xff]
    %v2575 = vld [vmem:[%s2559 + $0x78] sm:$0xff]
    %v2576 = vld [vmem:[%s2559 + $0x80] sm:$0xff]
    %v2577 = vld [vmem:[%s2559 + $0x88] sm:$0xff]
    %v2578 = vld [vmem:[%s2559 + $0x90] sm:$0xff]
    %v2579 = vld [vmem:[%s2559 + $0x98] sm:$0xff]
    %v2580 = vld [vmem:[%s2559 + $0xa0] sm:$0xff]
    %v2581 = vld [vmem:[%s2559 + $0xa8] sm:$0xff]
    %v2582 = vld [vmem:[%s2559 + $0xb0] sm:$0xff]
    %v2583 = vld [vmem:[%s2559 + $0xb8] sm:$0xff]
    %v2584 = vld [vmem:[%s2559 + $0xc0] sm:$0xff]
    %v2585 = vld [vmem:[%s2559 + $0xc8] sm:$0xff]
    %v2586 = vld [vmem:[%s2559 + $0xd0] sm:$0xff]
    %2587 = vmatpush.msra.mxu0 0.0
    %2588 = vmatpush.msra.mxu0 0.0
    %2589 = vmatpush.msra.mxu0 0.0
    %2590 = vmatpush.msra.mxu0 0.0
    %2591 = vmatpush.msra.mxu0 0.0
    %2592 = vmatpush.msra.mxu0 0.0
    %2593 = vmatpush.msra.mxu0 0.0
    %2594 = vmatpush.msra.mxu0 %v2584
    %2595 = vmatpush.msra.mxu0 %v2581
    %2596 = vmatpush.msra.mxu0 %v2578
    %2597 = vmatpush.msra.mxu0 %v2575
    %2598 = vmatpush.msra.mxu0 %v2572
    %2599 = vmatpush.msra.mxu0 %v2569
    %2600 = vmatpush.msra.mxu0 %v2566
    %2601 = vmatpush.msra.mxu0 %v2563
    %2602 = vmatpush.msra.mxu0 %v2560
    %2603 = vmatmul.f32.gmra.mxu0 %v1154
    %v2604 = vpop.f32.mrf.mxu0
    %v2605 = vadd.f32 0.0, %v2604
    %2606 = vmatmul.f32.gmra.mxu0 %v1157
    %v2607 = vpop.f32.mrf.mxu0
    %v2608 = vadd.f32 0.0, %v2607
    %2609 = vmatmul.f32.gmra.mxu0 %v1160
    %v2610 = vpop.f32.mrf.mxu0
    %v2611 = vadd.f32 0.0, %v2610
    %2612 = vmatmul.f32.gmra.mxu0 %v1163
    %v2613 = vpop.f32.mrf.mxu0
    %v2614 = vadd.f32 0.0, %v2613
    %2615 = vmatmul.f32.gmra.mxu0 %v1166
    %v2616 = vpop.f32.mrf.mxu0
    %v2617 = vadd.f32 0.0, %v2616
    %2618 = vmatmul.f32.gmra.mxu0 %v1169
    %v2619 = vpop.f32.mrf.mxu0
    %v2620 = vadd.f32 0.0, %v2619
    %2621 = vmatmul.f32.gmra.mxu0 %v1172
    %v2622 = vpop.f32.mrf.mxu0
    %v2623 = vadd.f32 0.0, %v2622
    %2624 = vmatmul.f32.gmra.mxu0 %v1175
    %v2625 = vpop.f32.mrf.mxu0
    %v2626 = vadd.f32 0.0, %v2625
    %2627 = vmatmul.f32.gmra.mxu0 %v1178
    %v2628 = vpop.f32.mrf.mxu0
    %v2629 = vadd.f32 0.0, %v2628
    %2630 = vmatmul.f32.gmra.mxu0 %v1181
    %v2631 = vpop.f32.mrf.mxu0
    %v2632 = vadd.f32 0.0, %v2631
    %2633 = vmatmul.f32.gmra.mxu0 %v1184
    %v2634 = vpop.f32.mrf.mxu0
    %v2635 = vadd.f32 0.0, %v2634
    %2636 = vmatmul.f32.gmra.mxu0 %v1187
    %v2637 = vpop.f32.mrf.mxu0
    %v2638 = vadd.f32 0.0, %v2637
    %2639 = vmatmul.f32.gmra.mxu0 %v1190
    %v2640 = vpop.f32.mrf.mxu0
    %v2641 = vadd.f32 0.0, %v2640
    %2642 = vmatmul.f32.gmra.mxu0 %v1193
    %v2643 = vpop.f32.mrf.mxu0
    %v2644 = vadd.f32 0.0, %v2643
    %2645 = vmatmul.f32.gmra.mxu0 %v1196
    %v2646 = vpop.f32.mrf.mxu0
    %v2647 = vadd.f32 0.0, %v2646
    %2648 = vmatmul.f32.gmra.mxu0 %v1199
    %v2649 = vpop.f32.mrf.mxu0
    %v2650 = vadd.f32 0.0, %v2649
    %2651 = vmatmul.f32.gmra.mxu0 %v1202
    %v2652 = vpop.f32.mrf.mxu0
    %v2653 = vadd.f32 0.0, %v2652
    %2654 = vmatmul.f32.gmra.mxu0 %v1205
    %v2655 = vpop.f32.mrf.mxu0
    %v2656 = vadd.f32 0.0, %v2655
    %2657 = vmatmul.f32.gmra.mxu0 %v1208
    %v2658 = vpop.f32.mrf.mxu0
    %v2659 = vadd.f32 0.0, %v2658
    %2660 = vmatmul.f32.gmra.mxu0 %v1211
    %v2661 = vpop.f32.mrf.mxu0
    %v2662 = vadd.f32 0.0, %v2661
    %2663 = vmatmul.f32.gmra.mxu0 %v1214
    %v2664 = vpop.f32.mrf.mxu0
    %v2665 = vadd.f32 0.0, %v2664
    %2666 = vmatmul.f32.gmra.mxu0 %v1217
    %v2667 = vpop.f32.mrf.mxu0
    %v2668 = vadd.f32 0.0, %v2667
    %2669 = vdwg.mxu0
    %2670 = vmatpush.msra.mxu0 0.0
    %2671 = vmatpush.msra.mxu0 0.0
    %2672 = vmatpush.msra.mxu0 0.0
    %2673 = vmatpush.msra.mxu0 0.0
    %2674 = vmatpush.msra.mxu0 0.0
    %2675 = vmatpush.msra.mxu0 0.0
    %2676 = vmatpush.msra.mxu0 0.0
    %2677 = vmatpush.msra.mxu0 %v2585
    %2678 = vmatpush.msra.mxu0 %v2582
    %2679 = vmatpush.msra.mxu0 %v2579
    %2680 = vmatpush.msra.mxu0 %v2576
    %2681 = vmatpush.msra.mxu0 %v2573
    %2682 = vmatpush.msra.mxu0 %v2570
    %2683 = vmatpush.msra.mxu0 %v2567
    %2684 = vmatpush.msra.mxu0 %v2564
    %2685 = vmatpush.msra.mxu0 %v2561
    %2686 = vmatmul.f32.gmra.mxu0 %v1154
    %v2687 = vpop.f32.mrf.mxu0
    %v2688 = vadd.f32 0.0, %v2687
    %2689 = vmatmul.f32.gmra.mxu0 %v1157
    %v2690 = vpop.f32.mrf.mxu0
    %v2691 = vadd.f32 0.0, %v2690
    %2692 = vmatmul.f32.gmra.mxu0 %v1160
    %v2693 = vpop.f32.mrf.mxu0
    %v2694 = vadd.f32 0.0, %v2693
    %2695 = vmatmul.f32.gmra.mxu0 %v1163
    %v2696 = vpop.f32.mrf.mxu0
    %v2697 = vadd.f32 0.0, %v2696
    %2698 = vmatmul.f32.gmra.mxu0 %v1166
    %v2699 = vpop.f32.mrf.mxu0
    %v2700 = vadd.f32 0.0, %v2699
    %2701 = vmatmul.f32.gmra.mxu0 %v1169
    %v2702 = vpop.f32.mrf.mxu0
    %v2703 = vadd.f32 0.0, %v2702
    %2704 = vmatmul.f32.gmra.mxu0 %v1172
    %v2705 = vpop.f32.mrf.mxu0
    %v2706 = vadd.f32 0.0, %v2705
    %2707 = vmatmul.f32.gmra.mxu0 %v1175
    %v2708 = vpop.f32.mrf.mxu0
    %v2709 = vadd.f32 0.0, %v2708
    %2710 = vmatmul.f32.gmra.mxu0 %v1178
    %v2711 = vpop.f32.mrf.mxu0
    %v2712 = vadd.f32 0.0, %v2711
    %2713 = vmatmul.f32.gmra.mxu0 %v1181
    %v2714 = vpop.f32.mrf.mxu0
    %v2715 = vadd.f32 0.0, %v2714
    %2716 = vmatmul.f32.gmra.mxu0 %v1184
    %v2717 = vpop.f32.mrf.mxu0
    %v2718 = vadd.f32 0.0, %v2717
    %2719 = vmatmul.f32.gmra.mxu0 %v1187
    %v2720 = vpop.f32.mrf.mxu0
    %v2721 = vadd.f32 0.0, %v2720
    %2722 = vmatmul.f32.gmra.mxu0 %v1190
    %v2723 = vpop.f32.mrf.mxu0
    %v2724 = vadd.f32 0.0, %v2723
    %2725 = vmatmul.f32.gmra.mxu0 %v1193
    %v2726 = vpop.f32.mrf.mxu0
    %v2727 = vadd.f32 0.0, %v2726
    %2728 = vmatmul.f32.gmra.mxu0 %v1196
    %v2729 = vpop.f32.mrf.mxu0
    %v2730 = vadd.f32 0.0, %v2729
    %2731 = vmatmul.f32.gmra.mxu0 %v1199
    %v2732 = vpop.f32.mrf.mxu0
    %v2733 = vadd.f32 0.0, %v2732
    %2734 = vmatmul.f32.gmra.mxu0 %v1202
    %v2735 = vpop.f32.mrf.mxu0
    %v2736 = vadd.f32 0.0, %v2735
    %2737 = vmatmul.f32.gmra.mxu0 %v1205
    %v2738 = vpop.f32.mrf.mxu0
    %v2739 = vadd.f32 0.0, %v2738
    %2740 = vmatmul.f32.gmra.mxu0 %v1208
    %v2741 = vpop.f32.mrf.mxu0
    %v2742 = vadd.f32 0.0, %v2741
    %2743 = vmatmul.f32.gmra.mxu0 %v1211
    %v2744 = vpop.f32.mrf.mxu0
    %v2745 = vadd.f32 0.0, %v2744
    %2746 = vmatmul.f32.gmra.mxu0 %v1214
    %v2747 = vpop.f32.mrf.mxu0
    %v2748 = vadd.f32 0.0, %v2747
    %2749 = vmatmul.f32.gmra.mxu0 %v1217
    %v2750 = vpop.f32.mrf.mxu0
    %v2751 = vadd.f32 0.0, %v2750
    %2752 = vdwg.mxu0
    %2753 = vmatpush.msra.mxu0 0.0
    %2754 = vmatpush.msra.mxu0 0.0
    %2755 = vmatpush.msra.mxu0 0.0
    %2756 = vmatpush.msra.mxu0 0.0
    %2757 = vmatpush.msra.mxu0 0.0
    %2758 = vmatpush.msra.mxu0 0.0
    %2759 = vmatpush.msra.mxu0 0.0
    %2760 = vmatpush.msra.mxu0 %v2586
    %2761 = vmatpush.msra.mxu0 %v2583
    %2762 = vmatpush.msra.mxu0 %v2580
    %2763 = vmatpush.msra.mxu0 %v2577
    %2764 = vmatpush.msra.mxu0 %v2574
    %2765 = vmatpush.msra.mxu0 %v2571
    %2766 = vmatpush.msra.mxu0 %v2568
    %2767 = vmatpush.msra.mxu0 %v2565
    %2768 = vmatpush.msra.mxu0 %v2562
    %2769 = vmatmul.f32.gmra.mxu0 %v1154
    %v2770 = vpop.f32.mrf.mxu0
    %v2771 = vadd.f32 0.0, %v2770
    %2772 = vmatmul.f32.gmra.mxu0 %v1157
    %v2773 = vpop.f32.mrf.mxu0
    %v2774 = vadd.f32 0.0, %v2773
    %2775 = vmatmul.f32.gmra.mxu0 %v1160
    %v2776 = vpop.f32.mrf.mxu0
    %v2777 = vadd.f32 0.0, %v2776
    %2778 = vmatmul.f32.gmra.mxu0 %v1163
    %v2779 = vpop.f32.mrf.mxu0
    %v2780 = vadd.f32 0.0, %v2779
    %2781 = vmatmul.f32.gmra.mxu0 %v1166
    %v2782 = vpop.f32.mrf.mxu0
    %v2783 = vadd.f32 0.0, %v2782
    %2784 = vmatmul.f32.gmra.mxu0 %v1169
    %v2785 = vpop.f32.mrf.mxu0
    %v2786 = vadd.f32 0.0, %v2785
    %2787 = vmatmul.f32.gmra.mxu0 %v1172
    %v2788 = vpop.f32.mrf.mxu0
    %v2789 = vadd.f32 0.0, %v2788
    %2790 = vmatmul.f32.gmra.mxu0 %v1175
    %v2791 = vpop.f32.mrf.mxu0
    %v2792 = vadd.f32 0.0, %v2791
    %2793 = vmatmul.f32.gmra.mxu0 %v1178
    %v2794 = vpop.f32.mrf.mxu0
    %v2795 = vadd.f32 0.0, %v2794
    %2796 = vmatmul.f32.gmra.mxu0 %v1181
    %v2797 = vpop.f32.mrf.mxu0
    %v2798 = vadd.f32 0.0, %v2797
    %2799 = vmatmul.f32.gmra.mxu0 %v1184
    %v2800 = vpop.f32.mrf.mxu0
    %v2801 = vadd.f32 0.0, %v2800
    %2802 = vmatmul.f32.gmra.mxu0 %v1187
    %v2803 = vpop.f32.mrf.mxu0
    %v2804 = vadd.f32 0.0, %v2803
    %2805 = vmatmul.f32.gmra.mxu0 %v1190
    %v2806 = vpop.f32.mrf.mxu0
    %v2807 = vadd.f32 0.0, %v2806
    %2808 = vmatmul.f32.gmra.mxu0 %v1193
    %v2809 = vpop.f32.mrf.mxu0
    %v2810 = vadd.f32 0.0, %v2809
    %2811 = vmatmul.f32.gmra.mxu0 %v1196
    %v2812 = vpop.f32.mrf.mxu0
    %v2813 = vadd.f32 0.0, %v2812
    %2814 = vmatmul.f32.gmra.mxu0 %v1199
    %v2815 = vpop.f32.mrf.mxu0
    %v2816 = vadd.f32 0.0, %v2815
    %2817 = vmatmul.f32.gmra.mxu0 %v1202
    %v2818 = vpop.f32.mrf.mxu0
    %v2819 = vadd.f32 0.0, %v2818
    %2820 = vmatmul.f32.gmra.mxu0 %v1205
    %v2821 = vpop.f32.mrf.mxu0
    %v2822 = vadd.f32 0.0, %v2821
    %2823 = vmatmul.f32.gmra.mxu0 %v1208
    %v2824 = vpop.f32.mrf.mxu0
    %v2825 = vadd.f32 0.0, %v2824
    %2826 = vmatmul.f32.gmra.mxu0 %v1211
    %v2827 = vpop.f32.mrf.mxu0
    %v2828 = vadd.f32 0.0, %v2827
    %2829 = vmatmul.f32.gmra.mxu0 %v1214
    %v2830 = vpop.f32.mrf.mxu0
    %v2831 = vadd.f32 0.0, %v2830
    %2832 = vmatmul.f32.gmra.mxu0 %v1217
    %v2833 = vpop.f32.mrf.mxu0
    %v2834 = vadd.f32 0.0, %v2833
    %2835 = vdwg.mxu0
    %2836 = vmatpush.msra.mxu0 0.0
    %2837 = vmatpush.msra.mxu0 0.0
    %2838 = vmatpush.msra.mxu0 0.0
    %2839 = vmatpush.msra.mxu0 0.0
    %2840 = vmatpush.msra.mxu0 0.0
    %2841 = vmatpush.msra.mxu0 0.0
    %2842 = vmatpush.msra.mxu0 0.0
    %2843 = vmatpush.msra.mxu0 %v2556
    %2844 = vmatpush.msra.mxu0 %v2553
    %2845 = vmatpush.msra.mxu0 %v2550
    %2846 = vmatpush.msra.mxu0 %v2547
    %2847 = vmatpush.msra.mxu0 %v2544
    %2848 = vmatpush.msra.mxu0 %v2541
    %2849 = vmatpush.msra.mxu0 %v2538
    %2850 = vmatpush.msra.mxu0 %v2535
    %2851 = vmatpush.msra.mxu0 %v2532
    %2852 = vmatmul.f32.gmra.mxu0 %v1469
    %v2853 = vpop.f32.mrf.mxu0
    %v2854 = vadd.f32 %v2605, %v2853
    %2855 = vmatmul.f32.gmra.mxu0 %v1472
    %v2856 = vpop.f32.mrf.mxu0
    %v2857 = vadd.f32 %v2608, %v2856
    %2858 = vmatmul.f32.gmra.mxu0 %v1475
    %v2859 = vpop.f32.mrf.mxu0
    %v2860 = vadd.f32 %v2611, %v2859
    %2861 = vmatmul.f32.gmra.mxu0 %v1478
    %v2862 = vpop.f32.mrf.mxu0
    %v2863 = vadd.f32 %v2614, %v2862
    %2864 = vmatmul.f32.gmra.mxu0 %v1481
    %v2865 = vpop.f32.mrf.mxu0
    %v2866 = vadd.f32 %v2617, %v2865
    %2867 = vmatmul.f32.gmra.mxu0 %v1484
    %v2868 = vpop.f32.mrf.mxu0
    %v2869 = vadd.f32 %v2620, %v2868
    %2870 = vmatmul.f32.gmra.mxu0 %v1487
    %v2871 = vpop.f32.mrf.mxu0
    %v2872 = vadd.f32 %v2623, %v2871
    %2873 = vmatmul.f32.gmra.mxu0 %v1490
    %v2874 = vpop.f32.mrf.mxu0
    %v2875 = vadd.f32 %v2626, %v2874
    %2876 = vmatmul.f32.gmra.mxu0 %v1493
    %v2877 = vpop.f32.mrf.mxu0
    %v2878 = vadd.f32 %v2629, %v2877
    %2879 = vmatmul.f32.gmra.mxu0 %v1496
    %v2880 = vpop.f32.mrf.mxu0
    %v2881 = vadd.f32 %v2632, %v2880
    %2882 = vmatmul.f32.gmra.mxu0 %v1499
    %v2883 = vpop.f32.mrf.mxu0
    %v2884 = vadd.f32 %v2635, %v2883
    %2885 = vmatmul.f32.gmra.mxu0 %v1502
    %v2886 = vpop.f32.mrf.mxu0
    %v2887 = vadd.f32 %v2638, %v2886
    %2888 = vmatmul.f32.gmra.mxu0 %v1505
    %v2889 = vpop.f32.mrf.mxu0
    %v2890 = vadd.f32 %v2641, %v2889
    %2891 = vmatmul.f32.gmra.mxu0 %v1508
    %v2892 = vpop.f32.mrf.mxu0
    %v2893 = vadd.f32 %v2644, %v2892
    %2894 = vmatmul.f32.gmra.mxu0 %v1511
    %v2895 = vpop.f32.mrf.mxu0
    %v2896 = vadd.f32 %v2647, %v2895
    %2897 = vmatmul.f32.gmra.mxu0 %v1514
    %v2898 = vpop.f32.mrf.mxu0
    %v2899 = vadd.f32 %v2650, %v2898
    %2900 = vmatmul.f32.gmra.mxu0 %v1517
    %v2901 = vpop.f32.mrf.mxu0
    %v2902 = vadd.f32 %v2653, %v2901
    %2903 = vmatmul.f32.gmra.mxu0 %v1520
    %v2904 = vpop.f32.mrf.mxu0
    %v2905 = vadd.f32 %v2656, %v2904
    %2906 = vmatmul.f32.gmra.mxu0 %v1523
    %v2907 = vpop.f32.mrf.mxu0
    %v2908 = vadd.f32 %v2659, %v2907
    %2909 = vmatmul.f32.gmra.mxu0 %v1526
    %v2910 = vpop.f32.mrf.mxu0
    %v2911 = vadd.f32 %v2662, %v2910
    %2912 = vmatmul.f32.gmra.mxu0 %v1529
    %v2913 = vpop.f32.mrf.mxu0
    %v2914 = vadd.f32 %v2665, %v2913
    %2915 = vmatmul.f32.gmra.mxu0 %v1532
    %v2916 = vpop.f32.mrf.mxu0
    %v2917 = vadd.f32 %v2668, %v2916
    %2918 = vdwg.mxu0
    %2919 = vmatpush.msra.mxu0 0.0
    %2920 = vmatpush.msra.mxu0 0.0
    %2921 = vmatpush.msra.mxu0 0.0
    %2922 = vmatpush.msra.mxu0 0.0
    %2923 = vmatpush.msra.mxu0 0.0
    %2924 = vmatpush.msra.mxu0 0.0
    %2925 = vmatpush.msra.mxu0 0.0
    %2926 = vmatpush.msra.mxu0 %v2557
    %2927 = vmatpush.msra.mxu0 %v2554
    %2928 = vmatpush.msra.mxu0 %v2551
    %2929 = vmatpush.msra.mxu0 %v2548
    %2930 = vmatpush.msra.mxu0 %v2545
    %2931 = vmatpush.msra.mxu0 %v2542
    %2932 = vmatpush.msra.mxu0 %v2539
    %2933 = vmatpush.msra.mxu0 %v2536
    %2934 = vmatpush.msra.mxu0 %v2533
    %2935 = vmatmul.f32.gmra.mxu0 %v1469
    %v2936 = vpop.f32.mrf.mxu0
    %v2937 = vadd.f32 %v2688, %v2936
    %2938 = vmatmul.f32.gmra.mxu0 %v1472
    %v2939 = vpop.f32.mrf.mxu0
    %v2940 = vadd.f32 %v2691, %v2939
    %2941 = vmatmul.f32.gmra.mxu0 %v1475
    %v2942 = vpop.f32.mrf.mxu0
    %v2943 = vadd.f32 %v2694, %v2942
    %2944 = vmatmul.f32.gmra.mxu0 %v1478
    %v2945 = vpop.f32.mrf.mxu0
    %v2946 = vadd.f32 %v2697, %v2945
    %2947 = vmatmul.f32.gmra.mxu0 %v1481
    %v2948 = vpop.f32.mrf.mxu0
    %v2949 = vadd.f32 %v2700, %v2948
    %2950 = vmatmul.f32.gmra.mxu0 %v1484
    %v2951 = vpop.f32.mrf.mxu0
    %v2952 = vadd.f32 %v2703, %v2951
    %2953 = vmatmul.f32.gmra.mxu0 %v1487
    %v2954 = vpop.f32.mrf.mxu0
    %v2955 = vadd.f32 %v2706, %v2954
    %2956 = vmatmul.f32.gmra.mxu0 %v1490
    %v2957 = vpop.f32.mrf.mxu0
    %v2958 = vadd.f32 %v2709, %v2957
    %2959 = vmatmul.f32.gmra.mxu0 %v1493
    %v2960 = vpop.f32.mrf.mxu0
    %v2961 = vadd.f32 %v2712, %v2960
    %2962 = vmatmul.f32.gmra.mxu0 %v1496
    %v2963 = vpop.f32.mrf.mxu0
    %v2964 = vadd.f32 %v2715, %v2963
    %2965 = vmatmul.f32.gmra.mxu0 %v1499
    %v2966 = vpop.f32.mrf.mxu0
    %v2967 = vadd.f32 %v2718, %v2966
    %2968 = vmatmul.f32.gmra.mxu0 %v1502
    %v2969 = vpop.f32.mrf.mxu0
    %v2970 = vadd.f32 %v2721, %v2969
    %2971 = vmatmul.f32.gmra.mxu0 %v1505
    %v2972 = vpop.f32.mrf.mxu0
    %v2973 = vadd.f32 %v2724, %v2972
    %2974 = vmatmul.f32.gmra.mxu0 %v1508
    %v2975 = vpop.f32.mrf.mxu0
    %v2976 = vadd.f32 %v2727, %v2975
    %2977 = vmatmul.f32.gmra.mxu0 %v1511
    %v2978 = vpop.f32.mrf.mxu0
    %v2979 = vadd.f32 %v2730, %v2978
    %2980 = vmatmul.f32.gmra.mxu0 %v1514
    %v2981 = vpop.f32.mrf.mxu0
    %v2982 = vadd.f32 %v2733, %v2981
    %2983 = vmatmul.f32.gmra.mxu0 %v1517
    %v2984 = vpop.f32.mrf.mxu0
    %v2985 = vadd.f32 %v2736, %v2984
    %2986 = vmatmul.f32.gmra.mxu0 %v1520
    %v2987 = vpop.f32.mrf.mxu0
    %v2988 = vadd.f32 %v2739, %v2987
    %2989 = vmatmul.f32.gmra.mxu0 %v1523
    %v2990 = vpop.f32.mrf.mxu0
    %v2991 = vadd.f32 %v2742, %v2990
    %2992 = vmatmul.f32.gmra.mxu0 %v1526
    %v2993 = vpop.f32.mrf.mxu0
    %v2994 = vadd.f32 %v2745, %v2993
    %2995 = vmatmul.f32.gmra.mxu0 %v1529
    %v2996 = vpop.f32.mrf.mxu0
    %v2997 = vadd.f32 %v2748, %v2996
    %2998 = vmatmul.f32.gmra.mxu0 %v1532
    %v2999 = vpop.f32.mrf.mxu0
    %v3000 = vadd.f32 %v2751, %v2999
    %3001 = vdwg.mxu0
    %3002 = vmatpush.msra.mxu0 0.0
    %3003 = vmatpush.msra.mxu0 0.0
    %3004 = vmatpush.msra.mxu0 0.0
    %3005 = vmatpush.msra.mxu0 0.0
    %3006 = vmatpush.msra.mxu0 0.0
    %3007 = vmatpush.msra.mxu0 0.0
    %3008 = vmatpush.msra.mxu0 0.0
    %3009 = vmatpush.msra.mxu0 %v2558
    %3010 = vmatpush.msra.mxu0 %v2555
    %3011 = vmatpush.msra.mxu0 %v2552
    %3012 = vmatpush.msra.mxu0 %v2549
    %3013 = vmatpush.msra.mxu0 %v2546
    %3014 = vmatpush.msra.mxu0 %v2543
    %3015 = vmatpush.msra.mxu0 %v2540
    %3016 = vmatpush.msra.mxu0 %v2537
    %3017 = vmatpush.msra.mxu0 %v2534
    %3018 = vmatmul.f32.gmra.mxu0 %v1469
    %v3019 = vpop.f32.mrf.mxu0
    %v3020 = vadd.f32 %v2771, %v3019
    %3021 = vmatmul.f32.gmra.mxu0 %v1472
    %v3022 = vpop.f32.mrf.mxu0
    %v3023 = vadd.f32 %v2774, %v3022
    %3024 = vmatmul.f32.gmra.mxu0 %v1475
    %v3025 = vpop.f32.mrf.mxu0
    %v3026 = vadd.f32 %v2777, %v3025
    %3027 = vmatmul.f32.gmra.mxu0 %v1478
    %v3028 = vpop.f32.mrf.mxu0
    %v3029 = vadd.f32 %v2780, %v3028
    %3030 = vmatmul.f32.gmra.mxu0 %v1481
    %v3031 = vpop.f32.mrf.mxu0
    %v3032 = vadd.f32 %v2783, %v3031
    %3033 = vmatmul.f32.gmra.mxu0 %v1484
    %v3034 = vpop.f32.mrf.mxu0
    %v3035 = vadd.f32 %v2786, %v3034
    %3036 = vmatmul.f32.gmra.mxu0 %v1487
    %v3037 = vpop.f32.mrf.mxu0
    %v3038 = vadd.f32 %v2789, %v3037
    %3039 = vmatmul.f32.gmra.mxu0 %v1490
    %v3040 = vpop.f32.mrf.mxu0
    %v3041 = vadd.f32 %v2792, %v3040
    %3042 = vmatmul.f32.gmra.mxu0 %v1493
    %v3043 = vpop.f32.mrf.mxu0
    %v3044 = vadd.f32 %v2795, %v3043
    %3045 = vmatmul.f32.gmra.mxu0 %v1496
    %v3046 = vpop.f32.mrf.mxu0
    %v3047 = vadd.f32 %v2798, %v3046
    %3048 = vmatmul.f32.gmra.mxu0 %v1499
    %v3049 = vpop.f32.mrf.mxu0
    %v3050 = vadd.f32 %v2801, %v3049
    %3051 = vmatmul.f32.gmra.mxu0 %v1502
    %v3052 = vpop.f32.mrf.mxu0
    %v3053 = vadd.f32 %v2804, %v3052
    %3054 = vmatmul.f32.gmra.mxu0 %v1505
    %v3055 = vpop.f32.mrf.mxu0
    %v3056 = vadd.f32 %v2807, %v3055
    %3057 = vmatmul.f32.gmra.mxu0 %v1508
    %v3058 = vpop.f32.mrf.mxu0
    %v3059 = vadd.f32 %v2810, %v3058
    %3060 = vmatmul.f32.gmra.mxu0 %v1511
    %v3061 = vpop.f32.mrf.mxu0
    %v3062 = vadd.f32 %v2813, %v3061
    %3063 = vmatmul.f32.gmra.mxu0 %v1514
    %v3064 = vpop.f32.mrf.mxu0
    %v3065 = vadd.f32 %v2816, %v3064
    %3066 = vmatmul.f32.gmra.mxu0 %v1517
    %v3067 = vpop.f32.mrf.mxu0
    %v3068 = vadd.f32 %v2819, %v3067
    %3069 = vmatmul.f32.gmra.mxu0 %v1520
    %v3070 = vpop.f32.mrf.mxu0
    %v3071 = vadd.f32 %v2822, %v3070
    %3072 = vmatmul.f32.gmra.mxu0 %v1523
    %v3073 = vpop.f32.mrf.mxu0
    %v3074 = vadd.f32 %v2825, %v3073
    %3075 = vmatmul.f32.gmra.mxu0 %v1526
    %v3076 = vpop.f32.mrf.mxu0
    %v3077 = vadd.f32 %v2828, %v3076
    %3078 = vmatmul.f32.gmra.mxu0 %v1529
    %v3079 = vpop.f32.mrf.mxu0
    %v3080 = vadd.f32 %v2831, %v3079
    %3081 = vmatmul.f32.gmra.mxu0 %v1532
    %v3082 = vpop.f32.mrf.mxu0
    %v3083 = vadd.f32 %v2834, %v3082
    %3084 = vdwg.mxu0
    %s3085 = scalar_lea.vmem [#allocation5], 1512
    %v3086 = vld [vmem:[%s3085] sm:$0xff]
    %v3087 = vld [vmem:[%s3085 + $0x8] sm:$0xff]
    %v3088 = vld [vmem:[%s3085 + $0x10] sm:$0xff]
    %v3089 = vld [vmem:[%s3085 + $0x18] sm:$0xff]
    %v3090 = vld [vmem:[%s3085 + $0x20] sm:$0xff]
    %v3091 = vld [vmem:[%s3085 + $0x28] sm:$0xff]
    %v3092 = vld [vmem:[%s3085 + $0x30] sm:$0xff]
    %v3093 = vld [vmem:[%s3085 + $0x38] sm:$0xff]
    %v3094 = vld [vmem:[%s3085 + $0x40] sm:$0xff]
    %v3095 = vld [vmem:[%s3085 + $0x48] sm:$0xff]
    %v3096 = vld [vmem:[%s3085 + $0x50] sm:$0xff]
    %v3097 = vld [vmem:[%s3085 + $0x58] sm:$0xff]
    %v3098 = vld [vmem:[%s3085 + $0x60] sm:$0xff]
    %v3099 = vld [vmem:[%s3085 + $0x68] sm:$0xff]
    %v3100 = vld [vmem:[%s3085 + $0x70] sm:$0xff]
    %v3101 = vld [vmem:[%s3085 + $0x78] sm:$0xff]
    %v3102 = vld [vmem:[%s3085 + $0x80] sm:$0xff]
    %v3103 = vld [vmem:[%s3085 + $0x88] sm:$0xff]
    %v3104 = vld [vmem:[%s3085 + $0x90] sm:$0xff]
    %v3105 = vld [vmem:[%s3085 + $0x98] sm:$0xff]
    %v3106 = vld [vmem:[%s3085 + $0xa0] sm:$0xff]
    %v3107 = vld [vmem:[%s3085 + $0xa8] sm:$0xff]
    %v3108 = vld [vmem:[%s3085 + $0xb0] sm:$0xff]
    %v3109 = vld [vmem:[%s3085 + $0xb8] sm:$0xff]
    %v3110 = vld [vmem:[%s3085 + $0xc0] sm:$0xff]
    %v3111 = vld [vmem:[%s3085 + $0xc8] sm:$0xff]
    %v3112 = vld [vmem:[%s3085 + $0xd0] sm:$0xff]
    %3113 = vmatpush.msra.mxu0 0.0
    %3114 = vmatpush.msra.mxu0 0.0
    %3115 = vmatpush.msra.mxu0 0.0
    %3116 = vmatpush.msra.mxu0 0.0
    %3117 = vmatpush.msra.mxu0 0.0
    %3118 = vmatpush.msra.mxu0 0.0
    %3119 = vmatpush.msra.mxu0 0.0
    %3120 = vmatpush.msra.mxu0 %v3110
    %3121 = vmatpush.msra.mxu0 %v3107
    %3122 = vmatpush.msra.mxu0 %v3104
    %3123 = vmatpush.msra.mxu0 %v3101
    %3124 = vmatpush.msra.mxu0 %v3098
    %3125 = vmatpush.msra.mxu0 %v3095
    %3126 = vmatpush.msra.mxu0 %v3092
    %3127 = vmatpush.msra.mxu0 %v3089
    %3128 = vmatpush.msra.mxu0 %v3086
    %3129 = vmatmul.f32.gmra.mxu0 %v1812
    %v3130 = vpop.f32.mrf.mxu0
    %v3131 = vadd.f32 0.0, %v3130
    %3132 = vmatmul.f32.gmra.mxu0 %v1815
    %v3133 = vpop.f32.mrf.mxu0
    %v3134 = vadd.f32 0.0, %v3133
    %3135 = vmatmul.f32.gmra.mxu0 %v1818
    %v3136 = vpop.f32.mrf.mxu0
    %v3137 = vadd.f32 0.0, %v3136
    %3138 = vmatmul.f32.gmra.mxu0 %v1821
    %v3139 = vpop.f32.mrf.mxu0
    %v3140 = vadd.f32 0.0, %v3139
    %3141 = vmatmul.f32.gmra.mxu0 %v1824
    %v3142 = vpop.f32.mrf.mxu0
    %v3143 = vadd.f32 0.0, %v3142
    %3144 = vmatmul.f32.gmra.mxu0 %v1827
    %v3145 = vpop.f32.mrf.mxu0
    %v3146 = vadd.f32 0.0, %v3145
    %3147 = vmatmul.f32.gmra.mxu0 %v1830
    %v3148 = vpop.f32.mrf.mxu0
    %v3149 = vadd.f32 0.0, %v3148
    %3150 = vmatmul.f32.gmra.mxu0 %v1833
    %v3151 = vpop.f32.mrf.mxu0
    %v3152 = vadd.f32 0.0, %v3151
    %3153 = vmatmul.f32.gmra.mxu0 %v1836
    %v3154 = vpop.f32.mrf.mxu0
    %v3155 = vadd.f32 0.0, %v3154
    %3156 = vmatmul.f32.gmra.mxu0 %v1839
    %v3157 = vpop.f32.mrf.mxu0
    %v3158 = vadd.f32 0.0, %v3157
    %3159 = vmatmul.f32.gmra.mxu0 %v1842
    %v3160 = vpop.f32.mrf.mxu0
    %v3161 = vadd.f32 0.0, %v3160
    %3162 = vmatmul.f32.gmra.mxu0 %v1845
    %v3163 = vpop.f32.mrf.mxu0
    %v3164 = vadd.f32 0.0, %v3163
    %3165 = vmatmul.f32.gmra.mxu0 %v1848
    %v3166 = vpop.f32.mrf.mxu0
    %v3167 = vadd.f32 0.0, %v3166
    %3168 = vmatmul.f32.gmra.mxu0 %v1851
    %v3169 = vpop.f32.mrf.mxu0
    %v3170 = vadd.f32 0.0, %v3169
    %3171 = vmatmul.f32.gmra.mxu0 %v1854
    %v3172 = vpop.f32.mrf.mxu0
    %v3173 = vadd.f32 0.0, %v3172
    %3174 = vmatmul.f32.gmra.mxu0 %v1857
    %v3175 = vpop.f32.mrf.mxu0
    %v3176 = vadd.f32 0.0, %v3175
    %3177 = vmatmul.f32.gmra.mxu0 %v1860
    %v3178 = vpop.f32.mrf.mxu0
    %v3179 = vadd.f32 0.0, %v3178
    %3180 = vmatmul.f32.gmra.mxu0 %v1863
    %v3181 = vpop.f32.mrf.mxu0
    %v3182 = vadd.f32 0.0, %v3181
    %3183 = vmatmul.f32.gmra.mxu0 %v1866
    %v3184 = vpop.f32.mrf.mxu0
    %v3185 = vadd.f32 0.0, %v3184
    %3186 = vmatmul.f32.gmra.mxu0 %v1869
    %v3187 = vpop.f32.mrf.mxu0
    %v3188 = vadd.f32 0.0, %v3187
    %3189 = vmatmul.f32.gmra.mxu0 %v1872
    %v3190 = vpop.f32.mrf.mxu0
    %v3191 = vadd.f32 0.0, %v3190
    %3192 = vmatmul.f32.gmra.mxu0 %v1875
    %v3193 = vpop.f32.mrf.mxu0
    %v3194 = vadd.f32 0.0, %v3193
    %3195 = vdwg.mxu0
    %3196 = vmatpush.msra.mxu0 0.0
    %3197 = vmatpush.msra.mxu0 0.0
    %3198 = vmatpush.msra.mxu0 0.0
    %3199 = vmatpush.msra.mxu0 0.0
    %3200 = vmatpush.msra.mxu0 0.0
    %3201 = vmatpush.msra.mxu0 0.0
    %3202 = vmatpush.msra.mxu0 0.0
    %3203 = vmatpush.msra.mxu0 %v3111
    %3204 = vmatpush.msra.mxu0 %v3108
    %3205 = vmatpush.msra.mxu0 %v3105
    %3206 = vmatpush.msra.mxu0 %v3102
    %3207 = vmatpush.msra.mxu0 %v3099
    %3208 = vmatpush.msra.mxu0 %v3096
    %3209 = vmatpush.msra.mxu0 %v3093
    %3210 = vmatpush.msra.mxu0 %v3090
    %3211 = vmatpush.msra.mxu0 %v3087
    %3212 = vmatmul.f32.gmra.mxu0 %v1812
    %v3213 = vpop.f32.mrf.mxu0
    %v3214 = vadd.f32 0.0, %v3213
    %3215 = vmatmul.f32.gmra.mxu0 %v1815
    %v3216 = vpop.f32.mrf.mxu0
    %v3217 = vadd.f32 0.0, %v3216
    %3218 = vmatmul.f32.gmra.mxu0 %v1818
    %v3219 = vpop.f32.mrf.mxu0
    %v3220 = vadd.f32 0.0, %v3219
    %3221 = vmatmul.f32.gmra.mxu0 %v1821
    %v3222 = vpop.f32.mrf.mxu0
    %v3223 = vadd.f32 0.0, %v3222
    %3224 = vmatmul.f32.gmra.mxu0 %v1824
    %v3225 = vpop.f32.mrf.mxu0
    %v3226 = vadd.f32 0.0, %v3225
    %3227 = vmatmul.f32.gmra.mxu0 %v1827
    %v3228 = vpop.f32.mrf.mxu0
    %v3229 = vadd.f32 0.0, %v3228
    %3230 = vmatmul.f32.gmra.mxu0 %v1830
    %v3231 = vpop.f32.mrf.mxu0
    %v3232 = vadd.f32 0.0, %v3231
    %3233 = vmatmul.f32.gmra.mxu0 %v1833
    %v3234 = vpop.f32.mrf.mxu0
    %v3235 = vadd.f32 0.0, %v3234
    %3236 = vmatmul.f32.gmra.mxu0 %v1836
    %v3237 = vpop.f32.mrf.mxu0
    %v3238 = vadd.f32 0.0, %v3237
    %3239 = vmatmul.f32.gmra.mxu0 %v1839
    %v3240 = vpop.f32.mrf.mxu0
    %v3241 = vadd.f32 0.0, %v3240
    %3242 = vmatmul.f32.gmra.mxu0 %v1842
    %v3243 = vpop.f32.mrf.mxu0
    %v3244 = vadd.f32 0.0, %v3243
    %3245 = vmatmul.f32.gmra.mxu0 %v1845
    %v3246 = vpop.f32.mrf.mxu0
    %v3247 = vadd.f32 0.0, %v3246
    %3248 = vmatmul.f32.gmra.mxu0 %v1848
    %v3249 = vpop.f32.mrf.mxu0
    %v3250 = vadd.f32 0.0, %v3249
    %3251 = vmatmul.f32.gmra.mxu0 %v1851
    %v3252 = vpop.f32.mrf.mxu0
    %v3253 = vadd.f32 0.0, %v3252
    %3254 = vmatmul.f32.gmra.mxu0 %v1854
    %v3255 = vpop.f32.mrf.mxu0
    %v3256 = vadd.f32 0.0, %v3255
    %3257 = vmatmul.f32.gmra.mxu0 %v1857
    %v3258 = vpop.f32.mrf.mxu0
    %v3259 = vadd.f32 0.0, %v3258
    %3260 = vmatmul.f32.gmra.mxu0 %v1860
    %v3261 = vpop.f32.mrf.mxu0
    %v3262 = vadd.f32 0.0, %v3261
    %3263 = vmatmul.f32.gmra.mxu0 %v1863
    %v3264 = vpop.f32.mrf.mxu0
    %v3265 = vadd.f32 0.0, %v3264
    %3266 = vmatmul.f32.gmra.mxu0 %v1866
    %v3267 = vpop.f32.mrf.mxu0
    %v3268 = vadd.f32 0.0, %v3267
    %3269 = vmatmul.f32.gmra.mxu0 %v1869
    %v3270 = vpop.f32.mrf.mxu0
    %v3271 = vadd.f32 0.0, %v3270
    %3272 = vmatmul.f32.gmra.mxu0 %v1872
    %v3273 = vpop.f32.mrf.mxu0
    %v3274 = vadd.f32 0.0, %v3273
    %3275 = vmatmul.f32.gmra.mxu0 %v1875
    %v3276 = vpop.f32.mrf.mxu0
    %v3277 = vadd.f32 0.0, %v3276
    %3278 = vdwg.mxu0
    %3279 = vmatpush.msra.mxu0 0.0
    %3280 = vmatpush.msra.mxu0 0.0
    %3281 = vmatpush.msra.mxu0 0.0
    %3282 = vmatpush.msra.mxu0 0.0
    %3283 = vmatpush.msra.mxu0 0.0
    %3284 = vmatpush.msra.mxu0 0.0
    %3285 = vmatpush.msra.mxu0 0.0
    %3286 = vmatpush.msra.mxu0 %v3112
    %3287 = vmatpush.msra.mxu0 %v3109
    %3288 = vmatpush.msra.mxu0 %v3106
    %3289 = vmatpush.msra.mxu0 %v3103
    %3290 = vmatpush.msra.mxu0 %v3100
    %3291 = vmatpush.msra.mxu0 %v3097
    %3292 = vmatpush.msra.mxu0 %v3094
    %3293 = vmatpush.msra.mxu0 %v3091
    %3294 = vmatpush.msra.mxu0 %v3088
    %3295 = vmatmul.f32.gmra.mxu0 %v1812
    %v3296 = vpop.f32.mrf.mxu0
    %v3297 = vadd.f32 0.0, %v3296
    %3298 = vmatmul.f32.gmra.mxu0 %v1815
    %v3299 = vpop.f32.mrf.mxu0
    %v3300 = vadd.f32 0.0, %v3299
    %3301 = vmatmul.f32.gmra.mxu0 %v1818
    %v3302 = vpop.f32.mrf.mxu0
    %v3303 = vadd.f32 0.0, %v3302
    %3304 = vmatmul.f32.gmra.mxu0 %v1821
    %v3305 = vpop.f32.mrf.mxu0
    %v3306 = vadd.f32 0.0, %v3305
    %3307 = vmatmul.f32.gmra.mxu0 %v1824
    %v3308 = vpop.f32.mrf.mxu0
    %v3309 = vadd.f32 0.0, %v3308
    %3310 = vmatmul.f32.gmra.mxu0 %v1827
    %v3311 = vpop.f32.mrf.mxu0
    %v3312 = vadd.f32 0.0, %v3311
    %3313 = vmatmul.f32.gmra.mxu0 %v1830
    %v3314 = vpop.f32.mrf.mxu0
    %v3315 = vadd.f32 0.0, %v3314
    %3316 = vmatmul.f32.gmra.mxu0 %v1833
    %v3317 = vpop.f32.mrf.mxu0
    %v3318 = vadd.f32 0.0, %v3317
    %3319 = vmatmul.f32.gmra.mxu0 %v1836
    %v3320 = vpop.f32.mrf.mxu0
    %v3321 = vadd.f32 0.0, %v3320
    %3322 = vmatmul.f32.gmra.mxu0 %v1839
    %v3323 = vpop.f32.mrf.mxu0
    %v3324 = vadd.f32 0.0, %v3323
    %3325 = vmatmul.f32.gmra.mxu0 %v1842
    %v3326 = vpop.f32.mrf.mxu0
    %v3327 = vadd.f32 0.0, %v3326
    %3328 = vmatmul.f32.gmra.mxu0 %v1845
    %v3329 = vpop.f32.mrf.mxu0
    %v3330 = vadd.f32 0.0, %v3329
    %3331 = vmatmul.f32.gmra.mxu0 %v1848
    %v3332 = vpop.f32.mrf.mxu0
    %v3333 = vadd.f32 0.0, %v3332
    %3334 = vmatmul.f32.gmra.mxu0 %v1851
    %v3335 = vpop.f32.mrf.mxu0
    %v3336 = vadd.f32 0.0, %v3335
    %3337 = vmatmul.f32.gmra.mxu0 %v1854
    %v3338 = vpop.f32.mrf.mxu0
    %v3339 = vadd.f32 0.0, %v3338
    %3340 = vmatmul.f32.gmra.mxu0 %v1857
    %v3341 = vpop.f32.mrf.mxu0
    %v3342 = vadd.f32 0.0, %v3341
    %3343 = vmatmul.f32.gmra.mxu0 %v1860
    %v3344 = vpop.f32.mrf.mxu0
    %v3345 = vadd.f32 0.0, %v3344
    %3346 = vmatmul.f32.gmra.mxu0 %v1863
    %v3347 = vpop.f32.mrf.mxu0
    %v3348 = vadd.f32 0.0, %v3347
    %3349 = vmatmul.f32.gmra.mxu0 %v1866
    %v3350 = vpop.f32.mrf.mxu0
    %v3351 = vadd.f32 0.0, %v3350
    %3352 = vmatmul.f32.gmra.mxu0 %v1869
    %v3353 = vpop.f32.mrf.mxu0
    %v3354 = vadd.f32 0.0, %v3353
    %3355 = vmatmul.f32.gmra.mxu0 %v1872
    %v3356 = vpop.f32.mrf.mxu0
    %v3357 = vadd.f32 0.0, %v3356
    %3358 = vmatmul.f32.gmra.mxu0 %v1875
    %v3359 = vpop.f32.mrf.mxu0
    %v3360 = vadd.f32 0.0, %v3359
    %3361 = vdwg.mxu0
    %v3362 = vadd.f32 %v2854, %v3131
    %v3363 = vadd.f32 %v2937, %v3214
    %v3364 = vadd.f32 %v3020, %v3297
    %v3365 = vadd.f32 %v2857, %v3134
    %v3366 = vadd.f32 %v2940, %v3217
    %v3367 = vadd.f32 %v3023, %v3300
    %v3368 = vadd.f32 %v2860, %v3137
    %v3369 = vadd.f32 %v2943, %v3220
    %v3370 = vadd.f32 %v3026, %v3303
    %v3371 = vadd.f32 %v2863, %v3140
    %v3372 = vadd.f32 %v2946, %v3223
    %v3373 = vadd.f32 %v3029, %v3306
    %v3374 = vadd.f32 %v2866, %v3143
    %v3375 = vadd.f32 %v2949, %v3226
    %v3376 = vadd.f32 %v3032, %v3309
    %v3377 = vadd.f32 %v2869, %v3146
    %v3378 = vadd.f32 %v2952, %v3229
    %v3379 = vadd.f32 %v3035, %v3312
    %v3380 = vadd.f32 %v2872, %v3149
    %v3381 = vadd.f32 %v2955, %v3232
    %v3382 = vadd.f32 %v3038, %v3315
    %v3383 = vadd.f32 %v2875, %v3152
    %v3384 = vadd.f32 %v2958, %v3235
    %v3385 = vadd.f32 %v3041, %v3318
    %v3386 = vadd.f32 %v2878, %v3155
    %v3387 = vadd.f32 %v2961, %v3238
    %v3388 = vadd.f32 %v3044, %v3321
    %v3389 = vadd.f32 %v2881, %v3158
    %v3390 = vadd.f32 %v2964, %v3241
    %v3391 = vadd.f32 %v3047, %v3324
    %v3392 = vadd.f32 %v2884, %v3161
    %v3393 = vadd.f32 %v2967, %v3244
    %v3394 = vadd.f32 %v3050, %v3327
    %v3395 = vadd.f32 %v2887, %v3164
    %v3396 = vadd.f32 %v2970, %v3247
    %v3397 = vadd.f32 %v3053, %v3330
    %v3398 = vadd.f32 %v2890, %v3167
    %v3399 = vadd.f32 %v2973, %v3250
    %v3400 = vadd.f32 %v3056, %v3333
    %v3401 = vadd.f32 %v2893, %v3170
    %v3402 = vadd.f32 %v2976, %v3253
    %v3403 = vadd.f32 %v3059, %v3336
    %v3404 = vadd.f32 %v2896, %v3173
    %v3405 = vadd.f32 %v2979, %v3256
    %v3406 = vadd.f32 %v3062, %v3339
    %v3407 = vadd.f32 %v2899, %v3176
    %v3408 = vadd.f32 %v2982, %v3259
    %v3409 = vadd.f32 %v3065, %v3342
    %v3410 = vadd.f32 %v2902, %v3179
    %v3411 = vadd.f32 %v2985, %v3262
    %v3412 = vadd.f32 %v3068, %v3345
    %v3413 = vadd.f32 %v2905, %v3182
    %v3414 = vadd.f32 %v2988, %v3265
    %v3415 = vadd.f32 %v3071, %v3348
    %v3416 = vadd.f32 %v2908, %v3185
    %v3417 = vadd.f32 %v2991, %v3268
    %v3418 = vadd.f32 %v3074, %v3351
    %v3419 = vadd.f32 %v2911, %v3188
    %v3420 = vadd.f32 %v2994, %v3271
    %v3421 = vadd.f32 %v3077, %v3354
    %v3422 = vadd.f32 %v2914, %v3191
    %v3423 = vadd.f32 %v2997, %v3274
    %v3424 = vadd.f32 %v3080, %v3357
    %v3425 = vadd.f32 %v2917, %v3194
    %v3426 = vadd.f32 %v3000, %v3277
    %v3427 = vadd.f32 %v3083, %v3360
    %v3428 = vadd.f32 %v3362, %v2194
    %v3429 = vadd.f32 %v3363, %v2195
    %v3430 = vadd.f32 %v3364, %v2196
    %v3431 = vadd.f32 %v3365, %v2194
    %v3432 = vadd.f32 %v3366, %v2195
    %v3433 = vadd.f32 %v3367, %v2196
    %v3434 = vadd.f32 %v3368, %v2194
    %v3435 = vadd.f32 %v3369, %v2195
    %v3436 = vadd.f32 %v3370, %v2196
    %v3437 = vadd.f32 %v3371, %v2194
    %v3438 = vadd.f32 %v3372, %v2195
    %v3439 = vadd.f32 %v3373, %v2196
    %v3440 = vadd.f32 %v3374, %v2194
    %v3441 = vadd.f32 %v3375, %v2195
    %v3442 = vadd.f32 %v3376, %v2196
    %v3443 = vadd.f32 %v3377, %v2194
    %v3444 = vadd.f32 %v3378, %v2195
    %v3445 = vadd.f32 %v3379, %v2196
    %v3446 = vadd.f32 %v3380, %v2194
    %v3447 = vadd.f32 %v3381, %v2195
    %v3448 = vadd.f32 %v3382, %v2196
    %v3449 = vadd.f32 %v3383, %v2194
    %v3450 = vadd.f32 %v3384, %v2195
    %v3451 = vadd.f32 %v3385, %v2196
    %v3452 = vadd.f32 %v3386, %v2194
    %v3453 = vadd.f32 %v3387, %v2195
    %v3454 = vadd.f32 %v3388, %v2196
    %v3455 = vadd.f32 %v3389, %v2194
    %v3456 = vadd.f32 %v3390, %v2195
    %v3457 = vadd.f32 %v3391, %v2196
    %v3458 = vadd.f32 %v3392, %v2194
    %v3459 = vadd.f32 %v3393, %v2195
    %v3460 = vadd.f32 %v3394, %v2196
    %v3461 = vadd.f32 %v3395, %v2194
    %v3462 = vadd.f32 %v3396, %v2195
    %v3463 = vadd.f32 %v3397, %v2196
    %v3464 = vadd.f32 %v3398, %v2194
    %v3465 = vadd.f32 %v3399, %v2195
    %v3466 = vadd.f32 %v3400, %v2196
    %v3467 = vadd.f32 %v3401, %v2194
    %v3468 = vadd.f32 %v3402, %v2195
    %v3469 = vadd.f32 %v3403, %v2196
    %v3470 = vadd.f32 %v3404, %v2194
    %v3471 = vadd.f32 %v3405, %v2195
    %v3472 = vadd.f32 %v3406, %v2196
    %v3473 = vadd.f32 %v3407, %v2194
    %v3474 = vadd.f32 %v3408, %v2195
    %v3475 = vadd.f32 %v3409, %v2196
    %v3476 = vadd.f32 %v3410, %v2194
    %v3477 = vadd.f32 %v3411, %v2195
    %v3478 = vadd.f32 %v3412, %v2196
    %v3479 = vadd.f32 %v3413, %v2194
    %v3480 = vadd.f32 %v3414, %v2195
    %v3481 = vadd.f32 %v3415, %v2196
    %v3482 = vadd.f32 %v3416, %v2194
    %v3483 = vadd.f32 %v3417, %v2195
    %v3484 = vadd.f32 %v3418, %v2196
    %v3485 = vadd.f32 %v3419, %v2194
    %v3486 = vadd.f32 %v3420, %v2195
    %v3487 = vadd.f32 %v3421, %v2196
    %v3488 = vadd.f32 %v3422, %v2194
    %v3489 = vadd.f32 %v3423, %v2195
    %v3490 = vadd.f32 %v3424, %v2196
    %v3491 = vadd.f32 %v3425, %v2194
    %v3492 = vadd.f32 %v3426, %v2195
    %v3493 = vadd.f32 %v3427, %v2196
    %v3494 = vmax.f32 %v3428, 0.0
    %v3495 = vmax.f32 %v3429, 0.0
    %v3496 = vmax.f32 %v3430, 0.0
    %v3497 = vmax.f32 %v3431, 0.0
    %v3498 = vmax.f32 %v3432, 0.0
    %v3499 = vmax.f32 %v3433, 0.0
    %v3500 = vmax.f32 %v3434, 0.0
    %v3501 = vmax.f32 %v3435, 0.0
    %v3502 = vmax.f32 %v3436, 0.0
    %v3503 = vmax.f32 %v3437, 0.0
    %v3504 = vmax.f32 %v3438, 0.0
    %v3505 = vmax.f32 %v3439, 0.0
    %v3506 = vmax.f32 %v3440, 0.0
    %v3507 = vmax.f32 %v3441, 0.0
    %v3508 = vmax.f32 %v3442, 0.0
    %v3509 = vmax.f32 %v3443, 0.0
    %v3510 = vmax.f32 %v3444, 0.0
    %v3511 = vmax.f32 %v3445, 0.0
    %v3512 = vmax.f32 %v3446, 0.0
    %v3513 = vmax.f32 %v3447, 0.0
    %v3514 = vmax.f32 %v3448, 0.0
    %v3515 = vmax.f32 %v3449, 0.0
    %v3516 = vmax.f32 %v3450, 0.0
    %v3517 = vmax.f32 %v3451, 0.0
    %v3518 = vmax.f32 %v3452, 0.0
    %v3519 = vmax.f32 %v3453, 0.0
    %v3520 = vmax.f32 %v3454, 0.0
    %v3521 = vmax.f32 %v3455, 0.0
    %v3522 = vmax.f32 %v3456, 0.0
    %v3523 = vmax.f32 %v3457, 0.0
    %v3524 = vmax.f32 %v3458, 0.0
    %v3525 = vmax.f32 %v3459, 0.0
    %v3526 = vmax.f32 %v3460, 0.0
    %v3527 = vmax.f32 %v3461, 0.0
    %v3528 = vmax.f32 %v3462, 0.0
    %v3529 = vmax.f32 %v3463, 0.0
    %v3530 = vmax.f32 %v3464, 0.0
    %v3531 = vmax.f32 %v3465, 0.0
    %v3532 = vmax.f32 %v3466, 0.0
    %v3533 = vmax.f32 %v3467, 0.0
    %v3534 = vmax.f32 %v3468, 0.0
    %v3535 = vmax.f32 %v3469, 0.0
    %v3536 = vmax.f32 %v3470, 0.0
    %v3537 = vmax.f32 %v3471, 0.0
    %v3538 = vmax.f32 %v3472, 0.0
    %v3539 = vmax.f32 %v3473, 0.0
    %v3540 = vmax.f32 %v3474, 0.0
    %v3541 = vmax.f32 %v3475, 0.0
    %v3542 = vmax.f32 %v3476, 0.0
    %v3543 = vmax.f32 %v3477, 0.0
    %v3544 = vmax.f32 %v3478, 0.0
    %v3545 = vmax.f32 %v3479, 0.0
    %v3546 = vmax.f32 %v3480, 0.0
    %v3547 = vmax.f32 %v3481, 0.0
    %v3548 = vmax.f32 %v3482, 0.0
    %v3549 = vmax.f32 %v3483, 0.0
    %v3550 = vmax.f32 %v3484, 0.0
    %v3551 = vmax.f32 %v3485, 0.0
    %v3552 = vmax.f32 %v3486, 0.0
    %v3553 = vmax.f32 %v3487, 0.0
    %v3554 = vmax.f32 %v3488, 0.0
    %v3555 = vmax.f32 %v3489, 0.0
    %v3556 = vmax.f32 %v3490, 0.0
    %v3557 = vmax.f32 %v3491, 0.0
    %v3558 = vmax.f32 %v3492, 0.0
    %v3559 = vmax.f32 %v3493, 0.0
    %v3560 = vmin.f32 %v3428, 0.0
    %v3561 = vmin.f32 %v3429, 0.0
    %v3562 = vmin.f32 %v3430, 0.0
    %v3563 = vmin.f32 %v3431, 0.0
    %v3564 = vmin.f32 %v3432, 0.0
    %v3565 = vmin.f32 %v3433, 0.0
    %v3566 = vmin.f32 %v3434, 0.0
    %v3567 = vmin.f32 %v3435, 0.0
    %v3568 = vmin.f32 %v3436, 0.0
    %v3569 = vmin.f32 %v3437, 0.0
    %v3570 = vmin.f32 %v3438, 0.0
    %v3571 = vmin.f32 %v3439, 0.0
    %v3572 = vmin.f32 %v3440, 0.0
    %v3573 = vmin.f32 %v3441, 0.0
    %v3574 = vmin.f32 %v3442, 0.0
    %v3575 = vmin.f32 %v3443, 0.0
    %v3576 = vmin.f32 %v3444, 0.0
    %v3577 = vmin.f32 %v3445, 0.0
    %v3578 = vmin.f32 %v3446, 0.0
    %v3579 = vmin.f32 %v3447, 0.0
    %v3580 = vmin.f32 %v3448, 0.0
    %v3581 = vmin.f32 %v3449, 0.0
    %v3582 = vmin.f32 %v3450, 0.0
    %v3583 = vmin.f32 %v3451, 0.0
    %v3584 = vmin.f32 %v3452, 0.0
    %v3585 = vmin.f32 %v3453, 0.0
    %v3586 = vmin.f32 %v3454, 0.0
    %v3587 = vmin.f32 %v3455, 0.0
    %v3588 = vmin.f32 %v3456, 0.0
    %v3589 = vmin.f32 %v3457, 0.0
    %v3590 = vmin.f32 %v3458, 0.0
    %v3591 = vmin.f32 %v3459, 0.0
    %v3592 = vmin.f32 %v3460, 0.0
    %v3593 = vmin.f32 %v3461, 0.0
    %v3594 = vmin.f32 %v3462, 0.0
    %v3595 = vmin.f32 %v3463, 0.0
    %v3596 = vmin.f32 %v3464, 0.0
    %v3597 = vmin.f32 %v3465, 0.0
    %v3598 = vmin.f32 %v3466, 0.0
    %v3599 = vmin.f32 %v3467, 0.0
    %v3600 = vmin.f32 %v3468, 0.0
    %v3601 = vmin.f32 %v3469, 0.0
    %v3602 = vmin.f32 %v3470, 0.0
    %v3603 = vmin.f32 %v3471, 0.0
    %v3604 = vmin.f32 %v3472, 0.0
    %v3605 = vmin.f32 %v3473, 0.0
    %v3606 = vmin.f32 %v3474, 0.0
    %v3607 = vmin.f32 %v3475, 0.0
    %v3608 = vmin.f32 %v3476, 0.0
    %v3609 = vmin.f32 %v3477, 0.0
    %v3610 = vmin.f32 %v3478, 0.0
    %v3611 = vmin.f32 %v3479, 0.0
    %v3612 = vmin.f32 %v3480, 0.0
    %v3613 = vmin.f32 %v3481, 0.0
    %v3614 = vmin.f32 %v3482, 0.0
    %v3615 = vmin.f32 %v3483, 0.0
    %v3616 = vmin.f32 %v3484, 0.0
    %v3617 = vmin.f32 %v3485, 0.0
    %v3618 = vmin.f32 %v3486, 0.0
    %v3619 = vmin.f32 %v3487, 0.0
    %v3620 = vmin.f32 %v3488, 0.0
    %v3621 = vmin.f32 %v3489, 0.0
    %v3622 = vmin.f32 %v3490, 0.0
    %v3623 = vmin.f32 %v3491, 0.0
    %v3624 = vmin.f32 %v3492, 0.0
    %v3625 = vmin.f32 %v3493, 0.0
    %v3626 = vmul.f32 %v2398, %v3560
    %v3627 = vmul.f32 %v2398, %v3561
    %v3628 = vmul.f32 %v2398, %v3562
    %v3629 = vmul.f32 %v2398, %v3563
    %v3630 = vmul.f32 %v2398, %v3564
    %v3631 = vmul.f32 %v2398, %v3565
    %v3632 = vmul.f32 %v2398, %v3566
    %v3633 = vmul.f32 %v2398, %v3567
    %v3634 = vmul.f32 %v2398, %v3568
    %v3635 = vmul.f32 %v2398, %v3569
    %v3636 = vmul.f32 %v2398, %v3570
    %v3637 = vmul.f32 %v2398, %v3571
    %v3638 = vmul.f32 %v2398, %v3572
    %v3639 = vmul.f32 %v2398, %v3573
    %v3640 = vmul.f32 %v2398, %v3574
    %v3641 = vmul.f32 %v2398, %v3575
    %v3642 = vmul.f32 %v2398, %v3576
    %v3643 = vmul.f32 %v2398, %v3577
    %v3644 = vmul.f32 %v2398, %v3578
    %v3645 = vmul.f32 %v2398, %v3579
    %v3646 = vmul.f32 %v2398, %v3580
    %v3647 = vmul.f32 %v2398, %v3581
    %v3648 = vmul.f32 %v2398, %v3582
    %v3649 = vmul.f32 %v2398, %v3583
    %v3650 = vmul.f32 %v2398, %v3584
    %v3651 = vmul.f32 %v2398, %v3585
    %v3652 = vmul.f32 %v2398, %v3586
    %v3653 = vmul.f32 %v2398, %v3587
    %v3654 = vmul.f32 %v2398, %v3588
    %v3655 = vmul.f32 %v2398, %v3589
    %v3656 = vmul.f32 %v2398, %v3590
    %v3657 = vmul.f32 %v2398, %v3591
    %v3658 = vmul.f32 %v2398, %v3592
    %v3659 = vmul.f32 %v2398, %v3593
    %v3660 = vmul.f32 %v2398, %v3594
    %v3661 = vmul.f32 %v2398, %v3595
    %v3662 = vmul.f32 %v2398, %v3596
    %v3663 = vmul.f32 %v2398, %v3597
    %v3664 = vmul.f32 %v2398, %v3598
    %v3665 = vmul.f32 %v2398, %v3599
    %v3666 = vmul.f32 %v2398, %v3600
    %v3667 = vmul.f32 %v2398, %v3601
    %v3668 = vmul.f32 %v2398, %v3602
    %v3669 = vmul.f32 %v2398, %v3603
    %v3670 = vmul.f32 %v2398, %v3604
    %v3671 = vmul.f32 %v2398, %v3605
    %v3672 = vmul.f32 %v2398, %v3606
    %v3673 = vmul.f32 %v2398, %v3607
    %v3674 = vmul.f32 %v2398, %v3608
    %v3675 = vmul.f32 %v2398, %v3609
    %v3676 = vmul.f32 %v2398, %v3610
    %v3677 = vmul.f32 %v2398, %v3611
    %v3678 = vmul.f32 %v2398, %v3612
    %v3679 = vmul.f32 %v2398, %v3613
    %v3680 = vmul.f32 %v2398, %v3614
    %v3681 = vmul.f32 %v2398, %v3615
    %v3682 = vmul.f32 %v2398, %v3616
    %v3683 = vmul.f32 %v2398, %v3617
    %v3684 = vmul.f32 %v2398, %v3618
    %v3685 = vmul.f32 %v2398, %v3619
    %v3686 = vmul.f32 %v2398, %v3620
    %v3687 = vmul.f32 %v2398, %v3621
    %v3688 = vmul.f32 %v2398, %v3622
    %v3689 = vmul.f32 %v2398, %v3623
    %v3690 = vmul.f32 %v2398, %v3624
    %v3691 = vmul.f32 %v2398, %v3625
    %v3692 = vadd.f32 %v3494, %v3626
    %v3693 = vadd.f32 %v3495, %v3627
    %v3694 = vadd.f32 %v3496, %v3628
    %v3695 = vadd.f32 %v3497, %v3629
    %v3696 = vadd.f32 %v3498, %v3630
    %v3697 = vadd.f32 %v3499, %v3631
    %v3698 = vadd.f32 %v3500, %v3632
    %v3699 = vadd.f32 %v3501, %v3633
    %v3700 = vadd.f32 %v3502, %v3634
    %v3701 = vadd.f32 %v3503, %v3635
    %v3702 = vadd.f32 %v3504, %v3636
    %v3703 = vadd.f32 %v3505, %v3637
    %v3704 = vadd.f32 %v3506, %v3638
    %v3705 = vadd.f32 %v3507, %v3639
    %v3706 = vadd.f32 %v3508, %v3640
    %v3707 = vadd.f32 %v3509, %v3641
    %v3708 = vadd.f32 %v3510, %v3642
    %v3709 = vadd.f32 %v3511, %v3643
    %v3710 = vadd.f32 %v3512, %v3644
    %v3711 = vadd.f32 %v3513, %v3645
    %v3712 = vadd.f32 %v3514, %v3646
    %v3713 = vadd.f32 %v3515, %v3647
    %v3714 = vadd.f32 %v3516, %v3648
    %v3715 = vadd.f32 %v3517, %v3649
    %v3716 = vadd.f32 %v3518, %v3650
    %v3717 = vadd.f32 %v3519, %v3651
    %v3718 = vadd.f32 %v3520, %v3652
    %v3719 = vadd.f32 %v3521, %v3653
    %v3720 = vadd.f32 %v3522, %v3654
    %v3721 = vadd.f32 %v3523, %v3655
    %v3722 = vadd.f32 %v3524, %v3656
    %v3723 = vadd.f32 %v3525, %v3657
    %v3724 = vadd.f32 %v3526, %v3658
    %v3725 = vadd.f32 %v3527, %v3659
    %v3726 = vadd.f32 %v3528, %v3660
    %v3727 = vadd.f32 %v3529, %v3661
    %v3728 = vadd.f32 %v3530, %v3662
    %v3729 = vadd.f32 %v3531, %v3663
    %v3730 = vadd.f32 %v3532, %v3664
    %v3731 = vadd.f32 %v3533, %v3665
    %v3732 = vadd.f32 %v3534, %v3666
    %v3733 = vadd.f32 %v3535, %v3667
    %v3734 = vadd.f32 %v3536, %v3668
    %v3735 = vadd.f32 %v3537, %v3669
    %v3736 = vadd.f32 %v3538, %v3670
    %v3737 = vadd.f32 %v3539, %v3671
    %v3738 = vadd.f32 %v3540, %v3672
    %v3739 = vadd.f32 %v3541, %v3673
    %v3740 = vadd.f32 %v3542, %v3674
    %v3741 = vadd.f32 %v3543, %v3675
    %v3742 = vadd.f32 %v3544, %v3676
    %v3743 = vadd.f32 %v3545, %v3677
    %v3744 = vadd.f32 %v3546, %v3678
    %v3745 = vadd.f32 %v3547, %v3679
    %v3746 = vadd.f32 %v3548, %v3680
    %v3747 = vadd.f32 %v3549, %v3681
    %v3748 = vadd.f32 %v3550, %v3682
    %v3749 = vadd.f32 %v3551, %v3683
    %v3750 = vadd.f32 %v3552, %v3684
    %v3751 = vadd.f32 %v3553, %v3685
    %v3752 = vadd.f32 %v3554, %v3686
    %v3753 = vadd.f32 %v3555, %v3687
    %v3754 = vadd.f32 %v3556, %v3688
    %v3755 = vadd.f32 %v3557, %v3689
    %v3756 = vadd.f32 %v3558, %v3690
    %v3757 = vadd.f32 %v3559, %v3691
    %s3758 = scalar_lea.vmem [#allocation5], 432
    %v3759 = vld [vmem:[%s3758] sm:$0xff]
    %v3760 = vld [vmem:[%s3758 + $0x8] sm:$0xff]
    %v3761 = vld [vmem:[%s3758 + $0x10] sm:$0xff]
    %v3762 = vld [vmem:[%s3758 + $0x18] sm:$0xff]
    %v3763 = vld [vmem:[%s3758 + $0x20] sm:$0xff]
    %v3764 = vld [vmem:[%s3758 + $0x28] sm:$0xff]
    %v3765 = vld [vmem:[%s3758 + $0x30] sm:$0xff]
    %v3766 = vld [vmem:[%s3758 + $0x38] sm:$0xff]
    %v3767 = vld [vmem:[%s3758 + $0x40] sm:$0xff]
    %v3768 = vld [vmem:[%s3758 + $0x48] sm:$0xff]
    %v3769 = vld [vmem:[%s3758 + $0x50] sm:$0xff]
    %v3770 = vld [vmem:[%s3758 + $0x58] sm:$0xff]
    %v3771 = vld [vmem:[%s3758 + $0x60] sm:$0xff]
    %v3772 = vld [vmem:[%s3758 + $0x68] sm:$0xff]
    %v3773 = vld [vmem:[%s3758 + $0x70] sm:$0xff]
    %v3774 = vld [vmem:[%s3758 + $0x78] sm:$0xff]
    %v3775 = vld [vmem:[%s3758 + $0x80] sm:$0xff]
    %v3776 = vld [vmem:[%s3758 + $0x88] sm:$0xff]
    %v3777 = vld [vmem:[%s3758 + $0x90] sm:$0xff]
    %v3778 = vld [vmem:[%s3758 + $0x98] sm:$0xff]
    %v3779 = vld [vmem:[%s3758 + $0xa0] sm:$0xff]
    %v3780 = vld [vmem:[%s3758 + $0xa8] sm:$0xff]
    %v3781 = vld [vmem:[%s3758 + $0xb0] sm:$0xff]
    %v3782 = vld [vmem:[%s3758 + $0xb8] sm:$0xff]
    %v3783 = vld [vmem:[%s3758 + $0xc0] sm:$0xff]
    %v3784 = vld [vmem:[%s3758 + $0xc8] sm:$0xff]
    %v3785 = vld [vmem:[%s3758 + $0xd0] sm:$0xff]
    %s3786 = scalar_lea.vmem [#allocation5], 1080
    %v3787 = vld [vmem:[%s3786] sm:$0xff]
    %v3788 = vld [vmem:[%s3786 + $0x8] sm:$0xff]
    %v3789 = vld [vmem:[%s3786 + $0x10] sm:$0xff]
    %v3790 = vld [vmem:[%s3786 + $0x18] sm:$0xff]
    %v3791 = vld [vmem:[%s3786 + $0x20] sm:$0xff]
    %v3792 = vld [vmem:[%s3786 + $0x28] sm:$0xff]
    %v3793 = vld [vmem:[%s3786 + $0x30] sm:$0xff]
    %v3794 = vld [vmem:[%s3786 + $0x38] sm:$0xff]
    %v3795 = vld [vmem:[%s3786 + $0x40] sm:$0xff]
    %v3796 = vld [vmem:[%s3786 + $0x48] sm:$0xff]
    %v3797 = vld [vmem:[%s3786 + $0x50] sm:$0xff]
    %v3798 = vld [vmem:[%s3786 + $0x58] sm:$0xff]
    %v3799 = vld [vmem:[%s3786 + $0x60] sm:$0xff]
    %v3800 = vld [vmem:[%s3786 + $0x68] sm:$0xff]
    %v3801 = vld [vmem:[%s3786 + $0x70] sm:$0xff]
    %v3802 = vld [vmem:[%s3786 + $0x78] sm:$0xff]
    %v3803 = vld [vmem:[%s3786 + $0x80] sm:$0xff]
    %v3804 = vld [vmem:[%s3786 + $0x88] sm:$0xff]
    %v3805 = vld [vmem:[%s3786 + $0x90] sm:$0xff]
    %v3806 = vld [vmem:[%s3786 + $0x98] sm:$0xff]
    %v3807 = vld [vmem:[%s3786 + $0xa0] sm:$0xff]
    %v3808 = vld [vmem:[%s3786 + $0xa8] sm:$0xff]
    %v3809 = vld [vmem:[%s3786 + $0xb0] sm:$0xff]
    %v3810 = vld [vmem:[%s3786 + $0xb8] sm:$0xff]
    %v3811 = vld [vmem:[%s3786 + $0xc0] sm:$0xff]
    %v3812 = vld [vmem:[%s3786 + $0xc8] sm:$0xff]
    %v3813 = vld [vmem:[%s3786 + $0xd0] sm:$0xff]
    %3814 = vmatpush.msra.mxu0 0.0
    %3815 = vmatpush.msra.mxu0 0.0
    %3816 = vmatpush.msra.mxu0 0.0
    %3817 = vmatpush.msra.mxu0 0.0
    %3818 = vmatpush.msra.mxu0 0.0
    %3819 = vmatpush.msra.mxu0 0.0
    %3820 = vmatpush.msra.mxu0 0.0
    %3821 = vmatpush.msra.mxu0 %v3811
    %3822 = vmatpush.msra.mxu0 %v3808
    %3823 = vmatpush.msra.mxu0 %v3805
    %3824 = vmatpush.msra.mxu0 %v3802
    %3825 = vmatpush.msra.mxu0 %v3799
    %3826 = vmatpush.msra.mxu0 %v3796
    %3827 = vmatpush.msra.mxu0 %v3793
    %3828 = vmatpush.msra.mxu0 %v3790
    %3829 = vmatpush.msra.mxu0 %v3787
    %3830 = vmatmul.f32.gmra.mxu0 %v1154
    %v3831 = vpop.f32.mrf.mxu0
    %v3832 = vadd.f32 0.0, %v3831
    %3833 = vmatmul.f32.gmra.mxu0 %v1157
    %v3834 = vpop.f32.mrf.mxu0
    %v3835 = vadd.f32 0.0, %v3834
    %3836 = vmatmul.f32.gmra.mxu0 %v1160
    %v3837 = vpop.f32.mrf.mxu0
    %v3838 = vadd.f32 0.0, %v3837
    %3839 = vmatmul.f32.gmra.mxu0 %v1163
    %v3840 = vpop.f32.mrf.mxu0
    %v3841 = vadd.f32 0.0, %v3840
    %3842 = vmatmul.f32.gmra.mxu0 %v1166
    %v3843 = vpop.f32.mrf.mxu0
    %v3844 = vadd.f32 0.0, %v3843
    %3845 = vmatmul.f32.gmra.mxu0 %v1169
    %v3846 = vpop.f32.mrf.mxu0
    %v3847 = vadd.f32 0.0, %v3846
    %3848 = vmatmul.f32.gmra.mxu0 %v1172
    %v3849 = vpop.f32.mrf.mxu0
    %v3850 = vadd.f32 0.0, %v3849
    %3851 = vmatmul.f32.gmra.mxu0 %v1175
    %v3852 = vpop.f32.mrf.mxu0
    %v3853 = vadd.f32 0.0, %v3852
    %3854 = vmatmul.f32.gmra.mxu0 %v1178
    %v3855 = vpop.f32.mrf.mxu0
    %v3856 = vadd.f32 0.0, %v3855
    %3857 = vmatmul.f32.gmra.mxu0 %v1181
    %v3858 = vpop.f32.mrf.mxu0
    %v3859 = vadd.f32 0.0, %v3858
    %3860 = vmatmul.f32.gmra.mxu0 %v1184
    %v3861 = vpop.f32.mrf.mxu0
    %v3862 = vadd.f32 0.0, %v3861
    %3863 = vmatmul.f32.gmra.mxu0 %v1187
    %v3864 = vpop.f32.mrf.mxu0
    %v3865 = vadd.f32 0.0, %v3864
    %3866 = vmatmul.f32.gmra.mxu0 %v1190
    %v3867 = vpop.f32.mrf.mxu0
    %v3868 = vadd.f32 0.0, %v3867
    %3869 = vmatmul.f32.gmra.mxu0 %v1193
    %v3870 = vpop.f32.mrf.mxu0
    %v3871 = vadd.f32 0.0, %v3870
    %3872 = vmatmul.f32.gmra.mxu0 %v1196
    %v3873 = vpop.f32.mrf.mxu0
    %v3874 = vadd.f32 0.0, %v3873
    %3875 = vmatmul.f32.gmra.mxu0 %v1199
    %v3876 = vpop.f32.mrf.mxu0
    %v3877 = vadd.f32 0.0, %v3876
    %3878 = vmatmul.f32.gmra.mxu0 %v1202
    %v3879 = vpop.f32.mrf.mxu0
    %v3880 = vadd.f32 0.0, %v3879
    %3881 = vmatmul.f32.gmra.mxu0 %v1205
    %v3882 = vpop.f32.mrf.mxu0
    %v3883 = vadd.f32 0.0, %v3882
    %3884 = vmatmul.f32.gmra.mxu0 %v1208
    %v3885 = vpop.f32.mrf.mxu0
    %v3886 = vadd.f32 0.0, %v3885
    %3887 = vmatmul.f32.gmra.mxu0 %v1211
    %v3888 = vpop.f32.mrf.mxu0
    %v3889 = vadd.f32 0.0, %v3888
    %3890 = vmatmul.f32.gmra.mxu0 %v1214
    %v3891 = vpop.f32.mrf.mxu0
    %v3892 = vadd.f32 0.0, %v3891
    %3893 = vmatmul.f32.gmra.mxu0 %v1217
    %v3894 = vpop.f32.mrf.mxu0
    %v3895 = vadd.f32 0.0, %v3894
    %3896 = vdwg.mxu0
    %3897 = vmatpush.msra.mxu0 0.0
    %3898 = vmatpush.msra.mxu0 0.0
    %3899 = vmatpush.msra.mxu0 0.0
    %3900 = vmatpush.msra.mxu0 0.0
    %3901 = vmatpush.msra.mxu0 0.0
    %3902 = vmatpush.msra.mxu0 0.0
    %3903 = vmatpush.msra.mxu0 0.0
    %3904 = vmatpush.msra.mxu0 %v3812
    %3905 = vmatpush.msra.mxu0 %v3809
    %3906 = vmatpush.msra.mxu0 %v3806
    %3907 = vmatpush.msra.mxu0 %v3803
    %3908 = vmatpush.msra.mxu0 %v3800
    %3909 = vmatpush.msra.mxu0 %v3797
    %3910 = vmatpush.msra.mxu0 %v3794
    %3911 = vmatpush.msra.mxu0 %v3791
    %3912 = vmatpush.msra.mxu0 %v3788
    %3913 = vmatmul.f32.gmra.mxu0 %v1154
    %v3914 = vpop.f32.mrf.mxu0
    %v3915 = vadd.f32 0.0, %v3914
    %3916 = vmatmul.f32.gmra.mxu0 %v1157
    %v3917 = vpop.f32.mrf.mxu0
    %v3918 = vadd.f32 0.0, %v3917
    %3919 = vmatmul.f32.gmra.mxu0 %v1160
    %v3920 = vpop.f32.mrf.mxu0
    %v3921 = vadd.f32 0.0, %v3920
    %3922 = vmatmul.f32.gmra.mxu0 %v1163
    %v3923 = vpop.f32.mrf.mxu0
    %v3924 = vadd.f32 0.0, %v3923
    %3925 = vmatmul.f32.gmra.mxu0 %v1166
    %v3926 = vpop.f32.mrf.mxu0
    %v3927 = vadd.f32 0.0, %v3926
    %3928 = vmatmul.f32.gmra.mxu0 %v1169
    %v3929 = vpop.f32.mrf.mxu0
    %v3930 = vadd.f32 0.0, %v3929
    %3931 = vmatmul.f32.gmra.mxu0 %v1172
    %v3932 = vpop.f32.mrf.mxu0
    %v3933 = vadd.f32 0.0, %v3932
    %3934 = vmatmul.f32.gmra.mxu0 %v1175
    %v3935 = vpop.f32.mrf.mxu0
    %v3936 = vadd.f32 0.0, %v3935
    %3937 = vmatmul.f32.gmra.mxu0 %v1178
    %v3938 = vpop.f32.mrf.mxu0
    %v3939 = vadd.f32 0.0, %v3938
    %3940 = vmatmul.f32.gmra.mxu0 %v1181
    %v3941 = vpop.f32.mrf.mxu0
    %v3942 = vadd.f32 0.0, %v3941
    %3943 = vmatmul.f32.gmra.mxu0 %v1184
    %v3944 = vpop.f32.mrf.mxu0
    %v3945 = vadd.f32 0.0, %v3944
    %3946 = vmatmul.f32.gmra.mxu0 %v1187
    %v3947 = vpop.f32.mrf.mxu0
    %v3948 = vadd.f32 0.0, %v3947
    %3949 = vmatmul.f32.gmra.mxu0 %v1190
    %v3950 = vpop.f32.mrf.mxu0
    %v3951 = vadd.f32 0.0, %v3950
    %3952 = vmatmul.f32.gmra.mxu0 %v1193
    %v3953 = vpop.f32.mrf.mxu0
    %v3954 = vadd.f32 0.0, %v3953
    %3955 = vmatmul.f32.gmra.mxu0 %v1196
    %v3956 = vpop.f32.mrf.mxu0
    %v3957 = vadd.f32 0.0, %v3956
    %3958 = vmatmul.f32.gmra.mxu0 %v1199
    %v3959 = vpop.f32.mrf.mxu0
    %v3960 = vadd.f32 0.0, %v3959
    %3961 = vmatmul.f32.gmra.mxu0 %v1202
    %v3962 = vpop.f32.mrf.mxu0
    %v3963 = vadd.f32 0.0, %v3962
    %3964 = vmatmul.f32.gmra.mxu0 %v1205
    %v3965 = vpop.f32.mrf.mxu0
    %v3966 = vadd.f32 0.0, %v3965
    %3967 = vmatmul.f32.gmra.mxu0 %v1208
    %v3968 = vpop.f32.mrf.mxu0
    %v3969 = vadd.f32 0.0, %v3968
    %3970 = vmatmul.f32.gmra.mxu0 %v1211
    %v3971 = vpop.f32.mrf.mxu0
    %v3972 = vadd.f32 0.0, %v3971
    %3973 = vmatmul.f32.gmra.mxu0 %v1214
    %v3974 = vpop.f32.mrf.mxu0
    %v3975 = vadd.f32 0.0, %v3974
    %3976 = vmatmul.f32.gmra.mxu0 %v1217
    %v3977 = vpop.f32.mrf.mxu0
    %v3978 = vadd.f32 0.0, %v3977
    %3979 = vdwg.mxu0
    %3980 = vmatpush.msra.mxu0 0.0
    %3981 = vmatpush.msra.mxu0 0.0
    %3982 = vmatpush.msra.mxu0 0.0
    %3983 = vmatpush.msra.mxu0 0.0
    %3984 = vmatpush.msra.mxu0 0.0
    %3985 = vmatpush.msra.mxu0 0.0
    %3986 = vmatpush.msra.mxu0 0.0
    %3987 = vmatpush.msra.mxu0 %v3813
    %3988 = vmatpush.msra.mxu0 %v3810
    %3989 = vmatpush.msra.mxu0 %v3807
    %3990 = vmatpush.msra.mxu0 %v3804
    %3991 = vmatpush.msra.mxu0 %v3801
    %3992 = vmatpush.msra.mxu0 %v3798
    %3993 = vmatpush.msra.mxu0 %v3795
    %3994 = vmatpush.msra.mxu0 %v3792
    %3995 = vmatpush.msra.mxu0 %v3789
    %3996 = vmatmul.f32.gmra.mxu0 %v1154
    %v3997 = vpop.f32.mrf.mxu0
    %v3998 = vadd.f32 0.0, %v3997
    %3999 = vmatmul.f32.gmra.mxu0 %v1157
    %v4000 = vpop.f32.mrf.mxu0
    %v4001 = vadd.f32 0.0, %v4000
    %4002 = vmatmul.f32.gmra.mxu0 %v1160
    %v4003 = vpop.f32.mrf.mxu0
    %v4004 = vadd.f32 0.0, %v4003
    %4005 = vmatmul.f32.gmra.mxu0 %v1163
    %v4006 = vpop.f32.mrf.mxu0
    %v4007 = vadd.f32 0.0, %v4006
    %4008 = vmatmul.f32.gmra.mxu0 %v1166
    %v4009 = vpop.f32.mrf.mxu0
    %v4010 = vadd.f32 0.0, %v4009
    %4011 = vmatmul.f32.gmra.mxu0 %v1169
    %v4012 = vpop.f32.mrf.mxu0
    %v4013 = vadd.f32 0.0, %v4012
    %4014 = vmatmul.f32.gmra.mxu0 %v1172
    %v4015 = vpop.f32.mrf.mxu0
    %v4016 = vadd.f32 0.0, %v4015
    %4017 = vmatmul.f32.gmra.mxu0 %v1175
    %v4018 = vpop.f32.mrf.mxu0
    %v4019 = vadd.f32 0.0, %v4018
    %4020 = vmatmul.f32.gmra.mxu0 %v1178
    %v4021 = vpop.f32.mrf.mxu0
    %v4022 = vadd.f32 0.0, %v4021
    %4023 = vmatmul.f32.gmra.mxu0 %v1181
    %v4024 = vpop.f32.mrf.mxu0
    %v4025 = vadd.f32 0.0, %v4024
    %4026 = vmatmul.f32.gmra.mxu0 %v1184
    %v4027 = vpop.f32.mrf.mxu0
    %v4028 = vadd.f32 0.0, %v4027
    %4029 = vmatmul.f32.gmra.mxu0 %v1187
    %v4030 = vpop.f32.mrf.mxu0
    %v4031 = vadd.f32 0.0, %v4030
    %4032 = vmatmul.f32.gmra.mxu0 %v1190
    %v4033 = vpop.f32.mrf.mxu0
    %v4034 = vadd.f32 0.0, %v4033
    %4035 = vmatmul.f32.gmra.mxu0 %v1193
    %v4036 = vpop.f32.mrf.mxu0
    %v4037 = vadd.f32 0.0, %v4036
    %4038 = vmatmul.f32.gmra.mxu0 %v1196
    %v4039 = vpop.f32.mrf.mxu0
    %v4040 = vadd.f32 0.0, %v4039
    %4041 = vmatmul.f32.gmra.mxu0 %v1199
    %v4042 = vpop.f32.mrf.mxu0
    %v4043 = vadd.f32 0.0, %v4042
    %4044 = vmatmul.f32.gmra.mxu0 %v1202
    %v4045 = vpop.f32.mrf.mxu0
    %v4046 = vadd.f32 0.0, %v4045
    %4047 = vmatmul.f32.gmra.mxu0 %v1205
    %v4048 = vpop.f32.mrf.mxu0
    %v4049 = vadd.f32 0.0, %v4048
    %4050 = vmatmul.f32.gmra.mxu0 %v1208
    %v4051 = vpop.f32.mrf.mxu0
    %v4052 = vadd.f32 0.0, %v4051
    %4053 = vmatmul.f32.gmra.mxu0 %v1211
    %v4054 = vpop.f32.mrf.mxu0
    %v4055 = vadd.f32 0.0, %v4054
    %4056 = vmatmul.f32.gmra.mxu0 %v1214
    %v4057 = vpop.f32.mrf.mxu0
    %v4058 = vadd.f32 0.0, %v4057
    %4059 = vmatmul.f32.gmra.mxu0 %v1217
    %v4060 = vpop.f32.mrf.mxu0
    %v4061 = vadd.f32 0.0, %v4060
    %4062 = vdwg.mxu0
    %4063 = vmatpush.msra.mxu0 0.0
    %4064 = vmatpush.msra.mxu0 0.0
    %4065 = vmatpush.msra.mxu0 0.0
    %4066 = vmatpush.msra.mxu0 0.0
    %4067 = vmatpush.msra.mxu0 0.0
    %4068 = vmatpush.msra.mxu0 0.0
    %4069 = vmatpush.msra.mxu0 0.0
    %4070 = vmatpush.msra.mxu0 %v3783
    %4071 = vmatpush.msra.mxu0 %v3780
    %4072 = vmatpush.msra.mxu0 %v3777
    %4073 = vmatpush.msra.mxu0 %v3774
    %4074 = vmatpush.msra.mxu0 %v3771
    %4075 = vmatpush.msra.mxu0 %v3768
    %4076 = vmatpush.msra.mxu0 %v3765
    %4077 = vmatpush.msra.mxu0 %v3762
    %4078 = vmatpush.msra.mxu0 %v3759
    %4079 = vmatmul.f32.gmra.mxu0 %v1469
    %v4080 = vpop.f32.mrf.mxu0
    %v4081 = vadd.f32 %v3832, %v4080
    %4082 = vmatmul.f32.gmra.mxu0 %v1472
    %v4083 = vpop.f32.mrf.mxu0
    %v4084 = vadd.f32 %v3835, %v4083
    %4085 = vmatmul.f32.gmra.mxu0 %v1475
    %v4086 = vpop.f32.mrf.mxu0
    %v4087 = vadd.f32 %v3838, %v4086
    %4088 = vmatmul.f32.gmra.mxu0 %v1478
    %v4089 = vpop.f32.mrf.mxu0
    %v4090 = vadd.f32 %v3841, %v4089
    %4091 = vmatmul.f32.gmra.mxu0 %v1481
    %v4092 = vpop.f32.mrf.mxu0
    %v4093 = vadd.f32 %v3844, %v4092
    %4094 = vmatmul.f32.gmra.mxu0 %v1484
    %v4095 = vpop.f32.mrf.mxu0
    %v4096 = vadd.f32 %v3847, %v4095
    %4097 = vmatmul.f32.gmra.mxu0 %v1487
    %v4098 = vpop.f32.mrf.mxu0
    %v4099 = vadd.f32 %v3850, %v4098
    %4100 = vmatmul.f32.gmra.mxu0 %v1490
    %v4101 = vpop.f32.mrf.mxu0
    %v4102 = vadd.f32 %v3853, %v4101
    %4103 = vmatmul.f32.gmra.mxu0 %v1493
    %v4104 = vpop.f32.mrf.mxu0
    %v4105 = vadd.f32 %v3856, %v4104
    %4106 = vmatmul.f32.gmra.mxu0 %v1496
    %v4107 = vpop.f32.mrf.mxu0
    %v4108 = vadd.f32 %v3859, %v4107
    %4109 = vmatmul.f32.gmra.mxu0 %v1499
    %v4110 = vpop.f32.mrf.mxu0
    %v4111 = vadd.f32 %v3862, %v4110
    %4112 = vmatmul.f32.gmra.mxu0 %v1502
    %v4113 = vpop.f32.mrf.mxu0
    %v4114 = vadd.f32 %v3865, %v4113
    %4115 = vmatmul.f32.gmra.mxu0 %v1505
    %v4116 = vpop.f32.mrf.mxu0
    %v4117 = vadd.f32 %v3868, %v4116
    %4118 = vmatmul.f32.gmra.mxu0 %v1508
    %v4119 = vpop.f32.mrf.mxu0
    %v4120 = vadd.f32 %v3871, %v4119
    %4121 = vmatmul.f32.gmra.mxu0 %v1511
    %v4122 = vpop.f32.mrf.mxu0
    %v4123 = vadd.f32 %v3874, %v4122
    %4124 = vmatmul.f32.gmra.mxu0 %v1514
    %v4125 = vpop.f32.mrf.mxu0
    %v4126 = vadd.f32 %v3877, %v4125
    %4127 = vmatmul.f32.gmra.mxu0 %v1517
    %v4128 = vpop.f32.mrf.mxu0
    %v4129 = vadd.f32 %v3880, %v4128
    %4130 = vmatmul.f32.gmra.mxu0 %v1520
    %v4131 = vpop.f32.mrf.mxu0
    %v4132 = vadd.f32 %v3883, %v4131
    %4133 = vmatmul.f32.gmra.mxu0 %v1523
    %v4134 = vpop.f32.mrf.mxu0
    %v4135 = vadd.f32 %v3886, %v4134
    %4136 = vmatmul.f32.gmra.mxu0 %v1526
    %v4137 = vpop.f32.mrf.mxu0
    %v4138 = vadd.f32 %v3889, %v4137
    %4139 = vmatmul.f32.gmra.mxu0 %v1529
    %v4140 = vpop.f32.mrf.mxu0
    %v4141 = vadd.f32 %v3892, %v4140
    %4142 = vmatmul.f32.gmra.mxu0 %v1532
    %v4143 = vpop.f32.mrf.mxu0
    %v4144 = vadd.f32 %v3895, %v4143
    %4145 = vdwg.mxu0
    %4146 = vmatpush.msra.mxu0 0.0
    %4147 = vmatpush.msra.mxu0 0.0
    %4148 = vmatpush.msra.mxu0 0.0
    %4149 = vmatpush.msra.mxu0 0.0
    %4150 = vmatpush.msra.mxu0 0.0
    %4151 = vmatpush.msra.mxu0 0.0
    %4152 = vmatpush.msra.mxu0 0.0
    %4153 = vmatpush.msra.mxu0 %v3784
    %4154 = vmatpush.msra.mxu0 %v3781
    %4155 = vmatpush.msra.mxu0 %v3778
    %4156 = vmatpush.msra.mxu0 %v3775
    %4157 = vmatpush.msra.mxu0 %v3772
    %4158 = vmatpush.msra.mxu0 %v3769
    %4159 = vmatpush.msra.mxu0 %v3766
    %4160 = vmatpush.msra.mxu0 %v3763
    %4161 = vmatpush.msra.mxu0 %v3760
    %4162 = vmatmul.f32.gmra.mxu0 %v1469
    %v4163 = vpop.f32.mrf.mxu0
    %v4164 = vadd.f32 %v3915, %v4163
    %4165 = vmatmul.f32.gmra.mxu0 %v1472
    %v4166 = vpop.f32.mrf.mxu0
    %v4167 = vadd.f32 %v3918, %v4166
    %4168 = vmatmul.f32.gmra.mxu0 %v1475
    %v4169 = vpop.f32.mrf.mxu0
    %v4170 = vadd.f32 %v3921, %v4169
    %4171 = vmatmul.f32.gmra.mxu0 %v1478
    %v4172 = vpop.f32.mrf.mxu0
    %v4173 = vadd.f32 %v3924, %v4172
    %4174 = vmatmul.f32.gmra.mxu0 %v1481
    %v4175 = vpop.f32.mrf.mxu0
    %v4176 = vadd.f32 %v3927, %v4175
    %4177 = vmatmul.f32.gmra.mxu0 %v1484
    %v4178 = vpop.f32.mrf.mxu0
    %v4179 = vadd.f32 %v3930, %v4178
    %4180 = vmatmul.f32.gmra.mxu0 %v1487
    %v4181 = vpop.f32.mrf.mxu0
    %v4182 = vadd.f32 %v3933, %v4181
    %4183 = vmatmul.f32.gmra.mxu0 %v1490
    %v4184 = vpop.f32.mrf.mxu0
    %v4185 = vadd.f32 %v3936, %v4184
    %4186 = vmatmul.f32.gmra.mxu0 %v1493
    %v4187 = vpop.f32.mrf.mxu0
    %v4188 = vadd.f32 %v3939, %v4187
    %4189 = vmatmul.f32.gmra.mxu0 %v1496
    %v4190 = vpop.f32.mrf.mxu0
    %v4191 = vadd.f32 %v3942, %v4190
    %4192 = vmatmul.f32.gmra.mxu0 %v1499
    %v4193 = vpop.f32.mrf.mxu0
    %v4194 = vadd.f32 %v3945, %v4193
    %4195 = vmatmul.f32.gmra.mxu0 %v1502
    %v4196 = vpop.f32.mrf.mxu0
    %v4197 = vadd.f32 %v3948, %v4196
    %4198 = vmatmul.f32.gmra.mxu0 %v1505
    %v4199 = vpop.f32.mrf.mxu0
    %v4200 = vadd.f32 %v3951, %v4199
    %4201 = vmatmul.f32.gmra.mxu0 %v1508
    %v4202 = vpop.f32.mrf.mxu0
    %v4203 = vadd.f32 %v3954, %v4202
    %4204 = vmatmul.f32.gmra.mxu0 %v1511
    %v4205 = vpop.f32.mrf.mxu0
    %v4206 = vadd.f32 %v3957, %v4205
    %4207 = vmatmul.f32.gmra.mxu0 %v1514
    %v4208 = vpop.f32.mrf.mxu0
    %v4209 = vadd.f32 %v3960, %v4208
    %4210 = vmatmul.f32.gmra.mxu0 %v1517
    %v4211 = vpop.f32.mrf.mxu0
    %v4212 = vadd.f32 %v3963, %v4211
    %4213 = vmatmul.f32.gmra.mxu0 %v1520
    %v4214 = vpop.f32.mrf.mxu0
    %v4215 = vadd.f32 %v3966, %v4214
    %4216 = vmatmul.f32.gmra.mxu0 %v1523
    %v4217 = vpop.f32.mrf.mxu0
    %v4218 = vadd.f32 %v3969, %v4217
    %4219 = vmatmul.f32.gmra.mxu0 %v1526
    %v4220 = vpop.f32.mrf.mxu0
    %v4221 = vadd.f32 %v3972, %v4220
    %4222 = vmatmul.f32.gmra.mxu0 %v1529
    %v4223 = vpop.f32.mrf.mxu0
    %v4224 = vadd.f32 %v3975, %v4223
    %4225 = vmatmul.f32.gmra.mxu0 %v1532
    %v4226 = vpop.f32.mrf.mxu0
    %v4227 = vadd.f32 %v3978, %v4226
    %4228 = vdwg.mxu0
    %4229 = vmatpush.msra.mxu0 0.0
    %4230 = vmatpush.msra.mxu0 0.0
    %4231 = vmatpush.msra.mxu0 0.0
    %4232 = vmatpush.msra.mxu0 0.0
    %4233 = vmatpush.msra.mxu0 0.0
    %4234 = vmatpush.msra.mxu0 0.0
    %4235 = vmatpush.msra.mxu0 0.0
    %4236 = vmatpush.msra.mxu0 %v3785
    %4237 = vmatpush.msra.mxu0 %v3782
    %4238 = vmatpush.msra.mxu0 %v3779
    %4239 = vmatpush.msra.mxu0 %v3776
    %4240 = vmatpush.msra.mxu0 %v3773
    %4241 = vmatpush.msra.mxu0 %v3770
    %4242 = vmatpush.msra.mxu0 %v3767
    %4243 = vmatpush.msra.mxu0 %v3764
    %4244 = vmatpush.msra.mxu0 %v3761
    %4245 = vmatmul.f32.gmra.mxu0 %v1469
    %v4246 = vpop.f32.mrf.mxu0
    %v4247 = vadd.f32 %v3998, %v4246
    %4248 = vmatmul.f32.gmra.mxu0 %v1472
    %v4249 = vpop.f32.mrf.mxu0
    %v4250 = vadd.f32 %v4001, %v4249
    %4251 = vmatmul.f32.gmra.mxu0 %v1475
    %v4252 = vpop.f32.mrf.mxu0
    %v4253 = vadd.f32 %v4004, %v4252
    %4254 = vmatmul.f32.gmra.mxu0 %v1478
    %v4255 = vpop.f32.mrf.mxu0
    %v4256 = vadd.f32 %v4007, %v4255
    %4257 = vmatmul.f32.gmra.mxu0 %v1481
    %v4258 = vpop.f32.mrf.mxu0
    %v4259 = vadd.f32 %v4010, %v4258
    %4260 = vmatmul.f32.gmra.mxu0 %v1484
    %v4261 = vpop.f32.mrf.mxu0
    %v4262 = vadd.f32 %v4013, %v4261
    %4263 = vmatmul.f32.gmra.mxu0 %v1487
    %v4264 = vpop.f32.mrf.mxu0
    %v4265 = vadd.f32 %v4016, %v4264
    %4266 = vmatmul.f32.gmra.mxu0 %v1490
    %v4267 = vpop.f32.mrf.mxu0
    %v4268 = vadd.f32 %v4019, %v4267
    %4269 = vmatmul.f32.gmra.mxu0 %v1493
    %v4270 = vpop.f32.mrf.mxu0
    %v4271 = vadd.f32 %v4022, %v4270
    %4272 = vmatmul.f32.gmra.mxu0 %v1496
    %v4273 = vpop.f32.mrf.mxu0
    %v4274 = vadd.f32 %v4025, %v4273
    %4275 = vmatmul.f32.gmra.mxu0 %v1499
    %v4276 = vpop.f32.mrf.mxu0
    %v4277 = vadd.f32 %v4028, %v4276
    %4278 = vmatmul.f32.gmra.mxu0 %v1502
    %v4279 = vpop.f32.mrf.mxu0
    %v4280 = vadd.f32 %v4031, %v4279
    %4281 = vmatmul.f32.gmra.mxu0 %v1505
    %v4282 = vpop.f32.mrf.mxu0
    %v4283 = vadd.f32 %v4034, %v4282
    %4284 = vmatmul.f32.gmra.mxu0 %v1508
    %v4285 = vpop.f32.mrf.mxu0
    %v4286 = vadd.f32 %v4037, %v4285
    %4287 = vmatmul.f32.gmra.mxu0 %v1511
    %v4288 = vpop.f32.mrf.mxu0
    %v4289 = vadd.f32 %v4040, %v4288
    %4290 = vmatmul.f32.gmra.mxu0 %v1514
    %v4291 = vpop.f32.mrf.mxu0
    %v4292 = vadd.f32 %v4043, %v4291
    %4293 = vmatmul.f32.gmra.mxu0 %v1517
    %v4294 = vpop.f32.mrf.mxu0
    %v4295 = vadd.f32 %v4046, %v4294
    %4296 = vmatmul.f32.gmra.mxu0 %v1520
    %v4297 = vpop.f32.mrf.mxu0
    %v4298 = vadd.f32 %v4049, %v4297
    %4299 = vmatmul.f32.gmra.mxu0 %v1523
    %v4300 = vpop.f32.mrf.mxu0
    %v4301 = vadd.f32 %v4052, %v4300
    %4302 = vmatmul.f32.gmra.mxu0 %v1526
    %v4303 = vpop.f32.mrf.mxu0
    %v4304 = vadd.f32 %v4055, %v4303
    %4305 = vmatmul.f32.gmra.mxu0 %v1529
    %v4306 = vpop.f32.mrf.mxu0
    %v4307 = vadd.f32 %v4058, %v4306
    %4308 = vmatmul.f32.gmra.mxu0 %v1532
    %v4309 = vpop.f32.mrf.mxu0
    %v4310 = vadd.f32 %v4061, %v4309
    %4311 = vdwg.mxu0
    %s4312 = scalar_lea.vmem [#allocation5], 1728
    %v4313 = vld [vmem:[%s4312] sm:$0xff]
    %v4314 = vld [vmem:[%s4312 + $0x8] sm:$0xff]
    %v4315 = vld [vmem:[%s4312 + $0x10] sm:$0xff]
    %v4316 = vld [vmem:[%s4312 + $0x18] sm:$0xff]
    %v4317 = vld [vmem:[%s4312 + $0x20] sm:$0xff]
    %v4318 = vld [vmem:[%s4312 + $0x28] sm:$0xff]
    %v4319 = vld [vmem:[%s4312 + $0x30] sm:$0xff]
    %v4320 = vld [vmem:[%s4312 + $0x38] sm:$0xff]
    %v4321 = vld [vmem:[%s4312 + $0x40] sm:$0xff]
    %v4322 = vld [vmem:[%s4312 + $0x48] sm:$0xff]
    %v4323 = vld [vmem:[%s4312 + $0x50] sm:$0xff]
    %v4324 = vld [vmem:[%s4312 + $0x58] sm:$0xff]
    %v4325 = vld [vmem:[%s4312 + $0x60] sm:$0xff]
    %v4326 = vld [vmem:[%s4312 + $0x68] sm:$0xff]
    %v4327 = vld [vmem:[%s4312 + $0x70] sm:$0xff]
    %v4328 = vld [vmem:[%s4312 + $0x78] sm:$0xff]
    %v4329 = vld [vmem:[%s4312 + $0x80] sm:$0xff]
    %v4330 = vld [vmem:[%s4312 + $0x88] sm:$0xff]
    %v4331 = vld [vmem:[%s4312 + $0x90] sm:$0xff]
    %v4332 = vld [vmem:[%s4312 + $0x98] sm:$0xff]
    %v4333 = vld [vmem:[%s4312 + $0xa0] sm:$0xff]
    %v4334 = vld [vmem:[%s4312 + $0xa8] sm:$0xff]
    %v4335 = vld [vmem:[%s4312 + $0xb0] sm:$0xff]
    %v4336 = vld [vmem:[%s4312 + $0xb8] sm:$0xff]
    %v4337 = vld [vmem:[%s4312 + $0xc0] sm:$0xff]
    %v4338 = vld [vmem:[%s4312 + $0xc8] sm:$0xff]
    %v4339 = vld [vmem:[%s4312 + $0xd0] sm:$0xff]
    %4340 = vmatpush.msra.mxu0 0.0
    %4341 = vmatpush.msra.mxu0 0.0
    %4342 = vmatpush.msra.mxu0 0.0
    %4343 = vmatpush.msra.mxu0 0.0
    %4344 = vmatpush.msra.mxu0 0.0
    %4345 = vmatpush.msra.mxu0 0.0
    %4346 = vmatpush.msra.mxu0 0.0
    %4347 = vmatpush.msra.mxu0 %v4337
    %4348 = vmatpush.msra.mxu0 %v4334
    %4349 = vmatpush.msra.mxu0 %v4331
    %4350 = vmatpush.msra.mxu0 %v4328
    %4351 = vmatpush.msra.mxu0 %v4325
    %4352 = vmatpush.msra.mxu0 %v4322
    %4353 = vmatpush.msra.mxu0 %v4319
    %4354 = vmatpush.msra.mxu0 %v4316
    %4355 = vmatpush.msra.mxu0 %v4313
    %4356 = vmatmul.f32.gmra.mxu0 %v1812
    %v4357 = vpop.f32.mrf.mxu0
    %v4358 = vadd.f32 0.0, %v4357
    %4359 = vmatmul.f32.gmra.mxu0 %v1815
    %v4360 = vpop.f32.mrf.mxu0
    %v4361 = vadd.f32 0.0, %v4360
    %4362 = vmatmul.f32.gmra.mxu0 %v1818
    %v4363 = vpop.f32.mrf.mxu0
    %v4364 = vadd.f32 0.0, %v4363
    %4365 = vmatmul.f32.gmra.mxu0 %v1821
    %v4366 = vpop.f32.mrf.mxu0
    %v4367 = vadd.f32 0.0, %v4366
    %4368 = vmatmul.f32.gmra.mxu0 %v1824
    %v4369 = vpop.f32.mrf.mxu0
    %v4370 = vadd.f32 0.0, %v4369
    %4371 = vmatmul.f32.gmra.mxu0 %v1827
    %v4372 = vpop.f32.mrf.mxu0
    %v4373 = vadd.f32 0.0, %v4372
    %4374 = vmatmul.f32.gmra.mxu0 %v1830
    %v4375 = vpop.f32.mrf.mxu0
    %v4376 = vadd.f32 0.0, %v4375
    %4377 = vmatmul.f32.gmra.mxu0 %v1833
    %v4378 = vpop.f32.mrf.mxu0
    %v4379 = vadd.f32 0.0, %v4378
    %4380 = vmatmul.f32.gmra.mxu0 %v1836
    %v4381 = vpop.f32.mrf.mxu0
    %v4382 = vadd.f32 0.0, %v4381
    %4383 = vmatmul.f32.gmra.mxu0 %v1839
    %v4384 = vpop.f32.mrf.mxu0
    %v4385 = vadd.f32 0.0, %v4384
    %4386 = vmatmul.f32.gmra.mxu0 %v1842
    %v4387 = vpop.f32.mrf.mxu0
    %v4388 = vadd.f32 0.0, %v4387
    %4389 = vmatmul.f32.gmra.mxu0 %v1845
    %v4390 = vpop.f32.mrf.mxu0
    %v4391 = vadd.f32 0.0, %v4390
    %4392 = vmatmul.f32.gmra.mxu0 %v1848
    %v4393 = vpop.f32.mrf.mxu0
    %v4394 = vadd.f32 0.0, %v4393
    %4395 = vmatmul.f32.gmra.mxu0 %v1851
    %v4396 = vpop.f32.mrf.mxu0
    %v4397 = vadd.f32 0.0, %v4396
    %4398 = vmatmul.f32.gmra.mxu0 %v1854
    %v4399 = vpop.f32.mrf.mxu0
    %v4400 = vadd.f32 0.0, %v4399
    %4401 = vmatmul.f32.gmra.mxu0 %v1857
    %v4402 = vpop.f32.mrf.mxu0
    %v4403 = vadd.f32 0.0, %v4402
    %4404 = vmatmul.f32.gmra.mxu0 %v1860
    %v4405 = vpop.f32.mrf.mxu0
    %v4406 = vadd.f32 0.0, %v4405
    %4407 = vmatmul.f32.gmra.mxu0 %v1863
    %v4408 = vpop.f32.mrf.mxu0
    %v4409 = vadd.f32 0.0, %v4408
    %4410 = vmatmul.f32.gmra.mxu0 %v1866
    %v4411 = vpop.f32.mrf.mxu0
    %v4412 = vadd.f32 0.0, %v4411
    %4413 = vmatmul.f32.gmra.mxu0 %v1869
    %v4414 = vpop.f32.mrf.mxu0
    %v4415 = vadd.f32 0.0, %v4414
    %4416 = vmatmul.f32.gmra.mxu0 %v1872
    %v4417 = vpop.f32.mrf.mxu0
    %v4418 = vadd.f32 0.0, %v4417
    %4419 = vmatmul.f32.gmra.mxu0 %v1875
    %v4420 = vpop.f32.mrf.mxu0
    %v4421 = vadd.f32 0.0, %v4420
    %4422 = vdwg.mxu0
    %4423 = vmatpush.msra.mxu0 0.0
    %4424 = vmatpush.msra.mxu0 0.0
    %4425 = vmatpush.msra.mxu0 0.0
    %4426 = vmatpush.msra.mxu0 0.0
    %4427 = vmatpush.msra.mxu0 0.0
    %4428 = vmatpush.msra.mxu0 0.0
    %4429 = vmatpush.msra.mxu0 0.0
    %4430 = vmatpush.msra.mxu0 %v4338
    %4431 = vmatpush.msra.mxu0 %v4335
    %4432 = vmatpush.msra.mxu0 %v4332
    %4433 = vmatpush.msra.mxu0 %v4329
    %4434 = vmatpush.msra.mxu0 %v4326
    %4435 = vmatpush.msra.mxu0 %v4323
    %4436 = vmatpush.msra.mxu0 %v4320
    %4437 = vmatpush.msra.mxu0 %v4317
    %4438 = vmatpush.msra.mxu0 %v4314
    %4439 = vmatmul.f32.gmra.mxu0 %v1812
    %v4440 = vpop.f32.mrf.mxu0
    %v4441 = vadd.f32 0.0, %v4440
    %4442 = vmatmul.f32.gmra.mxu0 %v1815
    %v4443 = vpop.f32.mrf.mxu0
    %v4444 = vadd.f32 0.0, %v4443
    %4445 = vmatmul.f32.gmra.mxu0 %v1818
    %v4446 = vpop.f32.mrf.mxu0
    %v4447 = vadd.f32 0.0, %v4446
    %4448 = vmatmul.f32.gmra.mxu0 %v1821
    %v4449 = vpop.f32.mrf.mxu0
    %v4450 = vadd.f32 0.0, %v4449
    %4451 = vmatmul.f32.gmra.mxu0 %v1824
    %v4452 = vpop.f32.mrf.mxu0
    %v4453 = vadd.f32 0.0, %v4452
    %4454 = vmatmul.f32.gmra.mxu0 %v1827
    %v4455 = vpop.f32.mrf.mxu0
    %v4456 = vadd.f32 0.0, %v4455
    %4457 = vmatmul.f32.gmra.mxu0 %v1830
    %v4458 = vpop.f32.mrf.mxu0
    %v4459 = vadd.f32 0.0, %v4458
    %4460 = vmatmul.f32.gmra.mxu0 %v1833
    %v4461 = vpop.f32.mrf.mxu0
    %v4462 = vadd.f32 0.0, %v4461
    %4463 = vmatmul.f32.gmra.mxu0 %v1836
    %v4464 = vpop.f32.mrf.mxu0
    %v4465 = vadd.f32 0.0, %v4464
    %4466 = vmatmul.f32.gmra.mxu0 %v1839
    %v4467 = vpop.f32.mrf.mxu0
    %v4468 = vadd.f32 0.0, %v4467
    %4469 = vmatmul.f32.gmra.mxu0 %v1842
    %v4470 = vpop.f32.mrf.mxu0
    %v4471 = vadd.f32 0.0, %v4470
    %4472 = vmatmul.f32.gmra.mxu0 %v1845
    %v4473 = vpop.f32.mrf.mxu0
    %v4474 = vadd.f32 0.0, %v4473
    %4475 = vmatmul.f32.gmra.mxu0 %v1848
    %v4476 = vpop.f32.mrf.mxu0
    %v4477 = vadd.f32 0.0, %v4476
    %4478 = vmatmul.f32.gmra.mxu0 %v1851
    %v4479 = vpop.f32.mrf.mxu0
    %v4480 = vadd.f32 0.0, %v4479
    %4481 = vmatmul.f32.gmra.mxu0 %v1854
    %v4482 = vpop.f32.mrf.mxu0
    %v4483 = vadd.f32 0.0, %v4482
    %4484 = vmatmul.f32.gmra.mxu0 %v1857
    %v4485 = vpop.f32.mrf.mxu0
    %v4486 = vadd.f32 0.0, %v4485
    %4487 = vmatmul.f32.gmra.mxu0 %v1860
    %v4488 = vpop.f32.mrf.mxu0
    %v4489 = vadd.f32 0.0, %v4488
    %4490 = vmatmul.f32.gmra.mxu0 %v1863
    %v4491 = vpop.f32.mrf.mxu0
    %v4492 = vadd.f32 0.0, %v4491
    %4493 = vmatmul.f32.gmra.mxu0 %v1866
    %v4494 = vpop.f32.mrf.mxu0
    %v4495 = vadd.f32 0.0, %v4494
    %4496 = vmatmul.f32.gmra.mxu0 %v1869
    %v4497 = vpop.f32.mrf.mxu0
    %v4498 = vadd.f32 0.0, %v4497
    %4499 = vmatmul.f32.gmra.mxu0 %v1872
    %v4500 = vpop.f32.mrf.mxu0
    %v4501 = vadd.f32 0.0, %v4500
    %4502 = vmatmul.f32.gmra.mxu0 %v1875
    %v4503 = vpop.f32.mrf.mxu0
    %v4504 = vadd.f32 0.0, %v4503
    %4505 = vdwg.mxu0
    %4506 = vmatpush.msra.mxu0 0.0
    %4507 = vmatpush.msra.mxu0 0.0
    %4508 = vmatpush.msra.mxu0 0.0
    %4509 = vmatpush.msra.mxu0 0.0
    %4510 = vmatpush.msra.mxu0 0.0
    %4511 = vmatpush.msra.mxu0 0.0
    %4512 = vmatpush.msra.mxu0 0.0
    %4513 = vmatpush.msra.mxu0 %v4339
    %4514 = vmatpush.msra.mxu0 %v4336
    %4515 = vmatpush.msra.mxu0 %v4333
    %4516 = vmatpush.msra.mxu0 %v4330
    %4517 = vmatpush.msra.mxu0 %v4327
    %4518 = vmatpush.msra.mxu0 %v4324
    %4519 = vmatpush.msra.mxu0 %v4321
    %4520 = vmatpush.msra.mxu0 %v4318
    %4521 = vmatpush.msra.mxu0 %v4315
    %4522 = vmatmul.f32.gmra.mxu0 %v1812
    %v4523 = vpop.f32.mrf.mxu0
    %v4524 = vadd.f32 0.0, %v4523
    %4525 = vmatmul.f32.gmra.mxu0 %v1815
    %v4526 = vpop.f32.mrf.mxu0
    %v4527 = vadd.f32 0.0, %v4526
    %4528 = vmatmul.f32.gmra.mxu0 %v1818
    %v4529 = vpop.f32.mrf.mxu0
    %v4530 = vadd.f32 0.0, %v4529
    %4531 = vmatmul.f32.gmra.mxu0 %v1821
    %v4532 = vpop.f32.mrf.mxu0
    %v4533 = vadd.f32 0.0, %v4532
    %4534 = vmatmul.f32.gmra.mxu0 %v1824
    %v4535 = vpop.f32.mrf.mxu0
    %v4536 = vadd.f32 0.0, %v4535
    %4537 = vmatmul.f32.gmra.mxu0 %v1827
    %v4538 = vpop.f32.mrf.mxu0
    %v4539 = vadd.f32 0.0, %v4538
    %4540 = vmatmul.f32.gmra.mxu0 %v1830
    %v4541 = vpop.f32.mrf.mxu0
    %v4542 = vadd.f32 0.0, %v4541
    %4543 = vmatmul.f32.gmra.mxu0 %v1833
    %v4544 = vpop.f32.mrf.mxu0
    %v4545 = vadd.f32 0.0, %v4544
    %4546 = vmatmul.f32.gmra.mxu0 %v1836
    %v4547 = vpop.f32.mrf.mxu0
    %v4548 = vadd.f32 0.0, %v4547
    %4549 = vmatmul.f32.gmra.mxu0 %v1839
    %v4550 = vpop.f32.mrf.mxu0
    %v4551 = vadd.f32 0.0, %v4550
    %4552 = vmatmul.f32.gmra.mxu0 %v1842
    %v4553 = vpop.f32.mrf.mxu0
    %v4554 = vadd.f32 0.0, %v4553
    %4555 = vmatmul.f32.gmra.mxu0 %v1845
    %v4556 = vpop.f32.mrf.mxu0
    %v4557 = vadd.f32 0.0, %v4556
    %4558 = vmatmul.f32.gmra.mxu0 %v1848
    %v4559 = vpop.f32.mrf.mxu0
    %v4560 = vadd.f32 0.0, %v4559
    %4561 = vmatmul.f32.gmra.mxu0 %v1851
    %v4562 = vpop.f32.mrf.mxu0
    %v4563 = vadd.f32 0.0, %v4562
    %4564 = vmatmul.f32.gmra.mxu0 %v1854
    %v4565 = vpop.f32.mrf.mxu0
    %v4566 = vadd.f32 0.0, %v4565
    %4567 = vmatmul.f32.gmra.mxu0 %v1857
    %v4568 = vpop.f32.mrf.mxu0
    %v4569 = vadd.f32 0.0, %v4568
    %4570 = vmatmul.f32.gmra.mxu0 %v1860
    %v4571 = vpop.f32.mrf.mxu0
    %v4572 = vadd.f32 0.0, %v4571
    %4573 = vmatmul.f32.gmra.mxu0 %v1863
    %v4574 = vpop.f32.mrf.mxu0
    %v4575 = vadd.f32 0.0, %v4574
    %4576 = vmatmul.f32.gmra.mxu0 %v1866
    %v4577 = vpop.f32.mrf.mxu0
    %v4578 = vadd.f32 0.0, %v4577
    %4579 = vmatmul.f32.gmra.mxu0 %v1869
    %v4580 = vpop.f32.mrf.mxu0
    %v4581 = vadd.f32 0.0, %v4580
    %4582 = vmatmul.f32.gmra.mxu0 %v1872
    %v4583 = vpop.f32.mrf.mxu0
    %v4584 = vadd.f32 0.0, %v4583
    %4585 = vmatmul.f32.gmra.mxu0 %v1875
    %v4586 = vpop.f32.mrf.mxu0
    %v4587 = vadd.f32 0.0, %v4586
    %4588 = vdwg.mxu0
    %v4589 = vadd.f32 %v4081, %v4358
    %v4590 = vadd.f32 %v4164, %v4441
    %v4591 = vadd.f32 %v4247, %v4524
    %v4592 = vadd.f32 %v4084, %v4361
    %v4593 = vadd.f32 %v4167, %v4444
    %v4594 = vadd.f32 %v4250, %v4527
    %v4595 = vadd.f32 %v4087, %v4364
    %v4596 = vadd.f32 %v4170, %v4447
    %v4597 = vadd.f32 %v4253, %v4530
    %v4598 = vadd.f32 %v4090, %v4367
    %v4599 = vadd.f32 %v4173, %v4450
    %v4600 = vadd.f32 %v4256, %v4533
    %v4601 = vadd.f32 %v4093, %v4370
    %v4602 = vadd.f32 %v4176, %v4453
    %v4603 = vadd.f32 %v4259, %v4536
    %v4604 = vadd.f32 %v4096, %v4373
    %v4605 = vadd.f32 %v4179, %v4456
    %v4606 = vadd.f32 %v4262, %v4539
    %v4607 = vadd.f32 %v4099, %v4376
    %v4608 = vadd.f32 %v4182, %v4459
    %v4609 = vadd.f32 %v4265, %v4542
    %v4610 = vadd.f32 %v4102, %v4379
    %v4611 = vadd.f32 %v4185, %v4462
    %v4612 = vadd.f32 %v4268, %v4545
    %v4613 = vadd.f32 %v4105, %v4382
    %v4614 = vadd.f32 %v4188, %v4465
    %v4615 = vadd.f32 %v4271, %v4548
    %v4616 = vadd.f32 %v4108, %v4385
    %v4617 = vadd.f32 %v4191, %v4468
    %v4618 = vadd.f32 %v4274, %v4551
    %v4619 = vadd.f32 %v4111, %v4388
    %v4620 = vadd.f32 %v4194, %v4471
    %v4621 = vadd.f32 %v4277, %v4554
    %v4622 = vadd.f32 %v4114, %v4391
    %v4623 = vadd.f32 %v4197, %v4474
    %v4624 = vadd.f32 %v4280, %v4557
    %v4625 = vadd.f32 %v4117, %v4394
    %v4626 = vadd.f32 %v4200, %v4477
    %v4627 = vadd.f32 %v4283, %v4560
    %v4628 = vadd.f32 %v4120, %v4397
    %v4629 = vadd.f32 %v4203, %v4480
    %v4630 = vadd.f32 %v4286, %v4563
    %v4631 = vadd.f32 %v4123, %v4400
    %v4632 = vadd.f32 %v4206, %v4483
    %v4633 = vadd.f32 %v4289, %v4566
    %v4634 = vadd.f32 %v4126, %v4403
    %v4635 = vadd.f32 %v4209, %v4486
    %v4636 = vadd.f32 %v4292, %v4569
    %v4637 = vadd.f32 %v4129, %v4406
    %v4638 = vadd.f32 %v4212, %v4489
    %v4639 = vadd.f32 %v4295, %v4572
    %v4640 = vadd.f32 %v4132, %v4409
    %v4641 = vadd.f32 %v4215, %v4492
    %v4642 = vadd.f32 %v4298, %v4575
    %v4643 = vadd.f32 %v4135, %v4412
    %v4644 = vadd.f32 %v4218, %v4495
    %v4645 = vadd.f32 %v4301, %v4578
    %v4646 = vadd.f32 %v4138, %v4415
    %v4647 = vadd.f32 %v4221, %v4498
    %v4648 = vadd.f32 %v4304, %v4581
    %v4649 = vadd.f32 %v4141, %v4418
    %v4650 = vadd.f32 %v4224, %v4501
    %v4651 = vadd.f32 %v4307, %v4584
    %v4652 = vadd.f32 %v4144, %v4421
    %v4653 = vadd.f32 %v4227, %v4504
    %v4654 = vadd.f32 %v4310, %v4587
    %v4655 = vadd.f32 %v4589, %v2194
    %v4656 = vadd.f32 %v4590, %v2195
    %v4657 = vadd.f32 %v4591, %v2196
    %v4658 = vadd.f32 %v4592, %v2194
    %v4659 = vadd.f32 %v4593, %v2195
    %v4660 = vadd.f32 %v4594, %v2196
    %v4661 = vadd.f32 %v4595, %v2194
    %v4662 = vadd.f32 %v4596, %v2195
    %v4663 = vadd.f32 %v4597, %v2196
    %v4664 = vadd.f32 %v4598, %v2194
    %v4665 = vadd.f32 %v4599, %v2195
    %v4666 = vadd.f32 %v4600, %v2196
    %v4667 = vadd.f32 %v4601, %v2194
    %v4668 = vadd.f32 %v4602, %v2195
    %v4669 = vadd.f32 %v4603, %v2196
    %v4670 = vadd.f32 %v4604, %v2194
    %v4671 = vadd.f32 %v4605, %v2195
    %v4672 = vadd.f32 %v4606, %v2196
    %v4673 = vadd.f32 %v4607, %v2194
    %v4674 = vadd.f32 %v4608, %v2195
    %v4675 = vadd.f32 %v4609, %v2196
    %v4676 = vadd.f32 %v4610, %v2194
    %v4677 = vadd.f32 %v4611, %v2195
    %v4678 = vadd.f32 %v4612, %v2196
    %v4679 = vadd.f32 %v4613, %v2194
    %v4680 = vadd.f32 %v4614, %v2195
    %v4681 = vadd.f32 %v4615, %v2196
    %v4682 = vadd.f32 %v4616, %v2194
    %v4683 = vadd.f32 %v4617, %v2195
    %v4684 = vadd.f32 %v4618, %v2196
    %v4685 = vadd.f32 %v4619, %v2194
    %v4686 = vadd.f32 %v4620, %v2195
    %v4687 = vadd.f32 %v4621, %v2196
    %v4688 = vadd.f32 %v4622, %v2194
    %v4689 = vadd.f32 %v4623, %v2195
    %v4690 = vadd.f32 %v4624, %v2196
    %v4691 = vadd.f32 %v4625, %v2194
    %v4692 = vadd.f32 %v4626, %v2195
    %v4693 = vadd.f32 %v4627, %v2196
    %v4694 = vadd.f32 %v4628, %v2194
    %v4695 = vadd.f32 %v4629, %v2195
    %v4696 = vadd.f32 %v4630, %v2196
    %v4697 = vadd.f32 %v4631, %v2194
    %v4698 = vadd.f32 %v4632, %v2195
    %v4699 = vadd.f32 %v4633, %v2196
    %v4700 = vadd.f32 %v4634, %v2194
    %v4701 = vadd.f32 %v4635, %v2195
    %v4702 = vadd.f32 %v4636, %v2196
    %v4703 = vadd.f32 %v4637, %v2194
    %v4704 = vadd.f32 %v4638, %v2195
    %v4705 = vadd.f32 %v4639, %v2196
    %v4706 = vadd.f32 %v4640, %v2194
    %v4707 = vadd.f32 %v4641, %v2195
    %v4708 = vadd.f32 %v4642, %v2196
    %v4709 = vadd.f32 %v4643, %v2194
    %v4710 = vadd.f32 %v4644, %v2195
    %v4711 = vadd.f32 %v4645, %v2196
    %v4712 = vadd.f32 %v4646, %v2194
    %v4713 = vadd.f32 %v4647, %v2195
    %v4714 = vadd.f32 %v4648, %v2196
    %v4715 = vadd.f32 %v4649, %v2194
    %v4716 = vadd.f32 %v4650, %v2195
    %v4717 = vadd.f32 %v4651, %v2196
    %v4718 = vadd.f32 %v4652, %v2194
    %v4719 = vadd.f32 %v4653, %v2195
    %v4720 = vadd.f32 %v4654, %v2196
    %v4721 = vmax.f32 %v4655, 0.0
    %v4722 = vmax.f32 %v4656, 0.0
    %v4723 = vmax.f32 %v4657, 0.0
    %v4724 = vmax.f32 %v4658, 0.0
    %v4725 = vmax.f32 %v4659, 0.0
    %v4726 = vmax.f32 %v4660, 0.0
    %v4727 = vmax.f32 %v4661, 0.0
    %v4728 = vmax.f32 %v4662, 0.0
    %v4729 = vmax.f32 %v4663, 0.0
    %v4730 = vmax.f32 %v4664, 0.0
    %v4731 = vmax.f32 %v4665, 0.0
    %v4732 = vmax.f32 %v4666, 0.0
    %v4733 = vmax.f32 %v4667, 0.0
    %v4734 = vmax.f32 %v4668, 0.0
    %v4735 = vmax.f32 %v4669, 0.0
    %v4736 = vmax.f32 %v4670, 0.0
    %v4737 = vmax.f32 %v4671, 0.0
    %v4738 = vmax.f32 %v4672, 0.0
    %v4739 = vmax.f32 %v4673, 0.0
    %v4740 = vmax.f32 %v4674, 0.0
    %v4741 = vmax.f32 %v4675, 0.0
    %v4742 = vmax.f32 %v4676, 0.0
    %v4743 = vmax.f32 %v4677, 0.0
    %v4744 = vmax.f32 %v4678, 0.0
    %v4745 = vmax.f32 %v4679, 0.0
    %v4746 = vmax.f32 %v4680, 0.0
    %v4747 = vmax.f32 %v4681, 0.0
    %v4748 = vmax.f32 %v4682, 0.0
    %v4749 = vmax.f32 %v4683, 0.0
    %v4750 = vmax.f32 %v4684, 0.0
    %v4751 = vmax.f32 %v4685, 0.0
    %v4752 = vmax.f32 %v4686, 0.0
    %v4753 = vmax.f32 %v4687, 0.0
    %v4754 = vmax.f32 %v4688, 0.0
    %v4755 = vmax.f32 %v4689, 0.0
    %v4756 = vmax.f32 %v4690, 0.0
    %v4757 = vmax.f32 %v4691, 0.0
    %v4758 = vmax.f32 %v4692, 0.0
    %v4759 = vmax.f32 %v4693, 0.0
    %v4760 = vmax.f32 %v4694, 0.0
    %v4761 = vmax.f32 %v4695, 0.0
    %v4762 = vmax.f32 %v4696, 0.0
    %v4763 = vmax.f32 %v4697, 0.0
    %v4764 = vmax.f32 %v4698, 0.0
    %v4765 = vmax.f32 %v4699, 0.0
    %v4766 = vmax.f32 %v4700, 0.0
    %v4767 = vmax.f32 %v4701, 0.0
    %v4768 = vmax.f32 %v4702, 0.0
    %v4769 = vmax.f32 %v4703, 0.0
    %v4770 = vmax.f32 %v4704, 0.0
    %v4771 = vmax.f32 %v4705, 0.0
    %v4772 = vmax.f32 %v4706, 0.0
    %v4773 = vmax.f32 %v4707, 0.0
    %v4774 = vmax.f32 %v4708, 0.0
    %v4775 = vmax.f32 %v4709, 0.0
    %v4776 = vmax.f32 %v4710, 0.0
    %v4777 = vmax.f32 %v4711, 0.0
    %v4778 = vmax.f32 %v4712, 0.0
    %v4779 = vmax.f32 %v4713, 0.0
    %v4780 = vmax.f32 %v4714, 0.0
    %v4781 = vmax.f32 %v4715, 0.0
    %v4782 = vmax.f32 %v4716, 0.0
    %v4783 = vmax.f32 %v4717, 0.0
    %v4784 = vmax.f32 %v4718, 0.0
    %v4785 = vmax.f32 %v4719, 0.0
    %v4786 = vmax.f32 %v4720, 0.0
    %v4787 = vmin.f32 %v4655, 0.0
    %v4788 = vmin.f32 %v4656, 0.0
    %v4789 = vmin.f32 %v4657, 0.0
    %v4790 = vmin.f32 %v4658, 0.0
    %v4791 = vmin.f32 %v4659, 0.0
    %v4792 = vmin.f32 %v4660, 0.0
    %v4793 = vmin.f32 %v4661, 0.0
    %v4794 = vmin.f32 %v4662, 0.0
    %v4795 = vmin.f32 %v4663, 0.0
    %v4796 = vmin.f32 %v4664, 0.0
    %v4797 = vmin.f32 %v4665, 0.0
    %v4798 = vmin.f32 %v4666, 0.0
    %v4799 = vmin.f32 %v4667, 0.0
    %v4800 = vmin.f32 %v4668, 0.0
    %v4801 = vmin.f32 %v4669, 0.0
    %v4802 = vmin.f32 %v4670, 0.0
    %v4803 = vmin.f32 %v4671, 0.0
    %v4804 = vmin.f32 %v4672, 0.0
    %v4805 = vmin.f32 %v4673, 0.0
    %v4806 = vmin.f32 %v4674, 0.0
    %v4807 = vmin.f32 %v4675, 0.0
    %v4808 = vmin.f32 %v4676, 0.0
    %v4809 = vmin.f32 %v4677, 0.0
    %v4810 = vmin.f32 %v4678, 0.0
    %v4811 = vmin.f32 %v4679, 0.0
    %v4812 = vmin.f32 %v4680, 0.0
    %v4813 = vmin.f32 %v4681, 0.0
    %v4814 = vmin.f32 %v4682, 0.0
    %v4815 = vmin.f32 %v4683, 0.0
    %v4816 = vmin.f32 %v4684, 0.0
    %v4817 = vmin.f32 %v4685, 0.0
    %v4818 = vmin.f32 %v4686, 0.0
    %v4819 = vmin.f32 %v4687, 0.0
    %v4820 = vmin.f32 %v4688, 0.0
    %v4821 = vmin.f32 %v4689, 0.0
    %v4822 = vmin.f32 %v4690, 0.0
    %v4823 = vmin.f32 %v4691, 0.0
    %v4824 = vmin.f32 %v4692, 0.0
    %v4825 = vmin.f32 %v4693, 0.0
    %v4826 = vmin.f32 %v4694, 0.0
    %v4827 = vmin.f32 %v4695, 0.0
    %v4828 = vmin.f32 %v4696, 0.0
    %v4829 = vmin.f32 %v4697, 0.0
    %v4830 = vmin.f32 %v4698, 0.0
    %v4831 = vmin.f32 %v4699, 0.0
    %v4832 = vmin.f32 %v4700, 0.0
    %v4833 = vmin.f32 %v4701, 0.0
    %v4834 = vmin.f32 %v4702, 0.0
    %v4835 = vmin.f32 %v4703, 0.0
    %v4836 = vmin.f32 %v4704, 0.0
    %v4837 = vmin.f32 %v4705, 0.0
    %v4838 = vmin.f32 %v4706, 0.0
    %v4839 = vmin.f32 %v4707, 0.0
    %v4840 = vmin.f32 %v4708, 0.0
    %v4841 = vmin.f32 %v4709, 0.0
    %v4842 = vmin.f32 %v4710, 0.0
    %v4843 = vmin.f32 %v4711, 0.0
    %v4844 = vmin.f32 %v4712, 0.0
    %v4845 = vmin.f32 %v4713, 0.0
    %v4846 = vmin.f32 %v4714, 0.0
    %v4847 = vmin.f32 %v4715, 0.0
    %v4848 = vmin.f32 %v4716, 0.0
    %v4849 = vmin.f32 %v4717, 0.0
    %v4850 = vmin.f32 %v4718, 0.0
    %v4851 = vmin.f32 %v4719, 0.0
    %v4852 = vmin.f32 %v4720, 0.0
    %v4853 = vmul.f32 %v2398, %v4787
    %v4854 = vmul.f32 %v2398, %v4788
    %v4855 = vmul.f32 %v2398, %v4789
    %v4856 = vmul.f32 %v2398, %v4790
    %v4857 = vmul.f32 %v2398, %v4791
    %v4858 = vmul.f32 %v2398, %v4792
    %v4859 = vmul.f32 %v2398, %v4793
    %v4860 = vmul.f32 %v2398, %v4794
    %v4861 = vmul.f32 %v2398, %v4795
    %v4862 = vmul.f32 %v2398, %v4796
    %v4863 = vmul.f32 %v2398, %v4797
    %v4864 = vmul.f32 %v2398, %v4798
    %v4865 = vmul.f32 %v2398, %v4799
    %v4866 = vmul.f32 %v2398, %v4800
    %v4867 = vmul.f32 %v2398, %v4801
    %v4868 = vmul.f32 %v2398, %v4802
    %v4869 = vmul.f32 %v2398, %v4803
    %v4870 = vmul.f32 %v2398, %v4804
    %v4871 = vmul.f32 %v2398, %v4805
    %v4872 = vmul.f32 %v2398, %v4806
    %v4873 = vmul.f32 %v2398, %v4807
    %v4874 = vmul.f32 %v2398, %v4808
    %v4875 = vmul.f32 %v2398, %v4809
    %v4876 = vmul.f32 %v2398, %v4810
    %v4877 = vmul.f32 %v2398, %v4811
    %v4878 = vmul.f32 %v2398, %v4812
    %v4879 = vmul.f32 %v2398, %v4813
    %v4880 = vmul.f32 %v2398, %v4814
    %v4881 = vmul.f32 %v2398, %v4815
    %v4882 = vmul.f32 %v2398, %v4816
    %v4883 = vmul.f32 %v2398, %v4817
    %v4884 = vmul.f32 %v2398, %v4818
    %v4885 = vmul.f32 %v2398, %v4819
    %v4886 = vmul.f32 %v2398, %v4820
    %v4887 = vmul.f32 %v2398, %v4821
    %v4888 = vmul.f32 %v2398, %v4822
    %v4889 = vmul.f32 %v2398, %v4823
    %v4890 = vmul.f32 %v2398, %v4824
    %v4891 = vmul.f32 %v2398, %v4825
    %v4892 = vmul.f32 %v2398, %v4826
    %v4893 = vmul.f32 %v2398, %v4827
    %v4894 = vmul.f32 %v2398, %v4828
    %v4895 = vmul.f32 %v2398, %v4829
    %v4896 = vmul.f32 %v2398, %v4830
    %v4897 = vmul.f32 %v2398, %v4831
    %v4898 = vmul.f32 %v2398, %v4832
    %v4899 = vmul.f32 %v2398, %v4833
    %v4900 = vmul.f32 %v2398, %v4834
    %v4901 = vmul.f32 %v2398, %v4835
    %v4902 = vmul.f32 %v2398, %v4836
    %v4903 = vmul.f32 %v2398, %v4837
    %v4904 = vmul.f32 %v2398, %v4838
    %v4905 = vmul.f32 %v2398, %v4839
    %v4906 = vmul.f32 %v2398, %v4840
    %v4907 = vmul.f32 %v2398, %v4841
    %v4908 = vmul.f32 %v2398, %v4842
    %v4909 = vmul.f32 %v2398, %v4843
    %v4910 = vmul.f32 %v2398, %v4844
    %v4911 = vmul.f32 %v2398, %v4845
    %v4912 = vmul.f32 %v2398, %v4846
    %v4913 = vmul.f32 %v2398, %v4847
    %v4914 = vmul.f32 %v2398, %v4848
    %v4915 = vmul.f32 %v2398, %v4849
    %v4916 = vmul.f32 %v2398, %v4850
    %v4917 = vmul.f32 %v2398, %v4851
    %v4918 = vmul.f32 %v2398, %v4852
    %v4919 = vadd.f32 %v4721, %v4853
    %v4920 = vadd.f32 %v4722, %v4854
    %v4921 = vadd.f32 %v4723, %v4855
    %v4922 = vadd.f32 %v4724, %v4856
    %v4923 = vadd.f32 %v4725, %v4857
    %v4924 = vadd.f32 %v4726, %v4858
    %v4925 = vadd.f32 %v4727, %v4859
    %v4926 = vadd.f32 %v4728, %v4860
    %v4927 = vadd.f32 %v4729, %v4861
    %v4928 = vadd.f32 %v4730, %v4862
    %v4929 = vadd.f32 %v4731, %v4863
    %v4930 = vadd.f32 %v4732, %v4864
    %v4931 = vadd.f32 %v4733, %v4865
    %v4932 = vadd.f32 %v4734, %v4866
    %v4933 = vadd.f32 %v4735, %v4867
    %v4934 = vadd.f32 %v4736, %v4868
    %v4935 = vadd.f32 %v4737, %v4869
    %v4936 = vadd.f32 %v4738, %v4870
    %v4937 = vadd.f32 %v4739, %v4871
    %v4938 = vadd.f32 %v4740, %v4872
    %v4939 = vadd.f32 %v4741, %v4873
    %v4940 = vadd.f32 %v4742, %v4874
    %v4941 = vadd.f32 %v4743, %v4875
    %v4942 = vadd.f32 %v4744, %v4876
    %v4943 = vadd.f32 %v4745, %v4877
    %v4944 = vadd.f32 %v4746, %v4878
    %v4945 = vadd.f32 %v4747, %v4879
    %v4946 = vadd.f32 %v4748, %v4880
    %v4947 = vadd.f32 %v4749, %v4881
    %v4948 = vadd.f32 %v4750, %v4882
    %v4949 = vadd.f32 %v4751, %v4883
    %v4950 = vadd.f32 %v4752, %v4884
    %v4951 = vadd.f32 %v4753, %v4885
    %v4952 = vadd.f32 %v4754, %v4886
    %v4953 = vadd.f32 %v4755, %v4887
    %v4954 = vadd.f32 %v4756, %v4888
    %v4955 = vadd.f32 %v4757, %v4889
    %v4956 = vadd.f32 %v4758, %v4890
    %v4957 = vadd.f32 %v4759, %v4891
    %v4958 = vadd.f32 %v4760, %v4892
    %v4959 = vadd.f32 %v4761, %v4893
    %v4960 = vadd.f32 %v4762, %v4894
    %v4961 = vadd.f32 %v4763, %v4895
    %v4962 = vadd.f32 %v4764, %v4896
    %v4963 = vadd.f32 %v4765, %v4897
    %v4964 = vadd.f32 %v4766, %v4898
    %v4965 = vadd.f32 %v4767, %v4899
    %v4966 = vadd.f32 %v4768, %v4900
    %v4967 = vadd.f32 %v4769, %v4901
    %v4968 = vadd.f32 %v4770, %v4902
    %v4969 = vadd.f32 %v4771, %v4903
    %v4970 = vadd.f32 %v4772, %v4904
    %v4971 = vadd.f32 %v4773, %v4905
    %v4972 = vadd.f32 %v4774, %v4906
    %v4973 = vadd.f32 %v4775, %v4907
    %v4974 = vadd.f32 %v4776, %v4908
    %v4975 = vadd.f32 %v4777, %v4909
    %v4976 = vadd.f32 %v4778, %v4910
    %v4977 = vadd.f32 %v4779, %v4911
    %v4978 = vadd.f32 %v4780, %v4912
    %v4979 = vadd.f32 %v4781, %v4913
    %v4980 = vadd.f32 %v4782, %v4914
    %v4981 = vadd.f32 %v4783, %v4915
    %v4982 = vadd.f32 %v4784, %v4916
    %v4983 = vadd.f32 %v4785, %v4917
    %v4984 = vadd.f32 %v4786, %v4918
    %v4985 = vmax.f32 %v3692, %v4919
    %v4986 = vmax.f32 %v3693, %v4920
    %v4987 = vmax.f32 %v3694, %v4921
    %v4988 = vmax.f32 %v3695, %v4922
    %v4989 = vmax.f32 %v3696, %v4923
    %v4990 = vmax.f32 %v3697, %v4924
    %v4991 = vmax.f32 %v3698, %v4925
    %v4992 = vmax.f32 %v3699, %v4926
    %v4993 = vmax.f32 %v3700, %v4927
    %v4994 = vmax.f32 %v3701, %v4928
    %v4995 = vmax.f32 %v3702, %v4929
    %v4996 = vmax.f32 %v3703, %v4930
    %v4997 = vmax.f32 %v3704, %v4931
    %v4998 = vmax.f32 %v3705, %v4932
    %v4999 = vmax.f32 %v3706, %v4933
    %v5000 = vmax.f32 %v3707, %v4934
    %v5001 = vmax.f32 %v3708, %v4935
    %v5002 = vmax.f32 %v3709, %v4936
    %v5003 = vmax.f32 %v3710, %v4937
    %v5004 = vmax.f32 %v3711, %v4938
    %v5005 = vmax.f32 %v3712, %v4939
    %v5006 = vmax.f32 %v3713, %v4940
    %v5007 = vmax.f32 %v3714, %v4941
    %v5008 = vmax.f32 %v3715, %v4942
    %v5009 = vmax.f32 %v3716, %v4943
    %v5010 = vmax.f32 %v3717, %v4944
    %v5011 = vmax.f32 %v3718, %v4945
    %v5012 = vmax.f32 %v3719, %v4946
    %v5013 = vmax.f32 %v3720, %v4947
    %v5014 = vmax.f32 %v3721, %v4948
    %v5015 = vmax.f32 %v3722, %v4949
    %v5016 = vmax.f32 %v3723, %v4950
    %v5017 = vmax.f32 %v3724, %v4951
    %v5018 = vmax.f32 %v3725, %v4952
    %v5019 = vmax.f32 %v3726, %v4953
    %v5020 = vmax.f32 %v3727, %v4954
    %v5021 = vmax.f32 %v3728, %v4955
    %v5022 = vmax.f32 %v3729, %v4956
    %v5023 = vmax.f32 %v3730, %v4957
    %v5024 = vmax.f32 %v3731, %v4958
    %v5025 = vmax.f32 %v3732, %v4959
    %v5026 = vmax.f32 %v3733, %v4960
    %v5027 = vmax.f32 %v3734, %v4961
    %v5028 = vmax.f32 %v3735, %v4962
    %v5029 = vmax.f32 %v3736, %v4963
    %v5030 = vmax.f32 %v3737, %v4964
    %v5031 = vmax.f32 %v3738, %v4965
    %v5032 = vmax.f32 %v3739, %v4966
    %v5033 = vmax.f32 %v3740, %v4967
    %v5034 = vmax.f32 %v3741, %v4968
    %v5035 = vmax.f32 %v3742, %v4969
    %v5036 = vmax.f32 %v3743, %v4970
    %v5037 = vmax.f32 %v3744, %v4971
    %v5038 = vmax.f32 %v3745, %v4972
    %v5039 = vmax.f32 %v3746, %v4973
    %v5040 = vmax.f32 %v3747, %v4974
    %v5041 = vmax.f32 %v3748, %v4975
    %v5042 = vmax.f32 %v3749, %v4976
    %v5043 = vmax.f32 %v3750, %v4977
    %v5044 = vmax.f32 %v3751, %v4978
    %v5045 = vmax.f32 %v3752, %v4979
    %v5046 = vmax.f32 %v3753, %v4980
    %v5047 = vmax.f32 %v3754, %v4981
    %v5048 = vmax.f32 %v3755, %v4982
    %v5049 = vmax.f32 %v3756, %v4983
    %v5050 = vmax.f32 %v3757, %v4984
    %v5051 = vmax.f32 %v2465, %v4985
    %v5052 = vmax.f32 %v2466, %v4986
    %v5053 = vmax.f32 %v2467, %v4987
    %v5054 = vmax.f32 %v2468, %v4988
    %v5055 = vmax.f32 %v2469, %v4989
    %v5056 = vmax.f32 %v2470, %v4990
    %v5057 = vmax.f32 %v2471, %v4991
    %v5058 = vmax.f32 %v2472, %v4992
    %v5059 = vmax.f32 %v2473, %v4993
    %v5060 = vmax.f32 %v2474, %v4994
    %v5061 = vmax.f32 %v2475, %v4995
    %v5062 = vmax.f32 %v2476, %v4996
    %v5063 = vmax.f32 %v2477, %v4997
    %v5064 = vmax.f32 %v2478, %v4998
    %v5065 = vmax.f32 %v2479, %v4999
    %v5066 = vmax.f32 %v2480, %v5000
    %v5067 = vmax.f32 %v2481, %v5001
    %v5068 = vmax.f32 %v2482, %v5002
    %v5069 = vmax.f32 %v2483, %v5003
    %v5070 = vmax.f32 %v2484, %v5004
    %v5071 = vmax.f32 %v2485, %v5005
    %v5072 = vmax.f32 %v2486, %v5006
    %v5073 = vmax.f32 %v2487, %v5007
    %v5074 = vmax.f32 %v2488, %v5008
    %v5075 = vmax.f32 %v2489, %v5009
    %v5076 = vmax.f32 %v2490, %v5010
    %v5077 = vmax.f32 %v2491, %v5011
    %v5078 = vmax.f32 %v2492, %v5012
    %v5079 = vmax.f32 %v2493, %v5013
    %v5080 = vmax.f32 %v2494, %v5014
    %v5081 = vmax.f32 %v2495, %v5015
    %v5082 = vmax.f32 %v2496, %v5016
    %v5083 = vmax.f32 %v2497, %v5017
    %v5084 = vmax.f32 %v2498, %v5018
    %v5085 = vmax.f32 %v2499, %v5019
    %v5086 = vmax.f32 %v2500, %v5020
    %v5087 = vmax.f32 %v2501, %v5021
    %v5088 = vmax.f32 %v2502, %v5022
    %v5089 = vmax.f32 %v2503, %v5023
    %v5090 = vmax.f32 %v2504, %v5024
    %v5091 = vmax.f32 %v2505, %v5025
    %v5092 = vmax.f32 %v2506, %v5026
    %v5093 = vmax.f32 %v2507, %v5027
    %v5094 = vmax.f32 %v2508, %v5028
    %v5095 = vmax.f32 %v2509, %v5029
    %v5096 = vmax.f32 %v2510, %v5030
    %v5097 = vmax.f32 %v2511, %v5031
    %v5098 = vmax.f32 %v2512, %v5032
    %v5099 = vmax.f32 %v2513, %v5033
    %v5100 = vmax.f32 %v2514, %v5034
    %v5101 = vmax.f32 %v2515, %v5035
    %v5102 = vmax.f32 %v2516, %v5036
    %v5103 = vmax.f32 %v2517, %v5037
    %v5104 = vmax.f32 %v2518, %v5038
    %v5105 = vmax.f32 %v2519, %v5039
    %v5106 = vmax.f32 %v2520, %v5040
    %v5107 = vmax.f32 %v2521, %v5041
    %v5108 = vmax.f32 %v2522, %v5042
    %v5109 = vmax.f32 %v2523, %v5043
    %v5110 = vmax.f32 %v2524, %v5044
    %v5111 = vmax.f32 %v2525, %v5045
    %v5112 = vmax.f32 %v2526, %v5046
    %v5113 = vmax.f32 %v2527, %v5047
    %v5114 = vmax.f32 %v2528, %v5048
    %v5115 = vmax.f32 %v2529, %v5049
    %v5116 = vmax.f32 %v2530, %v5050
    %v5117 = vld [vmem:[#allocation7] sm:$0xff]
    %v5118 = vld [vmem:[#allocation7 + $0x8] sm:$0xff]
    %v5119 = vld [vmem:[#allocation7 + $0x10] sm:$0xff]
    %v5120 = vld [vmem:[#allocation7 + $0x18] sm:$0xff]
    %v5121 = vld [vmem:[#allocation7 + $0x20] sm:$0xff]
    %v5122 = vld [vmem:[#allocation7 + $0x28] sm:$0xff]
    %v5123 = vld [vmem:[#allocation7 + $0x30] sm:$0xff]
    %v5124 = vld [vmem:[#allocation7 + $0x38] sm:$0xff]
    %v5125 = vld [vmem:[#allocation7 + $0x40] sm:$0xff]
    %v5126 = vld [vmem:[#allocation7 + $0x48] sm:$0xff]
    %v5127 = vld [vmem:[#allocation7 + $0x50] sm:$0xff]
    %v5128 = vld [vmem:[#allocation7 + $0x58] sm:$0xff]
    %v5129 = vld [vmem:[#allocation7 + $0x60] sm:$0xff]
    %v5130 = vld [vmem:[#allocation7 + $0x68] sm:$0xff]
    %v5131 = vld [vmem:[#allocation7 + $0x70] sm:$0xff]
    %v5132 = vld [vmem:[#allocation7 + $0x78] sm:$0xff]
    %v5133 = vld [vmem:[#allocation7 + $0x80] sm:$0xff]
    %v5134 = vld [vmem:[#allocation7 + $0x88] sm:$0xff]
    %v5135 = vld [vmem:[#allocation7 + $0x90] sm:$0xff]
    %v5136 = vld [vmem:[#allocation7 + $0x98] sm:$0xff]
    %vm5137 = vcmask 392192
    %v5139 = vsel %vm5137, %v5118, 0
    %v5142 = vsel %vm5137, %v5120, 0
    %v5145 = vsel %vm5137, %v5122, 0
    %v5148 = vsel %vm5137, %v5124, 0
    %v5151 = vsel %vm5137, %v5126, 0
    %v5154 = vsel %vm5137, %v5128, 0
    %v5157 = vsel %vm5137, %v5130, 0
    %v5160 = vsel %vm5137, %v5132, 0
    %v5163 = vsel %vm5137, %v5134, 0
    %v5166 = vsel %vm5137, %v5136, 0
    %5168 = vmatpush.msra.mxu0 %v5096
    %5169 = vmatpush.msra.mxu0 %v5093
    %5170 = vmatpush.msra.mxu0 %v5090
    %5171 = vmatpush.msra.mxu0 %v5087
    %5172 = vmatpush.msra.mxu0 %v5084
    %5173 = vmatpush.msra.mxu0 %v5081
    %5174 = vmatpush.msra.mxu0 %v5078
    %5175 = vmatpush.msra.mxu0 %v5075
    %5176 = vmatpush.msra.mxu0 %v5072
    %5177 = vmatpush.msra.mxu0 %v5069
    %5178 = vmatpush.msra.mxu0 %v5066
    %5179 = vmatpush.msra.mxu0 %v5063
    %5180 = vmatpush.msra.mxu0 %v5060
    %5181 = vmatpush.msra.mxu0 %v5057
    %5182 = vmatpush.msra.mxu0 %v5054
    %5183 = vmatpush.msra.mxu0 %v5051
    %5184 = vmatmul.f32.gmra.mxu0 %v5117
    %v5185 = vpop.f32.mrf.mxu0
    %v5186 = vadd.f32 0.0, %v5185
    %5187 = vmatmul.f32.gmra.mxu0 %v5119
    %v5188 = vpop.f32.mrf.mxu0
    %v5189 = vadd.f32 0.0, %v5188
    %5190 = vmatmul.f32.gmra.mxu0 %v5121
    %v5191 = vpop.f32.mrf.mxu0
    %v5192 = vadd.f32 0.0, %v5191
    %5193 = vmatmul.f32.gmra.mxu0 %v5123
    %v5194 = vpop.f32.mrf.mxu0
    %v5195 = vadd.f32 0.0, %v5194
    %5196 = vmatmul.f32.gmra.mxu0 %v5125
    %v5197 = vpop.f32.mrf.mxu0
    %v5198 = vadd.f32 0.0, %v5197
    %5199 = vmatmul.f32.gmra.mxu0 %v5127
    %v5200 = vpop.f32.mrf.mxu0
    %v5201 = vadd.f32 0.0, %v5200
    %5202 = vmatmul.f32.gmra.mxu0 %v5129
    %v5203 = vpop.f32.mrf.mxu0
    %v5204 = vadd.f32 0.0, %v5203
    %5205 = vmatmul.f32.gmra.mxu0 %v5131
    %v5206 = vpop.f32.mrf.mxu0
    %v5207 = vadd.f32 0.0, %v5206
    %5208 = vmatmul.f32.gmra.mxu0 %v5133
    %v5209 = vpop.f32.mrf.mxu0
    %v5210 = vadd.f32 0.0, %v5209
    %5211 = vmatmul.f32.gmra.mxu0 %v5135
    %v5212 = vpop.f32.mrf.mxu0
    %v5213 = vadd.f32 0.0, %v5212
    %5214 = vdwg.mxu0
    %5215 = vmatpush.msra.mxu0 0.0
    %5216 = vmatpush.msra.mxu0 0.0
    %5217 = vmatpush.msra.mxu0 0.0
    %5218 = vmatpush.msra.mxu0 0.0
    %5219 = vmatpush.msra.mxu0 0.0
    %5220 = vmatpush.msra.mxu0 0.0
    %5221 = vmatpush.msra.mxu0 0.0
    %5222 = vmatpush.msra.mxu0 0.0
    %5223 = vmatpush.msra.mxu0 0.0
    %5224 = vmatpush.msra.mxu0 0.0
    %5225 = vmatpush.msra.mxu0 %v5114
    %5226 = vmatpush.msra.mxu0 %v5111
    %5227 = vmatpush.msra.mxu0 %v5108
    %5228 = vmatpush.msra.mxu0 %v5105
    %5229 = vmatpush.msra.mxu0 %v5102
    %5230 = vmatpush.msra.mxu0 %v5099
    %5231 = vmatmul.f32.gmra.mxu0 %v5139
    %v5232 = vpop.f32.mrf.mxu0
    %v5233 = vadd.f32 %v5186, %v5232
    %5234 = vmatmul.f32.gmra.mxu0 %v5142
    %v5235 = vpop.f32.mrf.mxu0
    %v5236 = vadd.f32 %v5189, %v5235
    %5237 = vmatmul.f32.gmra.mxu0 %v5145
    %v5238 = vpop.f32.mrf.mxu0
    %v5239 = vadd.f32 %v5192, %v5238
    %5240 = vmatmul.f32.gmra.mxu0 %v5148
    %v5241 = vpop.f32.mrf.mxu0
    %v5242 = vadd.f32 %v5195, %v5241
    %5243 = vmatmul.f32.gmra.mxu0 %v5151
    %v5244 = vpop.f32.mrf.mxu0
    %v5245 = vadd.f32 %v5198, %v5244
    %5246 = vmatmul.f32.gmra.mxu0 %v5154
    %v5247 = vpop.f32.mrf.mxu0
    %v5248 = vadd.f32 %v5201, %v5247
    %5249 = vmatmul.f32.gmra.mxu0 %v5157
    %v5250 = vpop.f32.mrf.mxu0
    %v5251 = vadd.f32 %v5204, %v5250
    %5252 = vmatmul.f32.gmra.mxu0 %v5160
    %v5253 = vpop.f32.mrf.mxu0
    %v5254 = vadd.f32 %v5207, %v5253
    %5255 = vmatmul.f32.gmra.mxu0 %v5163
    %v5256 = vpop.f32.mrf.mxu0
    %v5257 = vadd.f32 %v5210, %v5256
    %5258 = vmatmul.f32.gmra.mxu0 %v5166
    %v5259 = vpop.f32.mrf.mxu0
    %v5260 = vadd.f32 %v5213, %v5259
    %5261 = vdwg.mxu0
    %5262 = vmatpush.msra.mxu0 %v5097
    %5263 = vmatpush.msra.mxu0 %v5094
    %5264 = vmatpush.msra.mxu0 %v5091
    %5265 = vmatpush.msra.mxu0 %v5088
    %5266 = vmatpush.msra.mxu0 %v5085
    %5267 = vmatpush.msra.mxu0 %v5082
    %5268 = vmatpush.msra.mxu0 %v5079
    %5269 = vmatpush.msra.mxu0 %v5076
    %5270 = vmatpush.msra.mxu0 %v5073
    %5271 = vmatpush.msra.mxu0 %v5070
    %5272 = vmatpush.msra.mxu0 %v5067
    %5273 = vmatpush.msra.mxu0 %v5064
    %5274 = vmatpush.msra.mxu0 %v5061
    %5275 = vmatpush.msra.mxu0 %v5058
    %5276 = vmatpush.msra.mxu0 %v5055
    %5277 = vmatpush.msra.mxu0 %v5052
    %5278 = vmatmul.f32.gmra.mxu0 %v5117
    %v5279 = vpop.f32.mrf.mxu0
    %v5280 = vadd.f32 0.0, %v5279
    %5281 = vmatmul.f32.gmra.mxu0 %v5119
    %v5282 = vpop.f32.mrf.mxu0
    %v5283 = vadd.f32 0.0, %v5282
    %5284 = vmatmul.f32.gmra.mxu0 %v5121
    %v5285 = vpop.f32.mrf.mxu0
    %v5286 = vadd.f32 0.0, %v5285
    %5287 = vmatmul.f32.gmra.mxu0 %v5123
    %v5288 = vpop.f32.mrf.mxu0
    %v5289 = vadd.f32 0.0, %v5288
    %5290 = vmatmul.f32.gmra.mxu0 %v5125
    %v5291 = vpop.f32.mrf.mxu0
    %v5292 = vadd.f32 0.0, %v5291
    %5293 = vmatmul.f32.gmra.mxu0 %v5127
    %v5294 = vpop.f32.mrf.mxu0
    %v5295 = vadd.f32 0.0, %v5294
    %5296 = vmatmul.f32.gmra.mxu0 %v5129
    %v5297 = vpop.f32.mrf.mxu0
    %v5298 = vadd.f32 0.0, %v5297
    %5299 = vmatmul.f32.gmra.mxu0 %v5131
    %v5300 = vpop.f32.mrf.mxu0
    %v5301 = vadd.f32 0.0, %v5300
    %5302 = vmatmul.f32.gmra.mxu0 %v5133
    %v5303 = vpop.f32.mrf.mxu0
    %v5304 = vadd.f32 0.0, %v5303
    %5305 = vmatmul.f32.gmra.mxu0 %v5135
    %v5306 = vpop.f32.mrf.mxu0
    %v5307 = vadd.f32 0.0, %v5306
    %5308 = vdwg.mxu0
    %5309 = vmatpush.msra.mxu0 0.0
    %5310 = vmatpush.msra.mxu0 0.0
    %5311 = vmatpush.msra.mxu0 0.0
    %5312 = vmatpush.msra.mxu0 0.0
    %5313 = vmatpush.msra.mxu0 0.0
    %5314 = vmatpush.msra.mxu0 0.0
    %5315 = vmatpush.msra.mxu0 0.0
    %5316 = vmatpush.msra.mxu0 0.0
    %5317 = vmatpush.msra.mxu0 0.0
    %5318 = vmatpush.msra.mxu0 0.0
    %5319 = vmatpush.msra.mxu0 %v5115
    %5320 = vmatpush.msra.mxu0 %v5112
    %5321 = vmatpush.msra.mxu0 %v5109
    %5322 = vmatpush.msra.mxu0 %v5106
    %5323 = vmatpush.msra.mxu0 %v5103
    %5324 = vmatpush.msra.mxu0 %v5100
    %5325 = vmatmul.f32.gmra.mxu0 %v5139
    %v5326 = vpop.f32.mrf.mxu0
    %v5327 = vadd.f32 %v5280, %v5326
    %5328 = vmatmul.f32.gmra.mxu0 %v5142
    %v5329 = vpop.f32.mrf.mxu0
    %v5330 = vadd.f32 %v5283, %v5329
    %5331 = vmatmul.f32.gmra.mxu0 %v5145
    %v5332 = vpop.f32.mrf.mxu0
    %v5333 = vadd.f32 %v5286, %v5332
    %5334 = vmatmul.f32.gmra.mxu0 %v5148
    %v5335 = vpop.f32.mrf.mxu0
    %v5336 = vadd.f32 %v5289, %v5335
    %5337 = vmatmul.f32.gmra.mxu0 %v5151
    %v5338 = vpop.f32.mrf.mxu0
    %v5339 = vadd.f32 %v5292, %v5338
    %5340 = vmatmul.f32.gmra.mxu0 %v5154
    %v5341 = vpop.f32.mrf.mxu0
    %v5342 = vadd.f32 %v5295, %v5341
    %5343 = vmatmul.f32.gmra.mxu0 %v5157
    %v5344 = vpop.f32.mrf.mxu0
    %v5345 = vadd.f32 %v5298, %v5344
    %5346 = vmatmul.f32.gmra.mxu0 %v5160
    %v5347 = vpop.f32.mrf.mxu0
    %v5348 = vadd.f32 %v5301, %v5347
    %5349 = vmatmul.f32.gmra.mxu0 %v5163
    %v5350 = vpop.f32.mrf.mxu0
    %v5351 = vadd.f32 %v5304, %v5350
    %5352 = vmatmul.f32.gmra.mxu0 %v5166
    %v5353 = vpop.f32.mrf.mxu0
    %v5354 = vadd.f32 %v5307, %v5353
    %5355 = vdwg.mxu0
    %5356 = vmatpush.msra.mxu0 %v5098
    %5357 = vmatpush.msra.mxu0 %v5095
    %5358 = vmatpush.msra.mxu0 %v5092
    %5359 = vmatpush.msra.mxu0 %v5089
    %5360 = vmatpush.msra.mxu0 %v5086
    %5361 = vmatpush.msra.mxu0 %v5083
    %5362 = vmatpush.msra.mxu0 %v5080
    %5363 = vmatpush.msra.mxu0 %v5077
    %5364 = vmatpush.msra.mxu0 %v5074
    %5365 = vmatpush.msra.mxu0 %v5071
    %5366 = vmatpush.msra.mxu0 %v5068
    %5367 = vmatpush.msra.mxu0 %v5065
    %5368 = vmatpush.msra.mxu0 %v5062
    %5369 = vmatpush.msra.mxu0 %v5059
    %5370 = vmatpush.msra.mxu0 %v5056
    %5371 = vmatpush.msra.mxu0 %v5053
    %5372 = vmatmul.f32.gmra.mxu0 %v5117
    %v5373 = vpop.f32.mrf.mxu0
    %v5374 = vadd.f32 0.0, %v5373
    %5375 = vmatmul.f32.gmra.mxu0 %v5119
    %v5376 = vpop.f32.mrf.mxu0
    %v5377 = vadd.f32 0.0, %v5376
    %5378 = vmatmul.f32.gmra.mxu0 %v5121
    %v5379 = vpop.f32.mrf.mxu0
    %v5380 = vadd.f32 0.0, %v5379
    %5381 = vmatmul.f32.gmra.mxu0 %v5123
    %v5382 = vpop.f32.mrf.mxu0
    %v5383 = vadd.f32 0.0, %v5382
    %5384 = vmatmul.f32.gmra.mxu0 %v5125
    %v5385 = vpop.f32.mrf.mxu0
    %v5386 = vadd.f32 0.0, %v5385
    %5387 = vmatmul.f32.gmra.mxu0 %v5127
    %v5388 = vpop.f32.mrf.mxu0
    %v5389 = vadd.f32 0.0, %v5388
    %5390 = vmatmul.f32.gmra.mxu0 %v5129
    %v5391 = vpop.f32.mrf.mxu0
    %v5392 = vadd.f32 0.0, %v5391
    %5393 = vmatmul.f32.gmra.mxu0 %v5131
    %v5394 = vpop.f32.mrf.mxu0
    %v5395 = vadd.f32 0.0, %v5394
    %5396 = vmatmul.f32.gmra.mxu0 %v5133
    %v5397 = vpop.f32.mrf.mxu0
    %v5398 = vadd.f32 0.0, %v5397
    %5399 = vmatmul.f32.gmra.mxu0 %v5135
    %v5400 = vpop.f32.mrf.mxu0
    %v5401 = vadd.f32 0.0, %v5400
    %5402 = vdwg.mxu0
    %5403 = vmatpush.msra.mxu0 0.0
    %5404 = vmatpush.msra.mxu0 0.0
    %5405 = vmatpush.msra.mxu0 0.0
    %5406 = vmatpush.msra.mxu0 0.0
    %5407 = vmatpush.msra.mxu0 0.0
    %5408 = vmatpush.msra.mxu0 0.0
    %5409 = vmatpush.msra.mxu0 0.0
    %5410 = vmatpush.msra.mxu0 0.0
    %5411 = vmatpush.msra.mxu0 0.0
    %5412 = vmatpush.msra.mxu0 0.0
    %5413 = vmatpush.msra.mxu0 %v5116
    %5414 = vmatpush.msra.mxu0 %v5113
    %5415 = vmatpush.msra.mxu0 %v5110
    %5416 = vmatpush.msra.mxu0 %v5107
    %5417 = vmatpush.msra.mxu0 %v5104
    %5418 = vmatpush.msra.mxu0 %v5101
    %5419 = vmatmul.f32.gmra.mxu0 %v5139
    %v5420 = vpop.f32.mrf.mxu0
    %v5421 = vadd.f32 %v5374, %v5420
    %5422 = vmatmul.f32.gmra.mxu0 %v5142
    %v5423 = vpop.f32.mrf.mxu0
    %v5424 = vadd.f32 %v5377, %v5423
    %5425 = vmatmul.f32.gmra.mxu0 %v5145
    %v5426 = vpop.f32.mrf.mxu0
    %v5427 = vadd.f32 %v5380, %v5426
    %5428 = vmatmul.f32.gmra.mxu0 %v5148
    %v5429 = vpop.f32.mrf.mxu0
    %v5430 = vadd.f32 %v5383, %v5429
    %5431 = vmatmul.f32.gmra.mxu0 %v5151
    %v5432 = vpop.f32.mrf.mxu0
    %v5433 = vadd.f32 %v5386, %v5432
    %5434 = vmatmul.f32.gmra.mxu0 %v5154
    %v5435 = vpop.f32.mrf.mxu0
    %v5436 = vadd.f32 %v5389, %v5435
    %5437 = vmatmul.f32.gmra.mxu0 %v5157
    %v5438 = vpop.f32.mrf.mxu0
    %v5439 = vadd.f32 %v5392, %v5438
    %5440 = vmatmul.f32.gmra.mxu0 %v5160
    %v5441 = vpop.f32.mrf.mxu0
    %v5442 = vadd.f32 %v5395, %v5441
    %5443 = vmatmul.f32.gmra.mxu0 %v5163
    %v5444 = vpop.f32.mrf.mxu0
    %v5445 = vadd.f32 %v5398, %v5444
    %5446 = vmatmul.f32.gmra.mxu0 %v5166
    %v5447 = vpop.f32.mrf.mxu0
    %v5448 = vadd.f32 %v5401, %v5447
    %5449 = vdwg.mxu0
    %s5450 = scalar_lea.vmem [#allocation7], 160
    %v5451 = vld [vmem:[%s5450] sm:$0xff]
    %v5452 = vld [vmem:[%s5450 + $0x8] sm:$0xff]
    %v5453 = vld [vmem:[%s5450 + $0x10] sm:$0xff]
    %v5454 = vld [vmem:[%s5450 + $0x18] sm:$0xff]
    %v5455 = vld [vmem:[%s5450 + $0x20] sm:$0xff]
    %v5456 = vld [vmem:[%s5450 + $0x28] sm:$0xff]
    %v5457 = vld [vmem:[%s5450 + $0x30] sm:$0xff]
    %v5458 = vld [vmem:[%s5450 + $0x38] sm:$0xff]
    %v5459 = vld [vmem:[%s5450 + $0x40] sm:$0xff]
    %v5460 = vld [vmem:[%s5450 + $0x48] sm:$0xff]
    %v5461 = vld [vmem:[%s5450 + $0x50] sm:$0xff]
    %v5462 = vld [vmem:[%s5450 + $0x58] sm:$0xff]
    %v5463 = vld [vmem:[%s5450 + $0x60] sm:$0xff]
    %v5464 = vld [vmem:[%s5450 + $0x68] sm:$0xff]
    %v5465 = vld [vmem:[%s5450 + $0x70] sm:$0xff]
    %v5466 = vld [vmem:[%s5450 + $0x78] sm:$0xff]
    %v5467 = vld [vmem:[%s5450 + $0x80] sm:$0xff]
    %v5468 = vld [vmem:[%s5450 + $0x88] sm:$0xff]
    %v5469 = vld [vmem:[%s5450 + $0x90] sm:$0xff]
    %v5470 = vld [vmem:[%s5450 + $0x98] sm:$0xff]
    %v5472 = vsel %vm5137, %v5452, 0
    %v5475 = vsel %vm5137, %v5454, 0
    %v5478 = vsel %vm5137, %v5456, 0
    %v5481 = vsel %vm5137, %v5458, 0
    %v5484 = vsel %vm5137, %v5460, 0
    %v5487 = vsel %vm5137, %v5462, 0
    %v5490 = vsel %vm5137, %v5464, 0
    %v5493 = vsel %vm5137, %v5466, 0
    %v5496 = vsel %vm5137, %v5468, 0
    %v5499 = vsel %vm5137, %v5470, 0
    %5501 = vmatpush.msra.mxu0 %v5096
    %5502 = vmatpush.msra.mxu0 %v5093
    %5503 = vmatpush.msra.mxu0 %v5090
    %5504 = vmatpush.msra.mxu0 %v5087
    %5505 = vmatpush.msra.mxu0 %v5084
    %5506 = vmatpush.msra.mxu0 %v5081
    %5507 = vmatpush.msra.mxu0 %v5078
    %5508 = vmatpush.msra.mxu0 %v5075
    %5509 = vmatpush.msra.mxu0 %v5072
    %5510 = vmatpush.msra.mxu0 %v5069
    %5511 = vmatpush.msra.mxu0 %v5066
    %5512 = vmatpush.msra.mxu0 %v5063
    %5513 = vmatpush.msra.mxu0 %v5060
    %5514 = vmatpush.msra.mxu0 %v5057
    %5515 = vmatpush.msra.mxu0 %v5054
    %5516 = vmatpush.msra.mxu0 %v5051
    %5517 = vmatmul.f32.gmra.mxu0 %v5451
    %v5518 = vpop.f32.mrf.mxu0
    %v5519 = vadd.f32 0.0, %v5518
    %5520 = vmatmul.f32.gmra.mxu0 %v5453
    %v5521 = vpop.f32.mrf.mxu0
    %v5522 = vadd.f32 0.0, %v5521
    %5523 = vmatmul.f32.gmra.mxu0 %v5455
    %v5524 = vpop.f32.mrf.mxu0
    %v5525 = vadd.f32 0.0, %v5524
    %5526 = vmatmul.f32.gmra.mxu0 %v5457
    %v5527 = vpop.f32.mrf.mxu0
    %v5528 = vadd.f32 0.0, %v5527
    %5529 = vmatmul.f32.gmra.mxu0 %v5459
    %v5530 = vpop.f32.mrf.mxu0
    %v5531 = vadd.f32 0.0, %v5530
    %5532 = vmatmul.f32.gmra.mxu0 %v5461
    %v5533 = vpop.f32.mrf.mxu0
    %v5534 = vadd.f32 0.0, %v5533
    %5535 = vmatmul.f32.gmra.mxu0 %v5463
    %v5536 = vpop.f32.mrf.mxu0
    %v5537 = vadd.f32 0.0, %v5536
    %5538 = vmatmul.f32.gmra.mxu0 %v5465
    %v5539 = vpop.f32.mrf.mxu0
    %v5540 = vadd.f32 0.0, %v5539
    %5541 = vmatmul.f32.gmra.mxu0 %v5467
    %v5542 = vpop.f32.mrf.mxu0
    %v5543 = vadd.f32 0.0, %v5542
    %5544 = vmatmul.f32.gmra.mxu0 %v5469
    %v5545 = vpop.f32.mrf.mxu0
    %v5546 = vadd.f32 0.0, %v5545
    %5547 = vdwg.mxu0
    %5548 = vmatpush.msra.mxu0 0.0
    %5549 = vmatpush.msra.mxu0 0.0
    %5550 = vmatpush.msra.mxu0 0.0
    %5551 = vmatpush.msra.mxu0 0.0
    %5552 = vmatpush.msra.mxu0 0.0
    %5553 = vmatpush.msra.mxu0 0.0
    %5554 = vmatpush.msra.mxu0 0.0
    %5555 = vmatpush.msra.mxu0 0.0
    %5556 = vmatpush.msra.mxu0 0.0
    %5557 = vmatpush.msra.mxu0 0.0
    %5558 = vmatpush.msra.mxu0 %v5114
    %5559 = vmatpush.msra.mxu0 %v5111
    %5560 = vmatpush.msra.mxu0 %v5108
    %5561 = vmatpush.msra.mxu0 %v5105
    %5562 = vmatpush.msra.mxu0 %v5102
    %5563 = vmatpush.msra.mxu0 %v5099
    %5564 = vmatmul.f32.gmra.mxu0 %v5472
    %v5565 = vpop.f32.mrf.mxu0
    %v5566 = vadd.f32 %v5519, %v5565
    %5567 = vmatmul.f32.gmra.mxu0 %v5475
    %v5568 = vpop.f32.mrf.mxu0
    %v5569 = vadd.f32 %v5522, %v5568
    %5570 = vmatmul.f32.gmra.mxu0 %v5478
    %v5571 = vpop.f32.mrf.mxu0
    %v5572 = vadd.f32 %v5525, %v5571
    %5573 = vmatmul.f32.gmra.mxu0 %v5481
    %v5574 = vpop.f32.mrf.mxu0
    %v5575 = vadd.f32 %v5528, %v5574
    %5576 = vmatmul.f32.gmra.mxu0 %v5484
    %v5577 = vpop.f32.mrf.mxu0
    %v5578 = vadd.f32 %v5531, %v5577
    %5579 = vmatmul.f32.gmra.mxu0 %v5487
    %v5580 = vpop.f32.mrf.mxu0
    %v5581 = vadd.f32 %v5534, %v5580
    %5582 = vmatmul.f32.gmra.mxu0 %v5490
    %v5583 = vpop.f32.mrf.mxu0
    %v5584 = vadd.f32 %v5537, %v5583
    %5585 = vmatmul.f32.gmra.mxu0 %v5493
    %v5586 = vpop.f32.mrf.mxu0
    %v5587 = vadd.f32 %v5540, %v5586
    %5588 = vmatmul.f32.gmra.mxu0 %v5496
    %v5589 = vpop.f32.mrf.mxu0
    %v5590 = vadd.f32 %v5543, %v5589
    %5591 = vmatmul.f32.gmra.mxu0 %v5499
    %v5592 = vpop.f32.mrf.mxu0
    %v5593 = vadd.f32 %v5546, %v5592
    %5594 = vdwg.mxu0
    %5595 = vmatpush.msra.mxu0 %v5097
    %5596 = vmatpush.msra.mxu0 %v5094
    %5597 = vmatpush.msra.mxu0 %v5091
    %5598 = vmatpush.msra.mxu0 %v5088
    %5599 = vmatpush.msra.mxu0 %v5085
    %5600 = vmatpush.msra.mxu0 %v5082
    %5601 = vmatpush.msra.mxu0 %v5079
    %5602 = vmatpush.msra.mxu0 %v5076
    %5603 = vmatpush.msra.mxu0 %v5073
    %5604 = vmatpush.msra.mxu0 %v5070
    %5605 = vmatpush.msra.mxu0 %v5067
    %5606 = vmatpush.msra.mxu0 %v5064
    %5607 = vmatpush.msra.mxu0 %v5061
    %5608 = vmatpush.msra.mxu0 %v5058
    %5609 = vmatpush.msra.mxu0 %v5055
    %5610 = vmatpush.msra.mxu0 %v5052
    %5611 = vmatmul.f32.gmra.mxu0 %v5451
    %v5612 = vpop.f32.mrf.mxu0
    %v5613 = vadd.f32 0.0, %v5612
    %5614 = vmatmul.f32.gmra.mxu0 %v5453
    %v5615 = vpop.f32.mrf.mxu0
    %v5616 = vadd.f32 0.0, %v5615
    %5617 = vmatmul.f32.gmra.mxu0 %v5455
    %v5618 = vpop.f32.mrf.mxu0
    %v5619 = vadd.f32 0.0, %v5618
    %5620 = vmatmul.f32.gmra.mxu0 %v5457
    %v5621 = vpop.f32.mrf.mxu0
    %v5622 = vadd.f32 0.0, %v5621
    %5623 = vmatmul.f32.gmra.mxu0 %v5459
    %v5624 = vpop.f32.mrf.mxu0
    %v5625 = vadd.f32 0.0, %v5624
    %5626 = vmatmul.f32.gmra.mxu0 %v5461
    %v5627 = vpop.f32.mrf.mxu0
    %v5628 = vadd.f32 0.0, %v5627
    %5629 = vmatmul.f32.gmra.mxu0 %v5463
    %v5630 = vpop.f32.mrf.mxu0
    %v5631 = vadd.f32 0.0, %v5630
    %5632 = vmatmul.f32.gmra.mxu0 %v5465
    %v5633 = vpop.f32.mrf.mxu0
    %v5634 = vadd.f32 0.0, %v5633
    %5635 = vmatmul.f32.gmra.mxu0 %v5467
    %v5636 = vpop.f32.mrf.mxu0
    %v5637 = vadd.f32 0.0, %v5636
    %5638 = vmatmul.f32.gmra.mxu0 %v5469
    %v5639 = vpop.f32.mrf.mxu0
    %v5640 = vadd.f32 0.0, %v5639
    %5641 = vdwg.mxu0
    %5642 = vmatpush.msra.mxu0 0.0
    %5643 = vmatpush.msra.mxu0 0.0
    %5644 = vmatpush.msra.mxu0 0.0
    %5645 = vmatpush.msra.mxu0 0.0
    %5646 = vmatpush.msra.mxu0 0.0
    %5647 = vmatpush.msra.mxu0 0.0
    %5648 = vmatpush.msra.mxu0 0.0
    %5649 = vmatpush.msra.mxu0 0.0
    %5650 = vmatpush.msra.mxu0 0.0
    %5651 = vmatpush.msra.mxu0 0.0
    %5652 = vmatpush.msra.mxu0 %v5115
    %5653 = vmatpush.msra.mxu0 %v5112
    %5654 = vmatpush.msra.mxu0 %v5109
    %5655 = vmatpush.msra.mxu0 %v5106
    %5656 = vmatpush.msra.mxu0 %v5103
    %5657 = vmatpush.msra.mxu0 %v5100
    %5658 = vmatmul.f32.gmra.mxu0 %v5472
    %v5659 = vpop.f32.mrf.mxu0
    %v5660 = vadd.f32 %v5613, %v5659
    %5661 = vmatmul.f32.gmra.mxu0 %v5475
    %v5662 = vpop.f32.mrf.mxu0
    %v5663 = vadd.f32 %v5616, %v5662
    %5664 = vmatmul.f32.gmra.mxu0 %v5478
    %v5665 = vpop.f32.mrf.mxu0
    %v5666 = vadd.f32 %v5619, %v5665
    %5667 = vmatmul.f32.gmra.mxu0 %v5481
    %v5668 = vpop.f32.mrf.mxu0
    %v5669 = vadd.f32 %v5622, %v5668
    %5670 = vmatmul.f32.gmra.mxu0 %v5484
    %v5671 = vpop.f32.mrf.mxu0
    %v5672 = vadd.f32 %v5625, %v5671
    %5673 = vmatmul.f32.gmra.mxu0 %v5487
    %v5674 = vpop.f32.mrf.mxu0
    %v5675 = vadd.f32 %v5628, %v5674
    %5676 = vmatmul.f32.gmra.mxu0 %v5490
    %v5677 = vpop.f32.mrf.mxu0
    %v5678 = vadd.f32 %v5631, %v5677
    %5679 = vmatmul.f32.gmra.mxu0 %v5493
    %v5680 = vpop.f32.mrf.mxu0
    %v5681 = vadd.f32 %v5634, %v5680
    %5682 = vmatmul.f32.gmra.mxu0 %v5496
    %v5683 = vpop.f32.mrf.mxu0
    %v5684 = vadd.f32 %v5637, %v5683
    %5685 = vmatmul.f32.gmra.mxu0 %v5499
    %v5686 = vpop.f32.mrf.mxu0
    %v5687 = vadd.f32 %v5640, %v5686
    %5688 = vdwg.mxu0
    %5689 = vmatpush.msra.mxu0 %v5098
    %5690 = vmatpush.msra.mxu0 %v5095
    %5691 = vmatpush.msra.mxu0 %v5092
    %5692 = vmatpush.msra.mxu0 %v5089
    %5693 = vmatpush.msra.mxu0 %v5086
    %5694 = vmatpush.msra.mxu0 %v5083
    %5695 = vmatpush.msra.mxu0 %v5080
    %5696 = vmatpush.msra.mxu0 %v5077
    %5697 = vmatpush.msra.mxu0 %v5074
    %5698 = vmatpush.msra.mxu0 %v5071
    %5699 = vmatpush.msra.mxu0 %v5068
    %5700 = vmatpush.msra.mxu0 %v5065
    %5701 = vmatpush.msra.mxu0 %v5062
    %5702 = vmatpush.msra.mxu0 %v5059
    %5703 = vmatpush.msra.mxu0 %v5056
    %5704 = vmatpush.msra.mxu0 %v5053
    %5705 = vmatmul.f32.gmra.mxu0 %v5451
    %v5706 = vpop.f32.mrf.mxu0
    %v5707 = vadd.f32 0.0, %v5706
    %5708 = vmatmul.f32.gmra.mxu0 %v5453
    %v5709 = vpop.f32.mrf.mxu0
    %v5710 = vadd.f32 0.0, %v5709
    %5711 = vmatmul.f32.gmra.mxu0 %v5455
    %v5712 = vpop.f32.mrf.mxu0
    %v5713 = vadd.f32 0.0, %v5712
    %5714 = vmatmul.f32.gmra.mxu0 %v5457
    %v5715 = vpop.f32.mrf.mxu0
    %v5716 = vadd.f32 0.0, %v5715
    %5717 = vmatmul.f32.gmra.mxu0 %v5459
    %v5718 = vpop.f32.mrf.mxu0
    %v5719 = vadd.f32 0.0, %v5718
    %5720 = vmatmul.f32.gmra.mxu0 %v5461
    %v5721 = vpop.f32.mrf.mxu0
    %v5722 = vadd.f32 0.0, %v5721
    %5723 = vmatmul.f32.gmra.mxu0 %v5463
    %v5724 = vpop.f32.mrf.mxu0
    %v5725 = vadd.f32 0.0, %v5724
    %5726 = vmatmul.f32.gmra.mxu0 %v5465
    %v5727 = vpop.f32.mrf.mxu0
    %v5728 = vadd.f32 0.0, %v5727
    %5729 = vmatmul.f32.gmra.mxu0 %v5467
    %v5730 = vpop.f32.mrf.mxu0
    %v5731 = vadd.f32 0.0, %v5730
    %5732 = vmatmul.f32.gmra.mxu0 %v5469
    %v5733 = vpop.f32.mrf.mxu0
    %v5734 = vadd.f32 0.0, %v5733
    %5735 = vdwg.mxu0
    %5736 = vmatpush.msra.mxu0 0.0
    %5737 = vmatpush.msra.mxu0 0.0
    %5738 = vmatpush.msra.mxu0 0.0
    %5739 = vmatpush.msra.mxu0 0.0
    %5740 = vmatpush.msra.mxu0 0.0
    %5741 = vmatpush.msra.mxu0 0.0
    %5742 = vmatpush.msra.mxu0 0.0
    %5743 = vmatpush.msra.mxu0 0.0
    %5744 = vmatpush.msra.mxu0 0.0
    %5745 = vmatpush.msra.mxu0 0.0
    %5746 = vmatpush.msra.mxu0 %v5116
    %5747 = vmatpush.msra.mxu0 %v5113
    %5748 = vmatpush.msra.mxu0 %v5110
    %5749 = vmatpush.msra.mxu0 %v5107
    %5750 = vmatpush.msra.mxu0 %v5104
    %5751 = vmatpush.msra.mxu0 %v5101
    %5752 = vmatmul.f32.gmra.mxu0 %v5472
    %v5753 = vpop.f32.mrf.mxu0
    %v5754 = vadd.f32 %v5707, %v5753
    %5755 = vmatmul.f32.gmra.mxu0 %v5475
    %v5756 = vpop.f32.mrf.mxu0
    %v5757 = vadd.f32 %v5710, %v5756
    %5758 = vmatmul.f32.gmra.mxu0 %v5478
    %v5759 = vpop.f32.mrf.mxu0
    %v5760 = vadd.f32 %v5713, %v5759
    %5761 = vmatmul.f32.gmra.mxu0 %v5481
    %v5762 = vpop.f32.mrf.mxu0
    %v5763 = vadd.f32 %v5716, %v5762
    %5764 = vmatmul.f32.gmra.mxu0 %v5484
    %v5765 = vpop.f32.mrf.mxu0
    %v5766 = vadd.f32 %v5719, %v5765
    %5767 = vmatmul.f32.gmra.mxu0 %v5487
    %v5768 = vpop.f32.mrf.mxu0
    %v5769 = vadd.f32 %v5722, %v5768
    %5770 = vmatmul.f32.gmra.mxu0 %v5490
    %v5771 = vpop.f32.mrf.mxu0
    %v5772 = vadd.f32 %v5725, %v5771
    %5773 = vmatmul.f32.gmra.mxu0 %v5493
    %v5774 = vpop.f32.mrf.mxu0
    %v5775 = vadd.f32 %v5728, %v5774
    %5776 = vmatmul.f32.gmra.mxu0 %v5496
    %v5777 = vpop.f32.mrf.mxu0
    %v5778 = vadd.f32 %v5731, %v5777
    %5779 = vmatmul.f32.gmra.mxu0 %v5499
    %v5780 = vpop.f32.mrf.mxu0
    %v5781 = vadd.f32 %v5734, %v5780
    %5782 = vdwg.mxu0
    %s5783 = scalar_lea.vmem [#allocation7], 320
    %v5784 = vld [vmem:[%s5783] sm:$0xff]
    %v5785 = vld [vmem:[%s5783 + $0x8] sm:$0xff]
    %v5786 = vld [vmem:[%s5783 + $0x10] sm:$0xff]
    %v5787 = vld [vmem:[%s5783 + $0x18] sm:$0xff]
    %v5788 = vld [vmem:[%s5783 + $0x20] sm:$0xff]
    %v5789 = vld [vmem:[%s5783 + $0x28] sm:$0xff]
    %v5790 = vld [vmem:[%s5783 + $0x30] sm:$0xff]
    %v5791 = vld [vmem:[%s5783 + $0x38] sm:$0xff]
    %v5792 = vld [vmem:[%s5783 + $0x40] sm:$0xff]
    %v5793 = vld [vmem:[%s5783 + $0x48] sm:$0xff]
    %v5794 = vld [vmem:[%s5783 + $0x50] sm:$0xff]
    %v5795 = vld [vmem:[%s5783 + $0x58] sm:$0xff]
    %v5796 = vld [vmem:[%s5783 + $0x60] sm:$0xff]
    %v5797 = vld [vmem:[%s5783 + $0x68] sm:$0xff]
    %v5798 = vld [vmem:[%s5783 + $0x70] sm:$0xff]
    %v5799 = vld [vmem:[%s5783 + $0x78] sm:$0xff]
    %v5800 = vld [vmem:[%s5783 + $0x80] sm:$0xff]
    %v5801 = vld [vmem:[%s5783 + $0x88] sm:$0xff]
    %v5802 = vld [vmem:[%s5783 + $0x90] sm:$0xff]
    %v5803 = vld [vmem:[%s5783 + $0x98] sm:$0xff]
    %v5805 = vsel %vm5137, %v5785, 0
    %v5808 = vsel %vm5137, %v5787, 0
    %v5811 = vsel %vm5137, %v5789, 0
    %v5814 = vsel %vm5137, %v5791, 0
    %v5817 = vsel %vm5137, %v5793, 0
    %v5820 = vsel %vm5137, %v5795, 0
    %v5823 = vsel %vm5137, %v5797, 0
    %v5826 = vsel %vm5137, %v5799, 0
    %v5829 = vsel %vm5137, %v5801, 0
    %v5832 = vsel %vm5137, %v5803, 0
    %5834 = vmatpush.msra.mxu0 %v5096
    %5835 = vmatpush.msra.mxu0 %v5093
    %5836 = vmatpush.msra.mxu0 %v5090
    %5837 = vmatpush.msra.mxu0 %v5087
    %5838 = vmatpush.msra.mxu0 %v5084
    %5839 = vmatpush.msra.mxu0 %v5081
    %5840 = vmatpush.msra.mxu0 %v5078
    %5841 = vmatpush.msra.mxu0 %v5075
    %5842 = vmatpush.msra.mxu0 %v5072
    %5843 = vmatpush.msra.mxu0 %v5069
    %5844 = vmatpush.msra.mxu0 %v5066
    %5845 = vmatpush.msra.mxu0 %v5063
    %5846 = vmatpush.msra.mxu0 %v5060
    %5847 = vmatpush.msra.mxu0 %v5057
    %5848 = vmatpush.msra.mxu0 %v5054
    %5849 = vmatpush.msra.mxu0 %v5051
    %5850 = vmatmul.f32.gmra.mxu0 %v5784
    %v5851 = vpop.f32.mrf.mxu0
    %v5852 = vadd.f32 0.0, %v5851
    %5853 = vmatmul.f32.gmra.mxu0 %v5786
    %v5854 = vpop.f32.mrf.mxu0
    %v5855 = vadd.f32 0.0, %v5854
    %5856 = vmatmul.f32.gmra.mxu0 %v5788
    %v5857 = vpop.f32.mrf.mxu0
    %v5858 = vadd.f32 0.0, %v5857
    %5859 = vmatmul.f32.gmra.mxu0 %v5790
    %v5860 = vpop.f32.mrf.mxu0
    %v5861 = vadd.f32 0.0, %v5860
    %5862 = vmatmul.f32.gmra.mxu0 %v5792
    %v5863 = vpop.f32.mrf.mxu0
    %v5864 = vadd.f32 0.0, %v5863
    %5865 = vmatmul.f32.gmra.mxu0 %v5794
    %v5866 = vpop.f32.mrf.mxu0
    %v5867 = vadd.f32 0.0, %v5866
    %5868 = vmatmul.f32.gmra.mxu0 %v5796
    %v5869 = vpop.f32.mrf.mxu0
    %v5870 = vadd.f32 0.0, %v5869
    %5871 = vmatmul.f32.gmra.mxu0 %v5798
    %v5872 = vpop.f32.mrf.mxu0
    %v5873 = vadd.f32 0.0, %v5872
    %5874 = vmatmul.f32.gmra.mxu0 %v5800
    %v5875 = vpop.f32.mrf.mxu0
    %v5876 = vadd.f32 0.0, %v5875
    %5877 = vmatmul.f32.gmra.mxu0 %v5802
    %v5878 = vpop.f32.mrf.mxu0
    %v5879 = vadd.f32 0.0, %v5878
    %5880 = vdwg.mxu0
    %5881 = vmatpush.msra.mxu0 0.0
    %5882 = vmatpush.msra.mxu0 0.0
    %5883 = vmatpush.msra.mxu0 0.0
    %5884 = vmatpush.msra.mxu0 0.0
    %5885 = vmatpush.msra.mxu0 0.0
    %5886 = vmatpush.msra.mxu0 0.0
    %5887 = vmatpush.msra.mxu0 0.0
    %5888 = vmatpush.msra.mxu0 0.0
    %5889 = vmatpush.msra.mxu0 0.0
    %5890 = vmatpush.msra.mxu0 0.0
    %5891 = vmatpush.msra.mxu0 %v5114
    %5892 = vmatpush.msra.mxu0 %v5111
    %5893 = vmatpush.msra.mxu0 %v5108
    %5894 = vmatpush.msra.mxu0 %v5105
    %5895 = vmatpush.msra.mxu0 %v5102
    %5896 = vmatpush.msra.mxu0 %v5099
    %5897 = vmatmul.f32.gmra.mxu0 %v5805
    %v5898 = vpop.f32.mrf.mxu0
    %v5899 = vadd.f32 %v5852, %v5898
    %5900 = vmatmul.f32.gmra.mxu0 %v5808
    %v5901 = vpop.f32.mrf.mxu0
    %v5902 = vadd.f32 %v5855, %v5901
    %5903 = vmatmul.f32.gmra.mxu0 %v5811
    %v5904 = vpop.f32.mrf.mxu0
    %v5905 = vadd.f32 %v5858, %v5904
    %5906 = vmatmul.f32.gmra.mxu0 %v5814
    %v5907 = vpop.f32.mrf.mxu0
    %v5908 = vadd.f32 %v5861, %v5907
    %5909 = vmatmul.f32.gmra.mxu0 %v5817
    %v5910 = vpop.f32.mrf.mxu0
    %v5911 = vadd.f32 %v5864, %v5910
    %5912 = vmatmul.f32.gmra.mxu0 %v5820
    %v5913 = vpop.f32.mrf.mxu0
    %v5914 = vadd.f32 %v5867, %v5913
    %5915 = vmatmul.f32.gmra.mxu0 %v5823
    %v5916 = vpop.f32.mrf.mxu0
    %v5917 = vadd.f32 %v5870, %v5916
    %5918 = vmatmul.f32.gmra.mxu0 %v5826
    %v5919 = vpop.f32.mrf.mxu0
    %v5920 = vadd.f32 %v5873, %v5919
    %5921 = vmatmul.f32.gmra.mxu0 %v5829
    %v5922 = vpop.f32.mrf.mxu0
    %v5923 = vadd.f32 %v5876, %v5922
    %5924 = vmatmul.f32.gmra.mxu0 %v5832
    %v5925 = vpop.f32.mrf.mxu0
    %v5926 = vadd.f32 %v5879, %v5925
    %5927 = vdwg.mxu0
    %5928 = vmatpush.msra.mxu0 %v5097
    %5929 = vmatpush.msra.mxu0 %v5094
    %5930 = vmatpush.msra.mxu0 %v5091
    %5931 = vmatpush.msra.mxu0 %v5088
    %5932 = vmatpush.msra.mxu0 %v5085
    %5933 = vmatpush.msra.mxu0 %v5082
    %5934 = vmatpush.msra.mxu0 %v5079
    %5935 = vmatpush.msra.mxu0 %v5076
    %5936 = vmatpush.msra.mxu0 %v5073
    %5937 = vmatpush.msra.mxu0 %v5070
    %5938 = vmatpush.msra.mxu0 %v5067
    %5939 = vmatpush.msra.mxu0 %v5064
    %5940 = vmatpush.msra.mxu0 %v5061
    %5941 = vmatpush.msra.mxu0 %v5058
    %5942 = vmatpush.msra.mxu0 %v5055
    %5943 = vmatpush.msra.mxu0 %v5052
    %5944 = vmatmul.f32.gmra.mxu0 %v5784
    %v5945 = vpop.f32.mrf.mxu0
    %v5946 = vadd.f32 0.0, %v5945
    %5947 = vmatmul.f32.gmra.mxu0 %v5786
    %v5948 = vpop.f32.mrf.mxu0
    %v5949 = vadd.f32 0.0, %v5948
    %5950 = vmatmul.f32.gmra.mxu0 %v5788
    %v5951 = vpop.f32.mrf.mxu0
    %v5952 = vadd.f32 0.0, %v5951
    %5953 = vmatmul.f32.gmra.mxu0 %v5790
    %v5954 = vpop.f32.mrf.mxu0
    %v5955 = vadd.f32 0.0, %v5954
    %5956 = vmatmul.f32.gmra.mxu0 %v5792
    %v5957 = vpop.f32.mrf.mxu0
    %v5958 = vadd.f32 0.0, %v5957
    %5959 = vmatmul.f32.gmra.mxu0 %v5794
    %v5960 = vpop.f32.mrf.mxu0
    %v5961 = vadd.f32 0.0, %v5960
    %5962 = vmatmul.f32.gmra.mxu0 %v5796
    %v5963 = vpop.f32.mrf.mxu0
    %v5964 = vadd.f32 0.0, %v5963
    %5965 = vmatmul.f32.gmra.mxu0 %v5798
    %v5966 = vpop.f32.mrf.mxu0
    %v5967 = vadd.f32 0.0, %v5966
    %5968 = vmatmul.f32.gmra.mxu0 %v5800
    %v5969 = vpop.f32.mrf.mxu0
    %v5970 = vadd.f32 0.0, %v5969
    %5971 = vmatmul.f32.gmra.mxu0 %v5802
    %v5972 = vpop.f32.mrf.mxu0
    %v5973 = vadd.f32 0.0, %v5972
    %5974 = vdwg.mxu0
    %5975 = vmatpush.msra.mxu0 0.0
    %5976 = vmatpush.msra.mxu0 0.0
    %5977 = vmatpush.msra.mxu0 0.0
    %5978 = vmatpush.msra.mxu0 0.0
    %5979 = vmatpush.msra.mxu0 0.0
    %5980 = vmatpush.msra.mxu0 0.0
    %5981 = vmatpush.msra.mxu0 0.0
    %5982 = vmatpush.msra.mxu0 0.0
    %5983 = vmatpush.msra.mxu0 0.0
    %5984 = vmatpush.msra.mxu0 0.0
    %5985 = vmatpush.msra.mxu0 %v5115
    %5986 = vmatpush.msra.mxu0 %v5112
    %5987 = vmatpush.msra.mxu0 %v5109
    %5988 = vmatpush.msra.mxu0 %v5106
    %5989 = vmatpush.msra.mxu0 %v5103
    %5990 = vmatpush.msra.mxu0 %v5100
    %5991 = vmatmul.f32.gmra.mxu0 %v5805
    %v5992 = vpop.f32.mrf.mxu0
    %v5993 = vadd.f32 %v5946, %v5992
    %5994 = vmatmul.f32.gmra.mxu0 %v5808
    %v5995 = vpop.f32.mrf.mxu0
    %v5996 = vadd.f32 %v5949, %v5995
    %5997 = vmatmul.f32.gmra.mxu0 %v5811
    %v5998 = vpop.f32.mrf.mxu0
    %v5999 = vadd.f32 %v5952, %v5998
    %6000 = vmatmul.f32.gmra.mxu0 %v5814
    %v6001 = vpop.f32.mrf.mxu0
    %v6002 = vadd.f32 %v5955, %v6001
    %6003 = vmatmul.f32.gmra.mxu0 %v5817
    %v6004 = vpop.f32.mrf.mxu0
    %v6005 = vadd.f32 %v5958, %v6004
    %6006 = vmatmul.f32.gmra.mxu0 %v5820
    %v6007 = vpop.f32.mrf.mxu0
    %v6008 = vadd.f32 %v5961, %v6007
    %6009 = vmatmul.f32.gmra.mxu0 %v5823
    %v6010 = vpop.f32.mrf.mxu0
    %v6011 = vadd.f32 %v5964, %v6010
    %6012 = vmatmul.f32.gmra.mxu0 %v5826
    %v6013 = vpop.f32.mrf.mxu0
    %v6014 = vadd.f32 %v5967, %v6013
    %6015 = vmatmul.f32.gmra.mxu0 %v5829
    %v6016 = vpop.f32.mrf.mxu0
    %v6017 = vadd.f32 %v5970, %v6016
    %6018 = vmatmul.f32.gmra.mxu0 %v5832
    %v6019 = vpop.f32.mrf.mxu0
    %v6020 = vadd.f32 %v5973, %v6019
    %6021 = vdwg.mxu0
    %6022 = vmatpush.msra.mxu0 %v5098
    %6023 = vmatpush.msra.mxu0 %v5095
    %6024 = vmatpush.msra.mxu0 %v5092
    %6025 = vmatpush.msra.mxu0 %v5089
    %6026 = vmatpush.msra.mxu0 %v5086
    %6027 = vmatpush.msra.mxu0 %v5083
    %6028 = vmatpush.msra.mxu0 %v5080
    %6029 = vmatpush.msra.mxu0 %v5077
    %6030 = vmatpush.msra.mxu0 %v5074
    %6031 = vmatpush.msra.mxu0 %v5071
    %6032 = vmatpush.msra.mxu0 %v5068
    %6033 = vmatpush.msra.mxu0 %v5065
    %6034 = vmatpush.msra.mxu0 %v5062
    %6035 = vmatpush.msra.mxu0 %v5059
    %6036 = vmatpush.msra.mxu0 %v5056
    %6037 = vmatpush.msra.mxu0 %v5053
    %6038 = vmatmul.f32.gmra.mxu0 %v5784
    %v6039 = vpop.f32.mrf.mxu0
    %v6040 = vadd.f32 0.0, %v6039
    %6041 = vmatmul.f32.gmra.mxu0 %v5786
    %v6042 = vpop.f32.mrf.mxu0
    %v6043 = vadd.f32 0.0, %v6042
    %6044 = vmatmul.f32.gmra.mxu0 %v5788
    %v6045 = vpop.f32.mrf.mxu0
    %v6046 = vadd.f32 0.0, %v6045
    %6047 = vmatmul.f32.gmra.mxu0 %v5790
    %v6048 = vpop.f32.mrf.mxu0
    %v6049 = vadd.f32 0.0, %v6048
    %6050 = vmatmul.f32.gmra.mxu0 %v5792
    %v6051 = vpop.f32.mrf.mxu0
    %v6052 = vadd.f32 0.0, %v6051
    %6053 = vmatmul.f32.gmra.mxu0 %v5794
    %v6054 = vpop.f32.mrf.mxu0
    %v6055 = vadd.f32 0.0, %v6054
    %6056 = vmatmul.f32.gmra.mxu0 %v5796
    %v6057 = vpop.f32.mrf.mxu0
    %v6058 = vadd.f32 0.0, %v6057
    %6059 = vmatmul.f32.gmra.mxu0 %v5798
    %v6060 = vpop.f32.mrf.mxu0
    %v6061 = vadd.f32 0.0, %v6060
    %6062 = vmatmul.f32.gmra.mxu0 %v5800
    %v6063 = vpop.f32.mrf.mxu0
    %v6064 = vadd.f32 0.0, %v6063
    %6065 = vmatmul.f32.gmra.mxu0 %v5802
    %v6066 = vpop.f32.mrf.mxu0
    %v6067 = vadd.f32 0.0, %v6066
    %6068 = vdwg.mxu0
    %6069 = vmatpush.msra.mxu0 0.0
    %6070 = vmatpush.msra.mxu0 0.0
    %6071 = vmatpush.msra.mxu0 0.0
    %6072 = vmatpush.msra.mxu0 0.0
    %6073 = vmatpush.msra.mxu0 0.0
    %6074 = vmatpush.msra.mxu0 0.0
    %6075 = vmatpush.msra.mxu0 0.0
    %6076 = vmatpush.msra.mxu0 0.0
    %6077 = vmatpush.msra.mxu0 0.0
    %6078 = vmatpush.msra.mxu0 0.0
    %6079 = vmatpush.msra.mxu0 %v5116
    %6080 = vmatpush.msra.mxu0 %v5113
    %6081 = vmatpush.msra.mxu0 %v5110
    %6082 = vmatpush.msra.mxu0 %v5107
    %6083 = vmatpush.msra.mxu0 %v5104
    %6084 = vmatpush.msra.mxu0 %v5101
    %6085 = vmatmul.f32.gmra.mxu0 %v5805
    %v6086 = vpop.f32.mrf.mxu0
    %v6087 = vadd.f32 %v6040, %v6086
    %6088 = vmatmul.f32.gmra.mxu0 %v5808
    %v6089 = vpop.f32.mrf.mxu0
    %v6090 = vadd.f32 %v6043, %v6089
    %6091 = vmatmul.f32.gmra.mxu0 %v5811
    %v6092 = vpop.f32.mrf.mxu0
    %v6093 = vadd.f32 %v6046, %v6092
    %6094 = vmatmul.f32.gmra.mxu0 %v5814
    %v6095 = vpop.f32.mrf.mxu0
    %v6096 = vadd.f32 %v6049, %v6095
    %6097 = vmatmul.f32.gmra.mxu0 %v5817
    %v6098 = vpop.f32.mrf.mxu0
    %v6099 = vadd.f32 %v6052, %v6098
    %6100 = vmatmul.f32.gmra.mxu0 %v5820
    %v6101 = vpop.f32.mrf.mxu0
    %v6102 = vadd.f32 %v6055, %v6101
    %6103 = vmatmul.f32.gmra.mxu0 %v5823
    %v6104 = vpop.f32.mrf.mxu0
    %v6105 = vadd.f32 %v6058, %v6104
    %6106 = vmatmul.f32.gmra.mxu0 %v5826
    %v6107 = vpop.f32.mrf.mxu0
    %v6108 = vadd.f32 %v6061, %v6107
    %6109 = vmatmul.f32.gmra.mxu0 %v5829
    %v6110 = vpop.f32.mrf.mxu0
    %v6111 = vadd.f32 %v6064, %v6110
    %6112 = vmatmul.f32.gmra.mxu0 %v5832
    %v6113 = vpop.f32.mrf.mxu0
    %v6114 = vadd.f32 %v6067, %v6113
    %6115 = vdwg.mxu0
    %v6116 = vmax.f32 %v5566, %v5899
    %v6117 = vmax.f32 %v5660, %v5993
    %v6118 = vmax.f32 %v5754, %v6087
    %v6119 = vmax.f32 %v5569, %v5902
    %v6120 = vmax.f32 %v5663, %v5996
    %v6121 = vmax.f32 %v5757, %v6090
    %v6122 = vmax.f32 %v5572, %v5905
    %v6123 = vmax.f32 %v5666, %v5999
    %v6124 = vmax.f32 %v5760, %v6093
    %v6125 = vmax.f32 %v5575, %v5908
    %v6126 = vmax.f32 %v5669, %v6002
    %v6127 = vmax.f32 %v5763, %v6096
    %v6128 = vmax.f32 %v5578, %v5911
    %v6129 = vmax.f32 %v5672, %v6005
    %v6130 = vmax.f32 %v5766, %v6099
    %v6131 = vmax.f32 %v5581, %v5914
    %v6132 = vmax.f32 %v5675, %v6008
    %v6133 = vmax.f32 %v5769, %v6102
    %v6134 = vmax.f32 %v5584, %v5917
    %v6135 = vmax.f32 %v5678, %v6011
    %v6136 = vmax.f32 %v5772, %v6105
    %v6137 = vmax.f32 %v5587, %v5920
    %v6138 = vmax.f32 %v5681, %v6014
    %v6139 = vmax.f32 %v5775, %v6108
    %v6140 = vmax.f32 %v5590, %v5923
    %v6141 = vmax.f32 %v5684, %v6017
    %v6142 = vmax.f32 %v5778, %v6111
    %v6143 = vmax.f32 %v5593, %v5926
    %v6144 = vmax.f32 %v5687, %v6020
    %v6145 = vmax.f32 %v5781, %v6114
    %v6146 = vmax.f32 %v5233, %v6116
    %v6147 = vmax.f32 %v5327, %v6117
    %v6148 = vmax.f32 %v5421, %v6118
    %v6149 = vmax.f32 %v5236, %v6119
    %v6150 = vmax.f32 %v5330, %v6120
    %v6151 = vmax.f32 %v5424, %v6121
    %v6152 = vmax.f32 %v5239, %v6122
    %v6153 = vmax.f32 %v5333, %v6123
    %v6154 = vmax.f32 %v5427, %v6124
    %v6155 = vmax.f32 %v5242, %v6125
    %v6156 = vmax.f32 %v5336, %v6126
    %v6157 = vmax.f32 %v5430, %v6127
    %v6158 = vmax.f32 %v5245, %v6128
    %v6159 = vmax.f32 %v5339, %v6129
    %v6160 = vmax.f32 %v5433, %v6130
    %v6161 = vmax.f32 %v5248, %v6131
    %v6162 = vmax.f32 %v5342, %v6132
    %v6163 = vmax.f32 %v5436, %v6133
    %v6164 = vmax.f32 %v5251, %v6134
    %v6165 = vmax.f32 %v5345, %v6135
    %v6166 = vmax.f32 %v5439, %v6136
    %v6167 = vmax.f32 %v5254, %v6137
    %v6168 = vmax.f32 %v5348, %v6138
    %v6169 = vmax.f32 %v5442, %v6139
    %v6170 = vmax.f32 %v5257, %v6140
    %v6171 = vmax.f32 %v5351, %v6141
    %v6172 = vmax.f32 %v5445, %v6142
    %v6173 = vmax.f32 %v5260, %v6143
    %v6174 = vmax.f32 %v5354, %v6144
    %v6175 = vmax.f32 %v5448, %v6145
    %v6176 = vld [vmem:[#allocation8] sm:$0xff]
    %v6177 = vld [vmem:[#allocation8 + $0x8] sm:$0xff]
    %v6178 = vld [vmem:[#allocation8 + $0x10] sm:$0xff]
    %v6179 = vld [vmem:[#allocation8 + $0x18] sm:$0xff]
    %v6180 = vld [vmem:[#allocation8 + $0x20] sm:$0xff]
    %v6181 = vld [vmem:[#allocation8 + $0x28] sm:$0xff]
    %v6182 = vld [vmem:[#allocation8 + $0x30] sm:$0xff]
    %v6183 = vld [vmem:[#allocation8 + $0x38] sm:$0xff]
    %vm6184 = vcmask 654336
    %v6186 = vsel %vm6184, %v6176, 0
    %v6189 = vsel %vm6184, %v6177, 0
    %v6192 = vsel %vm6184, %v6178, 0
    %v6195 = vsel %vm6184, %v6179, 0
    %v6198 = vsel %vm6184, %v6180, 0
    %v6201 = vsel %vm6184, %v6181, 0
    %v6204 = vsel %vm6184, %v6182, 0
    %v6207 = vsel %vm6184, %v6183, 0
    %6209 = vmatpush.msra.mxu0 0.0
    %6210 = vmatpush.msra.mxu0 0.0
    %6211 = vmatpush.msra.mxu0 0.0
    %6212 = vmatpush.msra.mxu0 0.0
    %6213 = vmatpush.msra.mxu0 0.0
    %6214 = vmatpush.msra.mxu0 0.0
    %6215 = vmatpush.msra.mxu0 %v6173
    %6216 = vmatpush.msra.mxu0 %v6170
    %6217 = vmatpush.msra.mxu0 %v6167
    %6218 = vmatpush.msra.mxu0 %v6164
    %6219 = vmatpush.msra.mxu0 %v6161
    %6220 = vmatpush.msra.mxu0 %v6158
    %6221 = vmatpush.msra.mxu0 %v6155
    %6222 = vmatpush.msra.mxu0 %v6152
    %6223 = vmatpush.msra.mxu0 %v6149
    %6224 = vmatpush.msra.mxu0 %v6146
    %6225 = vmatmul.f32.gmra.mxu0 %v6186
    %v6226 = vpop.f32.mrf.mxu0
    %v6227 = vadd.f32 0.0, %v6226
    %6228 = vmatmul.f32.gmra.mxu0 %v6189
    %v6229 = vpop.f32.mrf.mxu0
    %v6230 = vadd.f32 0.0, %v6229
    %6231 = vmatmul.f32.gmra.mxu0 %v6192
    %v6232 = vpop.f32.mrf.mxu0
    %v6233 = vadd.f32 0.0, %v6232
    %6234 = vmatmul.f32.gmra.mxu0 %v6195
    %v6235 = vpop.f32.mrf.mxu0
    %v6236 = vadd.f32 0.0, %v6235
    %6237 = vmatmul.f32.gmra.mxu0 %v6198
    %v6238 = vpop.f32.mrf.mxu0
    %v6239 = vadd.f32 0.0, %v6238
    %6240 = vmatmul.f32.gmra.mxu0 %v6201
    %v6241 = vpop.f32.mrf.mxu0
    %v6242 = vadd.f32 0.0, %v6241
    %6243 = vmatmul.f32.gmra.mxu0 %v6204
    %v6244 = vpop.f32.mrf.mxu0
    %v6245 = vadd.f32 0.0, %v6244
    %6246 = vmatmul.f32.gmra.mxu0 %v6207
    %v6247 = vpop.f32.mrf.mxu0
    %v6248 = vadd.f32 0.0, %v6247
    %6249 = vdwg.mxu0
    %6250 = vmatpush.msra.mxu0 0.0
    %6251 = vmatpush.msra.mxu0 0.0
    %6252 = vmatpush.msra.mxu0 0.0
    %6253 = vmatpush.msra.mxu0 0.0
    %6254 = vmatpush.msra.mxu0 0.0
    %6255 = vmatpush.msra.mxu0 0.0
    %6256 = vmatpush.msra.mxu0 %v6174
    %6257 = vmatpush.msra.mxu0 %v6171
    %6258 = vmatpush.msra.mxu0 %v6168
    %6259 = vmatpush.msra.mxu0 %v6165
    %6260 = vmatpush.msra.mxu0 %v6162
    %6261 = vmatpush.msra.mxu0 %v6159
    %6262 = vmatpush.msra.mxu0 %v6156
    %6263 = vmatpush.msra.mxu0 %v6153
    %6264 = vmatpush.msra.mxu0 %v6150
    %6265 = vmatpush.msra.mxu0 %v6147
    %6266 = vmatmul.f32.gmra.mxu0 %v6186
    %v6267 = vpop.f32.mrf.mxu0
    %v6268 = vadd.f32 0.0, %v6267
    %6269 = vmatmul.f32.gmra.mxu0 %v6189
    %v6270 = vpop.f32.mrf.mxu0
    %v6271 = vadd.f32 0.0, %v6270
    %6272 = vmatmul.f32.gmra.mxu0 %v6192
    %v6273 = vpop.f32.mrf.mxu0
    %v6274 = vadd.f32 0.0, %v6273
    %6275 = vmatmul.f32.gmra.mxu0 %v6195
    %v6276 = vpop.f32.mrf.mxu0
    %v6277 = vadd.f32 0.0, %v6276
    %6278 = vmatmul.f32.gmra.mxu0 %v6198
    %v6279 = vpop.f32.mrf.mxu0
    %v6280 = vadd.f32 0.0, %v6279
    %6281 = vmatmul.f32.gmra.mxu0 %v6201
    %v6282 = vpop.f32.mrf.mxu0
    %v6283 = vadd.f32 0.0, %v6282
    %6284 = vmatmul.f32.gmra.mxu0 %v6204
    %v6285 = vpop.f32.mrf.mxu0
    %v6286 = vadd.f32 0.0, %v6285
    %6287 = vmatmul.f32.gmra.mxu0 %v6207
    %v6288 = vpop.f32.mrf.mxu0
    %v6289 = vadd.f32 0.0, %v6288
    %6290 = vdwg.mxu0
    %6291 = vmatpush.msra.mxu0 0.0
    %6292 = vmatpush.msra.mxu0 0.0
    %6293 = vmatpush.msra.mxu0 0.0
    %6294 = vmatpush.msra.mxu0 0.0
    %6295 = vmatpush.msra.mxu0 0.0
    %6296 = vmatpush.msra.mxu0 0.0
    %6297 = vmatpush.msra.mxu0 %v6175
    %6298 = vmatpush.msra.mxu0 %v6172
    %6299 = vmatpush.msra.mxu0 %v6169
    %6300 = vmatpush.msra.mxu0 %v6166
    %6301 = vmatpush.msra.mxu0 %v6163
    %6302 = vmatpush.msra.mxu0 %v6160
    %6303 = vmatpush.msra.mxu0 %v6157
    %6304 = vmatpush.msra.mxu0 %v6154
    %6305 = vmatpush.msra.mxu0 %v6151
    %6306 = vmatpush.msra.mxu0 %v6148
    %6307 = vmatmul.f32.gmra.mxu0 %v6186
    %v6308 = vpop.f32.mrf.mxu0
    %v6309 = vadd.f32 0.0, %v6308
    %6310 = vmatmul.f32.gmra.mxu0 %v6189
    %v6311 = vpop.f32.mrf.mxu0
    %v6312 = vadd.f32 0.0, %v6311
    %6313 = vmatmul.f32.gmra.mxu0 %v6192
    %v6314 = vpop.f32.mrf.mxu0
    %v6315 = vadd.f32 0.0, %v6314
    %6316 = vmatmul.f32.gmra.mxu0 %v6195
    %v6317 = vpop.f32.mrf.mxu0
    %v6318 = vadd.f32 0.0, %v6317
    %6319 = vmatmul.f32.gmra.mxu0 %v6198
    %v6320 = vpop.f32.mrf.mxu0
    %v6321 = vadd.f32 0.0, %v6320
    %6322 = vmatmul.f32.gmra.mxu0 %v6201
    %v6323 = vpop.f32.mrf.mxu0
    %v6324 = vadd.f32 0.0, %v6323
    %6325 = vmatmul.f32.gmra.mxu0 %v6204
    %v6326 = vpop.f32.mrf.mxu0
    %v6327 = vadd.f32 0.0, %v6326
    %6328 = vmatmul.f32.gmra.mxu0 %v6207
    %v6329 = vpop.f32.mrf.mxu0
    %v6330 = vadd.f32 0.0, %v6329
    %6331 = vdwg.mxu0
    %s6332 = scalar_lea.vmem [#allocation8], 64
    %v6333 = vld [vmem:[%s6332] sm:$0xff]
    %v6334 = vld [vmem:[%s6332 + $0x8] sm:$0xff]
    %v6335 = vld [vmem:[%s6332 + $0x10] sm:$0xff]
    %v6336 = vld [vmem:[%s6332 + $0x18] sm:$0xff]
    %v6337 = vld [vmem:[%s6332 + $0x20] sm:$0xff]
    %v6338 = vld [vmem:[%s6332 + $0x28] sm:$0xff]
    %v6339 = vld [vmem:[%s6332 + $0x30] sm:$0xff]
    %v6340 = vld [vmem:[%s6332 + $0x38] sm:$0xff]
    %v6342 = vsel %vm6184, %v6333, 0
    %v6345 = vsel %vm6184, %v6334, 0
    %v6348 = vsel %vm6184, %v6335, 0
    %v6351 = vsel %vm6184, %v6336, 0
    %v6354 = vsel %vm6184, %v6337, 0
    %v6357 = vsel %vm6184, %v6338, 0
    %v6360 = vsel %vm6184, %v6339, 0
    %v6363 = vsel %vm6184, %v6340, 0
    %6365 = vmatpush.msra.mxu0 0.0
    %6366 = vmatpush.msra.mxu0 0.0
    %6367 = vmatpush.msra.mxu0 0.0
    %6368 = vmatpush.msra.mxu0 0.0
    %6369 = vmatpush.msra.mxu0 0.0
    %6370 = vmatpush.msra.mxu0 0.0
    %6371 = vmatpush.msra.mxu0 %v6173
    %6372 = vmatpush.msra.mxu0 %v6170
    %6373 = vmatpush.msra.mxu0 %v6167
    %6374 = vmatpush.msra.mxu0 %v6164
    %6375 = vmatpush.msra.mxu0 %v6161
    %6376 = vmatpush.msra.mxu0 %v6158
    %6377 = vmatpush.msra.mxu0 %v6155
    %6378 = vmatpush.msra.mxu0 %v6152
    %6379 = vmatpush.msra.mxu0 %v6149
    %6380 = vmatpush.msra.mxu0 %v6146
    %6381 = vmatmul.f32.gmra.mxu0 %v6342
    %v6382 = vpop.f32.mrf.mxu0
    %v6383 = vadd.f32 0.0, %v6382
    %6384 = vmatmul.f32.gmra.mxu0 %v6345
    %v6385 = vpop.f32.mrf.mxu0
    %v6386 = vadd.f32 0.0, %v6385
    %6387 = vmatmul.f32.gmra.mxu0 %v6348
    %v6388 = vpop.f32.mrf.mxu0
    %v6389 = vadd.f32 0.0, %v6388
    %6390 = vmatmul.f32.gmra.mxu0 %v6351
    %v6391 = vpop.f32.mrf.mxu0
    %v6392 = vadd.f32 0.0, %v6391
    %6393 = vmatmul.f32.gmra.mxu0 %v6354
    %v6394 = vpop.f32.mrf.mxu0
    %v6395 = vadd.f32 0.0, %v6394
    %6396 = vmatmul.f32.gmra.mxu0 %v6357
    %v6397 = vpop.f32.mrf.mxu0
    %v6398 = vadd.f32 0.0, %v6397
    %6399 = vmatmul.f32.gmra.mxu0 %v6360
    %v6400 = vpop.f32.mrf.mxu0
    %v6401 = vadd.f32 0.0, %v6400
    %6402 = vmatmul.f32.gmra.mxu0 %v6363
    %v6403 = vpop.f32.mrf.mxu0
    %v6404 = vadd.f32 0.0, %v6403
    %6405 = vdwg.mxu0
    %6406 = vmatpush.msra.mxu0 0.0
    %6407 = vmatpush.msra.mxu0 0.0
    %6408 = vmatpush.msra.mxu0 0.0
    %6409 = vmatpush.msra.mxu0 0.0
    %6410 = vmatpush.msra.mxu0 0.0
    %6411 = vmatpush.msra.mxu0 0.0
    %6412 = vmatpush.msra.mxu0 %v6174
    %6413 = vmatpush.msra.mxu0 %v6171
    %6414 = vmatpush.msra.mxu0 %v6168
    %6415 = vmatpush.msra.mxu0 %v6165
    %6416 = vmatpush.msra.mxu0 %v6162
    %6417 = vmatpush.msra.mxu0 %v6159
    %6418 = vmatpush.msra.mxu0 %v6156
    %6419 = vmatpush.msra.mxu0 %v6153
    %6420 = vmatpush.msra.mxu0 %v6150
    %6421 = vmatpush.msra.mxu0 %v6147
    %6422 = vmatmul.f32.gmra.mxu0 %v6342
    %v6423 = vpop.f32.mrf.mxu0
    %v6424 = vadd.f32 0.0, %v6423
    %6425 = vmatmul.f32.gmra.mxu0 %v6345
    %v6426 = vpop.f32.mrf.mxu0
    %v6427 = vadd.f32 0.0, %v6426
    %6428 = vmatmul.f32.gmra.mxu0 %v6348
    %v6429 = vpop.f32.mrf.mxu0
    %v6430 = vadd.f32 0.0, %v6429
    %6431 = vmatmul.f32.gmra.mxu0 %v6351
    %v6432 = vpop.f32.mrf.mxu0
    %v6433 = vadd.f32 0.0, %v6432
    %6434 = vmatmul.f32.gmra.mxu0 %v6354
    %v6435 = vpop.f32.mrf.mxu0
    %v6436 = vadd.f32 0.0, %v6435
    %6437 = vmatmul.f32.gmra.mxu0 %v6357
    %v6438 = vpop.f32.mrf.mxu0
    %v6439 = vadd.f32 0.0, %v6438
    %6440 = vmatmul.f32.gmra.mxu0 %v6360
    %v6441 = vpop.f32.mrf.mxu0
    %v6442 = vadd.f32 0.0, %v6441
    %6443 = vmatmul.f32.gmra.mxu0 %v6363
    %v6444 = vpop.f32.mrf.mxu0
    %v6445 = vadd.f32 0.0, %v6444
    %6446 = vdwg.mxu0
    %6447 = vmatpush.msra.mxu0 0.0
    %6448 = vmatpush.msra.mxu0 0.0
    %6449 = vmatpush.msra.mxu0 0.0
    %6450 = vmatpush.msra.mxu0 0.0
    %6451 = vmatpush.msra.mxu0 0.0
    %6452 = vmatpush.msra.mxu0 0.0
    %6453 = vmatpush.msra.mxu0 %v6175
    %6454 = vmatpush.msra.mxu0 %v6172
    %6455 = vmatpush.msra.mxu0 %v6169
    %6456 = vmatpush.msra.mxu0 %v6166
    %6457 = vmatpush.msra.mxu0 %v6163
    %6458 = vmatpush.msra.mxu0 %v6160
    %6459 = vmatpush.msra.mxu0 %v6157
    %6460 = vmatpush.msra.mxu0 %v6154
    %6461 = vmatpush.msra.mxu0 %v6151
    %6462 = vmatpush.msra.mxu0 %v6148
    %6463 = vmatmul.f32.gmra.mxu0 %v6342
    %v6464 = vpop.f32.mrf.mxu0
    %v6465 = vadd.f32 0.0, %v6464
    %6466 = vmatmul.f32.gmra.mxu0 %v6345
    %v6467 = vpop.f32.mrf.mxu0
    %v6468 = vadd.f32 0.0, %v6467
    %6469 = vmatmul.f32.gmra.mxu0 %v6348
    %v6470 = vpop.f32.mrf.mxu0
    %v6471 = vadd.f32 0.0, %v6470
    %6472 = vmatmul.f32.gmra.mxu0 %v6351
    %v6473 = vpop.f32.mrf.mxu0
    %v6474 = vadd.f32 0.0, %v6473
    %6475 = vmatmul.f32.gmra.mxu0 %v6354
    %v6476 = vpop.f32.mrf.mxu0
    %v6477 = vadd.f32 0.0, %v6476
    %6478 = vmatmul.f32.gmra.mxu0 %v6357
    %v6479 = vpop.f32.mrf.mxu0
    %v6480 = vadd.f32 0.0, %v6479
    %6481 = vmatmul.f32.gmra.mxu0 %v6360
    %v6482 = vpop.f32.mrf.mxu0
    %v6483 = vadd.f32 0.0, %v6482
    %6484 = vmatmul.f32.gmra.mxu0 %v6363
    %v6485 = vpop.f32.mrf.mxu0
    %v6486 = vadd.f32 0.0, %v6485
    %6487 = vdwg.mxu0
    %s6488 = scalar_lea.vmem [#allocation8], 128
    %v6489 = vld [vmem:[%s6488] sm:$0xff]
    %v6490 = vld [vmem:[%s6488 + $0x8] sm:$0xff]
    %v6491 = vld [vmem:[%s6488 + $0x10] sm:$0xff]
    %v6492 = vld [vmem:[%s6488 + $0x18] sm:$0xff]
    %v6493 = vld [vmem:[%s6488 + $0x20] sm:$0xff]
    %v6494 = vld [vmem:[%s6488 + $0x28] sm:$0xff]
    %v6495 = vld [vmem:[%s6488 + $0x30] sm:$0xff]
    %v6496 = vld [vmem:[%s6488 + $0x38] sm:$0xff]
    %v6498 = vsel %vm6184, %v6489, 0
    %v6501 = vsel %vm6184, %v6490, 0
    %v6504 = vsel %vm6184, %v6491, 0
    %v6507 = vsel %vm6184, %v6492, 0
    %v6510 = vsel %vm6184, %v6493, 0
    %v6513 = vsel %vm6184, %v6494, 0
    %v6516 = vsel %vm6184, %v6495, 0
    %v6519 = vsel %vm6184, %v6496, 0
    %6521 = vmatpush.msra.mxu0 0.0
    %6522 = vmatpush.msra.mxu0 0.0
    %6523 = vmatpush.msra.mxu0 0.0
    %6524 = vmatpush.msra.mxu0 0.0
    %6525 = vmatpush.msra.mxu0 0.0
    %6526 = vmatpush.msra.mxu0 0.0
    %6527 = vmatpush.msra.mxu0 %v6173
    %6528 = vmatpush.msra.mxu0 %v6170
    %6529 = vmatpush.msra.mxu0 %v6167
    %6530 = vmatpush.msra.mxu0 %v6164
    %6531 = vmatpush.msra.mxu0 %v6161
    %6532 = vmatpush.msra.mxu0 %v6158
    %6533 = vmatpush.msra.mxu0 %v6155
    %6534 = vmatpush.msra.mxu0 %v6152
    %6535 = vmatpush.msra.mxu0 %v6149
    %6536 = vmatpush.msra.mxu0 %v6146
    %6537 = vmatmul.f32.gmra.mxu0 %v6498
    %v6538 = vpop.f32.mrf.mxu0
    %v6539 = vadd.f32 0.0, %v6538
    %6540 = vmatmul.f32.gmra.mxu0 %v6501
    %v6541 = vpop.f32.mrf.mxu0
    %v6542 = vadd.f32 0.0, %v6541
    %6543 = vmatmul.f32.gmra.mxu0 %v6504
    %v6544 = vpop.f32.mrf.mxu0
    %v6545 = vadd.f32 0.0, %v6544
    %6546 = vmatmul.f32.gmra.mxu0 %v6507
    %v6547 = vpop.f32.mrf.mxu0
    %v6548 = vadd.f32 0.0, %v6547
    %6549 = vmatmul.f32.gmra.mxu0 %v6510
    %v6550 = vpop.f32.mrf.mxu0
    %v6551 = vadd.f32 0.0, %v6550
    %6552 = vmatmul.f32.gmra.mxu0 %v6513
    %v6553 = vpop.f32.mrf.mxu0
    %v6554 = vadd.f32 0.0, %v6553
    %6555 = vmatmul.f32.gmra.mxu0 %v6516
    %v6556 = vpop.f32.mrf.mxu0
    %v6557 = vadd.f32 0.0, %v6556
    %6558 = vmatmul.f32.gmra.mxu0 %v6519
    %v6559 = vpop.f32.mrf.mxu0
    %v6560 = vadd.f32 0.0, %v6559
    %6561 = vdwg.mxu0
    %6562 = vmatpush.msra.mxu0 0.0
    %6563 = vmatpush.msra.mxu0 0.0
    %6564 = vmatpush.msra.mxu0 0.0
    %6565 = vmatpush.msra.mxu0 0.0
    %6566 = vmatpush.msra.mxu0 0.0
    %6567 = vmatpush.msra.mxu0 0.0
    %6568 = vmatpush.msra.mxu0 %v6174
    %6569 = vmatpush.msra.mxu0 %v6171
    %6570 = vmatpush.msra.mxu0 %v6168
    %6571 = vmatpush.msra.mxu0 %v6165
    %6572 = vmatpush.msra.mxu0 %v6162
    %6573 = vmatpush.msra.mxu0 %v6159
    %6574 = vmatpush.msra.mxu0 %v6156
    %6575 = vmatpush.msra.mxu0 %v6153
    %6576 = vmatpush.msra.mxu0 %v6150
    %6577 = vmatpush.msra.mxu0 %v6147
    %6578 = vmatmul.f32.gmra.mxu0 %v6498
    %v6579 = vpop.f32.mrf.mxu0
    %v6580 = vadd.f32 0.0, %v6579
    %6581 = vmatmul.f32.gmra.mxu0 %v6501
    %v6582 = vpop.f32.mrf.mxu0
    %v6583 = vadd.f32 0.0, %v6582
    %6584 = vmatmul.f32.gmra.mxu0 %v6504
    %v6585 = vpop.f32.mrf.mxu0
    %v6586 = vadd.f32 0.0, %v6585
    %6587 = vmatmul.f32.gmra.mxu0 %v6507
    %v6588 = vpop.f32.mrf.mxu0
    %v6589 = vadd.f32 0.0, %v6588
    %6590 = vmatmul.f32.gmra.mxu0 %v6510
    %v6591 = vpop.f32.mrf.mxu0
    %v6592 = vadd.f32 0.0, %v6591
    %6593 = vmatmul.f32.gmra.mxu0 %v6513
    %v6594 = vpop.f32.mrf.mxu0
    %v6595 = vadd.f32 0.0, %v6594
    %6596 = vmatmul.f32.gmra.mxu0 %v6516
    %v6597 = vpop.f32.mrf.mxu0
    %v6598 = vadd.f32 0.0, %v6597
    %6599 = vmatmul.f32.gmra.mxu0 %v6519
    %v6600 = vpop.f32.mrf.mxu0
    %v6601 = vadd.f32 0.0, %v6600
    %6602 = vdwg.mxu0
    %6603 = vmatpush.msra.mxu0 0.0
    %6604 = vmatpush.msra.mxu0 0.0
    %6605 = vmatpush.msra.mxu0 0.0
    %6606 = vmatpush.msra.mxu0 0.0
    %6607 = vmatpush.msra.mxu0 0.0
    %6608 = vmatpush.msra.mxu0 0.0
    %6609 = vmatpush.msra.mxu0 %v6175
    %6610 = vmatpush.msra.mxu0 %v6172
    %6611 = vmatpush.msra.mxu0 %v6169
    %6612 = vmatpush.msra.mxu0 %v6166
    %6613 = vmatpush.msra.mxu0 %v6163
    %6614 = vmatpush.msra.mxu0 %v6160
    %6615 = vmatpush.msra.mxu0 %v6157
    %6616 = vmatpush.msra.mxu0 %v6154
    %6617 = vmatpush.msra.mxu0 %v6151
    %6618 = vmatpush.msra.mxu0 %v6148
    %6619 = vmatmul.f32.gmra.mxu0 %v6498
    %v6620 = vpop.f32.mrf.mxu0
    %v6621 = vadd.f32 0.0, %v6620
    %6622 = vmatmul.f32.gmra.mxu0 %v6501
    %v6623 = vpop.f32.mrf.mxu0
    %v6624 = vadd.f32 0.0, %v6623
    %6625 = vmatmul.f32.gmra.mxu0 %v6504
    %v6626 = vpop.f32.mrf.mxu0
    %v6627 = vadd.f32 0.0, %v6626
    %6628 = vmatmul.f32.gmra.mxu0 %v6507
    %v6629 = vpop.f32.mrf.mxu0
    %v6630 = vadd.f32 0.0, %v6629
    %6631 = vmatmul.f32.gmra.mxu0 %v6510
    %v6632 = vpop.f32.mrf.mxu0
    %v6633 = vadd.f32 0.0, %v6632
    %6634 = vmatmul.f32.gmra.mxu0 %v6513
    %v6635 = vpop.f32.mrf.mxu0
    %v6636 = vadd.f32 0.0, %v6635
    %6637 = vmatmul.f32.gmra.mxu0 %v6516
    %v6638 = vpop.f32.mrf.mxu0
    %v6639 = vadd.f32 0.0, %v6638
    %6640 = vmatmul.f32.gmra.mxu0 %v6519
    %v6641 = vpop.f32.mrf.mxu0
    %v6642 = vadd.f32 0.0, %v6641
    %6643 = vdwg.mxu0
    %v6644 = vld [vmem:[#allocation10] sm:$0xff]
    %v6645 = vld [vmem:[#allocation10 + $0x8] sm:$0xff]
    %v6646 = vld [vmem:[#allocation10 + $0x10] sm:$0xff]
    %v6647 = vld [vmem:[#allocation10 + $0x18] sm:$0xff]
    %v6648 = vld [vmem:[#allocation10 + $0x20] sm:$0xff]
    %v6649 = vld [vmem:[#allocation10 + $0x28] sm:$0xff]
    %v6650 = vld [vmem:[#allocation10 + $0x30] sm:$0xff]
    %v6651 = vld [vmem:[#allocation10 + $0x38] sm:$0xff]
    %v6652 = vld [vmem:[#allocation10 + $0x40] sm:$0xff]
    %v6653 = vld [vmem:[#allocation10 + $0x48] sm:$0xff]
    %v6654 = vld [vmem:[#allocation10 + $0x50] sm:$0xff]
    %v6655 = vld [vmem:[#allocation10 + $0x58] sm:$0xff]
    %v6656 = vld [vmem:[#allocation10 + $0x60] sm:$0xff]
    %v6657 = vld [vmem:[#allocation10 + $0x68] sm:$0xff]
    %v6658 = vld [vmem:[#allocation10 + $0x70] sm:$0xff]
    %v6659 = vld [vmem:[#allocation10 + $0x78] sm:$0xff]
    %v6660 = vld [vmem:[#allocation10 + $0x80] sm:$0xff]
    %v6661 = vld [vmem:[#allocation10 + $0x88] sm:$0xff]
    %v6662 = vld [vmem:[#allocation10 + $0x90] sm:$0xff]
    %v6663 = vld [vmem:[#allocation10 + $0x98] sm:$0xff]
    %v6664 = vld [vmem:[#allocation10 + $0xa0] sm:$0xff]
    %v6665 = vld [vmem:[#allocation10 + $0xa8] sm:$0xff]
    %v6666 = vld [vmem:[#allocation10 + $0xb0] sm:$0xff]
    %v6667 = vld [vmem:[#allocation10 + $0xb8] sm:$0xff]
    %v6668 = vld [vmem:[#allocation10 + $0xc0] sm:$0xff]
    %v6669 = vld [vmem:[#allocation10 + $0xc8] sm:$0xff]
    %v6670 = vld [vmem:[#allocation10 + $0xd0] sm:$0xff]
    %v6671 = vld [vmem:[#allocation10 + $0xd8] sm:$0xff]
    %v6672 = vld [vmem:[#allocation10 + $0xe0] sm:$0xff]
    %v6673 = vld [vmem:[#allocation10 + $0xe8] sm:$0xff]
    %v6674 = vld [vmem:[#allocation10 + $0xf0] sm:$0xff]
    %v6675 = vld [vmem:[#allocation10 + $0xf8] sm:$0xff]
    %v6676 = vld [vmem:[#allocation10 + $0x100] sm:$0xff]
    %v6677 = vld [vmem:[#allocation10 + $0x108] sm:$0xff]
    %v6678 = vld [vmem:[#allocation10 + $0x110] sm:$0xff]
    %v6679 = vld [vmem:[#allocation10 + $0x118] sm:$0xff]
    %v6680 = vld [vmem:[#allocation10 + $0x120] sm:$0xff]
    %v6681 = vld [vmem:[#allocation10 + $0x128] sm:$0xff]
    %v6682 = vld [vmem:[#allocation10 + $0x130] sm:$0xff]
    %v6683 = vld [vmem:[#allocation10 + $0x138] sm:$0xff]
    %v6684 = vld [vmem:[#allocation10 + $0x140] sm:$0xff]
    %v6685 = vld [vmem:[#allocation10 + $0x148] sm:$0xff]
    %v6686 = vld [vmem:[#allocation10 + $0x150] sm:$0xff]
    %v6687 = vld [vmem:[#allocation10 + $0x158] sm:$0xff]
    %v6688 = vld [vmem:[#allocation10 + $0x160] sm:$0xff]
    %v6689 = vld [vmem:[#allocation10 + $0x168] sm:$0xff]
    %v6690 = vld [vmem:[#allocation10 + $0x170] sm:$0xff]
    %v6691 = vld [vmem:[#allocation10 + $0x178] sm:$0xff]
    %v6692 = vld [vmem:[#allocation10 + $0x180] sm:$0xff]
    %v6693 = vld [vmem:[#allocation10 + $0x188] sm:$0xff]
    %v6694 = vld [vmem:[#allocation10 + $0x190] sm:$0xff]
    %v6695 = vld [vmem:[#allocation10 + $0x198] sm:$0xff]
    %v6696 = vld [vmem:[#allocation10 + $0x1a0] sm:$0xff]
    %v6697 = vld [vmem:[#allocation10 + $0x1a8] sm:$0xff]
    %v6698 = vld [vmem:[#allocation10 + $0x1b0] sm:$0xff]
    %v6699 = vld [vmem:[#allocation10 + $0x1b8] sm:$0xff]
    %v6700 = vld [vmem:[#allocation10 + $0x1c0] sm:$0xff]
    %v6701 = vld [vmem:[#allocation10 + $0x1c8] sm:$0xff]
    %v6702 = vld [vmem:[#allocation10 + $0x1d0] sm:$0xff]
    %v6703 = vld [vmem:[#allocation10 + $0x1d8] sm:$0xff]
    %v6704 = vld [vmem:[#allocation10 + $0x1e0] sm:$0xff]
    %v6705 = vld [vmem:[#allocation10 + $0x1e8] sm:$0xff]
    %v6706 = vld [vmem:[#allocation10 + $0x1f0] sm:$0xff]
    %v6707 = vld [vmem:[#allocation10 + $0x1f8] sm:$0xff]
    %v6708 = vld [vmem:[#allocation10 + $0x200] sm:$0xff]
    %v6709 = vld [vmem:[#allocation10 + $0x208] sm:$0xff]
    %v6710 = vld [vmem:[#allocation10 + $0x210] sm:$0xff]
    %v6711 = vld [vmem:[#allocation10 + $0x218] sm:$0xff]
    %v6712 = vld [vmem:[#allocation10 + $0x220] sm:$0xff]
    %v6713 = vld [vmem:[#allocation10 + $0x228] sm:$0xff]
    %s6714 = scalar_lea.vmem [#allocation10], 1680
    %v6715 = vld [vmem:[%s6714] sm:$0xff]
    %v6716 = vld [vmem:[%s6714 + $0x8] sm:$0xff]
    %v6717 = vld [vmem:[%s6714 + $0x10] sm:$0xff]
    %v6718 = vld [vmem:[%s6714 + $0x18] sm:$0xff]
    %v6719 = vld [vmem:[%s6714 + $0x20] sm:$0xff]
    %v6720 = vld [vmem:[%s6714 + $0x28] sm:$0xff]
    %v6721 = vld [vmem:[%s6714 + $0x30] sm:$0xff]
    %v6722 = vld [vmem:[%s6714 + $0x38] sm:$0xff]
    %v6723 = vld [vmem:[%s6714 + $0x40] sm:$0xff]
    %v6724 = vld [vmem:[%s6714 + $0x48] sm:$0xff]
    %v6725 = vld [vmem:[%s6714 + $0x50] sm:$0xff]
    %v6726 = vld [vmem:[%s6714 + $0x58] sm:$0xff]
    %v6727 = vld [vmem:[%s6714 + $0x60] sm:$0xff]
    %v6728 = vld [vmem:[%s6714 + $0x68] sm:$0xff]
    %v6729 = vld [vmem:[%s6714 + $0x70] sm:$0xff]
    %v6730 = vld [vmem:[%s6714 + $0x78] sm:$0xff]
    %v6731 = vld [vmem:[%s6714 + $0x80] sm:$0xff]
    %v6732 = vld [vmem:[%s6714 + $0x88] sm:$0xff]
    %v6733 = vld [vmem:[%s6714 + $0x90] sm:$0xff]
    %v6734 = vld [vmem:[%s6714 + $0x98] sm:$0xff]
    %v6735 = vld [vmem:[%s6714 + $0xa0] sm:$0xff]
    %v6736 = vld [vmem:[%s6714 + $0xa8] sm:$0xff]
    %v6737 = vld [vmem:[%s6714 + $0xb0] sm:$0xff]
    %v6738 = vld [vmem:[%s6714 + $0xb8] sm:$0xff]
    %v6739 = vld [vmem:[%s6714 + $0xc0] sm:$0xff]
    %v6740 = vld [vmem:[%s6714 + $0xc8] sm:$0xff]
    %v6741 = vld [vmem:[%s6714 + $0xd0] sm:$0xff]
    %v6742 = vld [vmem:[%s6714 + $0xd8] sm:$0xff]
    %v6743 = vld [vmem:[%s6714 + $0xe0] sm:$0xff]
    %v6744 = vld [vmem:[%s6714 + $0xe8] sm:$0xff]
    %v6745 = vld [vmem:[%s6714 + $0xf0] sm:$0xff]
    %v6746 = vld [vmem:[%s6714 + $0xf8] sm:$0xff]
    %v6747 = vld [vmem:[%s6714 + $0x100] sm:$0xff]
    %v6748 = vld [vmem:[%s6714 + $0x108] sm:$0xff]
    %v6749 = vld [vmem:[%s6714 + $0x110] sm:$0xff]
    %v6750 = vld [vmem:[%s6714 + $0x118] sm:$0xff]
    %v6751 = vld [vmem:[%s6714 + $0x120] sm:$0xff]
    %v6752 = vld [vmem:[%s6714 + $0x128] sm:$0xff]
    %v6753 = vld [vmem:[%s6714 + $0x130] sm:$0xff]
    %v6754 = vld [vmem:[%s6714 + $0x138] sm:$0xff]
    %v6755 = vld [vmem:[%s6714 + $0x140] sm:$0xff]
    %v6756 = vld [vmem:[%s6714 + $0x148] sm:$0xff]
    %v6757 = vld [vmem:[%s6714 + $0x150] sm:$0xff]
    %v6758 = vld [vmem:[%s6714 + $0x158] sm:$0xff]
    %v6759 = vld [vmem:[%s6714 + $0x160] sm:$0xff]
    %v6760 = vld [vmem:[%s6714 + $0x168] sm:$0xff]
    %v6761 = vld [vmem:[%s6714 + $0x170] sm:$0xff]
    %v6762 = vld [vmem:[%s6714 + $0x178] sm:$0xff]
    %v6763 = vld [vmem:[%s6714 + $0x180] sm:$0xff]
    %v6764 = vld [vmem:[%s6714 + $0x188] sm:$0xff]
    %v6765 = vld [vmem:[%s6714 + $0x190] sm:$0xff]
    %v6766 = vld [vmem:[%s6714 + $0x198] sm:$0xff]
    %v6767 = vld [vmem:[%s6714 + $0x1a0] sm:$0xff]
    %v6768 = vld [vmem:[%s6714 + $0x1a8] sm:$0xff]
    %v6769 = vld [vmem:[%s6714 + $0x1b0] sm:$0xff]
    %v6770 = vld [vmem:[%s6714 + $0x1b8] sm:$0xff]
    %v6771 = vld [vmem:[%s6714 + $0x1c0] sm:$0xff]
    %v6772 = vld [vmem:[%s6714 + $0x1c8] sm:$0xff]
    %v6773 = vld [vmem:[%s6714 + $0x1d0] sm:$0xff]
    %v6774 = vld [vmem:[%s6714 + $0x1d8] sm:$0xff]
    %v6775 = vld [vmem:[%s6714 + $0x1e0] sm:$0xff]
    %v6776 = vld [vmem:[%s6714 + $0x1e8] sm:$0xff]
    %v6777 = vld [vmem:[%s6714 + $0x1f0] sm:$0xff]
    %v6778 = vld [vmem:[%s6714 + $0x1f8] sm:$0xff]
    %v6779 = vld [vmem:[%s6714 + $0x200] sm:$0xff]
    %v6780 = vld [vmem:[%s6714 + $0x208] sm:$0xff]
    %v6781 = vld [vmem:[%s6714 + $0x210] sm:$0xff]
    %v6782 = vld [vmem:[%s6714 + $0x218] sm:$0xff]
    %v6783 = vld [vmem:[%s6714 + $0x220] sm:$0xff]
    %v6784 = vld [vmem:[%s6714 + $0x228] sm:$0xff]
    %vm6785 = vcmask 195584
    %v6787 = vsel %vm6785, %v6465, 0
    %v6790 = vsel %vm6785, %v6468, 0
    %v6793 = vsel %vm6785, %v6471, 0
    %v6796 = vsel %vm6785, %v6474, 0
    %v6799 = vsel %vm6785, %v6477, 0
    %v6802 = vsel %vm6785, %v6480, 0
    %v6805 = vsel %vm6785, %v6483, 0
    %v6808 = vsel %vm6785, %v6486, 0
    %6810 = vmatpush.msra.mxu0 %v6745
    %6811 = vmatpush.msra.mxu0 %v6743
    %6812 = vmatpush.msra.mxu0 %v6741
    %6813 = vmatpush.msra.mxu0 %v6739
    %6814 = vmatpush.msra.mxu0 %v6737
    %6815 = vmatpush.msra.mxu0 %v6735
    %6816 = vmatpush.msra.mxu0 %v6733
    %6817 = vmatpush.msra.mxu0 %v6731
    %6818 = vmatpush.msra.mxu0 %v6729
    %6819 = vmatpush.msra.mxu0 %v6727
    %6820 = vmatpush.msra.mxu0 %v6725
    %6821 = vmatpush.msra.mxu0 %v6723
    %6822 = vmatpush.msra.mxu0 %v6721
    %6823 = vmatpush.msra.mxu0 %v6719
    %6824 = vmatpush.msra.mxu0 %v6717
    %6825 = vmatpush.msra.mxu0 %v6715
    %6826 = vmatmul.f32.gmra.mxu0 %v6383
    %v6827 = vpop.f32.mrf.mxu0
    %v6828 = vadd.f32 0.0, %v6827
    %6829 = vmatmul.f32.gmra.mxu0 %v6386
    %v6830 = vpop.f32.mrf.mxu0
    %v6831 = vadd.f32 0.0, %v6830
    %6832 = vmatmul.f32.gmra.mxu0 %v6389
    %v6833 = vpop.f32.mrf.mxu0
    %v6834 = vadd.f32 0.0, %v6833
    %6835 = vmatmul.f32.gmra.mxu0 %v6392
    %v6836 = vpop.f32.mrf.mxu0
    %v6837 = vadd.f32 0.0, %v6836
    %6838 = vmatmul.f32.gmra.mxu0 %v6395
    %v6839 = vpop.f32.mrf.mxu0
    %v6840 = vadd.f32 0.0, %v6839
    %6841 = vmatmul.f32.gmra.mxu0 %v6398
    %v6842 = vpop.f32.mrf.mxu0
    %v6843 = vadd.f32 0.0, %v6842
    %6844 = vmatmul.f32.gmra.mxu0 %v6401
    %v6845 = vpop.f32.mrf.mxu0
    %v6846 = vadd.f32 0.0, %v6845
    %6847 = vmatmul.f32.gmra.mxu0 %v6404
    %v6848 = vpop.f32.mrf.mxu0
    %v6849 = vadd.f32 0.0, %v6848
    %6850 = vdwg.mxu0
    %6851 = vmatpush.msra.mxu0 %v6777
    %6852 = vmatpush.msra.mxu0 %v6775
    %6853 = vmatpush.msra.mxu0 %v6773
    %6854 = vmatpush.msra.mxu0 %v6771
    %6855 = vmatpush.msra.mxu0 %v6769
    %6856 = vmatpush.msra.mxu0 %v6767
    %6857 = vmatpush.msra.mxu0 %v6765
    %6858 = vmatpush.msra.mxu0 %v6763
    %6859 = vmatpush.msra.mxu0 %v6761
    %6860 = vmatpush.msra.mxu0 %v6759
    %6861 = vmatpush.msra.mxu0 %v6757
    %6862 = vmatpush.msra.mxu0 %v6755
    %6863 = vmatpush.msra.mxu0 %v6753
    %6864 = vmatpush.msra.mxu0 %v6751
    %6865 = vmatpush.msra.mxu0 %v6749
    %6866 = vmatpush.msra.mxu0 %v6747
    %6867 = vmatmul.f32.gmra.mxu0 %v6424
    %v6868 = vpop.f32.mrf.mxu0
    %v6869 = vadd.f32 %v6828, %v6868
    %6870 = vmatmul.f32.gmra.mxu0 %v6427
    %v6871 = vpop.f32.mrf.mxu0
    %v6872 = vadd.f32 %v6831, %v6871
    %6873 = vmatmul.f32.gmra.mxu0 %v6430
    %v6874 = vpop.f32.mrf.mxu0
    %v6875 = vadd.f32 %v6834, %v6874
    %6876 = vmatmul.f32.gmra.mxu0 %v6433
    %v6877 = vpop.f32.mrf.mxu0
    %v6878 = vadd.f32 %v6837, %v6877
    %6879 = vmatmul.f32.gmra.mxu0 %v6436
    %v6880 = vpop.f32.mrf.mxu0
    %v6881 = vadd.f32 %v6840, %v6880
    %6882 = vmatmul.f32.gmra.mxu0 %v6439
    %v6883 = vpop.f32.mrf.mxu0
    %v6884 = vadd.f32 %v6843, %v6883
    %6885 = vmatmul.f32.gmra.mxu0 %v6442
    %v6886 = vpop.f32.mrf.mxu0
    %v6887 = vadd.f32 %v6846, %v6886
    %6888 = vmatmul.f32.gmra.mxu0 %v6445
    %v6889 = vpop.f32.mrf.mxu0
    %v6890 = vadd.f32 %v6849, %v6889
    %6891 = vdwg.mxu0
    %6892 = vmatpush.msra.mxu0 0.0
    %6893 = vmatpush.msra.mxu0 0.0
    %6894 = vmatpush.msra.mxu0 0.0
    %6895 = vmatpush.msra.mxu0 0.0
    %6896 = vmatpush.msra.mxu0 0.0
    %6897 = vmatpush.msra.mxu0 0.0
    %6898 = vmatpush.msra.mxu0 0.0
    %6899 = vmatpush.msra.mxu0 0.0
    %6900 = vmatpush.msra.mxu0 0.0
    %6901 = vmatpush.msra.mxu0 0.0
    %6902 = vmatpush.msra.mxu0 0.0
    %6903 = vmatpush.msra.mxu0 0.0
    %6904 = vmatpush.msra.mxu0 0.0
    %6905 = vmatpush.msra.mxu0 %v6783
    %6906 = vmatpush.msra.mxu0 %v6781
    %6907 = vmatpush.msra.mxu0 %v6779
    %6908 = vmatmul.f32.gmra.mxu0 %v6787
    %v6909 = vpop.f32.mrf.mxu0
    %v6910 = vadd.f32 %v6869, %v6909
    %6911 = vmatmul.f32.gmra.mxu0 %v6790
    %v6912 = vpop.f32.mrf.mxu0
    %v6913 = vadd.f32 %v6872, %v6912
    %6914 = vmatmul.f32.gmra.mxu0 %v6793
    %v6915 = vpop.f32.mrf.mxu0
    %v6916 = vadd.f32 %v6875, %v6915
    %6917 = vmatmul.f32.gmra.mxu0 %v6796
    %v6918 = vpop.f32.mrf.mxu0
    %v6919 = vadd.f32 %v6878, %v6918
    %6920 = vmatmul.f32.gmra.mxu0 %v6799
    %v6921 = vpop.f32.mrf.mxu0
    %v6922 = vadd.f32 %v6881, %v6921
    %6923 = vmatmul.f32.gmra.mxu0 %v6802
    %v6924 = vpop.f32.mrf.mxu0
    %v6925 = vadd.f32 %v6884, %v6924
    %6926 = vmatmul.f32.gmra.mxu0 %v6805
    %v6927 = vpop.f32.mrf.mxu0
    %v6928 = vadd.f32 %v6887, %v6927
    %6929 = vmatmul.f32.gmra.mxu0 %v6808
    %v6930 = vpop.f32.mrf.mxu0
    %v6931 = vadd.f32 %v6890, %v6930
    %6932 = vdwg.mxu0
    %6933 = vmatpush.msra.mxu0 %v6746
    %6934 = vmatpush.msra.mxu0 %v6744
    %6935 = vmatpush.msra.mxu0 %v6742
    %6936 = vmatpush.msra.mxu0 %v6740
    %6937 = vmatpush.msra.mxu0 %v6738
    %6938 = vmatpush.msra.mxu0 %v6736
    %6939 = vmatpush.msra.mxu0 %v6734
    %6940 = vmatpush.msra.mxu0 %v6732
    %6941 = vmatpush.msra.mxu0 %v6730
    %6942 = vmatpush.msra.mxu0 %v6728
    %6943 = vmatpush.msra.mxu0 %v6726
    %6944 = vmatpush.msra.mxu0 %v6724
    %6945 = vmatpush.msra.mxu0 %v6722
    %6946 = vmatpush.msra.mxu0 %v6720
    %6947 = vmatpush.msra.mxu0 %v6718
    %6948 = vmatpush.msra.mxu0 %v6716
    %6949 = vmatmul.f32.gmra.mxu0 %v6383
    %v6950 = vpop.f32.mrf.mxu0
    %v6951 = vadd.f32 0.0, %v6950
    %6952 = vmatmul.f32.gmra.mxu0 %v6386
    %v6953 = vpop.f32.mrf.mxu0
    %v6954 = vadd.f32 0.0, %v6953
    %6955 = vmatmul.f32.gmra.mxu0 %v6389
    %v6956 = vpop.f32.mrf.mxu0
    %v6957 = vadd.f32 0.0, %v6956
    %6958 = vmatmul.f32.gmra.mxu0 %v6392
    %v6959 = vpop.f32.mrf.mxu0
    %v6960 = vadd.f32 0.0, %v6959
    %6961 = vmatmul.f32.gmra.mxu0 %v6395
    %v6962 = vpop.f32.mrf.mxu0
    %v6963 = vadd.f32 0.0, %v6962
    %6964 = vmatmul.f32.gmra.mxu0 %v6398
    %v6965 = vpop.f32.mrf.mxu0
    %v6966 = vadd.f32 0.0, %v6965
    %6967 = vmatmul.f32.gmra.mxu0 %v6401
    %v6968 = vpop.f32.mrf.mxu0
    %v6969 = vadd.f32 0.0, %v6968
    %6970 = vmatmul.f32.gmra.mxu0 %v6404
    %v6971 = vpop.f32.mrf.mxu0
    %v6972 = vadd.f32 0.0, %v6971
    %6973 = vdwg.mxu0
    %6974 = vmatpush.msra.mxu0 %v6778
    %6975 = vmatpush.msra.mxu0 %v6776
    %6976 = vmatpush.msra.mxu0 %v6774
    %6977 = vmatpush.msra.mxu0 %v6772
    %6978 = vmatpush.msra.mxu0 %v6770
    %6979 = vmatpush.msra.mxu0 %v6768
    %6980 = vmatpush.msra.mxu0 %v6766
    %6981 = vmatpush.msra.mxu0 %v6764
    %6982 = vmatpush.msra.mxu0 %v6762
    %6983 = vmatpush.msra.mxu0 %v6760
    %6984 = vmatpush.msra.mxu0 %v6758
    %6985 = vmatpush.msra.mxu0 %v6756
    %6986 = vmatpush.msra.mxu0 %v6754
    %6987 = vmatpush.msra.mxu0 %v6752
    %6988 = vmatpush.msra.mxu0 %v6750
    %6989 = vmatpush.msra.mxu0 %v6748
    %6990 = vmatmul.f32.gmra.mxu0 %v6424
    %v6991 = vpop.f32.mrf.mxu0
    %v6992 = vadd.f32 %v6951, %v6991
    %6993 = vmatmul.f32.gmra.mxu0 %v6427
    %v6994 = vpop.f32.mrf.mxu0
    %v6995 = vadd.f32 %v6954, %v6994
    %6996 = vmatmul.f32.gmra.mxu0 %v6430
    %v6997 = vpop.f32.mrf.mxu0
    %v6998 = vadd.f32 %v6957, %v6997
    %6999 = vmatmul.f32.gmra.mxu0 %v6433
    %v7000 = vpop.f32.mrf.mxu0
    %v7001 = vadd.f32 %v6960, %v7000
    %7002 = vmatmul.f32.gmra.mxu0 %v6436
    %v7003 = vpop.f32.mrf.mxu0
    %v7004 = vadd.f32 %v6963, %v7003
    %7005 = vmatmul.f32.gmra.mxu0 %v6439
    %v7006 = vpop.f32.mrf.mxu0
    %v7007 = vadd.f32 %v6966, %v7006
    %7008 = vmatmul.f32.gmra.mxu0 %v6442
    %v7009 = vpop.f32.mrf.mxu0
    %v7010 = vadd.f32 %v6969, %v7009
    %7011 = vmatmul.f32.gmra.mxu0 %v6445
    %v7012 = vpop.f32.mrf.mxu0
    %v7013 = vadd.f32 %v6972, %v7012
    %7014 = vdwg.mxu0
    %7015 = vmatpush.msra.mxu0 0.0
    %7016 = vmatpush.msra.mxu0 0.0
    %7017 = vmatpush.msra.mxu0 0.0
    %7018 = vmatpush.msra.mxu0 0.0
    %7019 = vmatpush.msra.mxu0 0.0
    %7020 = vmatpush.msra.mxu0 0.0
    %7021 = vmatpush.msra.mxu0 0.0
    %7022 = vmatpush.msra.mxu0 0.0
    %7023 = vmatpush.msra.mxu0 0.0
    %7024 = vmatpush.msra.mxu0 0.0
    %7025 = vmatpush.msra.mxu0 0.0
    %7026 = vmatpush.msra.mxu0 0.0
    %7027 = vmatpush.msra.mxu0 0.0
    %7028 = vmatpush.msra.mxu0 %v6784
    %7029 = vmatpush.msra.mxu0 %v6782
    %7030 = vmatpush.msra.mxu0 %v6780
    %7031 = vmatmul.f32.gmra.mxu0 %v6787
    %v7032 = vpop.f32.mrf.mxu0
    %v7033 = vadd.f32 %v6992, %v7032
    %7034 = vmatmul.f32.gmra.mxu0 %v6790
    %v7035 = vpop.f32.mrf.mxu0
    %v7036 = vadd.f32 %v6995, %v7035
    %7037 = vmatmul.f32.gmra.mxu0 %v6793
    %v7038 = vpop.f32.mrf.mxu0
    %v7039 = vadd.f32 %v6998, %v7038
    %7040 = vmatmul.f32.gmra.mxu0 %v6796
    %v7041 = vpop.f32.mrf.mxu0
    %v7042 = vadd.f32 %v7001, %v7041
    %7043 = vmatmul.f32.gmra.mxu0 %v6799
    %v7044 = vpop.f32.mrf.mxu0
    %v7045 = vadd.f32 %v7004, %v7044
    %7046 = vmatmul.f32.gmra.mxu0 %v6802
    %v7047 = vpop.f32.mrf.mxu0
    %v7048 = vadd.f32 %v7007, %v7047
    %7049 = vmatmul.f32.gmra.mxu0 %v6805
    %v7050 = vpop.f32.mrf.mxu0
    %v7051 = vadd.f32 %v7010, %v7050
    %7052 = vmatmul.f32.gmra.mxu0 %v6808
    %v7053 = vpop.f32.mrf.mxu0
    %v7054 = vadd.f32 %v7013, %v7053
    %7055 = vdwg.mxu0
    %v7057 = vsel %vm6785, %v6309, 0
    %v7060 = vsel %vm6785, %v6312, 0
    %v7063 = vsel %vm6785, %v6315, 0
    %v7066 = vsel %vm6785, %v6318, 0
    %v7069 = vsel %vm6785, %v6321, 0
    %v7072 = vsel %vm6785, %v6324, 0
    %v7075 = vsel %vm6785, %v6327, 0
    %v7078 = vsel %vm6785, %v6330, 0
    %7080 = vmatpush.msra.mxu0 %v6674
    %7081 = vmatpush.msra.mxu0 %v6672
    %7082 = vmatpush.msra.mxu0 %v6670
    %7083 = vmatpush.msra.mxu0 %v6668
    %7084 = vmatpush.msra.mxu0 %v6666
    %7085 = vmatpush.msra.mxu0 %v6664
    %7086 = vmatpush.msra.mxu0 %v6662
    %7087 = vmatpush.msra.mxu0 %v6660
    %7088 = vmatpush.msra.mxu0 %v6658
    %7089 = vmatpush.msra.mxu0 %v6656
    %7090 = vmatpush.msra.mxu0 %v6654
    %7091 = vmatpush.msra.mxu0 %v6652
    %7092 = vmatpush.msra.mxu0 %v6650
    %7093 = vmatpush.msra.mxu0 %v6648
    %7094 = vmatpush.msra.mxu0 %v6646
    %7095 = vmatpush.msra.mxu0 %v6644
    %7096 = vmatmul.f32.gmra.mxu0 %v6227
    %v7097 = vpop.f32.mrf.mxu0
    %v7098 = vadd.f32 %v6910, %v7097
    %7099 = vmatmul.f32.gmra.mxu0 %v6230
    %v7100 = vpop.f32.mrf.mxu0
    %v7101 = vadd.f32 %v6913, %v7100
    %7102 = vmatmul.f32.gmra.mxu0 %v6233
    %v7103 = vpop.f32.mrf.mxu0
    %v7104 = vadd.f32 %v6916, %v7103
    %7105 = vmatmul.f32.gmra.mxu0 %v6236
    %v7106 = vpop.f32.mrf.mxu0
    %v7107 = vadd.f32 %v6919, %v7106
    %7108 = vmatmul.f32.gmra.mxu0 %v6239
    %v7109 = vpop.f32.mrf.mxu0
    %v7110 = vadd.f32 %v6922, %v7109
    %7111 = vmatmul.f32.gmra.mxu0 %v6242
    %v7112 = vpop.f32.mrf.mxu0
    %v7113 = vadd.f32 %v6925, %v7112
    %7114 = vmatmul.f32.gmra.mxu0 %v6245
    %v7115 = vpop.f32.mrf.mxu0
    %v7116 = vadd.f32 %v6928, %v7115
    %7117 = vmatmul.f32.gmra.mxu0 %v6248
    %v7118 = vpop.f32.mrf.mxu0
    %v7119 = vadd.f32 %v6931, %v7118
    %7120 = vdwg.mxu0
    %7121 = vmatpush.msra.mxu0 %v6706
    %7122 = vmatpush.msra.mxu0 %v6704
    %7123 = vmatpush.msra.mxu0 %v6702
    %7124 = vmatpush.msra.mxu0 %v6700
    %7125 = vmatpush.msra.mxu0 %v6698
    %7126 = vmatpush.msra.mxu0 %v6696
    %7127 = vmatpush.msra.mxu0 %v6694
    %7128 = vmatpush.msra.mxu0 %v6692
    %7129 = vmatpush.msra.mxu0 %v6690
    %7130 = vmatpush.msra.mxu0 %v6688
    %7131 = vmatpush.msra.mxu0 %v6686
    %7132 = vmatpush.msra.mxu0 %v6684
    %7133 = vmatpush.msra.mxu0 %v6682
    %7134 = vmatpush.msra.mxu0 %v6680
    %7135 = vmatpush.msra.mxu0 %v6678
    %7136 = vmatpush.msra.mxu0 %v6676
    %7137 = vmatmul.f32.gmra.mxu0 %v6268
    %v7138 = vpop.f32.mrf.mxu0
    %v7139 = vadd.f32 %v7098, %v7138
    %7140 = vmatmul.f32.gmra.mxu0 %v6271
    %v7141 = vpop.f32.mrf.mxu0
    %v7142 = vadd.f32 %v7101, %v7141
    %7143 = vmatmul.f32.gmra.mxu0 %v6274
    %v7144 = vpop.f32.mrf.mxu0
    %v7145 = vadd.f32 %v7104, %v7144
    %7146 = vmatmul.f32.gmra.mxu0 %v6277
    %v7147 = vpop.f32.mrf.mxu0
    %v7148 = vadd.f32 %v7107, %v7147
    %7149 = vmatmul.f32.gmra.mxu0 %v6280
    %v7150 = vpop.f32.mrf.mxu0
    %v7151 = vadd.f32 %v7110, %v7150
    %7152 = vmatmul.f32.gmra.mxu0 %v6283
    %v7153 = vpop.f32.mrf.mxu0
    %v7154 = vadd.f32 %v7113, %v7153
    %7155 = vmatmul.f32.gmra.mxu0 %v6286
    %v7156 = vpop.f32.mrf.mxu0
    %v7157 = vadd.f32 %v7116, %v7156
    %7158 = vmatmul.f32.gmra.mxu0 %v6289
    %v7159 = vpop.f32.mrf.mxu0
    %v7160 = vadd.f32 %v7119, %v7159
    %7161 = vdwg.mxu0
    %7162 = vmatpush.msra.mxu0 0.0
    %7163 = vmatpush.msra.mxu0 0.0
    %7164 = vmatpush.msra.mxu0 0.0
    %7165 = vmatpush.msra.mxu0 0.0
    %7166 = vmatpush.msra.mxu0 0.0
    %7167 = vmatpush.msra.mxu0 0.0
    %7168 = vmatpush.msra.mxu0 0.0
    %7169 = vmatpush.msra.mxu0 0.0
    %7170 = vmatpush.msra.mxu0 0.0
    %7171 = vmatpush.msra.mxu0 0.0
    %7172 = vmatpush.msra.mxu0 0.0
    %7173 = vmatpush.msra.mxu0 0.0
    %7174 = vmatpush.msra.mxu0 0.0
    %7175 = vmatpush.msra.mxu0 %v6712
    %7176 = vmatpush.msra.mxu0 %v6710
    %7177 = vmatpush.msra.mxu0 %v6708
    %7178 = vmatmul.f32.gmra.mxu0 %v7057
    %v7179 = vpop.f32.mrf.mxu0
    %v7180 = vadd.f32 %v7139, %v7179
    %7181 = vmatmul.f32.gmra.mxu0 %v7060
    %v7182 = vpop.f32.mrf.mxu0
    %v7183 = vadd.f32 %v7142, %v7182
    %7184 = vmatmul.f32.gmra.mxu0 %v7063
    %v7185 = vpop.f32.mrf.mxu0
    %v7186 = vadd.f32 %v7145, %v7185
    %7187 = vmatmul.f32.gmra.mxu0 %v7066
    %v7188 = vpop.f32.mrf.mxu0
    %v7189 = vadd.f32 %v7148, %v7188
    %7190 = vmatmul.f32.gmra.mxu0 %v7069
    %v7191 = vpop.f32.mrf.mxu0
    %v7192 = vadd.f32 %v7151, %v7191
    %7193 = vmatmul.f32.gmra.mxu0 %v7072
    %v7194 = vpop.f32.mrf.mxu0
    %v7195 = vadd.f32 %v7154, %v7194
    %7196 = vmatmul.f32.gmra.mxu0 %v7075
    %v7197 = vpop.f32.mrf.mxu0
    %v7198 = vadd.f32 %v7157, %v7197
    %7199 = vmatmul.f32.gmra.mxu0 %v7078
    %v7200 = vpop.f32.mrf.mxu0
    %v7201 = vadd.f32 %v7160, %v7200
    %7202 = vdwg.mxu0
    %7203 = vmatpush.msra.mxu0 %v6675
    %7204 = vmatpush.msra.mxu0 %v6673
    %7205 = vmatpush.msra.mxu0 %v6671
    %7206 = vmatpush.msra.mxu0 %v6669
    %7207 = vmatpush.msra.mxu0 %v6667
    %7208 = vmatpush.msra.mxu0 %v6665
    %7209 = vmatpush.msra.mxu0 %v6663
    %7210 = vmatpush.msra.mxu0 %v6661
    %7211 = vmatpush.msra.mxu0 %v6659
    %7212 = vmatpush.msra.mxu0 %v6657
    %7213 = vmatpush.msra.mxu0 %v6655
    %7214 = vmatpush.msra.mxu0 %v6653
    %7215 = vmatpush.msra.mxu0 %v6651
    %7216 = vmatpush.msra.mxu0 %v6649
    %7217 = vmatpush.msra.mxu0 %v6647
    %7218 = vmatpush.msra.mxu0 %v6645
    %7219 = vmatmul.f32.gmra.mxu0 %v6227
    %v7220 = vpop.f32.mrf.mxu0
    %v7221 = vadd.f32 %v7033, %v7220
    %7222 = vmatmul.f32.gmra.mxu0 %v6230
    %v7223 = vpop.f32.mrf.mxu0
    %v7224 = vadd.f32 %v7036, %v7223
    %7225 = vmatmul.f32.gmra.mxu0 %v6233
    %v7226 = vpop.f32.mrf.mxu0
    %v7227 = vadd.f32 %v7039, %v7226
    %7228 = vmatmul.f32.gmra.mxu0 %v6236
    %v7229 = vpop.f32.mrf.mxu0
    %v7230 = vadd.f32 %v7042, %v7229
    %7231 = vmatmul.f32.gmra.mxu0 %v6239
    %v7232 = vpop.f32.mrf.mxu0
    %v7233 = vadd.f32 %v7045, %v7232
    %7234 = vmatmul.f32.gmra.mxu0 %v6242
    %v7235 = vpop.f32.mrf.mxu0
    %v7236 = vadd.f32 %v7048, %v7235
    %7237 = vmatmul.f32.gmra.mxu0 %v6245
    %v7238 = vpop.f32.mrf.mxu0
    %v7239 = vadd.f32 %v7051, %v7238
    %7240 = vmatmul.f32.gmra.mxu0 %v6248
    %v7241 = vpop.f32.mrf.mxu0
    %v7242 = vadd.f32 %v7054, %v7241
    %7243 = vdwg.mxu0
    %7244 = vmatpush.msra.mxu0 %v6707
    %7245 = vmatpush.msra.mxu0 %v6705
    %7246 = vmatpush.msra.mxu0 %v6703
    %7247 = vmatpush.msra.mxu0 %v6701
    %7248 = vmatpush.msra.mxu0 %v6699
    %7249 = vmatpush.msra.mxu0 %v6697
    %7250 = vmatpush.msra.mxu0 %v6695
    %7251 = vmatpush.msra.mxu0 %v6693
    %7252 = vmatpush.msra.mxu0 %v6691
    %7253 = vmatpush.msra.mxu0 %v6689
    %7254 = vmatpush.msra.mxu0 %v6687
    %7255 = vmatpush.msra.mxu0 %v6685
    %7256 = vmatpush.msra.mxu0 %v6683
    %7257 = vmatpush.msra.mxu0 %v6681
    %7258 = vmatpush.msra.mxu0 %v6679
    %7259 = vmatpush.msra.mxu0 %v6677
    %7260 = vmatmul.f32.gmra.mxu0 %v6268
    %v7261 = vpop.f32.mrf.mxu0
    %v7262 = vadd.f32 %v7221, %v7261
    %7263 = vmatmul.f32.gmra.mxu0 %v6271
    %v7264 = vpop.f32.mrf.mxu0
    %v7265 = vadd.f32 %v7224, %v7264
    %7266 = vmatmul.f32.gmra.mxu0 %v6274
    %v7267 = vpop.f32.mrf.mxu0
    %v7268 = vadd.f32 %v7227, %v7267
    %7269 = vmatmul.f32.gmra.mxu0 %v6277
    %v7270 = vpop.f32.mrf.mxu0
    %v7271 = vadd.f32 %v7230, %v7270
    %7272 = vmatmul.f32.gmra.mxu0 %v6280
    %v7273 = vpop.f32.mrf.mxu0
    %v7274 = vadd.f32 %v7233, %v7273
    %7275 = vmatmul.f32.gmra.mxu0 %v6283
    %v7276 = vpop.f32.mrf.mxu0
    %v7277 = vadd.f32 %v7236, %v7276
    %7278 = vmatmul.f32.gmra.mxu0 %v6286
    %v7279 = vpop.f32.mrf.mxu0
    %v7280 = vadd.f32 %v7239, %v7279
    %7281 = vmatmul.f32.gmra.mxu0 %v6289
    %v7282 = vpop.f32.mrf.mxu0
    %v7283 = vadd.f32 %v7242, %v7282
    %7284 = vdwg.mxu0
    %7285 = vmatpush.msra.mxu0 0.0
    %7286 = vmatpush.msra.mxu0 0.0
    %7287 = vmatpush.msra.mxu0 0.0
    %7288 = vmatpush.msra.mxu0 0.0
    %7289 = vmatpush.msra.mxu0 0.0
    %7290 = vmatpush.msra.mxu0 0.0
    %7291 = vmatpush.msra.mxu0 0.0
    %7292 = vmatpush.msra.mxu0 0.0
    %7293 = vmatpush.msra.mxu0 0.0
    %7294 = vmatpush.msra.mxu0 0.0
    %7295 = vmatpush.msra.mxu0 0.0
    %7296 = vmatpush.msra.mxu0 0.0
    %7297 = vmatpush.msra.mxu0 0.0
    %7298 = vmatpush.msra.mxu0 %v6713
    %7299 = vmatpush.msra.mxu0 %v6711
    %7300 = vmatpush.msra.mxu0 %v6709
    %7301 = vmatmul.f32.gmra.mxu0 %v7057
    %v7302 = vpop.f32.mrf.mxu0
    %v7303 = vadd.f32 %v7262, %v7302
    %7304 = vmatmul.f32.gmra.mxu0 %v7060
    %v7305 = vpop.f32.mrf.mxu0
    %v7306 = vadd.f32 %v7265, %v7305
    %7307 = vmatmul.f32.gmra.mxu0 %v7063
    %v7308 = vpop.f32.mrf.mxu0
    %v7309 = vadd.f32 %v7268, %v7308
    %7310 = vmatmul.f32.gmra.mxu0 %v7066
    %v7311 = vpop.f32.mrf.mxu0
    %v7312 = vadd.f32 %v7271, %v7311
    %7313 = vmatmul.f32.gmra.mxu0 %v7069
    %v7314 = vpop.f32.mrf.mxu0
    %v7315 = vadd.f32 %v7274, %v7314
    %7316 = vmatmul.f32.gmra.mxu0 %v7072
    %v7317 = vpop.f32.mrf.mxu0
    %v7318 = vadd.f32 %v7277, %v7317
    %7319 = vmatmul.f32.gmra.mxu0 %v7075
    %v7320 = vpop.f32.mrf.mxu0
    %v7321 = vadd.f32 %v7280, %v7320
    %7322 = vmatmul.f32.gmra.mxu0 %v7078
    %v7323 = vpop.f32.mrf.mxu0
    %v7324 = vadd.f32 %v7283, %v7323
    %7325 = vdwg.mxu0
    %s7326 = scalar_lea.vmem [#allocation10], 3360
    %v7327 = vld [vmem:[%s7326] sm:$0xff]
    %v7328 = vld [vmem:[%s7326 + $0x8] sm:$0xff]
    %v7329 = vld [vmem:[%s7326 + $0x10] sm:$0xff]
    %v7330 = vld [vmem:[%s7326 + $0x18] sm:$0xff]
    %v7331 = vld [vmem:[%s7326 + $0x20] sm:$0xff]
    %v7332 = vld [vmem:[%s7326 + $0x28] sm:$0xff]
    %v7333 = vld [vmem:[%s7326 + $0x30] sm:$0xff]
    %v7334 = vld [vmem:[%s7326 + $0x38] sm:$0xff]
    %v7335 = vld [vmem:[%s7326 + $0x40] sm:$0xff]
    %v7336 = vld [vmem:[%s7326 + $0x48] sm:$0xff]
    %v7337 = vld [vmem:[%s7326 + $0x50] sm:$0xff]
    %v7338 = vld [vmem:[%s7326 + $0x58] sm:$0xff]
    %v7339 = vld [vmem:[%s7326 + $0x60] sm:$0xff]
    %v7340 = vld [vmem:[%s7326 + $0x68] sm:$0xff]
    %v7341 = vld [vmem:[%s7326 + $0x70] sm:$0xff]
    %v7342 = vld [vmem:[%s7326 + $0x78] sm:$0xff]
    %v7343 = vld [vmem:[%s7326 + $0x80] sm:$0xff]
    %v7344 = vld [vmem:[%s7326 + $0x88] sm:$0xff]
    %v7345 = vld [vmem:[%s7326 + $0x90] sm:$0xff]
    %v7346 = vld [vmem:[%s7326 + $0x98] sm:$0xff]
    %v7347 = vld [vmem:[%s7326 + $0xa0] sm:$0xff]
    %v7348 = vld [vmem:[%s7326 + $0xa8] sm:$0xff]
    %v7349 = vld [vmem:[%s7326 + $0xb0] sm:$0xff]
    %v7350 = vld [vmem:[%s7326 + $0xb8] sm:$0xff]
    %v7351 = vld [vmem:[%s7326 + $0xc0] sm:$0xff]
    %v7352 = vld [vmem:[%s7326 + $0xc8] sm:$0xff]
    %v7353 = vld [vmem:[%s7326 + $0xd0] sm:$0xff]
    %v7354 = vld [vmem:[%s7326 + $0xd8] sm:$0xff]
    %v7355 = vld [vmem:[%s7326 + $0xe0] sm:$0xff]
    %v7356 = vld [vmem:[%s7326 + $0xe8] sm:$0xff]
    %v7357 = vld [vmem:[%s7326 + $0xf0] sm:$0xff]
    %v7358 = vld [vmem:[%s7326 + $0xf8] sm:$0xff]
    %v7359 = vld [vmem:[%s7326 + $0x100] sm:$0xff]
    %v7360 = vld [vmem:[%s7326 + $0x108] sm:$0xff]
    %v7361 = vld [vmem:[%s7326 + $0x110] sm:$0xff]
    %v7362 = vld [vmem:[%s7326 + $0x118] sm:$0xff]
    %v7363 = vld [vmem:[%s7326 + $0x120] sm:$0xff]
    %v7364 = vld [vmem:[%s7326 + $0x128] sm:$0xff]
    %v7365 = vld [vmem:[%s7326 + $0x130] sm:$0xff]
    %v7366 = vld [vmem:[%s7326 + $0x138] sm:$0xff]
    %v7367 = vld [vmem:[%s7326 + $0x140] sm:$0xff]
    %v7368 = vld [vmem:[%s7326 + $0x148] sm:$0xff]
    %v7369 = vld [vmem:[%s7326 + $0x150] sm:$0xff]
    %v7370 = vld [vmem:[%s7326 + $0x158] sm:$0xff]
    %v7371 = vld [vmem:[%s7326 + $0x160] sm:$0xff]
    %v7372 = vld [vmem:[%s7326 + $0x168] sm:$0xff]
    %v7373 = vld [vmem:[%s7326 + $0x170] sm:$0xff]
    %v7374 = vld [vmem:[%s7326 + $0x178] sm:$0xff]
    %v7375 = vld [vmem:[%s7326 + $0x180] sm:$0xff]
    %v7376 = vld [vmem:[%s7326 + $0x188] sm:$0xff]
    %v7377 = vld [vmem:[%s7326 + $0x190] sm:$0xff]
    %v7378 = vld [vmem:[%s7326 + $0x198] sm:$0xff]
    %v7379 = vld [vmem:[%s7326 + $0x1a0] sm:$0xff]
    %v7380 = vld [vmem:[%s7326 + $0x1a8] sm:$0xff]
    %v7381 = vld [vmem:[%s7326 + $0x1b0] sm:$0xff]
    %v7382 = vld [vmem:[%s7326 + $0x1b8] sm:$0xff]
    %v7383 = vld [vmem:[%s7326 + $0x1c0] sm:$0xff]
    %v7384 = vld [vmem:[%s7326 + $0x1c8] sm:$0xff]
    %v7385 = vld [vmem:[%s7326 + $0x1d0] sm:$0xff]
    %v7386 = vld [vmem:[%s7326 + $0x1d8] sm:$0xff]
    %v7387 = vld [vmem:[%s7326 + $0x1e0] sm:$0xff]
    %v7388 = vld [vmem:[%s7326 + $0x1e8] sm:$0xff]
    %v7389 = vld [vmem:[%s7326 + $0x1f0] sm:$0xff]
    %v7390 = vld [vmem:[%s7326 + $0x1f8] sm:$0xff]
    %v7391 = vld [vmem:[%s7326 + $0x200] sm:$0xff]
    %v7392 = vld [vmem:[%s7326 + $0x208] sm:$0xff]
    %v7393 = vld [vmem:[%s7326 + $0x210] sm:$0xff]
    %v7394 = vld [vmem:[%s7326 + $0x218] sm:$0xff]
    %v7395 = vld [vmem:[%s7326 + $0x220] sm:$0xff]
    %v7396 = vld [vmem:[%s7326 + $0x228] sm:$0xff]
    %v7398 = vsel %vm6785, %v6621, 0
    %v7401 = vsel %vm6785, %v6624, 0
    %v7404 = vsel %vm6785, %v6627, 0
    %v7407 = vsel %vm6785, %v6630, 0
    %v7410 = vsel %vm6785, %v6633, 0
    %v7413 = vsel %vm6785, %v6636, 0
    %v7416 = vsel %vm6785, %v6639, 0
    %v7419 = vsel %vm6785, %v6642, 0
    %7421 = vmatpush.msra.mxu0 %v7357
    %7422 = vmatpush.msra.mxu0 %v7355
    %7423 = vmatpush.msra.mxu0 %v7353
    %7424 = vmatpush.msra.mxu0 %v7351
    %7425 = vmatpush.msra.mxu0 %v7349
    %7426 = vmatpush.msra.mxu0 %v7347
    %7427 = vmatpush.msra.mxu0 %v7345
    %7428 = vmatpush.msra.mxu0 %v7343
    %7429 = vmatpush.msra.mxu0 %v7341
    %7430 = vmatpush.msra.mxu0 %v7339
    %7431 = vmatpush.msra.mxu0 %v7337
    %7432 = vmatpush.msra.mxu0 %v7335
    %7433 = vmatpush.msra.mxu0 %v7333
    %7434 = vmatpush.msra.mxu0 %v7331
    %7435 = vmatpush.msra.mxu0 %v7329
    %7436 = vmatpush.msra.mxu0 %v7327
    %7437 = vmatmul.f32.gmra.mxu0 %v6539
    %v7438 = vpop.f32.mrf.mxu0
    %v7439 = vadd.f32 0.0, %v7438
    %7440 = vmatmul.f32.gmra.mxu0 %v6542
    %v7441 = vpop.f32.mrf.mxu0
    %v7442 = vadd.f32 0.0, %v7441
    %7443 = vmatmul.f32.gmra.mxu0 %v6545
    %v7444 = vpop.f32.mrf.mxu0
    %v7445 = vadd.f32 0.0, %v7444
    %7446 = vmatmul.f32.gmra.mxu0 %v6548
    %v7447 = vpop.f32.mrf.mxu0
    %v7448 = vadd.f32 0.0, %v7447
    %7449 = vmatmul.f32.gmra.mxu0 %v6551
    %v7450 = vpop.f32.mrf.mxu0
    %v7451 = vadd.f32 0.0, %v7450
    %7452 = vmatmul.f32.gmra.mxu0 %v6554
    %v7453 = vpop.f32.mrf.mxu0
    %v7454 = vadd.f32 0.0, %v7453
    %7455 = vmatmul.f32.gmra.mxu0 %v6557
    %v7456 = vpop.f32.mrf.mxu0
    %v7457 = vadd.f32 0.0, %v7456
    %7458 = vmatmul.f32.gmra.mxu0 %v6560
    %v7459 = vpop.f32.mrf.mxu0
    %v7460 = vadd.f32 0.0, %v7459
    %7461 = vdwg.mxu0
    %7462 = vmatpush.msra.mxu0 %v7389
    %7463 = vmatpush.msra.mxu0 %v7387
    %7464 = vmatpush.msra.mxu0 %v7385
    %7465 = vmatpush.msra.mxu0 %v7383
    %7466 = vmatpush.msra.mxu0 %v7381
    %7467 = vmatpush.msra.mxu0 %v7379
    %7468 = vmatpush.msra.mxu0 %v7377
    %7469 = vmatpush.msra.mxu0 %v7375
    %7470 = vmatpush.msra.mxu0 %v7373
    %7471 = vmatpush.msra.mxu0 %v7371
    %7472 = vmatpush.msra.mxu0 %v7369
    %7473 = vmatpush.msra.mxu0 %v7367
    %7474 = vmatpush.msra.mxu0 %v7365
    %7475 = vmatpush.msra.mxu0 %v7363
    %7476 = vmatpush.msra.mxu0 %v7361
    %7477 = vmatpush.msra.mxu0 %v7359
    %7478 = vmatmul.f32.gmra.mxu0 %v6580
    %v7479 = vpop.f32.mrf.mxu0
    %v7480 = vadd.f32 %v7439, %v7479
    %7481 = vmatmul.f32.gmra.mxu0 %v6583
    %v7482 = vpop.f32.mrf.mxu0
    %v7483 = vadd.f32 %v7442, %v7482
    %7484 = vmatmul.f32.gmra.mxu0 %v6586
    %v7485 = vpop.f32.mrf.mxu0
    %v7486 = vadd.f32 %v7445, %v7485
    %7487 = vmatmul.f32.gmra.mxu0 %v6589
    %v7488 = vpop.f32.mrf.mxu0
    %v7489 = vadd.f32 %v7448, %v7488
    %7490 = vmatmul.f32.gmra.mxu0 %v6592
    %v7491 = vpop.f32.mrf.mxu0
    %v7492 = vadd.f32 %v7451, %v7491
    %7493 = vmatmul.f32.gmra.mxu0 %v6595
    %v7494 = vpop.f32.mrf.mxu0
    %v7495 = vadd.f32 %v7454, %v7494
    %7496 = vmatmul.f32.gmra.mxu0 %v6598
    %v7497 = vpop.f32.mrf.mxu0
    %v7498 = vadd.f32 %v7457, %v7497
    %7499 = vmatmul.f32.gmra.mxu0 %v6601
    %v7500 = vpop.f32.mrf.mxu0
    %v7501 = vadd.f32 %v7460, %v7500
    %7502 = vdwg.mxu0
    %7503 = vmatpush.msra.mxu0 0.0
    %7504 = vmatpush.msra.mxu0 0.0
    %7505 = vmatpush.msra.mxu0 0.0
    %7506 = vmatpush.msra.mxu0 0.0
    %7507 = vmatpush.msra.mxu0 0.0
    %7508 = vmatpush.msra.mxu0 0.0
    %7509 = vmatpush.msra.mxu0 0.0
    %7510 = vmatpush.msra.mxu0 0.0
    %7511 = vmatpush.msra.mxu0 0.0
    %7512 = vmatpush.msra.mxu0 0.0
    %7513 = vmatpush.msra.mxu0 0.0
    %7514 = vmatpush.msra.mxu0 0.0
    %7515 = vmatpush.msra.mxu0 0.0
    %7516 = vmatpush.msra.mxu0 %v7395
    %7517 = vmatpush.msra.mxu0 %v7393
    %7518 = vmatpush.msra.mxu0 %v7391
    %7519 = vmatmul.f32.gmra.mxu0 %v7398
    %v7520 = vpop.f32.mrf.mxu0
    %v7521 = vadd.f32 %v7480, %v7520
    %7522 = vmatmul.f32.gmra.mxu0 %v7401
    %v7523 = vpop.f32.mrf.mxu0
    %v7524 = vadd.f32 %v7483, %v7523
    %7525 = vmatmul.f32.gmra.mxu0 %v7404
    %v7526 = vpop.f32.mrf.mxu0
    %v7527 = vadd.f32 %v7486, %v7526
    %7528 = vmatmul.f32.gmra.mxu0 %v7407
    %v7529 = vpop.f32.mrf.mxu0
    %v7530 = vadd.f32 %v7489, %v7529
    %7531 = vmatmul.f32.gmra.mxu0 %v7410
    %v7532 = vpop.f32.mrf.mxu0
    %v7533 = vadd.f32 %v7492, %v7532
    %7534 = vmatmul.f32.gmra.mxu0 %v7413
    %v7535 = vpop.f32.mrf.mxu0
    %v7536 = vadd.f32 %v7495, %v7535
    %7537 = vmatmul.f32.gmra.mxu0 %v7416
    %v7538 = vpop.f32.mrf.mxu0
    %v7539 = vadd.f32 %v7498, %v7538
    %7540 = vmatmul.f32.gmra.mxu0 %v7419
    %v7541 = vpop.f32.mrf.mxu0
    %v7542 = vadd.f32 %v7501, %v7541
    %7543 = vdwg.mxu0
    %7544 = vmatpush.msra.mxu0 %v7358
    %7545 = vmatpush.msra.mxu0 %v7356
    %7546 = vmatpush.msra.mxu0 %v7354
    %7547 = vmatpush.msra.mxu0 %v7352
    %7548 = vmatpush.msra.mxu0 %v7350
    %7549 = vmatpush.msra.mxu0 %v7348
    %7550 = vmatpush.msra.mxu0 %v7346
    %7551 = vmatpush.msra.mxu0 %v7344
    %7552 = vmatpush.msra.mxu0 %v7342
    %7553 = vmatpush.msra.mxu0 %v7340
    %7554 = vmatpush.msra.mxu0 %v7338
    %7555 = vmatpush.msra.mxu0 %v7336
    %7556 = vmatpush.msra.mxu0 %v7334
    %7557 = vmatpush.msra.mxu0 %v7332
    %7558 = vmatpush.msra.mxu0 %v7330
    %7559 = vmatpush.msra.mxu0 %v7328
    %7560 = vmatmul.f32.gmra.mxu0 %v6539
    %v7561 = vpop.f32.mrf.mxu0
    %v7562 = vadd.f32 0.0, %v7561
    %7563 = vmatmul.f32.gmra.mxu0 %v6542
    %v7564 = vpop.f32.mrf.mxu0
    %v7565 = vadd.f32 0.0, %v7564
    %7566 = vmatmul.f32.gmra.mxu0 %v6545
    %v7567 = vpop.f32.mrf.mxu0
    %v7568 = vadd.f32 0.0, %v7567
    %7569 = vmatmul.f32.gmra.mxu0 %v6548
    %v7570 = vpop.f32.mrf.mxu0
    %v7571 = vadd.f32 0.0, %v7570
    %7572 = vmatmul.f32.gmra.mxu0 %v6551
    %v7573 = vpop.f32.mrf.mxu0
    %v7574 = vadd.f32 0.0, %v7573
    %7575 = vmatmul.f32.gmra.mxu0 %v6554
    %v7576 = vpop.f32.mrf.mxu0
    %v7577 = vadd.f32 0.0, %v7576
    %7578 = vmatmul.f32.gmra.mxu0 %v6557
    %v7579 = vpop.f32.mrf.mxu0
    %v7580 = vadd.f32 0.0, %v7579
    %7581 = vmatmul.f32.gmra.mxu0 %v6560
    %v7582 = vpop.f32.mrf.mxu0
    %v7583 = vadd.f32 0.0, %v7582
    %7584 = vdwg.mxu0
    %7585 = vmatpush.msra.mxu0 %v7390
    %7586 = vmatpush.msra.mxu0 %v7388
    %7587 = vmatpush.msra.mxu0 %v7386
    %7588 = vmatpush.msra.mxu0 %v7384
    %7589 = vmatpush.msra.mxu0 %v7382
    %7590 = vmatpush.msra.mxu0 %v7380
    %7591 = vmatpush.msra.mxu0 %v7378
    %7592 = vmatpush.msra.mxu0 %v7376
    %7593 = vmatpush.msra.mxu0 %v7374
    %7594 = vmatpush.msra.mxu0 %v7372
    %7595 = vmatpush.msra.mxu0 %v7370
    %7596 = vmatpush.msra.mxu0 %v7368
    %7597 = vmatpush.msra.mxu0 %v7366
    %7598 = vmatpush.msra.mxu0 %v7364
    %7599 = vmatpush.msra.mxu0 %v7362
    %7600 = vmatpush.msra.mxu0 %v7360
    %7601 = vmatmul.f32.gmra.mxu0 %v6580
    %v7602 = vpop.f32.mrf.mxu0
    %v7603 = vadd.f32 %v7562, %v7602
    %7604 = vmatmul.f32.gmra.mxu0 %v6583
    %v7605 = vpop.f32.mrf.mxu0
    %v7606 = vadd.f32 %v7565, %v7605
    %7607 = vmatmul.f32.gmra.mxu0 %v6586
    %v7608 = vpop.f32.mrf.mxu0
    %v7609 = vadd.f32 %v7568, %v7608
    %7610 = vmatmul.f32.gmra.mxu0 %v6589
    %v7611 = vpop.f32.mrf.mxu0
    %v7612 = vadd.f32 %v7571, %v7611
    %7613 = vmatmul.f32.gmra.mxu0 %v6592
    %v7614 = vpop.f32.mrf.mxu0
    %v7615 = vadd.f32 %v7574, %v7614
    %7616 = vmatmul.f32.gmra.mxu0 %v6595
    %v7617 = vpop.f32.mrf.mxu0
    %v7618 = vadd.f32 %v7577, %v7617
    %7619 = vmatmul.f32.gmra.mxu0 %v6598
    %v7620 = vpop.f32.mrf.mxu0
    %v7621 = vadd.f32 %v7580, %v7620
    %7622 = vmatmul.f32.gmra.mxu0 %v6601
    %v7623 = vpop.f32.mrf.mxu0
    %v7624 = vadd.f32 %v7583, %v7623
    %7625 = vdwg.mxu0
    %7626 = vmatpush.msra.mxu0 0.0
    %7627 = vmatpush.msra.mxu0 0.0
    %7628 = vmatpush.msra.mxu0 0.0
    %7629 = vmatpush.msra.mxu0 0.0
    %7630 = vmatpush.msra.mxu0 0.0
    %7631 = vmatpush.msra.mxu0 0.0
    %7632 = vmatpush.msra.mxu0 0.0
    %7633 = vmatpush.msra.mxu0 0.0
    %7634 = vmatpush.msra.mxu0 0.0
    %7635 = vmatpush.msra.mxu0 0.0
    %7636 = vmatpush.msra.mxu0 0.0
    %7637 = vmatpush.msra.mxu0 0.0
    %7638 = vmatpush.msra.mxu0 0.0
    %7639 = vmatpush.msra.mxu0 %v7396
    %7640 = vmatpush.msra.mxu0 %v7394
    %7641 = vmatpush.msra.mxu0 %v7392
    %7642 = vmatmul.f32.gmra.mxu0 %v7398
    %v7643 = vpop.f32.mrf.mxu0
    %v7644 = vadd.f32 %v7603, %v7643
    %7645 = vmatmul.f32.gmra.mxu0 %v7401
    %v7646 = vpop.f32.mrf.mxu0
    %v7647 = vadd.f32 %v7606, %v7646
    %7648 = vmatmul.f32.gmra.mxu0 %v7404
    %v7649 = vpop.f32.mrf.mxu0
    %v7650 = vadd.f32 %v7609, %v7649
    %7651 = vmatmul.f32.gmra.mxu0 %v7407
    %v7652 = vpop.f32.mrf.mxu0
    %v7653 = vadd.f32 %v7612, %v7652
    %7654 = vmatmul.f32.gmra.mxu0 %v7410
    %v7655 = vpop.f32.mrf.mxu0
    %v7656 = vadd.f32 %v7615, %v7655
    %7657 = vmatmul.f32.gmra.mxu0 %v7413
    %v7658 = vpop.f32.mrf.mxu0
    %v7659 = vadd.f32 %v7618, %v7658
    %7660 = vmatmul.f32.gmra.mxu0 %v7416
    %v7661 = vpop.f32.mrf.mxu0
    %v7662 = vadd.f32 %v7621, %v7661
    %7663 = vmatmul.f32.gmra.mxu0 %v7419
    %v7664 = vpop.f32.mrf.mxu0
    %v7665 = vadd.f32 %v7624, %v7664
    %7666 = vdwg.mxu0
    %v7667 = vadd.f32 %v7180, %v7521
    %v7668 = vadd.f32 %v7303, %v7644
    %v7669 = vadd.f32 %v7183, %v7524
    %v7670 = vadd.f32 %v7306, %v7647
    %v7671 = vadd.f32 %v7186, %v7527
    %v7672 = vadd.f32 %v7309, %v7650
    %v7673 = vadd.f32 %v7189, %v7530
    %v7674 = vadd.f32 %v7312, %v7653
    %v7675 = vadd.f32 %v7192, %v7533
    %v7676 = vadd.f32 %v7315, %v7656
    %v7677 = vadd.f32 %v7195, %v7536
    %v7678 = vadd.f32 %v7318, %v7659
    %v7679 = vadd.f32 %v7198, %v7539
    %v7680 = vadd.f32 %v7321, %v7662
    %v7681 = vadd.f32 %v7201, %v7542
    %v7682 = vadd.f32 %v7324, %v7665
    %v7683 = vld [vmem:[%s7] sm:$0x3]
    %v7685 = vperm.slane %v7683, 0
    %v7686 = vperm.slane %v7683, 1
    %v7689 = vadd.f32 %v7667, %v7685
    %v7690 = vadd.f32 %v7668, %v7686
    %v7691 = vadd.f32 %v7669, %v7685
    %v7692 = vadd.f32 %v7670, %v7686
    %v7693 = vadd.f32 %v7671, %v7685
    %v7694 = vadd.f32 %v7672, %v7686
    %v7695 = vadd.f32 %v7673, %v7685
    %v7696 = vadd.f32 %v7674, %v7686
    %v7697 = vadd.f32 %v7675, %v7685
    %v7698 = vadd.f32 %v7676, %v7686
    %v7699 = vadd.f32 %v7677, %v7685
    %v7700 = vadd.f32 %v7678, %v7686
    %v7701 = vadd.f32 %v7679, %v7685
    %v7702 = vadd.f32 %v7680, %v7686
    %v7703 = vadd.f32 %v7681, %v7685
    %v7704 = vadd.f32 %v7682, %v7686
    %v7705 = vmax.f32 %v7689, 0.0
    %v7706 = vmax.f32 %v7690, 0.0
    %v7707 = vmax.f32 %v7691, 0.0
    %v7708 = vmax.f32 %v7692, 0.0
    %v7709 = vmax.f32 %v7693, 0.0
    %v7710 = vmax.f32 %v7694, 0.0
    %v7711 = vmax.f32 %v7695, 0.0
    %v7712 = vmax.f32 %v7696, 0.0
    %v7713 = vmax.f32 %v7697, 0.0
    %v7714 = vmax.f32 %v7698, 0.0
    %v7715 = vmax.f32 %v7699, 0.0
    %v7716 = vmax.f32 %v7700, 0.0
    %v7717 = vmax.f32 %v7701, 0.0
    %v7718 = vmax.f32 %v7702, 0.0
    %v7719 = vmax.f32 %v7703, 0.0
    %v7720 = vmax.f32 %v7704, 0.0
    %v7721 = vmin.f32 %v7689, 0.0
    %v7722 = vmin.f32 %v7690, 0.0
    %v7723 = vmin.f32 %v7691, 0.0
    %v7724 = vmin.f32 %v7692, 0.0
    %v7725 = vmin.f32 %v7693, 0.0
    %v7726 = vmin.f32 %v7694, 0.0
    %v7727 = vmin.f32 %v7695, 0.0
    %v7728 = vmin.f32 %v7696, 0.0
    %v7729 = vmin.f32 %v7697, 0.0
    %v7730 = vmin.f32 %v7698, 0.0
    %v7731 = vmin.f32 %v7699, 0.0
    %v7732 = vmin.f32 %v7700, 0.0
    %v7733 = vmin.f32 %v7701, 0.0
    %v7734 = vmin.f32 %v7702, 0.0
    %v7735 = vmin.f32 %v7703, 0.0
    %v7736 = vmin.f32 %v7704, 0.0
    %v7737 = vstv %s239
    %v7738 = vmul.f32 %v7737, %v7721
    %v7739 = vmul.f32 %v7737, %v7722
    %v7740 = vmul.f32 %v7737, %v7723
    %v7741 = vmul.f32 %v7737, %v7724
    %v7742 = vmul.f32 %v7737, %v7725
    %v7743 = vmul.f32 %v7737, %v7726
    %v7744 = vmul.f32 %v7737, %v7727
    %v7745 = vmul.f32 %v7737, %v7728
    %v7746 = vmul.f32 %v7737, %v7729
    %v7747 = vmul.f32 %v7737, %v7730
    %v7748 = vmul.f32 %v7737, %v7731
    %v7749 = vmul.f32 %v7737, %v7732
    %v7750 = vmul.f32 %v7737, %v7733
    %v7751 = vmul.f32 %v7737, %v7734
    %v7752 = vmul.f32 %v7737, %v7735
    %v7753 = vmul.f32 %v7737, %v7736
    %v7754 = vadd.f32 %v7705, %v7738
    %v7755 = vadd.f32 %v7706, %v7739
    %v7756 = vadd.f32 %v7707, %v7740
    %v7757 = vadd.f32 %v7708, %v7741
    %v7758 = vadd.f32 %v7709, %v7742
    %v7759 = vadd.f32 %v7710, %v7743
    %v7760 = vadd.f32 %v7711, %v7744
    %v7761 = vadd.f32 %v7712, %v7745
    %v7762 = vadd.f32 %v7713, %v7746
    %v7763 = vadd.f32 %v7714, %v7747
    %v7764 = vadd.f32 %v7715, %v7748
    %v7765 = vadd.f32 %v7716, %v7749
    %v7766 = vadd.f32 %v7717, %v7750
    %v7767 = vadd.f32 %v7718, %v7751
    %v7768 = vadd.f32 %v7719, %v7752
    %v7769 = vadd.f32 %v7720, %v7753
    %s7770 = scalar_lea.vmem [#allocation10], 560
    %v7771 = vld [vmem:[%s7770] sm:$0xff]
    %v7772 = vld [vmem:[%s7770 + $0x8] sm:$0xff]
    %v7773 = vld [vmem:[%s7770 + $0x10] sm:$0xff]
    %v7774 = vld [vmem:[%s7770 + $0x18] sm:$0xff]
    %v7775 = vld [vmem:[%s7770 + $0x20] sm:$0xff]
    %v7776 = vld [vmem:[%s7770 + $0x28] sm:$0xff]
    %v7777 = vld [vmem:[%s7770 + $0x30] sm:$0xff]
    %v7778 = vld [vmem:[%s7770 + $0x38] sm:$0xff]
    %v7779 = vld [vmem:[%s7770 + $0x40] sm:$0xff]
    %v7780 = vld [vmem:[%s7770 + $0x48] sm:$0xff]
    %v7781 = vld [vmem:[%s7770 + $0x50] sm:$0xff]
    %v7782 = vld [vmem:[%s7770 + $0x58] sm:$0xff]
    %v7783 = vld [vmem:[%s7770 + $0x60] sm:$0xff]
    %v7784 = vld [vmem:[%s7770 + $0x68] sm:$0xff]
    %v7785 = vld [vmem:[%s7770 + $0x70] sm:$0xff]
    %v7786 = vld [vmem:[%s7770 + $0x78] sm:$0xff]
    %v7787 = vld [vmem:[%s7770 + $0x80] sm:$0xff]
    %v7788 = vld [vmem:[%s7770 + $0x88] sm:$0xff]
    %v7789 = vld [vmem:[%s7770 + $0x90] sm:$0xff]
    %v7790 = vld [vmem:[%s7770 + $0x98] sm:$0xff]
    %v7791 = vld [vmem:[%s7770 + $0xa0] sm:$0xff]
    %v7792 = vld [vmem:[%s7770 + $0xa8] sm:$0xff]
    %v7793 = vld [vmem:[%s7770 + $0xb0] sm:$0xff]
    %v7794 = vld [vmem:[%s7770 + $0xb8] sm:$0xff]
    %v7795 = vld [vmem:[%s7770 + $0xc0] sm:$0xff]
    %v7796 = vld [vmem:[%s7770 + $0xc8] sm:$0xff]
    %v7797 = vld [vmem:[%s7770 + $0xd0] sm:$0xff]
    %v7798 = vld [vmem:[%s7770 + $0xd8] sm:$0xff]
    %v7799 = vld [vmem:[%s7770 + $0xe0] sm:$0xff]
    %v7800 = vld [vmem:[%s7770 + $0xe8] sm:$0xff]
    %v7801 = vld [vmem:[%s7770 + $0xf0] sm:$0xff]
    %v7802 = vld [vmem:[%s7770 + $0xf8] sm:$0xff]
    %v7803 = vld [vmem:[%s7770 + $0x100] sm:$0xff]
    %v7804 = vld [vmem:[%s7770 + $0x108] sm:$0xff]
    %v7805 = vld [vmem:[%s7770 + $0x110] sm:$0xff]
    %v7806 = vld [vmem:[%s7770 + $0x118] sm:$0xff]
    %v7807 = vld [vmem:[%s7770 + $0x120] sm:$0xff]
    %v7808 = vld [vmem:[%s7770 + $0x128] sm:$0xff]
    %v7809 = vld [vmem:[%s7770 + $0x130] sm:$0xff]
    %v7810 = vld [vmem:[%s7770 + $0x138] sm:$0xff]
    %v7811 = vld [vmem:[%s7770 + $0x140] sm:$0xff]
    %v7812 = vld [vmem:[%s7770 + $0x148] sm:$0xff]
    %v7813 = vld [vmem:[%s7770 + $0x150] sm:$0xff]
    %v7814 = vld [vmem:[%s7770 + $0x158] sm:$0xff]
    %v7815 = vld [vmem:[%s7770 + $0x160] sm:$0xff]
    %v7816 = vld [vmem:[%s7770 + $0x168] sm:$0xff]
    %v7817 = vld [vmem:[%s7770 + $0x170] sm:$0xff]
    %v7818 = vld [vmem:[%s7770 + $0x178] sm:$0xff]
    %v7819 = vld [vmem:[%s7770 + $0x180] sm:$0xff]
    %v7820 = vld [vmem:[%s7770 + $0x188] sm:$0xff]
    %v7821 = vld [vmem:[%s7770 + $0x190] sm:$0xff]
    %v7822 = vld [vmem:[%s7770 + $0x198] sm:$0xff]
    %v7823 = vld [vmem:[%s7770 + $0x1a0] sm:$0xff]
    %v7824 = vld [vmem:[%s7770 + $0x1a8] sm:$0xff]
    %v7825 = vld [vmem:[%s7770 + $0x1b0] sm:$0xff]
    %v7826 = vld [vmem:[%s7770 + $0x1b8] sm:$0xff]
    %v7827 = vld [vmem:[%s7770 + $0x1c0] sm:$0xff]
    %v7828 = vld [vmem:[%s7770 + $0x1c8] sm:$0xff]
    %v7829 = vld [vmem:[%s7770 + $0x1d0] sm:$0xff]
    %v7830 = vld [vmem:[%s7770 + $0x1d8] sm:$0xff]
    %v7831 = vld [vmem:[%s7770 + $0x1e0] sm:$0xff]
    %v7832 = vld [vmem:[%s7770 + $0x1e8] sm:$0xff]
    %v7833 = vld [vmem:[%s7770 + $0x1f0] sm:$0xff]
    %v7834 = vld [vmem:[%s7770 + $0x1f8] sm:$0xff]
    %v7835 = vld [vmem:[%s7770 + $0x200] sm:$0xff]
    %v7836 = vld [vmem:[%s7770 + $0x208] sm:$0xff]
    %v7837 = vld [vmem:[%s7770 + $0x210] sm:$0xff]
    %v7838 = vld [vmem:[%s7770 + $0x218] sm:$0xff]
    %v7839 = vld [vmem:[%s7770 + $0x220] sm:$0xff]
    %v7840 = vld [vmem:[%s7770 + $0x228] sm:$0xff]
    %s7841 = scalar_lea.vmem [#allocation10], 2240
    %v7842 = vld [vmem:[%s7841] sm:$0xff]
    %v7843 = vld [vmem:[%s7841 + $0x8] sm:$0xff]
    %v7844 = vld [vmem:[%s7841 + $0x10] sm:$0xff]
    %v7845 = vld [vmem:[%s7841 + $0x18] sm:$0xff]
    %v7846 = vld [vmem:[%s7841 + $0x20] sm:$0xff]
    %v7847 = vld [vmem:[%s7841 + $0x28] sm:$0xff]
    %v7848 = vld [vmem:[%s7841 + $0x30] sm:$0xff]
    %v7849 = vld [vmem:[%s7841 + $0x38] sm:$0xff]
    %v7850 = vld [vmem:[%s7841 + $0x40] sm:$0xff]
    %v7851 = vld [vmem:[%s7841 + $0x48] sm:$0xff]
    %v7852 = vld [vmem:[%s7841 + $0x50] sm:$0xff]
    %v7853 = vld [vmem:[%s7841 + $0x58] sm:$0xff]
    %v7854 = vld [vmem:[%s7841 + $0x60] sm:$0xff]
    %v7855 = vld [vmem:[%s7841 + $0x68] sm:$0xff]
    %v7856 = vld [vmem:[%s7841 + $0x70] sm:$0xff]
    %v7857 = vld [vmem:[%s7841 + $0x78] sm:$0xff]
    %v7858 = vld [vmem:[%s7841 + $0x80] sm:$0xff]
    %v7859 = vld [vmem:[%s7841 + $0x88] sm:$0xff]
    %v7860 = vld [vmem:[%s7841 + $0x90] sm:$0xff]
    %v7861 = vld [vmem:[%s7841 + $0x98] sm:$0xff]
    %v7862 = vld [vmem:[%s7841 + $0xa0] sm:$0xff]
    %v7863 = vld [vmem:[%s7841 + $0xa8] sm:$0xff]
    %v7864 = vld [vmem:[%s7841 + $0xb0] sm:$0xff]
    %v7865 = vld [vmem:[%s7841 + $0xb8] sm:$0xff]
    %v7866 = vld [vmem:[%s7841 + $0xc0] sm:$0xff]
    %v7867 = vld [vmem:[%s7841 + $0xc8] sm:$0xff]
    %v7868 = vld [vmem:[%s7841 + $0xd0] sm:$0xff]
    %v7869 = vld [vmem:[%s7841 + $0xd8] sm:$0xff]
    %v7870 = vld [vmem:[%s7841 + $0xe0] sm:$0xff]
    %v7871 = vld [vmem:[%s7841 + $0xe8] sm:$0xff]
    %v7872 = vld [vmem:[%s7841 + $0xf0] sm:$0xff]
    %v7873 = vld [vmem:[%s7841 + $0xf8] sm:$0xff]
    %v7874 = vld [vmem:[%s7841 + $0x100] sm:$0xff]
    %v7875 = vld [vmem:[%s7841 + $0x108] sm:$0xff]
    %v7876 = vld [vmem:[%s7841 + $0x110] sm:$0xff]
    %v7877 = vld [vmem:[%s7841 + $0x118] sm:$0xff]
    %v7878 = vld [vmem:[%s7841 + $0x120] sm:$0xff]
    %v7879 = vld [vmem:[%s7841 + $0x128] sm:$0xff]
    %v7880 = vld [vmem:[%s7841 + $0x130] sm:$0xff]
    %v7881 = vld [vmem:[%s7841 + $0x138] sm:$0xff]
    %v7882 = vld [vmem:[%s7841 + $0x140] sm:$0xff]
    %v7883 = vld [vmem:[%s7841 + $0x148] sm:$0xff]
    %v7884 = vld [vmem:[%s7841 + $0x150] sm:$0xff]
    %v7885 = vld [vmem:[%s7841 + $0x158] sm:$0xff]
    %v7886 = vld [vmem:[%s7841 + $0x160] sm:$0xff]
    %v7887 = vld [vmem:[%s7841 + $0x168] sm:$0xff]
    %v7888 = vld [vmem:[%s7841 + $0x170] sm:$0xff]
    %v7889 = vld [vmem:[%s7841 + $0x178] sm:$0xff]
    %v7890 = vld [vmem:[%s7841 + $0x180] sm:$0xff]
    %v7891 = vld [vmem:[%s7841 + $0x188] sm:$0xff]
    %v7892 = vld [vmem:[%s7841 + $0x190] sm:$0xff]
    %v7893 = vld [vmem:[%s7841 + $0x198] sm:$0xff]
    %v7894 = vld [vmem:[%s7841 + $0x1a0] sm:$0xff]
    %v7895 = vld [vmem:[%s7841 + $0x1a8] sm:$0xff]
    %v7896 = vld [vmem:[%s7841 + $0x1b0] sm:$0xff]
    %v7897 = vld [vmem:[%s7841 + $0x1b8] sm:$0xff]
    %v7898 = vld [vmem:[%s7841 + $0x1c0] sm:$0xff]
    %v7899 = vld [vmem:[%s7841 + $0x1c8] sm:$0xff]
    %v7900 = vld [vmem:[%s7841 + $0x1d0] sm:$0xff]
    %v7901 = vld [vmem:[%s7841 + $0x1d8] sm:$0xff]
    %v7902 = vld [vmem:[%s7841 + $0x1e0] sm:$0xff]
    %v7903 = vld [vmem:[%s7841 + $0x1e8] sm:$0xff]
    %v7904 = vld [vmem:[%s7841 + $0x1f0] sm:$0xff]
    %v7905 = vld [vmem:[%s7841 + $0x1f8] sm:$0xff]
    %v7906 = vld [vmem:[%s7841 + $0x200] sm:$0xff]
    %v7907 = vld [vmem:[%s7841 + $0x208] sm:$0xff]
    %v7908 = vld [vmem:[%s7841 + $0x210] sm:$0xff]
    %v7909 = vld [vmem:[%s7841 + $0x218] sm:$0xff]
    %v7910 = vld [vmem:[%s7841 + $0x220] sm:$0xff]
    %v7911 = vld [vmem:[%s7841 + $0x228] sm:$0xff]
    %7912 = vmatpush.msra.mxu0 %v7872
    %7913 = vmatpush.msra.mxu0 %v7870
    %7914 = vmatpush.msra.mxu0 %v7868
    %7915 = vmatpush.msra.mxu0 %v7866
    %7916 = vmatpush.msra.mxu0 %v7864
    %7917 = vmatpush.msra.mxu0 %v7862
    %7918 = vmatpush.msra.mxu0 %v7860
    %7919 = vmatpush.msra.mxu0 %v7858
    %7920 = vmatpush.msra.mxu0 %v7856
    %7921 = vmatpush.msra.mxu0 %v7854
    %7922 = vmatpush.msra.mxu0 %v7852
    %7923 = vmatpush.msra.mxu0 %v7850
    %7924 = vmatpush.msra.mxu0 %v7848
    %7925 = vmatpush.msra.mxu0 %v7846
    %7926 = vmatpush.msra.mxu0 %v7844
    %7927 = vmatpush.msra.mxu0 %v7842
    %7928 = vmatmul.f32.gmra.mxu0 %v6383
    %v7929 = vpop.f32.mrf.mxu0
    %v7930 = vadd.f32 0.0, %v7929
    %7931 = vmatmul.f32.gmra.mxu0 %v6386
    %v7932 = vpop.f32.mrf.mxu0
    %v7933 = vadd.f32 0.0, %v7932
    %7934 = vmatmul.f32.gmra.mxu0 %v6389
    %v7935 = vpop.f32.mrf.mxu0
    %v7936 = vadd.f32 0.0, %v7935
    %7937 = vmatmul.f32.gmra.mxu0 %v6392
    %v7938 = vpop.f32.mrf.mxu0
    %v7939 = vadd.f32 0.0, %v7938
    %7940 = vmatmul.f32.gmra.mxu0 %v6395
    %v7941 = vpop.f32.mrf.mxu0
    %v7942 = vadd.f32 0.0, %v7941
    %7943 = vmatmul.f32.gmra.mxu0 %v6398
    %v7944 = vpop.f32.mrf.mxu0
    %v7945 = vadd.f32 0.0, %v7944
    %7946 = vmatmul.f32.gmra.mxu0 %v6401
    %v7947 = vpop.f32.mrf.mxu0
    %v7948 = vadd.f32 0.0, %v7947
    %7949 = vmatmul.f32.gmra.mxu0 %v6404
    %v7950 = vpop.f32.mrf.mxu0
    %v7951 = vadd.f32 0.0, %v7950
    %7952 = vdwg.mxu0
    %7953 = vmatpush.msra.mxu0 %v7904
    %7954 = vmatpush.msra.mxu0 %v7902
    %7955 = vmatpush.msra.mxu0 %v7900
    %7956 = vmatpush.msra.mxu0 %v7898
    %7957 = vmatpush.msra.mxu0 %v7896
    %7958 = vmatpush.msra.mxu0 %v7894
    %7959 = vmatpush.msra.mxu0 %v7892
    %7960 = vmatpush.msra.mxu0 %v7890
    %7961 = vmatpush.msra.mxu0 %v7888
    %7962 = vmatpush.msra.mxu0 %v7886
    %7963 = vmatpush.msra.mxu0 %v7884
    %7964 = vmatpush.msra.mxu0 %v7882
    %7965 = vmatpush.msra.mxu0 %v7880
    %7966 = vmatpush.msra.mxu0 %v7878
    %7967 = vmatpush.msra.mxu0 %v7876
    %7968 = vmatpush.msra.mxu0 %v7874
    %7969 = vmatmul.f32.gmra.mxu0 %v6424
    %v7970 = vpop.f32.mrf.mxu0
    %v7971 = vadd.f32 %v7930, %v7970
    %7972 = vmatmul.f32.gmra.mxu0 %v6427
    %v7973 = vpop.f32.mrf.mxu0
    %v7974 = vadd.f32 %v7933, %v7973
    %7975 = vmatmul.f32.gmra.mxu0 %v6430
    %v7976 = vpop.f32.mrf.mxu0
    %v7977 = vadd.f32 %v7936, %v7976
    %7978 = vmatmul.f32.gmra.mxu0 %v6433
    %v7979 = vpop.f32.mrf.mxu0
    %v7980 = vadd.f32 %v7939, %v7979
    %7981 = vmatmul.f32.gmra.mxu0 %v6436
    %v7982 = vpop.f32.mrf.mxu0
    %v7983 = vadd.f32 %v7942, %v7982
    %7984 = vmatmul.f32.gmra.mxu0 %v6439
    %v7985 = vpop.f32.mrf.mxu0
    %v7986 = vadd.f32 %v7945, %v7985
    %7987 = vmatmul.f32.gmra.mxu0 %v6442
    %v7988 = vpop.f32.mrf.mxu0
    %v7989 = vadd.f32 %v7948, %v7988
    %7990 = vmatmul.f32.gmra.mxu0 %v6445
    %v7991 = vpop.f32.mrf.mxu0
    %v7992 = vadd.f32 %v7951, %v7991
    %7993 = vdwg.mxu0
    %7994 = vmatpush.msra.mxu0 0.0
    %7995 = vmatpush.msra.mxu0 0.0
    %7996 = vmatpush.msra.mxu0 0.0
    %7997 = vmatpush.msra.mxu0 0.0
    %7998 = vmatpush.msra.mxu0 0.0
    %7999 = vmatpush.msra.mxu0 0.0
    %8000 = vmatpush.msra.mxu0 0.0
    %8001 = vmatpush.msra.mxu0 0.0
    %8002 = vmatpush.msra.mxu0 0.0
    %8003 = vmatpush.msra.mxu0 0.0
    %8004 = vmatpush.msra.mxu0 0.0
    %8005 = vmatpush.msra.mxu0 0.0
    %8006 = vmatpush.msra.mxu0 0.0
    %8007 = vmatpush.msra.mxu0 %v7910
    %8008 = vmatpush.msra.mxu0 %v7908
    %8009 = vmatpush.msra.mxu0 %v7906
    %8010 = vmatmul.f32.gmra.mxu0 %v6787
    %v8011 = vpop.f32.mrf.mxu0
    %v8012 = vadd.f32 %v7971, %v8011
    %8013 = vmatmul.f32.gmra.mxu0 %v6790
    %v8014 = vpop.f32.mrf.mxu0
    %v8015 = vadd.f32 %v7974, %v8014
    %8016 = vmatmul.f32.gmra.mxu0 %v6793
    %v8017 = vpop.f32.mrf.mxu0
    %v8018 = vadd.f32 %v7977, %v8017
    %8019 = vmatmul.f32.gmra.mxu0 %v6796
    %v8020 = vpop.f32.mrf.mxu0
    %v8021 = vadd.f32 %v7980, %v8020
    %8022 = vmatmul.f32.gmra.mxu0 %v6799
    %v8023 = vpop.f32.mrf.mxu0
    %v8024 = vadd.f32 %v7983, %v8023
    %8025 = vmatmul.f32.gmra.mxu0 %v6802
    %v8026 = vpop.f32.mrf.mxu0
    %v8027 = vadd.f32 %v7986, %v8026
    %8028 = vmatmul.f32.gmra.mxu0 %v6805
    %v8029 = vpop.f32.mrf.mxu0
    %v8030 = vadd.f32 %v7989, %v8029
    %8031 = vmatmul.f32.gmra.mxu0 %v6808
    %v8032 = vpop.f32.mrf.mxu0
    %v8033 = vadd.f32 %v7992, %v8032
    %8034 = vdwg.mxu0
    %8035 = vmatpush.msra.mxu0 %v7873
    %8036 = vmatpush.msra.mxu0 %v7871
    %8037 = vmatpush.msra.mxu0 %v7869
    %8038 = vmatpush.msra.mxu0 %v7867
    %8039 = vmatpush.msra.mxu0 %v7865
    %8040 = vmatpush.msra.mxu0 %v7863
    %8041 = vmatpush.msra.mxu0 %v7861
    %8042 = vmatpush.msra.mxu0 %v7859
    %8043 = vmatpush.msra.mxu0 %v7857
    %8044 = vmatpush.msra.mxu0 %v7855
    %8045 = vmatpush.msra.mxu0 %v7853
    %8046 = vmatpush.msra.mxu0 %v7851
    %8047 = vmatpush.msra.mxu0 %v7849
    %8048 = vmatpush.msra.mxu0 %v7847
    %8049 = vmatpush.msra.mxu0 %v7845
    %8050 = vmatpush.msra.mxu0 %v7843
    %8051 = vmatmul.f32.gmra.mxu0 %v6383
    %v8052 = vpop.f32.mrf.mxu0
    %v8053 = vadd.f32 0.0, %v8052
    %8054 = vmatmul.f32.gmra.mxu0 %v6386
    %v8055 = vpop.f32.mrf.mxu0
    %v8056 = vadd.f32 0.0, %v8055
    %8057 = vmatmul.f32.gmra.mxu0 %v6389
    %v8058 = vpop.f32.mrf.mxu0
    %v8059 = vadd.f32 0.0, %v8058
    %8060 = vmatmul.f32.gmra.mxu0 %v6392
    %v8061 = vpop.f32.mrf.mxu0
    %v8062 = vadd.f32 0.0, %v8061
    %8063 = vmatmul.f32.gmra.mxu0 %v6395
    %v8064 = vpop.f32.mrf.mxu0
    %v8065 = vadd.f32 0.0, %v8064
    %8066 = vmatmul.f32.gmra.mxu0 %v6398
    %v8067 = vpop.f32.mrf.mxu0
    %v8068 = vadd.f32 0.0, %v8067
    %8069 = vmatmul.f32.gmra.mxu0 %v6401
    %v8070 = vpop.f32.mrf.mxu0
    %v8071 = vadd.f32 0.0, %v8070
    %8072 = vmatmul.f32.gmra.mxu0 %v6404
    %v8073 = vpop.f32.mrf.mxu0
    %v8074 = vadd.f32 0.0, %v8073
    %8075 = vdwg.mxu0
    %8076 = vmatpush.msra.mxu0 %v7905
    %8077 = vmatpush.msra.mxu0 %v7903
    %8078 = vmatpush.msra.mxu0 %v7901
    %8079 = vmatpush.msra.mxu0 %v7899
    %8080 = vmatpush.msra.mxu0 %v7897
    %8081 = vmatpush.msra.mxu0 %v7895
    %8082 = vmatpush.msra.mxu0 %v7893
    %8083 = vmatpush.msra.mxu0 %v7891
    %8084 = vmatpush.msra.mxu0 %v7889
    %8085 = vmatpush.msra.mxu0 %v7887
    %8086 = vmatpush.msra.mxu0 %v7885
    %8087 = vmatpush.msra.mxu0 %v7883
    %8088 = vmatpush.msra.mxu0 %v7881
    %8089 = vmatpush.msra.mxu0 %v7879
    %8090 = vmatpush.msra.mxu0 %v7877
    %8091 = vmatpush.msra.mxu0 %v7875
    %8092 = vmatmul.f32.gmra.mxu0 %v6424
    %v8093 = vpop.f32.mrf.mxu0
    %v8094 = vadd.f32 %v8053, %v8093
    %8095 = vmatmul.f32.gmra.mxu0 %v6427
    %v8096 = vpop.f32.mrf.mxu0
    %v8097 = vadd.f32 %v8056, %v8096
    %8098 = vmatmul.f32.gmra.mxu0 %v6430
    %v8099 = vpop.f32.mrf.mxu0
    %v8100 = vadd.f32 %v8059, %v8099
    %8101 = vmatmul.f32.gmra.mxu0 %v6433
    %v8102 = vpop.f32.mrf.mxu0
    %v8103 = vadd.f32 %v8062, %v8102
    %8104 = vmatmul.f32.gmra.mxu0 %v6436
    %v8105 = vpop.f32.mrf.mxu0
    %v8106 = vadd.f32 %v8065, %v8105
    %8107 = vmatmul.f32.gmra.mxu0 %v6439
    %v8108 = vpop.f32.mrf.mxu0
    %v8109 = vadd.f32 %v8068, %v8108
    %8110 = vmatmul.f32.gmra.mxu0 %v6442
    %v8111 = vpop.f32.mrf.mxu0
    %v8112 = vadd.f32 %v8071, %v8111
    %8113 = vmatmul.f32.gmra.mxu0 %v6445
    %v8114 = vpop.f32.mrf.mxu0
    %v8115 = vadd.f32 %v8074, %v8114
    %8116 = vdwg.mxu0
    %8117 = vmatpush.msra.mxu0 0.0
    %8118 = vmatpush.msra.mxu0 0.0
    %8119 = vmatpush.msra.mxu0 0.0
    %8120 = vmatpush.msra.mxu0 0.0
    %8121 = vmatpush.msra.mxu0 0.0
    %8122 = vmatpush.msra.mxu0 0.0
    %8123 = vmatpush.msra.mxu0 0.0
    %8124 = vmatpush.msra.mxu0 0.0
    %8125 = vmatpush.msra.mxu0 0.0
    %8126 = vmatpush.msra.mxu0 0.0
    %8127 = vmatpush.msra.mxu0 0.0
    %8128 = vmatpush.msra.mxu0 0.0
    %8129 = vmatpush.msra.mxu0 0.0
    %8130 = vmatpush.msra.mxu0 %v7911
    %8131 = vmatpush.msra.mxu0 %v7909
    %8132 = vmatpush.msra.mxu0 %v7907
    %8133 = vmatmul.f32.gmra.mxu0 %v6787
    %v8134 = vpop.f32.mrf.mxu0
    %v8135 = vadd.f32 %v8094, %v8134
    %8136 = vmatmul.f32.gmra.mxu0 %v6790
    %v8137 = vpop.f32.mrf.mxu0
    %v8138 = vadd.f32 %v8097, %v8137
    %8139 = vmatmul.f32.gmra.mxu0 %v6793
    %v8140 = vpop.f32.mrf.mxu0
    %v8141 = vadd.f32 %v8100, %v8140
    %8142 = vmatmul.f32.gmra.mxu0 %v6796
    %v8143 = vpop.f32.mrf.mxu0
    %v8144 = vadd.f32 %v8103, %v8143
    %8145 = vmatmul.f32.gmra.mxu0 %v6799
    %v8146 = vpop.f32.mrf.mxu0
    %v8147 = vadd.f32 %v8106, %v8146
    %8148 = vmatmul.f32.gmra.mxu0 %v6802
    %v8149 = vpop.f32.mrf.mxu0
    %v8150 = vadd.f32 %v8109, %v8149
    %8151 = vmatmul.f32.gmra.mxu0 %v6805
    %v8152 = vpop.f32.mrf.mxu0
    %v8153 = vadd.f32 %v8112, %v8152
    %8154 = vmatmul.f32.gmra.mxu0 %v6808
    %v8155 = vpop.f32.mrf.mxu0
    %v8156 = vadd.f32 %v8115, %v8155
    %8157 = vdwg.mxu0
    %8158 = vmatpush.msra.mxu0 %v7801
    %8159 = vmatpush.msra.mxu0 %v7799
    %8160 = vmatpush.msra.mxu0 %v7797
    %8161 = vmatpush.msra.mxu0 %v7795
    %8162 = vmatpush.msra.mxu0 %v7793
    %8163 = vmatpush.msra.mxu0 %v7791
    %8164 = vmatpush.msra.mxu0 %v7789
    %8165 = vmatpush.msra.mxu0 %v7787
    %8166 = vmatpush.msra.mxu0 %v7785
    %8167 = vmatpush.msra.mxu0 %v7783
    %8168 = vmatpush.msra.mxu0 %v7781
    %8169 = vmatpush.msra.mxu0 %v7779
    %8170 = vmatpush.msra.mxu0 %v7777
    %8171 = vmatpush.msra.mxu0 %v7775
    %8172 = vmatpush.msra.mxu0 %v7773
    %8173 = vmatpush.msra.mxu0 %v7771
    %8174 = vmatmul.f32.gmra.mxu0 %v6227
    %v8175 = vpop.f32.mrf.mxu0
    %v8176 = vadd.f32 %v8012, %v8175
    %8177 = vmatmul.f32.gmra.mxu0 %v6230
    %v8178 = vpop.f32.mrf.mxu0
    %v8179 = vadd.f32 %v8015, %v8178
    %8180 = vmatmul.f32.gmra.mxu0 %v6233
    %v8181 = vpop.f32.mrf.mxu0
    %v8182 = vadd.f32 %v8018, %v8181
    %8183 = vmatmul.f32.gmra.mxu0 %v6236
    %v8184 = vpop.f32.mrf.mxu0
    %v8185 = vadd.f32 %v8021, %v8184
    %8186 = vmatmul.f32.gmra.mxu0 %v6239
    %v8187 = vpop.f32.mrf.mxu0
    %v8188 = vadd.f32 %v8024, %v8187
    %8189 = vmatmul.f32.gmra.mxu0 %v6242
    %v8190 = vpop.f32.mrf.mxu0
    %v8191 = vadd.f32 %v8027, %v8190
    %8192 = vmatmul.f32.gmra.mxu0 %v6245
    %v8193 = vpop.f32.mrf.mxu0
    %v8194 = vadd.f32 %v8030, %v8193
    %8195 = vmatmul.f32.gmra.mxu0 %v6248
    %v8196 = vpop.f32.mrf.mxu0
    %v8197 = vadd.f32 %v8033, %v8196
    %8198 = vdwg.mxu0
    %8199 = vmatpush.msra.mxu0 %v7833
    %8200 = vmatpush.msra.mxu0 %v7831
    %8201 = vmatpush.msra.mxu0 %v7829
    %8202 = vmatpush.msra.mxu0 %v7827
    %8203 = vmatpush.msra.mxu0 %v7825
    %8204 = vmatpush.msra.mxu0 %v7823
    %8205 = vmatpush.msra.mxu0 %v7821
    %8206 = vmatpush.msra.mxu0 %v7819
    %8207 = vmatpush.msra.mxu0 %v7817
    %8208 = vmatpush.msra.mxu0 %v7815
    %8209 = vmatpush.msra.mxu0 %v7813
    %8210 = vmatpush.msra.mxu0 %v7811
    %8211 = vmatpush.msra.mxu0 %v7809
    %8212 = vmatpush.msra.mxu0 %v7807
    %8213 = vmatpush.msra.mxu0 %v7805
    %8214 = vmatpush.msra.mxu0 %v7803
    %8215 = vmatmul.f32.gmra.mxu0 %v6268
    %v8216 = vpop.f32.mrf.mxu0
    %v8217 = vadd.f32 %v8176, %v8216
    %8218 = vmatmul.f32.gmra.mxu0 %v6271
    %v8219 = vpop.f32.mrf.mxu0
    %v8220 = vadd.f32 %v8179, %v8219
    %8221 = vmatmul.f32.gmra.mxu0 %v6274
    %v8222 = vpop.f32.mrf.mxu0
    %v8223 = vadd.f32 %v8182, %v8222
    %8224 = vmatmul.f32.gmra.mxu0 %v6277
    %v8225 = vpop.f32.mrf.mxu0
    %v8226 = vadd.f32 %v8185, %v8225
    %8227 = vmatmul.f32.gmra.mxu0 %v6280
    %v8228 = vpop.f32.mrf.mxu0
    %v8229 = vadd.f32 %v8188, %v8228
    %8230 = vmatmul.f32.gmra.mxu0 %v6283
    %v8231 = vpop.f32.mrf.mxu0
    %v8232 = vadd.f32 %v8191, %v8231
    %8233 = vmatmul.f32.gmra.mxu0 %v6286
    %v8234 = vpop.f32.mrf.mxu0
    %v8235 = vadd.f32 %v8194, %v8234
    %8236 = vmatmul.f32.gmra.mxu0 %v6289
    %v8237 = vpop.f32.mrf.mxu0
    %v8238 = vadd.f32 %v8197, %v8237
    %8239 = vdwg.mxu0
    %8240 = vmatpush.msra.mxu0 0.0
    %8241 = vmatpush.msra.mxu0 0.0
    %8242 = vmatpush.msra.mxu0 0.0
    %8243 = vmatpush.msra.mxu0 0.0
    %8244 = vmatpush.msra.mxu0 0.0
    %8245 = vmatpush.msra.mxu0 0.0
    %8246 = vmatpush.msra.mxu0 0.0
    %8247 = vmatpush.msra.mxu0 0.0
    %8248 = vmatpush.msra.mxu0 0.0
    %8249 = vmatpush.msra.mxu0 0.0
    %8250 = vmatpush.msra.mxu0 0.0
    %8251 = vmatpush.msra.mxu0 0.0
    %8252 = vmatpush.msra.mxu0 0.0
    %8253 = vmatpush.msra.mxu0 %v7839
    %8254 = vmatpush.msra.mxu0 %v7837
    %8255 = vmatpush.msra.mxu0 %v7835
    %8256 = vmatmul.f32.gmra.mxu0 %v7057
    %v8257 = vpop.f32.mrf.mxu0
    %v8258 = vadd.f32 %v8217, %v8257
    %8259 = vmatmul.f32.gmra.mxu0 %v7060
    %v8260 = vpop.f32.mrf.mxu0
    %v8261 = vadd.f32 %v8220, %v8260
    %8262 = vmatmul.f32.gmra.mxu0 %v7063
    %v8263 = vpop.f32.mrf.mxu0
    %v8264 = vadd.f32 %v8223, %v8263
    %8265 = vmatmul.f32.gmra.mxu0 %v7066
    %v8266 = vpop.f32.mrf.mxu0
    %v8267 = vadd.f32 %v8226, %v8266
    %8268 = vmatmul.f32.gmra.mxu0 %v7069
    %v8269 = vpop.f32.mrf.mxu0
    %v8270 = vadd.f32 %v8229, %v8269
    %8271 = vmatmul.f32.gmra.mxu0 %v7072
    %v8272 = vpop.f32.mrf.mxu0
    %v8273 = vadd.f32 %v8232, %v8272
    %8274 = vmatmul.f32.gmra.mxu0 %v7075
    %v8275 = vpop.f32.mrf.mxu0
    %v8276 = vadd.f32 %v8235, %v8275
    %8277 = vmatmul.f32.gmra.mxu0 %v7078
    %v8278 = vpop.f32.mrf.mxu0
    %v8279 = vadd.f32 %v8238, %v8278
    %8280 = vdwg.mxu0
    %8281 = vmatpush.msra.mxu0 %v7802
    %8282 = vmatpush.msra.mxu0 %v7800
    %8283 = vmatpush.msra.mxu0 %v7798
    %8284 = vmatpush.msra.mxu0 %v7796
    %8285 = vmatpush.msra.mxu0 %v7794
    %8286 = vmatpush.msra.mxu0 %v7792
    %8287 = vmatpush.msra.mxu0 %v7790
    %8288 = vmatpush.msra.mxu0 %v7788
    %8289 = vmatpush.msra.mxu0 %v7786
    %8290 = vmatpush.msra.mxu0 %v7784
    %8291 = vmatpush.msra.mxu0 %v7782
    %8292 = vmatpush.msra.mxu0 %v7780
    %8293 = vmatpush.msra.mxu0 %v7778
    %8294 = vmatpush.msra.mxu0 %v7776
    %8295 = vmatpush.msra.mxu0 %v7774
    %8296 = vmatpush.msra.mxu0 %v7772
    %8297 = vmatmul.f32.gmra.mxu0 %v6227
    %v8298 = vpop.f32.mrf.mxu0
    %v8299 = vadd.f32 %v8135, %v8298
    %8300 = vmatmul.f32.gmra.mxu0 %v6230
    %v8301 = vpop.f32.mrf.mxu0
    %v8302 = vadd.f32 %v8138, %v8301
    %8303 = vmatmul.f32.gmra.mxu0 %v6233
    %v8304 = vpop.f32.mrf.mxu0
    %v8305 = vadd.f32 %v8141, %v8304
    %8306 = vmatmul.f32.gmra.mxu0 %v6236
    %v8307 = vpop.f32.mrf.mxu0
    %v8308 = vadd.f32 %v8144, %v8307
    %8309 = vmatmul.f32.gmra.mxu0 %v6239
    %v8310 = vpop.f32.mrf.mxu0
    %v8311 = vadd.f32 %v8147, %v8310
    %8312 = vmatmul.f32.gmra.mxu0 %v6242
    %v8313 = vpop.f32.mrf.mxu0
    %v8314 = vadd.f32 %v8150, %v8313
    %8315 = vmatmul.f32.gmra.mxu0 %v6245
    %v8316 = vpop.f32.mrf.mxu0
    %v8317 = vadd.f32 %v8153, %v8316
    %8318 = vmatmul.f32.gmra.mxu0 %v6248
    %v8319 = vpop.f32.mrf.mxu0
    %v8320 = vadd.f32 %v8156, %v8319
    %8321 = vdwg.mxu0
    %8322 = vmatpush.msra.mxu0 %v7834
    %8323 = vmatpush.msra.mxu0 %v7832
    %8324 = vmatpush.msra.mxu0 %v7830
    %8325 = vmatpush.msra.mxu0 %v7828
    %8326 = vmatpush.msra.mxu0 %v7826
    %8327 = vmatpush.msra.mxu0 %v7824
    %8328 = vmatpush.msra.mxu0 %v7822
    %8329 = vmatpush.msra.mxu0 %v7820
    %8330 = vmatpush.msra.mxu0 %v7818
    %8331 = vmatpush.msra.mxu0 %v7816
    %8332 = vmatpush.msra.mxu0 %v7814
    %8333 = vmatpush.msra.mxu0 %v7812
    %8334 = vmatpush.msra.mxu0 %v7810
    %8335 = vmatpush.msra.mxu0 %v7808
    %8336 = vmatpush.msra.mxu0 %v7806
    %8337 = vmatpush.msra.mxu0 %v7804
    %8338 = vmatmul.f32.gmra.mxu0 %v6268
    %v8339 = vpop.f32.mrf.mxu0
    %v8340 = vadd.f32 %v8299, %v8339
    %8341 = vmatmul.f32.gmra.mxu0 %v6271
    %v8342 = vpop.f32.mrf.mxu0
    %v8343 = vadd.f32 %v8302, %v8342
    %8344 = vmatmul.f32.gmra.mxu0 %v6274
    %v8345 = vpop.f32.mrf.mxu0
    %v8346 = vadd.f32 %v8305, %v8345
    %8347 = vmatmul.f32.gmra.mxu0 %v6277
    %v8348 = vpop.f32.mrf.mxu0
    %v8349 = vadd.f32 %v8308, %v8348
    %8350 = vmatmul.f32.gmra.mxu0 %v6280
    %v8351 = vpop.f32.mrf.mxu0
    %v8352 = vadd.f32 %v8311, %v8351
    %8353 = vmatmul.f32.gmra.mxu0 %v6283
    %v8354 = vpop.f32.mrf.mxu0
    %v8355 = vadd.f32 %v8314, %v8354
    %8356 = vmatmul.f32.gmra.mxu0 %v6286
    %v8357 = vpop.f32.mrf.mxu0
    %v8358 = vadd.f32 %v8317, %v8357
    %8359 = vmatmul.f32.gmra.mxu0 %v6289
    %v8360 = vpop.f32.mrf.mxu0
    %v8361 = vadd.f32 %v8320, %v8360
    %8362 = vdwg.mxu0
    %8363 = vmatpush.msra.mxu0 0.0
    %8364 = vmatpush.msra.mxu0 0.0
    %8365 = vmatpush.msra.mxu0 0.0
    %8366 = vmatpush.msra.mxu0 0.0
    %8367 = vmatpush.msra.mxu0 0.0
    %8368 = vmatpush.msra.mxu0 0.0
    %8369 = vmatpush.msra.mxu0 0.0
    %8370 = vmatpush.msra.mxu0 0.0
    %8371 = vmatpush.msra.mxu0 0.0
    %8372 = vmatpush.msra.mxu0 0.0
    %8373 = vmatpush.msra.mxu0 0.0
    %8374 = vmatpush.msra.mxu0 0.0
    %8375 = vmatpush.msra.mxu0 0.0
    %8376 = vmatpush.msra.mxu0 %v7840
    %8377 = vmatpush.msra.mxu0 %v7838
    %8378 = vmatpush.msra.mxu0 %v7836
    %8379 = vmatmul.f32.gmra.mxu0 %v7057
    %v8380 = vpop.f32.mrf.mxu0
    %v8381 = vadd.f32 %v8340, %v8380
    %8382 = vmatmul.f32.gmra.mxu0 %v7060
    %v8383 = vpop.f32.mrf.mxu0
    %v8384 = vadd.f32 %v8343, %v8383
    %8385 = vmatmul.f32.gmra.mxu0 %v7063
    %v8386 = vpop.f32.mrf.mxu0
    %v8387 = vadd.f32 %v8346, %v8386
    %8388 = vmatmul.f32.gmra.mxu0 %v7066
    %v8389 = vpop.f32.mrf.mxu0
    %v8390 = vadd.f32 %v8349, %v8389
    %8391 = vmatmul.f32.gmra.mxu0 %v7069
    %v8392 = vpop.f32.mrf.mxu0
    %v8393 = vadd.f32 %v8352, %v8392
    %8394 = vmatmul.f32.gmra.mxu0 %v7072
    %v8395 = vpop.f32.mrf.mxu0
    %v8396 = vadd.f32 %v8355, %v8395
    %8397 = vmatmul.f32.gmra.mxu0 %v7075
    %v8398 = vpop.f32.mrf.mxu0
    %v8399 = vadd.f32 %v8358, %v8398
    %8400 = vmatmul.f32.gmra.mxu0 %v7078
    %v8401 = vpop.f32.mrf.mxu0
    %v8402 = vadd.f32 %v8361, %v8401
    %8403 = vdwg.mxu0
    %s8404 = scalar_lea.vmem [#allocation10], 3920
    %v8405 = vld [vmem:[%s8404] sm:$0xff]
    %v8406 = vld [vmem:[%s8404 + $0x8] sm:$0xff]
    %v8407 = vld [vmem:[%s8404 + $0x10] sm:$0xff]
    %v8408 = vld [vmem:[%s8404 + $0x18] sm:$0xff]
    %v8409 = vld [vmem:[%s8404 + $0x20] sm:$0xff]
    %v8410 = vld [vmem:[%s8404 + $0x28] sm:$0xff]
    %v8411 = vld [vmem:[%s8404 + $0x30] sm:$0xff]
    %v8412 = vld [vmem:[%s8404 + $0x38] sm:$0xff]
    %v8413 = vld [vmem:[%s8404 + $0x40] sm:$0xff]
    %v8414 = vld [vmem:[%s8404 + $0x48] sm:$0xff]
    %v8415 = vld [vmem:[%s8404 + $0x50] sm:$0xff]
    %v8416 = vld [vmem:[%s8404 + $0x58] sm:$0xff]
    %v8417 = vld [vmem:[%s8404 + $0x60] sm:$0xff]
    %v8418 = vld [vmem:[%s8404 + $0x68] sm:$0xff]
    %v8419 = vld [vmem:[%s8404 + $0x70] sm:$0xff]
    %v8420 = vld [vmem:[%s8404 + $0x78] sm:$0xff]
    %v8421 = vld [vmem:[%s8404 + $0x80] sm:$0xff]
    %v8422 = vld [vmem:[%s8404 + $0x88] sm:$0xff]
    %v8423 = vld [vmem:[%s8404 + $0x90] sm:$0xff]
    %v8424 = vld [vmem:[%s8404 + $0x98] sm:$0xff]
    %v8425 = vld [vmem:[%s8404 + $0xa0] sm:$0xff]
    %v8426 = vld [vmem:[%s8404 + $0xa8] sm:$0xff]
    %v8427 = vld [vmem:[%s8404 + $0xb0] sm:$0xff]
    %v8428 = vld [vmem:[%s8404 + $0xb8] sm:$0xff]
    %v8429 = vld [vmem:[%s8404 + $0xc0] sm:$0xff]
    %v8430 = vld [vmem:[%s8404 + $0xc8] sm:$0xff]
    %v8431 = vld [vmem:[%s8404 + $0xd0] sm:$0xff]
    %v8432 = vld [vmem:[%s8404 + $0xd8] sm:$0xff]
    %v8433 = vld [vmem:[%s8404 + $0xe0] sm:$0xff]
    %v8434 = vld [vmem:[%s8404 + $0xe8] sm:$0xff]
    %v8435 = vld [vmem:[%s8404 + $0xf0] sm:$0xff]
    %v8436 = vld [vmem:[%s8404 + $0xf8] sm:$0xff]
    %v8437 = vld [vmem:[%s8404 + $0x100] sm:$0xff]
    %v8438 = vld [vmem:[%s8404 + $0x108] sm:$0xff]
    %v8439 = vld [vmem:[%s8404 + $0x110] sm:$0xff]
    %v8440 = vld [vmem:[%s8404 + $0x118] sm:$0xff]
    %v8441 = vld [vmem:[%s8404 + $0x120] sm:$0xff]
    %v8442 = vld [vmem:[%s8404 + $0x128] sm:$0xff]
    %v8443 = vld [vmem:[%s8404 + $0x130] sm:$0xff]
    %v8444 = vld [vmem:[%s8404 + $0x138] sm:$0xff]
    %v8445 = vld [vmem:[%s8404 + $0x140] sm:$0xff]
    %v8446 = vld [vmem:[%s8404 + $0x148] sm:$0xff]
    %v8447 = vld [vmem:[%s8404 + $0x150] sm:$0xff]
    %v8448 = vld [vmem:[%s8404 + $0x158] sm:$0xff]
    %v8449 = vld [vmem:[%s8404 + $0x160] sm:$0xff]
    %v8450 = vld [vmem:[%s8404 + $0x168] sm:$0xff]
    %v8451 = vld [vmem:[%s8404 + $0x170] sm:$0xff]
    %v8452 = vld [vmem:[%s8404 + $0x178] sm:$0xff]
    %v8453 = vld [vmem:[%s8404 + $0x180] sm:$0xff]
    %v8454 = vld [vmem:[%s8404 + $0x188] sm:$0xff]
    %v8455 = vld [vmem:[%s8404 + $0x190] sm:$0xff]
    %v8456 = vld [vmem:[%s8404 + $0x198] sm:$0xff]
    %v8457 = vld [vmem:[%s8404 + $0x1a0] sm:$0xff]
    %v8458 = vld [vmem:[%s8404 + $0x1a8] sm:$0xff]
    %v8459 = vld [vmem:[%s8404 + $0x1b0] sm:$0xff]
    %v8460 = vld [vmem:[%s8404 + $0x1b8] sm:$0xff]
    %v8461 = vld [vmem:[%s8404 + $0x1c0] sm:$0xff]
    %v8462 = vld [vmem:[%s8404 + $0x1c8] sm:$0xff]
    %v8463 = vld [vmem:[%s8404 + $0x1d0] sm:$0xff]
    %v8464 = vld [vmem:[%s8404 + $0x1d8] sm:$0xff]
    %v8465 = vld [vmem:[%s8404 + $0x1e0] sm:$0xff]
    %v8466 = vld [vmem:[%s8404 + $0x1e8] sm:$0xff]
    %v8467 = vld [vmem:[%s8404 + $0x1f0] sm:$0xff]
    %v8468 = vld [vmem:[%s8404 + $0x1f8] sm:$0xff]
    %v8469 = vld [vmem:[%s8404 + $0x200] sm:$0xff]
    %v8470 = vld [vmem:[%s8404 + $0x208] sm:$0xff]
    %v8471 = vld [vmem:[%s8404 + $0x210] sm:$0xff]
    %v8472 = vld [vmem:[%s8404 + $0x218] sm:$0xff]
    %v8473 = vld [vmem:[%s8404 + $0x220] sm:$0xff]
    %v8474 = vld [vmem:[%s8404 + $0x228] sm:$0xff]
    %8475 = vmatpush.msra.mxu0 %v8435
    %8476 = vmatpush.msra.mxu0 %v8433
    %8477 = vmatpush.msra.mxu0 %v8431
    %8478 = vmatpush.msra.mxu0 %v8429
    %8479 = vmatpush.msra.mxu0 %v8427
    %8480 = vmatpush.msra.mxu0 %v8425
    %8481 = vmatpush.msra.mxu0 %v8423
    %8482 = vmatpush.msra.mxu0 %v8421
    %8483 = vmatpush.msra.mxu0 %v8419
    %8484 = vmatpush.msra.mxu0 %v8417
    %8485 = vmatpush.msra.mxu0 %v8415
    %8486 = vmatpush.msra.mxu0 %v8413
    %8487 = vmatpush.msra.mxu0 %v8411
    %8488 = vmatpush.msra.mxu0 %v8409
    %8489 = vmatpush.msra.mxu0 %v8407
    %8490 = vmatpush.msra.mxu0 %v8405
    %8491 = vmatmul.f32.gmra.mxu0 %v6539
    %v8492 = vpop.f32.mrf.mxu0
    %v8493 = vadd.f32 0.0, %v8492
    %8494 = vmatmul.f32.gmra.mxu0 %v6542
    %v8495 = vpop.f32.mrf.mxu0
    %v8496 = vadd.f32 0.0, %v8495
    %8497 = vmatmul.f32.gmra.mxu0 %v6545
    %v8498 = vpop.f32.mrf.mxu0
    %v8499 = vadd.f32 0.0, %v8498
    %8500 = vmatmul.f32.gmra.mxu0 %v6548
    %v8501 = vpop.f32.mrf.mxu0
    %v8502 = vadd.f32 0.0, %v8501
    %8503 = vmatmul.f32.gmra.mxu0 %v6551
    %v8504 = vpop.f32.mrf.mxu0
    %v8505 = vadd.f32 0.0, %v8504
    %8506 = vmatmul.f32.gmra.mxu0 %v6554
    %v8507 = vpop.f32.mrf.mxu0
    %v8508 = vadd.f32 0.0, %v8507
    %8509 = vmatmul.f32.gmra.mxu0 %v6557
    %v8510 = vpop.f32.mrf.mxu0
    %v8511 = vadd.f32 0.0, %v8510
    %8512 = vmatmul.f32.gmra.mxu0 %v6560
    %v8513 = vpop.f32.mrf.mxu0
    %v8514 = vadd.f32 0.0, %v8513
    %8515 = vdwg.mxu0
    %8516 = vmatpush.msra.mxu0 %v8467
    %8517 = vmatpush.msra.mxu0 %v8465
    %8518 = vmatpush.msra.mxu0 %v8463
    %8519 = vmatpush.msra.mxu0 %v8461
    %8520 = vmatpush.msra.mxu0 %v8459
    %8521 = vmatpush.msra.mxu0 %v8457
    %8522 = vmatpush.msra.mxu0 %v8455
    %8523 = vmatpush.msra.mxu0 %v8453
    %8524 = vmatpush.msra.mxu0 %v8451
    %8525 = vmatpush.msra.mxu0 %v8449
    %8526 = vmatpush.msra.mxu0 %v8447
    %8527 = vmatpush.msra.mxu0 %v8445
    %8528 = vmatpush.msra.mxu0 %v8443
    %8529 = vmatpush.msra.mxu0 %v8441
    %8530 = vmatpush.msra.mxu0 %v8439
    %8531 = vmatpush.msra.mxu0 %v8437
    %8532 = vmatmul.f32.gmra.mxu0 %v6580
    %v8533 = vpop.f32.mrf.mxu0
    %v8534 = vadd.f32 %v8493, %v8533
    %8535 = vmatmul.f32.gmra.mxu0 %v6583
    %v8536 = vpop.f32.mrf.mxu0
    %v8537 = vadd.f32 %v8496, %v8536
    %8538 = vmatmul.f32.gmra.mxu0 %v6586
    %v8539 = vpop.f32.mrf.mxu0
    %v8540 = vadd.f32 %v8499, %v8539
    %8541 = vmatmul.f32.gmra.mxu0 %v6589
    %v8542 = vpop.f32.mrf.mxu0
    %v8543 = vadd.f32 %v8502, %v8542
    %8544 = vmatmul.f32.gmra.mxu0 %v6592
    %v8545 = vpop.f32.mrf.mxu0
    %v8546 = vadd.f32 %v8505, %v8545
    %8547 = vmatmul.f32.gmra.mxu0 %v6595
    %v8548 = vpop.f32.mrf.mxu0
    %v8549 = vadd.f32 %v8508, %v8548
    %8550 = vmatmul.f32.gmra.mxu0 %v6598
    %v8551 = vpop.f32.mrf.mxu0
    %v8552 = vadd.f32 %v8511, %v8551
    %8553 = vmatmul.f32.gmra.mxu0 %v6601
    %v8554 = vpop.f32.mrf.mxu0
    %v8555 = vadd.f32 %v8514, %v8554
    %8556 = vdwg.mxu0
    %8557 = vmatpush.msra.mxu0 0.0
    %8558 = vmatpush.msra.mxu0 0.0
    %8559 = vmatpush.msra.mxu0 0.0
    %8560 = vmatpush.msra.mxu0 0.0
    %8561 = vmatpush.msra.mxu0 0.0
    %8562 = vmatpush.msra.mxu0 0.0
    %8563 = vmatpush.msra.mxu0 0.0
    %8564 = vmatpush.msra.mxu0 0.0
    %8565 = vmatpush.msra.mxu0 0.0
    %8566 = vmatpush.msra.mxu0 0.0
    %8567 = vmatpush.msra.mxu0 0.0
    %8568 = vmatpush.msra.mxu0 0.0
    %8569 = vmatpush.msra.mxu0 0.0
    %8570 = vmatpush.msra.mxu0 %v8473
    %8571 = vmatpush.msra.mxu0 %v8471
    %8572 = vmatpush.msra.mxu0 %v8469
    %8573 = vmatmul.f32.gmra.mxu0 %v7398
    %v8574 = vpop.f32.mrf.mxu0
    %v8575 = vadd.f32 %v8534, %v8574
    %8576 = vmatmul.f32.gmra.mxu0 %v7401
    %v8577 = vpop.f32.mrf.mxu0
    %v8578 = vadd.f32 %v8537, %v8577
    %8579 = vmatmul.f32.gmra.mxu0 %v7404
    %v8580 = vpop.f32.mrf.mxu0
    %v8581 = vadd.f32 %v8540, %v8580
    %8582 = vmatmul.f32.gmra.mxu0 %v7407
    %v8583 = vpop.f32.mrf.mxu0
    %v8584 = vadd.f32 %v8543, %v8583
    %8585 = vmatmul.f32.gmra.mxu0 %v7410
    %v8586 = vpop.f32.mrf.mxu0
    %v8587 = vadd.f32 %v8546, %v8586
    %8588 = vmatmul.f32.gmra.mxu0 %v7413
    %v8589 = vpop.f32.mrf.mxu0
    %v8590 = vadd.f32 %v8549, %v8589
    %8591 = vmatmul.f32.gmra.mxu0 %v7416
    %v8592 = vpop.f32.mrf.mxu0
    %v8593 = vadd.f32 %v8552, %v8592
    %8594 = vmatmul.f32.gmra.mxu0 %v7419
    %v8595 = vpop.f32.mrf.mxu0
    %v8596 = vadd.f32 %v8555, %v8595
    %8597 = vdwg.mxu0
    %8598 = vmatpush.msra.mxu0 %v8436
    %8599 = vmatpush.msra.mxu0 %v8434
    %8600 = vmatpush.msra.mxu0 %v8432
    %8601 = vmatpush.msra.mxu0 %v8430
    %8602 = vmatpush.msra.mxu0 %v8428
    %8603 = vmatpush.msra.mxu0 %v8426
    %8604 = vmatpush.msra.mxu0 %v8424
    %8605 = vmatpush.msra.mxu0 %v8422
    %8606 = vmatpush.msra.mxu0 %v8420
    %8607 = vmatpush.msra.mxu0 %v8418
    %8608 = vmatpush.msra.mxu0 %v8416
    %8609 = vmatpush.msra.mxu0 %v8414
    %8610 = vmatpush.msra.mxu0 %v8412
    %8611 = vmatpush.msra.mxu0 %v8410
    %8612 = vmatpush.msra.mxu0 %v8408
    %8613 = vmatpush.msra.mxu0 %v8406
    %8614 = vmatmul.f32.gmra.mxu0 %v6539
    %v8615 = vpop.f32.mrf.mxu0
    %v8616 = vadd.f32 0.0, %v8615
    %8617 = vmatmul.f32.gmra.mxu0 %v6542
    %v8618 = vpop.f32.mrf.mxu0
    %v8619 = vadd.f32 0.0, %v8618
    %8620 = vmatmul.f32.gmra.mxu0 %v6545
    %v8621 = vpop.f32.mrf.mxu0
    %v8622 = vadd.f32 0.0, %v8621
    %8623 = vmatmul.f32.gmra.mxu0 %v6548
    %v8624 = vpop.f32.mrf.mxu0
    %v8625 = vadd.f32 0.0, %v8624
    %8626 = vmatmul.f32.gmra.mxu0 %v6551
    %v8627 = vpop.f32.mrf.mxu0
    %v8628 = vadd.f32 0.0, %v8627
    %8629 = vmatmul.f32.gmra.mxu0 %v6554
    %v8630 = vpop.f32.mrf.mxu0
    %v8631 = vadd.f32 0.0, %v8630
    %8632 = vmatmul.f32.gmra.mxu0 %v6557
    %v8633 = vpop.f32.mrf.mxu0
    %v8634 = vadd.f32 0.0, %v8633
    %8635 = vmatmul.f32.gmra.mxu0 %v6560
    %v8636 = vpop.f32.mrf.mxu0
    %v8637 = vadd.f32 0.0, %v8636
    %8638 = vdwg.mxu0
    %8639 = vmatpush.msra.mxu0 %v8468
    %8640 = vmatpush.msra.mxu0 %v8466
    %8641 = vmatpush.msra.mxu0 %v8464
    %8642 = vmatpush.msra.mxu0 %v8462
    %8643 = vmatpush.msra.mxu0 %v8460
    %8644 = vmatpush.msra.mxu0 %v8458
    %8645 = vmatpush.msra.mxu0 %v8456
    %8646 = vmatpush.msra.mxu0 %v8454
    %8647 = vmatpush.msra.mxu0 %v8452
    %8648 = vmatpush.msra.mxu0 %v8450
    %8649 = vmatpush.msra.mxu0 %v8448
    %8650 = vmatpush.msra.mxu0 %v8446
    %8651 = vmatpush.msra.mxu0 %v8444
    %8652 = vmatpush.msra.mxu0 %v8442
    %8653 = vmatpush.msra.mxu0 %v8440
    %8654 = vmatpush.msra.mxu0 %v8438
    %8655 = vmatmul.f32.gmra.mxu0 %v6580
    %v8656 = vpop.f32.mrf.mxu0
    %v8657 = vadd.f32 %v8616, %v8656
    %8658 = vmatmul.f32.gmra.mxu0 %v6583
    %v8659 = vpop.f32.mrf.mxu0
    %v8660 = vadd.f32 %v8619, %v8659
    %8661 = vmatmul.f32.gmra.mxu0 %v6586
    %v8662 = vpop.f32.mrf.mxu0
    %v8663 = vadd.f32 %v8622, %v8662
    %8664 = vmatmul.f32.gmra.mxu0 %v6589
    %v8665 = vpop.f32.mrf.mxu0
    %v8666 = vadd.f32 %v8625, %v8665
    %8667 = vmatmul.f32.gmra.mxu0 %v6592
    %v8668 = vpop.f32.mrf.mxu0
    %v8669 = vadd.f32 %v8628, %v8668
    %8670 = vmatmul.f32.gmra.mxu0 %v6595
    %v8671 = vpop.f32.mrf.mxu0
    %v8672 = vadd.f32 %v8631, %v8671
    %8673 = vmatmul.f32.gmra.mxu0 %v6598
    %v8674 = vpop.f32.mrf.mxu0
    %v8675 = vadd.f32 %v8634, %v8674
    %8676 = vmatmul.f32.gmra.mxu0 %v6601
    %v8677 = vpop.f32.mrf.mxu0
    %v8678 = vadd.f32 %v8637, %v8677
    %8679 = vdwg.mxu0
    %8680 = vmatpush.msra.mxu0 0.0
    %8681 = vmatpush.msra.mxu0 0.0
    %8682 = vmatpush.msra.mxu0 0.0
    %8683 = vmatpush.msra.mxu0 0.0
    %8684 = vmatpush.msra.mxu0 0.0
    %8685 = vmatpush.msra.mxu0 0.0
    %8686 = vmatpush.msra.mxu0 0.0
    %8687 = vmatpush.msra.mxu0 0.0
    %8688 = vmatpush.msra.mxu0 0.0
    %8689 = vmatpush.msra.mxu0 0.0
    %8690 = vmatpush.msra.mxu0 0.0
    %8691 = vmatpush.msra.mxu0 0.0
    %8692 = vmatpush.msra.mxu0 0.0
    %8693 = vmatpush.msra.mxu0 %v8474
    %8694 = vmatpush.msra.mxu0 %v8472
    %8695 = vmatpush.msra.mxu0 %v8470
    %8696 = vmatmul.f32.gmra.mxu0 %v7398
    %v8697 = vpop.f32.mrf.mxu0
    %v8698 = vadd.f32 %v8657, %v8697
    %8699 = vmatmul.f32.gmra.mxu0 %v7401
    %v8700 = vpop.f32.mrf.mxu0
    %v8701 = vadd.f32 %v8660, %v8700
    %8702 = vmatmul.f32.gmra.mxu0 %v7404
    %v8703 = vpop.f32.mrf.mxu0
    %v8704 = vadd.f32 %v8663, %v8703
    %8705 = vmatmul.f32.gmra.mxu0 %v7407
    %v8706 = vpop.f32.mrf.mxu0
    %v8707 = vadd.f32 %v8666, %v8706
    %8708 = vmatmul.f32.gmra.mxu0 %v7410
    %v8709 = vpop.f32.mrf.mxu0
    %v8710 = vadd.f32 %v8669, %v8709
    %8711 = vmatmul.f32.gmra.mxu0 %v7413
    %v8712 = vpop.f32.mrf.mxu0
    %v8713 = vadd.f32 %v8672, %v8712
    %8714 = vmatmul.f32.gmra.mxu0 %v7416
    %v8715 = vpop.f32.mrf.mxu0
    %v8716 = vadd.f32 %v8675, %v8715
    %8717 = vmatmul.f32.gmra.mxu0 %v7419
    %v8718 = vpop.f32.mrf.mxu0
    %v8719 = vadd.f32 %v8678, %v8718
    %8720 = vdwg.mxu0
    %v8721 = vadd.f32 %v8258, %v8575
    %v8722 = vadd.f32 %v8381, %v8698
    %v8723 = vadd.f32 %v8261, %v8578
    %v8724 = vadd.f32 %v8384, %v8701
    %v8725 = vadd.f32 %v8264, %v8581
    %v8726 = vadd.f32 %v8387, %v8704
    %v8727 = vadd.f32 %v8267, %v8584
    %v8728 = vadd.f32 %v8390, %v8707
    %v8729 = vadd.f32 %v8270, %v8587
    %v8730 = vadd.f32 %v8393, %v8710
    %v8731 = vadd.f32 %v8273, %v8590
    %v8732 = vadd.f32 %v8396, %v8713
    %v8733 = vadd.f32 %v8276, %v8593
    %v8734 = vadd.f32 %v8399, %v8716
    %v8735 = vadd.f32 %v8279, %v8596
    %v8736 = vadd.f32 %v8402, %v8719
    %v8737 = vadd.f32 %v8721, %v7685
    %v8738 = vadd.f32 %v8722, %v7686
    %v8739 = vadd.f32 %v8723, %v7685
    %v8740 = vadd.f32 %v8724, %v7686
    %v8741 = vadd.f32 %v8725, %v7685
    %v8742 = vadd.f32 %v8726, %v7686
    %v8743 = vadd.f32 %v8727, %v7685
    %v8744 = vadd.f32 %v8728, %v7686
    %v8745 = vadd.f32 %v8729, %v7685
    %v8746 = vadd.f32 %v8730, %v7686
    %v8747 = vadd.f32 %v8731, %v7685
    %v8748 = vadd.f32 %v8732, %v7686
    %v8749 = vadd.f32 %v8733, %v7685
    %v8750 = vadd.f32 %v8734, %v7686
    %v8751 = vadd.f32 %v8735, %v7685
    %v8752 = vadd.f32 %v8736, %v7686
    %v8753 = vmax.f32 %v8737, 0.0
    %v8754 = vmax.f32 %v8738, 0.0
    %v8755 = vmax.f32 %v8739, 0.0
    %v8756 = vmax.f32 %v8740, 0.0
    %v8757 = vmax.f32 %v8741, 0.0
    %v8758 = vmax.f32 %v8742, 0.0
    %v8759 = vmax.f32 %v8743, 0.0
    %v8760 = vmax.f32 %v8744, 0.0
    %v8761 = vmax.f32 %v8745, 0.0
    %v8762 = vmax.f32 %v8746, 0.0
    %v8763 = vmax.f32 %v8747, 0.0
    %v8764 = vmax.f32 %v8748, 0.0
    %v8765 = vmax.f32 %v8749, 0.0
    %v8766 = vmax.f32 %v8750, 0.0
    %v8767 = vmax.f32 %v8751, 0.0
    %v8768 = vmax.f32 %v8752, 0.0
    %v8769 = vmin.f32 %v8737, 0.0
    %v8770 = vmin.f32 %v8738, 0.0
    %v8771 = vmin.f32 %v8739, 0.0
    %v8772 = vmin.f32 %v8740, 0.0
    %v8773 = vmin.f32 %v8741, 0.0
    %v8774 = vmin.f32 %v8742, 0.0
    %v8775 = vmin.f32 %v8743, 0.0
    %v8776 = vmin.f32 %v8744, 0.0
    %v8777 = vmin.f32 %v8745, 0.0
    %v8778 = vmin.f32 %v8746, 0.0
    %v8779 = vmin.f32 %v8747, 0.0
    %v8780 = vmin.f32 %v8748, 0.0
    %v8781 = vmin.f32 %v8749, 0.0
    %v8782 = vmin.f32 %v8750, 0.0
    %v8783 = vmin.f32 %v8751, 0.0
    %v8784 = vmin.f32 %v8752, 0.0
    %v8785 = vmul.f32 %v7737, %v8769
    %v8786 = vmul.f32 %v7737, %v8770
    %v8787 = vmul.f32 %v7737, %v8771
    %v8788 = vmul.f32 %v7737, %v8772
    %v8789 = vmul.f32 %v7737, %v8773
    %v8790 = vmul.f32 %v7737, %v8774
    %v8791 = vmul.f32 %v7737, %v8775
    %v8792 = vmul.f32 %v7737, %v8776
    %v8793 = vmul.f32 %v7737, %v8777
    %v8794 = vmul.f32 %v7737, %v8778
    %v8795 = vmul.f32 %v7737, %v8779
    %v8796 = vmul.f32 %v7737, %v8780
    %v8797 = vmul.f32 %v7737, %v8781
    %v8798 = vmul.f32 %v7737, %v8782
    %v8799 = vmul.f32 %v7737, %v8783
    %v8800 = vmul.f32 %v7737, %v8784
    %v8801 = vadd.f32 %v8753, %v8785
    %v8802 = vadd.f32 %v8754, %v8786
    %v8803 = vadd.f32 %v8755, %v8787
    %v8804 = vadd.f32 %v8756, %v8788
    %v8805 = vadd.f32 %v8757, %v8789
    %v8806 = vadd.f32 %v8758, %v8790
    %v8807 = vadd.f32 %v8759, %v8791
    %v8808 = vadd.f32 %v8760, %v8792
    %v8809 = vadd.f32 %v8761, %v8793
    %v8810 = vadd.f32 %v8762, %v8794
    %v8811 = vadd.f32 %v8763, %v8795
    %v8812 = vadd.f32 %v8764, %v8796
    %v8813 = vadd.f32 %v8765, %v8797
    %v8814 = vadd.f32 %v8766, %v8798
    %v8815 = vadd.f32 %v8767, %v8799
    %v8816 = vadd.f32 %v8768, %v8800
    %s8817 = scalar_lea.vmem [#allocation10], 1120
    %v8818 = vld [vmem:[%s8817] sm:$0xff]
    %v8819 = vld [vmem:[%s8817 + $0x8] sm:$0xff]
    %v8820 = vld [vmem:[%s8817 + $0x10] sm:$0xff]
    %v8821 = vld [vmem:[%s8817 + $0x18] sm:$0xff]
    %v8822 = vld [vmem:[%s8817 + $0x20] sm:$0xff]
    %v8823 = vld [vmem:[%s8817 + $0x28] sm:$0xff]
    %v8824 = vld [vmem:[%s8817 + $0x30] sm:$0xff]
    %v8825 = vld [vmem:[%s8817 + $0x38] sm:$0xff]
    %v8826 = vld [vmem:[%s8817 + $0x40] sm:$0xff]
    %v8827 = vld [vmem:[%s8817 + $0x48] sm:$0xff]
    %v8828 = vld [vmem:[%s8817 + $0x50] sm:$0xff]
    %v8829 = vld [vmem:[%s8817 + $0x58] sm:$0xff]
    %v8830 = vld [vmem:[%s8817 + $0x60] sm:$0xff]
    %v8831 = vld [vmem:[%s8817 + $0x68] sm:$0xff]
    %v8832 = vld [vmem:[%s8817 + $0x70] sm:$0xff]
    %v8833 = vld [vmem:[%s8817 + $0x78] sm:$0xff]
    %v8834 = vld [vmem:[%s8817 + $0x80] sm:$0xff]
    %v8835 = vld [vmem:[%s8817 + $0x88] sm:$0xff]
    %v8836 = vld [vmem:[%s8817 + $0x90] sm:$0xff]
    %v8837 = vld [vmem:[%s8817 + $0x98] sm:$0xff]
    %v8838 = vld [vmem:[%s8817 + $0xa0] sm:$0xff]
    %v8839 = vld [vmem:[%s8817 + $0xa8] sm:$0xff]
    %v8840 = vld [vmem:[%s8817 + $0xb0] sm:$0xff]
    %v8841 = vld [vmem:[%s8817 + $0xb8] sm:$0xff]
    %v8842 = vld [vmem:[%s8817 + $0xc0] sm:$0xff]
    %v8843 = vld [vmem:[%s8817 + $0xc8] sm:$0xff]
    %v8844 = vld [vmem:[%s8817 + $0xd0] sm:$0xff]
    %v8845 = vld [vmem:[%s8817 + $0xd8] sm:$0xff]
    %v8846 = vld [vmem:[%s8817 + $0xe0] sm:$0xff]
    %v8847 = vld [vmem:[%s8817 + $0xe8] sm:$0xff]
    %v8848 = vld [vmem:[%s8817 + $0xf0] sm:$0xff]
    %v8849 = vld [vmem:[%s8817 + $0xf8] sm:$0xff]
    %v8850 = vld [vmem:[%s8817 + $0x100] sm:$0xff]
    %v8851 = vld [vmem:[%s8817 + $0x108] sm:$0xff]
    %v8852 = vld [vmem:[%s8817 + $0x110] sm:$0xff]
    %v8853 = vld [vmem:[%s8817 + $0x118] sm:$0xff]
    %v8854 = vld [vmem:[%s8817 + $0x120] sm:$0xff]
    %v8855 = vld [vmem:[%s8817 + $0x128] sm:$0xff]
    %v8856 = vld [vmem:[%s8817 + $0x130] sm:$0xff]
    %v8857 = vld [vmem:[%s8817 + $0x138] sm:$0xff]
    %v8858 = vld [vmem:[%s8817 + $0x140] sm:$0xff]
    %v8859 = vld [vmem:[%s8817 + $0x148] sm:$0xff]
    %v8860 = vld [vmem:[%s8817 + $0x150] sm:$0xff]
    %v8861 = vld [vmem:[%s8817 + $0x158] sm:$0xff]
    %v8862 = vld [vmem:[%s8817 + $0x160] sm:$0xff]
    %v8863 = vld [vmem:[%s8817 + $0x168] sm:$0xff]
    %v8864 = vld [vmem:[%s8817 + $0x170] sm:$0xff]
    %v8865 = vld [vmem:[%s8817 + $0x178] sm:$0xff]
    %v8866 = vld [vmem:[%s8817 + $0x180] sm:$0xff]
    %v8867 = vld [vmem:[%s8817 + $0x188] sm:$0xff]
    %v8868 = vld [vmem:[%s8817 + $0x190] sm:$0xff]
    %v8869 = vld [vmem:[%s8817 + $0x198] sm:$0xff]
    %v8870 = vld [vmem:[%s8817 + $0x1a0] sm:$0xff]
    %v8871 = vld [vmem:[%s8817 + $0x1a8] sm:$0xff]
    %v8872 = vld [vmem:[%s8817 + $0x1b0] sm:$0xff]
    %v8873 = vld [vmem:[%s8817 + $0x1b8] sm:$0xff]
    %v8874 = vld [vmem:[%s8817 + $0x1c0] sm:$0xff]
    %v8875 = vld [vmem:[%s8817 + $0x1c8] sm:$0xff]
    %v8876 = vld [vmem:[%s8817 + $0x1d0] sm:$0xff]
    %v8877 = vld [vmem:[%s8817 + $0x1d8] sm:$0xff]
    %v8878 = vld [vmem:[%s8817 + $0x1e0] sm:$0xff]
    %v8879 = vld [vmem:[%s8817 + $0x1e8] sm:$0xff]
    %v8880 = vld [vmem:[%s8817 + $0x1f0] sm:$0xff]
    %v8881 = vld [vmem:[%s8817 + $0x1f8] sm:$0xff]
    %v8882 = vld [vmem:[%s8817 + $0x200] sm:$0xff]
    %v8883 = vld [vmem:[%s8817 + $0x208] sm:$0xff]
    %v8884 = vld [vmem:[%s8817 + $0x210] sm:$0xff]
    %v8885 = vld [vmem:[%s8817 + $0x218] sm:$0xff]
    %v8886 = vld [vmem:[%s8817 + $0x220] sm:$0xff]
    %v8887 = vld [vmem:[%s8817 + $0x228] sm:$0xff]
    %s8888 = scalar_lea.vmem [#allocation10], 2800
    %v8889 = vld [vmem:[%s8888] sm:$0xff]
    %v8890 = vld [vmem:[%s8888 + $0x8] sm:$0xff]
    %v8891 = vld [vmem:[%s8888 + $0x10] sm:$0xff]
    %v8892 = vld [vmem:[%s8888 + $0x18] sm:$0xff]
    %v8893 = vld [vmem:[%s8888 + $0x20] sm:$0xff]
    %v8894 = vld [vmem:[%s8888 + $0x28] sm:$0xff]
    %v8895 = vld [vmem:[%s8888 + $0x30] sm:$0xff]
    %v8896 = vld [vmem:[%s8888 + $0x38] sm:$0xff]
    %v8897 = vld [vmem:[%s8888 + $0x40] sm:$0xff]
    %v8898 = vld [vmem:[%s8888 + $0x48] sm:$0xff]
    %v8899 = vld [vmem:[%s8888 + $0x50] sm:$0xff]
    %v8900 = vld [vmem:[%s8888 + $0x58] sm:$0xff]
    %v8901 = vld [vmem:[%s8888 + $0x60] sm:$0xff]
    %v8902 = vld [vmem:[%s8888 + $0x68] sm:$0xff]
    %v8903 = vld [vmem:[%s8888 + $0x70] sm:$0xff]
    %v8904 = vld [vmem:[%s8888 + $0x78] sm:$0xff]
    %v8905 = vld [vmem:[%s8888 + $0x80] sm:$0xff]
    %v8906 = vld [vmem:[%s8888 + $0x88] sm:$0xff]
    %v8907 = vld [vmem:[%s8888 + $0x90] sm:$0xff]
    %v8908 = vld [vmem:[%s8888 + $0x98] sm:$0xff]
    %v8909 = vld [vmem:[%s8888 + $0xa0] sm:$0xff]
    %v8910 = vld [vmem:[%s8888 + $0xa8] sm:$0xff]
    %v8911 = vld [vmem:[%s8888 + $0xb0] sm:$0xff]
    %v8912 = vld [vmem:[%s8888 + $0xb8] sm:$0xff]
    %v8913 = vld [vmem:[%s8888 + $0xc0] sm:$0xff]
    %v8914 = vld [vmem:[%s8888 + $0xc8] sm:$0xff]
    %v8915 = vld [vmem:[%s8888 + $0xd0] sm:$0xff]
    %v8916 = vld [vmem:[%s8888 + $0xd8] sm:$0xff]
    %v8917 = vld [vmem:[%s8888 + $0xe0] sm:$0xff]
    %v8918 = vld [vmem:[%s8888 + $0xe8] sm:$0xff]
    %v8919 = vld [vmem:[%s8888 + $0xf0] sm:$0xff]
    %v8920 = vld [vmem:[%s8888 + $0xf8] sm:$0xff]
    %v8921 = vld [vmem:[%s8888 + $0x100] sm:$0xff]
    %v8922 = vld [vmem:[%s8888 + $0x108] sm:$0xff]
    %v8923 = vld [vmem:[%s8888 + $0x110] sm:$0xff]
    %v8924 = vld [vmem:[%s8888 + $0x118] sm:$0xff]
    %v8925 = vld [vmem:[%s8888 + $0x120] sm:$0xff]
    %v8926 = vld [vmem:[%s8888 + $0x128] sm:$0xff]
    %v8927 = vld [vmem:[%s8888 + $0x130] sm:$0xff]
    %v8928 = vld [vmem:[%s8888 + $0x138] sm:$0xff]
    %v8929 = vld [vmem:[%s8888 + $0x140] sm:$0xff]
    %v8930 = vld [vmem:[%s8888 + $0x148] sm:$0xff]
    %v8931 = vld [vmem:[%s8888 + $0x150] sm:$0xff]
    %v8932 = vld [vmem:[%s8888 + $0x158] sm:$0xff]
    %v8933 = vld [vmem:[%s8888 + $0x160] sm:$0xff]
    %v8934 = vld [vmem:[%s8888 + $0x168] sm:$0xff]
    %v8935 = vld [vmem:[%s8888 + $0x170] sm:$0xff]
    %v8936 = vld [vmem:[%s8888 + $0x178] sm:$0xff]
    %v8937 = vld [vmem:[%s8888 + $0x180] sm:$0xff]
    %v8938 = vld [vmem:[%s8888 + $0x188] sm:$0xff]
    %v8939 = vld [vmem:[%s8888 + $0x190] sm:$0xff]
    %v8940 = vld [vmem:[%s8888 + $0x198] sm:$0xff]
    %v8941 = vld [vmem:[%s8888 + $0x1a0] sm:$0xff]
    %v8942 = vld [vmem:[%s8888 + $0x1a8] sm:$0xff]
    %v8943 = vld [vmem:[%s8888 + $0x1b0] sm:$0xff]
    %v8944 = vld [vmem:[%s8888 + $0x1b8] sm:$0xff]
    %v8945 = vld [vmem:[%s8888 + $0x1c0] sm:$0xff]
    %v8946 = vld [vmem:[%s8888 + $0x1c8] sm:$0xff]
    %v8947 = vld [vmem:[%s8888 + $0x1d0] sm:$0xff]
    %v8948 = vld [vmem:[%s8888 + $0x1d8] sm:$0xff]
    %v8949 = vld [vmem:[%s8888 + $0x1e0] sm:$0xff]
    %v8950 = vld [vmem:[%s8888 + $0x1e8] sm:$0xff]
    %v8951 = vld [vmem:[%s8888 + $0x1f0] sm:$0xff]
    %v8952 = vld [vmem:[%s8888 + $0x1f8] sm:$0xff]
    %v8953 = vld [vmem:[%s8888 + $0x200] sm:$0xff]
    %v8954 = vld [vmem:[%s8888 + $0x208] sm:$0xff]
    %v8955 = vld [vmem:[%s8888 + $0x210] sm:$0xff]
    %v8956 = vld [vmem:[%s8888 + $0x218] sm:$0xff]
    %v8957 = vld [vmem:[%s8888 + $0x220] sm:$0xff]
    %v8958 = vld [vmem:[%s8888 + $0x228] sm:$0xff]
    %8959 = vmatpush.msra.mxu0 %v8919
    %8960 = vmatpush.msra.mxu0 %v8917
    %8961 = vmatpush.msra.mxu0 %v8915
    %8962 = vmatpush.msra.mxu0 %v8913
    %8963 = vmatpush.msra.mxu0 %v8911
    %8964 = vmatpush.msra.mxu0 %v8909
    %8965 = vmatpush.msra.mxu0 %v8907
    %8966 = vmatpush.msra.mxu0 %v8905
    %8967 = vmatpush.msra.mxu0 %v8903
    %8968 = vmatpush.msra.mxu0 %v8901
    %8969 = vmatpush.msra.mxu0 %v8899
    %8970 = vmatpush.msra.mxu0 %v8897
    %8971 = vmatpush.msra.mxu0 %v8895
    %8972 = vmatpush.msra.mxu0 %v8893
    %8973 = vmatpush.msra.mxu0 %v8891
    %8974 = vmatpush.msra.mxu0 %v8889
    %8975 = vmatmul.f32.gmra.mxu0 %v6383
    %v8976 = vpop.f32.mrf.mxu0
    %v8977 = vadd.f32 0.0, %v8976
    %8978 = vmatmul.f32.gmra.mxu0 %v6386
    %v8979 = vpop.f32.mrf.mxu0
    %v8980 = vadd.f32 0.0, %v8979
    %8981 = vmatmul.f32.gmra.mxu0 %v6389
    %v8982 = vpop.f32.mrf.mxu0
    %v8983 = vadd.f32 0.0, %v8982
    %8984 = vmatmul.f32.gmra.mxu0 %v6392
    %v8985 = vpop.f32.mrf.mxu0
    %v8986 = vadd.f32 0.0, %v8985
    %8987 = vmatmul.f32.gmra.mxu0 %v6395
    %v8988 = vpop.f32.mrf.mxu0
    %v8989 = vadd.f32 0.0, %v8988
    %8990 = vmatmul.f32.gmra.mxu0 %v6398
    %v8991 = vpop.f32.mrf.mxu0
    %v8992 = vadd.f32 0.0, %v8991
    %8993 = vmatmul.f32.gmra.mxu0 %v6401
    %v8994 = vpop.f32.mrf.mxu0
    %v8995 = vadd.f32 0.0, %v8994
    %8996 = vmatmul.f32.gmra.mxu0 %v6404
    %v8997 = vpop.f32.mrf.mxu0
    %v8998 = vadd.f32 0.0, %v8997
    %8999 = vdwg.mxu0
    %9000 = vmatpush.msra.mxu0 %v8951
    %9001 = vmatpush.msra.mxu0 %v8949
    %9002 = vmatpush.msra.mxu0 %v8947
    %9003 = vmatpush.msra.mxu0 %v8945
    %9004 = vmatpush.msra.mxu0 %v8943
    %9005 = vmatpush.msra.mxu0 %v8941
    %9006 = vmatpush.msra.mxu0 %v8939
    %9007 = vmatpush.msra.mxu0 %v8937
    %9008 = vmatpush.msra.mxu0 %v8935
    %9009 = vmatpush.msra.mxu0 %v8933
    %9010 = vmatpush.msra.mxu0 %v8931
    %9011 = vmatpush.msra.mxu0 %v8929
    %9012 = vmatpush.msra.mxu0 %v8927
    %9013 = vmatpush.msra.mxu0 %v8925
    %9014 = vmatpush.msra.mxu0 %v8923
    %9015 = vmatpush.msra.mxu0 %v8921
    %9016 = vmatmul.f32.gmra.mxu0 %v6424
    %v9017 = vpop.f32.mrf.mxu0
    %v9018 = vadd.f32 %v8977, %v9017
    %9019 = vmatmul.f32.gmra.mxu0 %v6427
    %v9020 = vpop.f32.mrf.mxu0
    %v9021 = vadd.f32 %v8980, %v9020
    %9022 = vmatmul.f32.gmra.mxu0 %v6430
    %v9023 = vpop.f32.mrf.mxu0
    %v9024 = vadd.f32 %v8983, %v9023
    %9025 = vmatmul.f32.gmra.mxu0 %v6433
    %v9026 = vpop.f32.mrf.mxu0
    %v9027 = vadd.f32 %v8986, %v9026
    %9028 = vmatmul.f32.gmra.mxu0 %v6436
    %v9029 = vpop.f32.mrf.mxu0
    %v9030 = vadd.f32 %v8989, %v9029
    %9031 = vmatmul.f32.gmra.mxu0 %v6439
    %v9032 = vpop.f32.mrf.mxu0
    %v9033 = vadd.f32 %v8992, %v9032
    %9034 = vmatmul.f32.gmra.mxu0 %v6442
    %v9035 = vpop.f32.mrf.mxu0
    %v9036 = vadd.f32 %v8995, %v9035
    %9037 = vmatmul.f32.gmra.mxu0 %v6445
    %v9038 = vpop.f32.mrf.mxu0
    %v9039 = vadd.f32 %v8998, %v9038
    %9040 = vdwg.mxu0
    %9041 = vmatpush.msra.mxu0 0.0
    %9042 = vmatpush.msra.mxu0 0.0
    %9043 = vmatpush.msra.mxu0 0.0
    %9044 = vmatpush.msra.mxu0 0.0
    %9045 = vmatpush.msra.mxu0 0.0
    %9046 = vmatpush.msra.mxu0 0.0
    %9047 = vmatpush.msra.mxu0 0.0
    %9048 = vmatpush.msra.mxu0 0.0
    %9049 = vmatpush.msra.mxu0 0.0
    %9050 = vmatpush.msra.mxu0 0.0
    %9051 = vmatpush.msra.mxu0 0.0
    %9052 = vmatpush.msra.mxu0 0.0
    %9053 = vmatpush.msra.mxu0 0.0
    %9054 = vmatpush.msra.mxu0 %v8957
    %9055 = vmatpush.msra.mxu0 %v8955
    %9056 = vmatpush.msra.mxu0 %v8953
    %9057 = vmatmul.f32.gmra.mxu0 %v6787
    %v9058 = vpop.f32.mrf.mxu0
    %v9059 = vadd.f32 %v9018, %v9058
    %9060 = vmatmul.f32.gmra.mxu0 %v6790
    %v9061 = vpop.f32.mrf.mxu0
    %v9062 = vadd.f32 %v9021, %v9061
    %9063 = vmatmul.f32.gmra.mxu0 %v6793
    %v9064 = vpop.f32.mrf.mxu0
    %v9065 = vadd.f32 %v9024, %v9064
    %9066 = vmatmul.f32.gmra.mxu0 %v6796
    %v9067 = vpop.f32.mrf.mxu0
    %v9068 = vadd.f32 %v9027, %v9067
    %9069 = vmatmul.f32.gmra.mxu0 %v6799
    %v9070 = vpop.f32.mrf.mxu0
    %v9071 = vadd.f32 %v9030, %v9070
    %9072 = vmatmul.f32.gmra.mxu0 %v6802
    %v9073 = vpop.f32.mrf.mxu0
    %v9074 = vadd.f32 %v9033, %v9073
    %9075 = vmatmul.f32.gmra.mxu0 %v6805
    %v9076 = vpop.f32.mrf.mxu0
    %v9077 = vadd.f32 %v9036, %v9076
    %9078 = vmatmul.f32.gmra.mxu0 %v6808
    %v9079 = vpop.f32.mrf.mxu0
    %v9080 = vadd.f32 %v9039, %v9079
    %9081 = vdwg.mxu0
    %9082 = vmatpush.msra.mxu0 %v8920
    %9083 = vmatpush.msra.mxu0 %v8918
    %9084 = vmatpush.msra.mxu0 %v8916
    %9085 = vmatpush.msra.mxu0 %v8914
    %9086 = vmatpush.msra.mxu0 %v8912
    %9087 = vmatpush.msra.mxu0 %v8910
    %9088 = vmatpush.msra.mxu0 %v8908
    %9089 = vmatpush.msra.mxu0 %v8906
    %9090 = vmatpush.msra.mxu0 %v8904
    %9091 = vmatpush.msra.mxu0 %v8902
    %9092 = vmatpush.msra.mxu0 %v8900
    %9093 = vmatpush.msra.mxu0 %v8898
    %9094 = vmatpush.msra.mxu0 %v8896
    %9095 = vmatpush.msra.mxu0 %v8894
    %9096 = vmatpush.msra.mxu0 %v8892
    %9097 = vmatpush.msra.mxu0 %v8890
    %9098 = vmatmul.f32.gmra.mxu0 %v6383
    %v9099 = vpop.f32.mrf.mxu0
    %v9100 = vadd.f32 0.0, %v9099
    %9101 = vmatmul.f32.gmra.mxu0 %v6386
    %v9102 = vpop.f32.mrf.mxu0
    %v9103 = vadd.f32 0.0, %v9102
    %9104 = vmatmul.f32.gmra.mxu0 %v6389
    %v9105 = vpop.f32.mrf.mxu0
    %v9106 = vadd.f32 0.0, %v9105
    %9107 = vmatmul.f32.gmra.mxu0 %v6392
    %v9108 = vpop.f32.mrf.mxu0
    %v9109 = vadd.f32 0.0, %v9108
    %9110 = vmatmul.f32.gmra.mxu0 %v6395
    %v9111 = vpop.f32.mrf.mxu0
    %v9112 = vadd.f32 0.0, %v9111
    %9113 = vmatmul.f32.gmra.mxu0 %v6398
    %v9114 = vpop.f32.mrf.mxu0
    %v9115 = vadd.f32 0.0, %v9114
    %9116 = vmatmul.f32.gmra.mxu0 %v6401
    %v9117 = vpop.f32.mrf.mxu0
    %v9118 = vadd.f32 0.0, %v9117
    %9119 = vmatmul.f32.gmra.mxu0 %v6404
    %v9120 = vpop.f32.mrf.mxu0
    %v9121 = vadd.f32 0.0, %v9120
    %9122 = vdwg.mxu0
    %9123 = vmatpush.msra.mxu0 %v8952
    %9124 = vmatpush.msra.mxu0 %v8950
    %9125 = vmatpush.msra.mxu0 %v8948
    %9126 = vmatpush.msra.mxu0 %v8946
    %9127 = vmatpush.msra.mxu0 %v8944
    %9128 = vmatpush.msra.mxu0 %v8942
    %9129 = vmatpush.msra.mxu0 %v8940
    %9130 = vmatpush.msra.mxu0 %v8938
    %9131 = vmatpush.msra.mxu0 %v8936
    %9132 = vmatpush.msra.mxu0 %v8934
    %9133 = vmatpush.msra.mxu0 %v8932
    %9134 = vmatpush.msra.mxu0 %v8930
    %9135 = vmatpush.msra.mxu0 %v8928
    %9136 = vmatpush.msra.mxu0 %v8926
    %9137 = vmatpush.msra.mxu0 %v8924
    %9138 = vmatpush.msra.mxu0 %v8922
    %9139 = vmatmul.f32.gmra.mxu0 %v6424
    %v9140 = vpop.f32.mrf.mxu0
    %v9141 = vadd.f32 %v9100, %v9140
    %9142 = vmatmul.f32.gmra.mxu0 %v6427
    %v9143 = vpop.f32.mrf.mxu0
    %v9144 = vadd.f32 %v9103, %v9143
    %9145 = vmatmul.f32.gmra.mxu0 %v6430
    %v9146 = vpop.f32.mrf.mxu0
    %v9147 = vadd.f32 %v9106, %v9146
    %9148 = vmatmul.f32.gmra.mxu0 %v6433
    %v9149 = vpop.f32.mrf.mxu0
    %v9150 = vadd.f32 %v9109, %v9149
    %9151 = vmatmul.f32.gmra.mxu0 %v6436
    %v9152 = vpop.f32.mrf.mxu0
    %v9153 = vadd.f32 %v9112, %v9152
    %9154 = vmatmul.f32.gmra.mxu0 %v6439
    %v9155 = vpop.f32.mrf.mxu0
    %v9156 = vadd.f32 %v9115, %v9155
    %9157 = vmatmul.f32.gmra.mxu0 %v6442
    %v9158 = vpop.f32.mrf.mxu0
    %v9159 = vadd.f32 %v9118, %v9158
    %9160 = vmatmul.f32.gmra.mxu0 %v6445
    %v9161 = vpop.f32.mrf.mxu0
    %v9162 = vadd.f32 %v9121, %v9161
    %9163 = vdwg.mxu0
    %9164 = vmatpush.msra.mxu0 0.0
    %9165 = vmatpush.msra.mxu0 0.0
    %9166 = vmatpush.msra.mxu0 0.0
    %9167 = vmatpush.msra.mxu0 0.0
    %9168 = vmatpush.msra.mxu0 0.0
    %9169 = vmatpush.msra.mxu0 0.0
    %9170 = vmatpush.msra.mxu0 0.0
    %9171 = vmatpush.msra.mxu0 0.0
    %9172 = vmatpush.msra.mxu0 0.0
    %9173 = vmatpush.msra.mxu0 0.0
    %9174 = vmatpush.msra.mxu0 0.0
    %9175 = vmatpush.msra.mxu0 0.0
    %9176 = vmatpush.msra.mxu0 0.0
    %9177 = vmatpush.msra.mxu0 %v8958
    %9178 = vmatpush.msra.mxu0 %v8956
    %9179 = vmatpush.msra.mxu0 %v8954
    %9180 = vmatmul.f32.gmra.mxu0 %v6787
    %v9181 = vpop.f32.mrf.mxu0
    %v9182 = vadd.f32 %v9141, %v9181
    %9183 = vmatmul.f32.gmra.mxu0 %v6790
    %v9184 = vpop.f32.mrf.mxu0
    %v9185 = vadd.f32 %v9144, %v9184
    %9186 = vmatmul.f32.gmra.mxu0 %v6793
    %v9187 = vpop.f32.mrf.mxu0
    %v9188 = vadd.f32 %v9147, %v9187
    %9189 = vmatmul.f32.gmra.mxu0 %v6796
    %v9190 = vpop.f32.mrf.mxu0
    %v9191 = vadd.f32 %v9150, %v9190
    %9192 = vmatmul.f32.gmra.mxu0 %v6799
    %v9193 = vpop.f32.mrf.mxu0
    %v9194 = vadd.f32 %v9153, %v9193
    %9195 = vmatmul.f32.gmra.mxu0 %v6802
    %v9196 = vpop.f32.mrf.mxu0
    %v9197 = vadd.f32 %v9156, %v9196
    %9198 = vmatmul.f32.gmra.mxu0 %v6805
    %v9199 = vpop.f32.mrf.mxu0
    %v9200 = vadd.f32 %v9159, %v9199
    %9201 = vmatmul.f32.gmra.mxu0 %v6808
    %v9202 = vpop.f32.mrf.mxu0
    %v9203 = vadd.f32 %v9162, %v9202
    %9204 = vdwg.mxu0
    %9205 = vmatpush.msra.mxu0 %v8848
    %9206 = vmatpush.msra.mxu0 %v8846
    %9207 = vmatpush.msra.mxu0 %v8844
    %9208 = vmatpush.msra.mxu0 %v8842
    %9209 = vmatpush.msra.mxu0 %v8840
    %9210 = vmatpush.msra.mxu0 %v8838
    %9211 = vmatpush.msra.mxu0 %v8836
    %9212 = vmatpush.msra.mxu0 %v8834
    %9213 = vmatpush.msra.mxu0 %v8832
    %9214 = vmatpush.msra.mxu0 %v8830
    %9215 = vmatpush.msra.mxu0 %v8828
    %9216 = vmatpush.msra.mxu0 %v8826
    %9217 = vmatpush.msra.mxu0 %v8824
    %9218 = vmatpush.msra.mxu0 %v8822
    %9219 = vmatpush.msra.mxu0 %v8820
    %9220 = vmatpush.msra.mxu0 %v8818
    %9221 = vmatmul.f32.gmra.mxu0 %v6227
    %v9222 = vpop.f32.mrf.mxu0
    %v9223 = vadd.f32 %v9059, %v9222
    %9224 = vmatmul.f32.gmra.mxu0 %v6230
    %v9225 = vpop.f32.mrf.mxu0
    %v9226 = vadd.f32 %v9062, %v9225
    %9227 = vmatmul.f32.gmra.mxu0 %v6233
    %v9228 = vpop.f32.mrf.mxu0
    %v9229 = vadd.f32 %v9065, %v9228
    %9230 = vmatmul.f32.gmra.mxu0 %v6236
    %v9231 = vpop.f32.mrf.mxu0
    %v9232 = vadd.f32 %v9068, %v9231
    %9233 = vmatmul.f32.gmra.mxu0 %v6239
    %v9234 = vpop.f32.mrf.mxu0
    %v9235 = vadd.f32 %v9071, %v9234
    %9236 = vmatmul.f32.gmra.mxu0 %v6242
    %v9237 = vpop.f32.mrf.mxu0
    %v9238 = vadd.f32 %v9074, %v9237
    %9239 = vmatmul.f32.gmra.mxu0 %v6245
    %v9240 = vpop.f32.mrf.mxu0
    %v9241 = vadd.f32 %v9077, %v9240
    %9242 = vmatmul.f32.gmra.mxu0 %v6248
    %v9243 = vpop.f32.mrf.mxu0
    %v9244 = vadd.f32 %v9080, %v9243
    %9245 = vdwg.mxu0
    %9246 = vmatpush.msra.mxu0 %v8880
    %9247 = vmatpush.msra.mxu0 %v8878
    %9248 = vmatpush.msra.mxu0 %v8876
    %9249 = vmatpush.msra.mxu0 %v8874
    %9250 = vmatpush.msra.mxu0 %v8872
    %9251 = vmatpush.msra.mxu0 %v8870
    %9252 = vmatpush.msra.mxu0 %v8868
    %9253 = vmatpush.msra.mxu0 %v8866
    %9254 = vmatpush.msra.mxu0 %v8864
    %9255 = vmatpush.msra.mxu0 %v8862
    %9256 = vmatpush.msra.mxu0 %v8860
    %9257 = vmatpush.msra.mxu0 %v8858
    %9258 = vmatpush.msra.mxu0 %v8856
    %9259 = vmatpush.msra.mxu0 %v8854
    %9260 = vmatpush.msra.mxu0 %v8852
    %9261 = vmatpush.msra.mxu0 %v8850
    %9262 = vmatmul.f32.gmra.mxu0 %v6268
    %v9263 = vpop.f32.mrf.mxu0
    %v9264 = vadd.f32 %v9223, %v9263
    %9265 = vmatmul.f32.gmra.mxu0 %v6271
    %v9266 = vpop.f32.mrf.mxu0
    %v9267 = vadd.f32 %v9226, %v9266
    %9268 = vmatmul.f32.gmra.mxu0 %v6274
    %v9269 = vpop.f32.mrf.mxu0
    %v9270 = vadd.f32 %v9229, %v9269
    %9271 = vmatmul.f32.gmra.mxu0 %v6277
    %v9272 = vpop.f32.mrf.mxu0
    %v9273 = vadd.f32 %v9232, %v9272
    %9274 = vmatmul.f32.gmra.mxu0 %v6280
    %v9275 = vpop.f32.mrf.mxu0
    %v9276 = vadd.f32 %v9235, %v9275
    %9277 = vmatmul.f32.gmra.mxu0 %v6283
    %v9278 = vpop.f32.mrf.mxu0
    %v9279 = vadd.f32 %v9238, %v9278
    %9280 = vmatmul.f32.gmra.mxu0 %v6286
    %v9281 = vpop.f32.mrf.mxu0
    %v9282 = vadd.f32 %v9241, %v9281
    %9283 = vmatmul.f32.gmra.mxu0 %v6289
    %v9284 = vpop.f32.mrf.mxu0
    %v9285 = vadd.f32 %v9244, %v9284
    %9286 = vdwg.mxu0
    %9287 = vmatpush.msra.mxu0 0.0
    %9288 = vmatpush.msra.mxu0 0.0
    %9289 = vmatpush.msra.mxu0 0.0
    %9290 = vmatpush.msra.mxu0 0.0
    %9291 = vmatpush.msra.mxu0 0.0
    %9292 = vmatpush.msra.mxu0 0.0
    %9293 = vmatpush.msra.mxu0 0.0
    %9294 = vmatpush.msra.mxu0 0.0
    %9295 = vmatpush.msra.mxu0 0.0
    %9296 = vmatpush.msra.mxu0 0.0
    %9297 = vmatpush.msra.mxu0 0.0
    %9298 = vmatpush.msra.mxu0 0.0
    %9299 = vmatpush.msra.mxu0 0.0
    %9300 = vmatpush.msra.mxu0 %v8886
    %9301 = vmatpush.msra.mxu0 %v8884
    %9302 = vmatpush.msra.mxu0 %v8882
    %9303 = vmatmul.f32.gmra.mxu0 %v7057
    %v9304 = vpop.f32.mrf.mxu0
    %v9305 = vadd.f32 %v9264, %v9304
    %9306 = vmatmul.f32.gmra.mxu0 %v7060
    %v9307 = vpop.f32.mrf.mxu0
    %v9308 = vadd.f32 %v9267, %v9307
    %9309 = vmatmul.f32.gmra.mxu0 %v7063
    %v9310 = vpop.f32.mrf.mxu0
    %v9311 = vadd.f32 %v9270, %v9310
    %9312 = vmatmul.f32.gmra.mxu0 %v7066
    %v9313 = vpop.f32.mrf.mxu0
    %v9314 = vadd.f32 %v9273, %v9313
    %9315 = vmatmul.f32.gmra.mxu0 %v7069
    %v9316 = vpop.f32.mrf.mxu0
    %v9317 = vadd.f32 %v9276, %v9316
    %9318 = vmatmul.f32.gmra.mxu0 %v7072
    %v9319 = vpop.f32.mrf.mxu0
    %v9320 = vadd.f32 %v9279, %v9319
    %9321 = vmatmul.f32.gmra.mxu0 %v7075
    %v9322 = vpop.f32.mrf.mxu0
    %v9323 = vadd.f32 %v9282, %v9322
    %9324 = vmatmul.f32.gmra.mxu0 %v7078
    %v9325 = vpop.f32.mrf.mxu0
    %v9326 = vadd.f32 %v9285, %v9325
    %9327 = vdwg.mxu0
    %9328 = vmatpush.msra.mxu0 %v8849
    %9329 = vmatpush.msra.mxu0 %v8847
    %9330 = vmatpush.msra.mxu0 %v8845
    %9331 = vmatpush.msra.mxu0 %v8843
    %9332 = vmatpush.msra.mxu0 %v8841
    %9333 = vmatpush.msra.mxu0 %v8839
    %9334 = vmatpush.msra.mxu0 %v8837
    %9335 = vmatpush.msra.mxu0 %v8835
    %9336 = vmatpush.msra.mxu0 %v8833
    %9337 = vmatpush.msra.mxu0 %v8831
    %9338 = vmatpush.msra.mxu0 %v8829
    %9339 = vmatpush.msra.mxu0 %v8827
    %9340 = vmatpush.msra.mxu0 %v8825
    %9341 = vmatpush.msra.mxu0 %v8823
    %9342 = vmatpush.msra.mxu0 %v8821
    %9343 = vmatpush.msra.mxu0 %v8819
    %9344 = vmatmul.f32.gmra.mxu0 %v6227
    %v9345 = vpop.f32.mrf.mxu0
    %v9346 = vadd.f32 %v9182, %v9345
    %9347 = vmatmul.f32.gmra.mxu0 %v6230
    %v9348 = vpop.f32.mrf.mxu0
    %v9349 = vadd.f32 %v9185, %v9348
    %9350 = vmatmul.f32.gmra.mxu0 %v6233
    %v9351 = vpop.f32.mrf.mxu0
    %v9352 = vadd.f32 %v9188, %v9351
    %9353 = vmatmul.f32.gmra.mxu0 %v6236
    %v9354 = vpop.f32.mrf.mxu0
    %v9355 = vadd.f32 %v9191, %v9354
    %9356 = vmatmul.f32.gmra.mxu0 %v6239
    %v9357 = vpop.f32.mrf.mxu0
    %v9358 = vadd.f32 %v9194, %v9357
    %9359 = vmatmul.f32.gmra.mxu0 %v6242
    %v9360 = vpop.f32.mrf.mxu0
    %v9361 = vadd.f32 %v9197, %v9360
    %9362 = vmatmul.f32.gmra.mxu0 %v6245
    %v9363 = vpop.f32.mrf.mxu0
    %v9364 = vadd.f32 %v9200, %v9363
    %9365 = vmatmul.f32.gmra.mxu0 %v6248
    %v9366 = vpop.f32.mrf.mxu0
    %v9367 = vadd.f32 %v9203, %v9366
    %9368 = vdwg.mxu0
    %9369 = vmatpush.msra.mxu0 %v8881
    %9370 = vmatpush.msra.mxu0 %v8879
    %9371 = vmatpush.msra.mxu0 %v8877
    %9372 = vmatpush.msra.mxu0 %v8875
    %9373 = vmatpush.msra.mxu0 %v8873
    %9374 = vmatpush.msra.mxu0 %v8871
    %9375 = vmatpush.msra.mxu0 %v8869
    %9376 = vmatpush.msra.mxu0 %v8867
    %9377 = vmatpush.msra.mxu0 %v8865
    %9378 = vmatpush.msra.mxu0 %v8863
    %9379 = vmatpush.msra.mxu0 %v8861
    %9380 = vmatpush.msra.mxu0 %v8859
    %9381 = vmatpush.msra.mxu0 %v8857
    %9382 = vmatpush.msra.mxu0 %v8855
    %9383 = vmatpush.msra.mxu0 %v8853
    %9384 = vmatpush.msra.mxu0 %v8851
    %9385 = vmatmul.f32.gmra.mxu0 %v6268
    %v9386 = vpop.f32.mrf.mxu0
    %v9387 = vadd.f32 %v9346, %v9386
    %9388 = vmatmul.f32.gmra.mxu0 %v6271
    %v9389 = vpop.f32.mrf.mxu0
    %v9390 = vadd.f32 %v9349, %v9389
    %9391 = vmatmul.f32.gmra.mxu0 %v6274
    %v9392 = vpop.f32.mrf.mxu0
    %v9393 = vadd.f32 %v9352, %v9392
    %9394 = vmatmul.f32.gmra.mxu0 %v6277
    %v9395 = vpop.f32.mrf.mxu0
    %v9396 = vadd.f32 %v9355, %v9395
    %9397 = vmatmul.f32.gmra.mxu0 %v6280
    %v9398 = vpop.f32.mrf.mxu0
    %v9399 = vadd.f32 %v9358, %v9398
    %9400 = vmatmul.f32.gmra.mxu0 %v6283
    %v9401 = vpop.f32.mrf.mxu0
    %v9402 = vadd.f32 %v9361, %v9401
    %9403 = vmatmul.f32.gmra.mxu0 %v6286
    %v9404 = vpop.f32.mrf.mxu0
    %v9405 = vadd.f32 %v9364, %v9404
    %9406 = vmatmul.f32.gmra.mxu0 %v6289
    %v9407 = vpop.f32.mrf.mxu0
    %v9408 = vadd.f32 %v9367, %v9407
    %9409 = vdwg.mxu0
    %9410 = vmatpush.msra.mxu0 0.0
    %9411 = vmatpush.msra.mxu0 0.0
    %9412 = vmatpush.msra.mxu0 0.0
    %9413 = vmatpush.msra.mxu0 0.0
    %9414 = vmatpush.msra.mxu0 0.0
    %9415 = vmatpush.msra.mxu0 0.0
    %9416 = vmatpush.msra.mxu0 0.0
    %9417 = vmatpush.msra.mxu0 0.0
    %9418 = vmatpush.msra.mxu0 0.0
    %9419 = vmatpush.msra.mxu0 0.0
    %9420 = vmatpush.msra.mxu0 0.0
    %9421 = vmatpush.msra.mxu0 0.0
    %9422 = vmatpush.msra.mxu0 0.0
    %9423 = vmatpush.msra.mxu0 %v8887
    %9424 = vmatpush.msra.mxu0 %v8885
    %9425 = vmatpush.msra.mxu0 %v8883
    %9426 = vmatmul.f32.gmra.mxu0 %v7057
    %v9427 = vpop.f32.mrf.mxu0
    %v9428 = vadd.f32 %v9387, %v9427
    %9429 = vmatmul.f32.gmra.mxu0 %v7060
    %v9430 = vpop.f32.mrf.mxu0
    %v9431 = vadd.f32 %v9390, %v9430
    %9432 = vmatmul.f32.gmra.mxu0 %v7063
    %v9433 = vpop.f32.mrf.mxu0
    %v9434 = vadd.f32 %v9393, %v9433
    %9435 = vmatmul.f32.gmra.mxu0 %v7066
    %v9436 = vpop.f32.mrf.mxu0
    %v9437 = vadd.f32 %v9396, %v9436
    %9438 = vmatmul.f32.gmra.mxu0 %v7069
    %v9439 = vpop.f32.mrf.mxu0
    %v9440 = vadd.f32 %v9399, %v9439
    %9441 = vmatmul.f32.gmra.mxu0 %v7072
    %v9442 = vpop.f32.mrf.mxu0
    %v9443 = vadd.f32 %v9402, %v9442
    %9444 = vmatmul.f32.gmra.mxu0 %v7075
    %v9445 = vpop.f32.mrf.mxu0
    %v9446 = vadd.f32 %v9405, %v9445
    %9447 = vmatmul.f32.gmra.mxu0 %v7078
    %v9448 = vpop.f32.mrf.mxu0
    %v9449 = vadd.f32 %v9408, %v9448
    %9450 = vdwg.mxu0
    %s9451 = scalar_lea.vmem [#allocation10], 4480
    %v9452 = vld [vmem:[%s9451] sm:$0xff]
    %v9453 = vld [vmem:[%s9451 + $0x8] sm:$0xff]
    %v9454 = vld [vmem:[%s9451 + $0x10] sm:$0xff]
    %v9455 = vld [vmem:[%s9451 + $0x18] sm:$0xff]
    %v9456 = vld [vmem:[%s9451 + $0x20] sm:$0xff]
    %v9457 = vld [vmem:[%s9451 + $0x28] sm:$0xff]
    %v9458 = vld [vmem:[%s9451 + $0x30] sm:$0xff]
    %v9459 = vld [vmem:[%s9451 + $0x38] sm:$0xff]
    %v9460 = vld [vmem:[%s9451 + $0x40] sm:$0xff]
    %v9461 = vld [vmem:[%s9451 + $0x48] sm:$0xff]
    %v9462 = vld [vmem:[%s9451 + $0x50] sm:$0xff]
    %v9463 = vld [vmem:[%s9451 + $0x58] sm:$0xff]
    %v9464 = vld [vmem:[%s9451 + $0x60] sm:$0xff]
    %v9465 = vld [vmem:[%s9451 + $0x68] sm:$0xff]
    %v9466 = vld [vmem:[%s9451 + $0x70] sm:$0xff]
    %v9467 = vld [vmem:[%s9451 + $0x78] sm:$0xff]
    %v9468 = vld [vmem:[%s9451 + $0x80] sm:$0xff]
    %v9469 = vld [vmem:[%s9451 + $0x88] sm:$0xff]
    %v9470 = vld [vmem:[%s9451 + $0x90] sm:$0xff]
    %v9471 = vld [vmem:[%s9451 + $0x98] sm:$0xff]
    %v9472 = vld [vmem:[%s9451 + $0xa0] sm:$0xff]
    %v9473 = vld [vmem:[%s9451 + $0xa8] sm:$0xff]
    %v9474 = vld [vmem:[%s9451 + $0xb0] sm:$0xff]
    %v9475 = vld [vmem:[%s9451 + $0xb8] sm:$0xff]
    %v9476 = vld [vmem:[%s9451 + $0xc0] sm:$0xff]
    %v9477 = vld [vmem:[%s9451 + $0xc8] sm:$0xff]
    %v9478 = vld [vmem:[%s9451 + $0xd0] sm:$0xff]
    %v9479 = vld [vmem:[%s9451 + $0xd8] sm:$0xff]
    %v9480 = vld [vmem:[%s9451 + $0xe0] sm:$0xff]
    %v9481 = vld [vmem:[%s9451 + $0xe8] sm:$0xff]
    %v9482 = vld [vmem:[%s9451 + $0xf0] sm:$0xff]
    %v9483 = vld [vmem:[%s9451 + $0xf8] sm:$0xff]
    %v9484 = vld [vmem:[%s9451 + $0x100] sm:$0xff]
    %v9485 = vld [vmem:[%s9451 + $0x108] sm:$0xff]
    %v9486 = vld [vmem:[%s9451 + $0x110] sm:$0xff]
    %v9487 = vld [vmem:[%s9451 + $0x118] sm:$0xff]
    %v9488 = vld [vmem:[%s9451 + $0x120] sm:$0xff]
    %v9489 = vld [vmem:[%s9451 + $0x128] sm:$0xff]
    %v9490 = vld [vmem:[%s9451 + $0x130] sm:$0xff]
    %v9491 = vld [vmem:[%s9451 + $0x138] sm:$0xff]
    %v9492 = vld [vmem:[%s9451 + $0x140] sm:$0xff]
    %v9493 = vld [vmem:[%s9451 + $0x148] sm:$0xff]
    %v9494 = vld [vmem:[%s9451 + $0x150] sm:$0xff]
    %v9495 = vld [vmem:[%s9451 + $0x158] sm:$0xff]
    %v9496 = vld [vmem:[%s9451 + $0x160] sm:$0xff]
    %v9497 = vld [vmem:[%s9451 + $0x168] sm:$0xff]
    %v9498 = vld [vmem:[%s9451 + $0x170] sm:$0xff]
    %v9499 = vld [vmem:[%s9451 + $0x178] sm:$0xff]
    %v9500 = vld [vmem:[%s9451 + $0x180] sm:$0xff]
    %v9501 = vld [vmem:[%s9451 + $0x188] sm:$0xff]
    %v9502 = vld [vmem:[%s9451 + $0x190] sm:$0xff]
    %v9503 = vld [vmem:[%s9451 + $0x198] sm:$0xff]
    %v9504 = vld [vmem:[%s9451 + $0x1a0] sm:$0xff]
    %v9505 = vld [vmem:[%s9451 + $0x1a8] sm:$0xff]
    %v9506 = vld [vmem:[%s9451 + $0x1b0] sm:$0xff]
    %v9507 = vld [vmem:[%s9451 + $0x1b8] sm:$0xff]
    %v9508 = vld [vmem:[%s9451 + $0x1c0] sm:$0xff]
    %v9509 = vld [vmem:[%s9451 + $0x1c8] sm:$0xff]
    %v9510 = vld [vmem:[%s9451 + $0x1d0] sm:$0xff]
    %v9511 = vld [vmem:[%s9451 + $0x1d8] sm:$0xff]
    %v9512 = vld [vmem:[%s9451 + $0x1e0] sm:$0xff]
    %v9513 = vld [vmem:[%s9451 + $0x1e8] sm:$0xff]
    %v9514 = vld [vmem:[%s9451 + $0x1f0] sm:$0xff]
    %v9515 = vld [vmem:[%s9451 + $0x1f8] sm:$0xff]
    %v9516 = vld [vmem:[%s9451 + $0x200] sm:$0xff]
    %v9517 = vld [vmem:[%s9451 + $0x208] sm:$0xff]
    %v9518 = vld [vmem:[%s9451 + $0x210] sm:$0xff]
    %v9519 = vld [vmem:[%s9451 + $0x218] sm:$0xff]
    %v9520 = vld [vmem:[%s9451 + $0x220] sm:$0xff]
    %v9521 = vld [vmem:[%s9451 + $0x228] sm:$0xff]
    %9522 = vmatpush.msra.mxu0 %v9482
    %9523 = vmatpush.msra.mxu0 %v9480
    %9524 = vmatpush.msra.mxu0 %v9478
    %9525 = vmatpush.msra.mxu0 %v9476
    %9526 = vmatpush.msra.mxu0 %v9474
    %9527 = vmatpush.msra.mxu0 %v9472
    %9528 = vmatpush.msra.mxu0 %v9470
    %9529 = vmatpush.msra.mxu0 %v9468
    %9530 = vmatpush.msra.mxu0 %v9466
    %9531 = vmatpush.msra.mxu0 %v9464
    %9532 = vmatpush.msra.mxu0 %v9462
    %9533 = vmatpush.msra.mxu0 %v9460
    %9534 = vmatpush.msra.mxu0 %v9458
    %9535 = vmatpush.msra.mxu0 %v9456
    %9536 = vmatpush.msra.mxu0 %v9454
    %9537 = vmatpush.msra.mxu0 %v9452
    %9538 = vmatmul.f32.gmra.mxu0 %v6539
    %v9539 = vpop.f32.mrf.mxu0
    %v9540 = vadd.f32 0.0, %v9539
    %9541 = vmatmul.f32.gmra.mxu0 %v6542
    %v9542 = vpop.f32.mrf.mxu0
    %v9543 = vadd.f32 0.0, %v9542
    %9544 = vmatmul.f32.gmra.mxu0 %v6545
    %v9545 = vpop.f32.mrf.mxu0
    %v9546 = vadd.f32 0.0, %v9545
    %9547 = vmatmul.f32.gmra.mxu0 %v6548
    %v9548 = vpop.f32.mrf.mxu0
    %v9549 = vadd.f32 0.0, %v9548
    %9550 = vmatmul.f32.gmra.mxu0 %v6551
    %v9551 = vpop.f32.mrf.mxu0
    %v9552 = vadd.f32 0.0, %v9551
    %9553 = vmatmul.f32.gmra.mxu0 %v6554
    %v9554 = vpop.f32.mrf.mxu0
    %v9555 = vadd.f32 0.0, %v9554
    %9556 = vmatmul.f32.gmra.mxu0 %v6557
    %v9557 = vpop.f32.mrf.mxu0
    %v9558 = vadd.f32 0.0, %v9557
    %9559 = vmatmul.f32.gmra.mxu0 %v6560
    %v9560 = vpop.f32.mrf.mxu0
    %v9561 = vadd.f32 0.0, %v9560
    %9562 = vdwg.mxu0
    %9563 = vmatpush.msra.mxu0 %v9514
    %9564 = vmatpush.msra.mxu0 %v9512
    %9565 = vmatpush.msra.mxu0 %v9510
    %9566 = vmatpush.msra.mxu0 %v9508
    %9567 = vmatpush.msra.mxu0 %v9506
    %9568 = vmatpush.msra.mxu0 %v9504
    %9569 = vmatpush.msra.mxu0 %v9502
    %9570 = vmatpush.msra.mxu0 %v9500
    %9571 = vmatpush.msra.mxu0 %v9498
    %9572 = vmatpush.msra.mxu0 %v9496
    %9573 = vmatpush.msra.mxu0 %v9494
    %9574 = vmatpush.msra.mxu0 %v9492
    %9575 = vmatpush.msra.mxu0 %v9490
    %9576 = vmatpush.msra.mxu0 %v9488
    %9577 = vmatpush.msra.mxu0 %v9486
    %9578 = vmatpush.msra.mxu0 %v9484
    %9579 = vmatmul.f32.gmra.mxu0 %v6580
    %v9580 = vpop.f32.mrf.mxu0
    %v9581 = vadd.f32 %v9540, %v9580
    %9582 = vmatmul.f32.gmra.mxu0 %v6583
    %v9583 = vpop.f32.mrf.mxu0
    %v9584 = vadd.f32 %v9543, %v9583
    %9585 = vmatmul.f32.gmra.mxu0 %v6586
    %v9586 = vpop.f32.mrf.mxu0
    %v9587 = vadd.f32 %v9546, %v9586
    %9588 = vmatmul.f32.gmra.mxu0 %v6589
    %v9589 = vpop.f32.mrf.mxu0
    %v9590 = vadd.f32 %v9549, %v9589
    %9591 = vmatmul.f32.gmra.mxu0 %v6592
    %v9592 = vpop.f32.mrf.mxu0
    %v9593 = vadd.f32 %v9552, %v9592
    %9594 = vmatmul.f32.gmra.mxu0 %v6595
    %v9595 = vpop.f32.mrf.mxu0
    %v9596 = vadd.f32 %v9555, %v9595
    %9597 = vmatmul.f32.gmra.mxu0 %v6598
    %v9598 = vpop.f32.mrf.mxu0
    %v9599 = vadd.f32 %v9558, %v9598
    %9600 = vmatmul.f32.gmra.mxu0 %v6601
    %v9601 = vpop.f32.mrf.mxu0
    %v9602 = vadd.f32 %v9561, %v9601
    %9603 = vdwg.mxu0
    %9604 = vmatpush.msra.mxu0 0.0
    %9605 = vmatpush.msra.mxu0 0.0
    %9606 = vmatpush.msra.mxu0 0.0
    %9607 = vmatpush.msra.mxu0 0.0
    %9608 = vmatpush.msra.mxu0 0.0
    %9609 = vmatpush.msra.mxu0 0.0
    %9610 = vmatpush.msra.mxu0 0.0
    %9611 = vmatpush.msra.mxu0 0.0
    %9612 = vmatpush.msra.mxu0 0.0
    %9613 = vmatpush.msra.mxu0 0.0
    %9614 = vmatpush.msra.mxu0 0.0
    %9615 = vmatpush.msra.mxu0 0.0
    %9616 = vmatpush.msra.mxu0 0.0
    %9617 = vmatpush.msra.mxu0 %v9520
    %9618 = vmatpush.msra.mxu0 %v9518
    %9619 = vmatpush.msra.mxu0 %v9516
    %9620 = vmatmul.f32.gmra.mxu0 %v7398
    %v9621 = vpop.f32.mrf.mxu0
    %v9622 = vadd.f32 %v9581, %v9621
    %9623 = vmatmul.f32.gmra.mxu0 %v7401
    %v9624 = vpop.f32.mrf.mxu0
    %v9625 = vadd.f32 %v9584, %v9624
    %9626 = vmatmul.f32.gmra.mxu0 %v7404
    %v9627 = vpop.f32.mrf.mxu0
    %v9628 = vadd.f32 %v9587, %v9627
    %9629 = vmatmul.f32.gmra.mxu0 %v7407
    %v9630 = vpop.f32.mrf.mxu0
    %v9631 = vadd.f32 %v9590, %v9630
    %9632 = vmatmul.f32.gmra.mxu0 %v7410
    %v9633 = vpop.f32.mrf.mxu0
    %v9634 = vadd.f32 %v9593, %v9633
    %9635 = vmatmul.f32.gmra.mxu0 %v7413
    %v9636 = vpop.f32.mrf.mxu0
    %v9637 = vadd.f32 %v9596, %v9636
    %9638 = vmatmul.f32.gmra.mxu0 %v7416
    %v9639 = vpop.f32.mrf.mxu0
    %v9640 = vadd.f32 %v9599, %v9639
    %9641 = vmatmul.f32.gmra.mxu0 %v7419
    %v9642 = vpop.f32.mrf.mxu0
    %v9643 = vadd.f32 %v9602, %v9642
    %9644 = vdwg.mxu0
    %9645 = vmatpush.msra.mxu0 %v9483
    %9646 = vmatpush.msra.mxu0 %v9481
    %9647 = vmatpush.msra.mxu0 %v9479
    %9648 = vmatpush.msra.mxu0 %v9477
    %9649 = vmatpush.msra.mxu0 %v9475
    %9650 = vmatpush.msra.mxu0 %v9473
    %9651 = vmatpush.msra.mxu0 %v9471
    %9652 = vmatpush.msra.mxu0 %v9469
    %9653 = vmatpush.msra.mxu0 %v9467
    %9654 = vmatpush.msra.mxu0 %v9465
    %9655 = vmatpush.msra.mxu0 %v9463
    %9656 = vmatpush.msra.mxu0 %v9461
    %9657 = vmatpush.msra.mxu0 %v9459
    %9658 = vmatpush.msra.mxu0 %v9457
    %9659 = vmatpush.msra.mxu0 %v9455
    %9660 = vmatpush.msra.mxu0 %v9453
    %9661 = vmatmul.f32.gmra.mxu0 %v6539
    %v9662 = vpop.f32.mrf.mxu0
    %v9663 = vadd.f32 0.0, %v9662
    %9664 = vmatmul.f32.gmra.mxu0 %v6542
    %v9665 = vpop.f32.mrf.mxu0
    %v9666 = vadd.f32 0.0, %v9665
    %9667 = vmatmul.f32.gmra.mxu0 %v6545
    %v9668 = vpop.f32.mrf.mxu0
    %v9669 = vadd.f32 0.0, %v9668
    %9670 = vmatmul.f32.gmra.mxu0 %v6548
    %v9671 = vpop.f32.mrf.mxu0
    %v9672 = vadd.f32 0.0, %v9671
    %9673 = vmatmul.f32.gmra.mxu0 %v6551
    %v9674 = vpop.f32.mrf.mxu0
    %v9675 = vadd.f32 0.0, %v9674
    %9676 = vmatmul.f32.gmra.mxu0 %v6554
    %v9677 = vpop.f32.mrf.mxu0
    %v9678 = vadd.f32 0.0, %v9677
    %9679 = vmatmul.f32.gmra.mxu0 %v6557
    %v9680 = vpop.f32.mrf.mxu0
    %v9681 = vadd.f32 0.0, %v9680
    %9682 = vmatmul.f32.gmra.mxu0 %v6560
    %v9683 = vpop.f32.mrf.mxu0
    %v9684 = vadd.f32 0.0, %v9683
    %9685 = vdwg.mxu0
    %9686 = vmatpush.msra.mxu0 %v9515
    %9687 = vmatpush.msra.mxu0 %v9513
    %9688 = vmatpush.msra.mxu0 %v9511
    %9689 = vmatpush.msra.mxu0 %v9509
    %9690 = vmatpush.msra.mxu0 %v9507
    %9691 = vmatpush.msra.mxu0 %v9505
    %9692 = vmatpush.msra.mxu0 %v9503
    %9693 = vmatpush.msra.mxu0 %v9501
    %9694 = vmatpush.msra.mxu0 %v9499
    %9695 = vmatpush.msra.mxu0 %v9497
    %9696 = vmatpush.msra.mxu0 %v9495
    %9697 = vmatpush.msra.mxu0 %v9493
    %9698 = vmatpush.msra.mxu0 %v9491
    %9699 = vmatpush.msra.mxu0 %v9489
    %9700 = vmatpush.msra.mxu0 %v9487
    %9701 = vmatpush.msra.mxu0 %v9485
    %9702 = vmatmul.f32.gmra.mxu0 %v6580
    %v9703 = vpop.f32.mrf.mxu0
    %v9704 = vadd.f32 %v9663, %v9703
    %9705 = vmatmul.f32.gmra.mxu0 %v6583
    %v9706 = vpop.f32.mrf.mxu0
    %v9707 = vadd.f32 %v9666, %v9706
    %9708 = vmatmul.f32.gmra.mxu0 %v6586
    %v9709 = vpop.f32.mrf.mxu0
    %v9710 = vadd.f32 %v9669, %v9709
    %9711 = vmatmul.f32.gmra.mxu0 %v6589
    %v9712 = vpop.f32.mrf.mxu0
    %v9713 = vadd.f32 %v9672, %v9712
    %9714 = vmatmul.f32.gmra.mxu0 %v6592
    %v9715 = vpop.f32.mrf.mxu0
    %v9716 = vadd.f32 %v9675, %v9715
    %9717 = vmatmul.f32.gmra.mxu0 %v6595
    %v9718 = vpop.f32.mrf.mxu0
    %v9719 = vadd.f32 %v9678, %v9718
    %9720 = vmatmul.f32.gmra.mxu0 %v6598
    %v9721 = vpop.f32.mrf.mxu0
    %v9722 = vadd.f32 %v9681, %v9721
    %9723 = vmatmul.f32.gmra.mxu0 %v6601
    %v9724 = vpop.f32.mrf.mxu0
    %v9725 = vadd.f32 %v9684, %v9724
    %9726 = vdwg.mxu0
    %9727 = vmatpush.msra.mxu0 0.0
    %9728 = vmatpush.msra.mxu0 0.0
    %9729 = vmatpush.msra.mxu0 0.0
    %9730 = vmatpush.msra.mxu0 0.0
    %9731 = vmatpush.msra.mxu0 0.0
    %9732 = vmatpush.msra.mxu0 0.0
    %9733 = vmatpush.msra.mxu0 0.0
    %9734 = vmatpush.msra.mxu0 0.0
    %9735 = vmatpush.msra.mxu0 0.0
    %9736 = vmatpush.msra.mxu0 0.0
    %9737 = vmatpush.msra.mxu0 0.0
    %9738 = vmatpush.msra.mxu0 0.0
    %9739 = vmatpush.msra.mxu0 0.0
    %9740 = vmatpush.msra.mxu0 %v9521
    %9741 = vmatpush.msra.mxu0 %v9519
    %9742 = vmatpush.msra.mxu0 %v9517
    %9743 = vmatmul.f32.gmra.mxu0 %v7398
    %v9744 = vpop.f32.mrf.mxu0
    %v9745 = vadd.f32 %v9704, %v9744
    %9746 = vmatmul.f32.gmra.mxu0 %v7401
    %v9747 = vpop.f32.mrf.mxu0
    %v9748 = vadd.f32 %v9707, %v9747
    %9749 = vmatmul.f32.gmra.mxu0 %v7404
    %v9750 = vpop.f32.mrf.mxu0
    %v9751 = vadd.f32 %v9710, %v9750
    %9752 = vmatmul.f32.gmra.mxu0 %v7407
    %v9753 = vpop.f32.mrf.mxu0
    %v9754 = vadd.f32 %v9713, %v9753
    %9755 = vmatmul.f32.gmra.mxu0 %v7410
    %v9756 = vpop.f32.mrf.mxu0
    %v9757 = vadd.f32 %v9716, %v9756
    %9758 = vmatmul.f32.gmra.mxu0 %v7413
    %v9759 = vpop.f32.mrf.mxu0
    %v9760 = vadd.f32 %v9719, %v9759
    %9761 = vmatmul.f32.gmra.mxu0 %v7416
    %v9762 = vpop.f32.mrf.mxu0
    %v9763 = vadd.f32 %v9722, %v9762
    %9764 = vmatmul.f32.gmra.mxu0 %v7419
    %v9765 = vpop.f32.mrf.mxu0
    %v9766 = vadd.f32 %v9725, %v9765
    %9767 = vdwg.mxu0
    %v9768 = vadd.f32 %v9305, %v9622
    %v9769 = vadd.f32 %v9428, %v9745
    %v9770 = vadd.f32 %v9308, %v9625
    %v9771 = vadd.f32 %v9431, %v9748
    %v9772 = vadd.f32 %v9311, %v9628
    %v9773 = vadd.f32 %v9434, %v9751
    %v9774 = vadd.f32 %v9314, %v9631
    %v9775 = vadd.f32 %v9437, %v9754
    %v9776 = vadd.f32 %v9317, %v9634
    %v9777 = vadd.f32 %v9440, %v9757
    %v9778 = vadd.f32 %v9320, %v9637
    %v9779 = vadd.f32 %v9443, %v9760
    %v9780 = vadd.f32 %v9323, %v9640
    %v9781 = vadd.f32 %v9446, %v9763
    %v9782 = vadd.f32 %v9326, %v9643
    %v9783 = vadd.f32 %v9449, %v9766
    %v9784 = vadd.f32 %v9768, %v7685
    %v9785 = vadd.f32 %v9769, %v7686
    %v9786 = vadd.f32 %v9770, %v7685
    %v9787 = vadd.f32 %v9771, %v7686
    %v9788 = vadd.f32 %v9772, %v7685
    %v9789 = vadd.f32 %v9773, %v7686
    %v9790 = vadd.f32 %v9774, %v7685
    %v9791 = vadd.f32 %v9775, %v7686
    %v9792 = vadd.f32 %v9776, %v7685
    %v9793 = vadd.f32 %v9777, %v7686
    %v9794 = vadd.f32 %v9778, %v7685
    %v9795 = vadd.f32 %v9779, %v7686
    %v9796 = vadd.f32 %v9780, %v7685
    %v9797 = vadd.f32 %v9781, %v7686
    %v9798 = vadd.f32 %v9782, %v7685
    %v9799 = vadd.f32 %v9783, %v7686
    %v9800 = vmax.f32 %v9784, 0.0
    %v9801 = vmax.f32 %v9785, 0.0
    %v9802 = vmax.f32 %v9786, 0.0
    %v9803 = vmax.f32 %v9787, 0.0
    %v9804 = vmax.f32 %v9788, 0.0
    %v9805 = vmax.f32 %v9789, 0.0
    %v9806 = vmax.f32 %v9790, 0.0
    %v9807 = vmax.f32 %v9791, 0.0
    %v9808 = vmax.f32 %v9792, 0.0
    %v9809 = vmax.f32 %v9793, 0.0
    %v9810 = vmax.f32 %v9794, 0.0
    %v9811 = vmax.f32 %v9795, 0.0
    %v9812 = vmax.f32 %v9796, 0.0
    %v9813 = vmax.f32 %v9797, 0.0
    %v9814 = vmax.f32 %v9798, 0.0
    %v9815 = vmax.f32 %v9799, 0.0
    %v9816 = vmin.f32 %v9784, 0.0
    %v9817 = vmin.f32 %v9785, 0.0
    %v9818 = vmin.f32 %v9786, 0.0
    %v9819 = vmin.f32 %v9787, 0.0
    %v9820 = vmin.f32 %v9788, 0.0
    %v9821 = vmin.f32 %v9789, 0.0
    %v9822 = vmin.f32 %v9790, 0.0
    %v9823 = vmin.f32 %v9791, 0.0
    %v9824 = vmin.f32 %v9792, 0.0
    %v9825 = vmin.f32 %v9793, 0.0
    %v9826 = vmin.f32 %v9794, 0.0
    %v9827 = vmin.f32 %v9795, 0.0
    %v9828 = vmin.f32 %v9796, 0.0
    %v9829 = vmin.f32 %v9797, 0.0
    %v9830 = vmin.f32 %v9798, 0.0
    %v9831 = vmin.f32 %v9799, 0.0
    %v9832 = vmul.f32 %v7737, %v9816
    %v9833 = vmul.f32 %v7737, %v9817
    %v9834 = vmul.f32 %v7737, %v9818
    %v9835 = vmul.f32 %v7737, %v9819
    %v9836 = vmul.f32 %v7737, %v9820
    %v9837 = vmul.f32 %v7737, %v9821
    %v9838 = vmul.f32 %v7737, %v9822
    %v9839 = vmul.f32 %v7737, %v9823
    %v9840 = vmul.f32 %v7737, %v9824
    %v9841 = vmul.f32 %v7737, %v9825
    %v9842 = vmul.f32 %v7737, %v9826
    %v9843 = vmul.f32 %v7737, %v9827
    %v9844 = vmul.f32 %v7737, %v9828
    %v9845 = vmul.f32 %v7737, %v9829
    %v9846 = vmul.f32 %v7737, %v9830
    %v9847 = vmul.f32 %v7737, %v9831
    %v9848 = vadd.f32 %v9800, %v9832
    %v9849 = vadd.f32 %v9801, %v9833
    %v9850 = vadd.f32 %v9802, %v9834
    %v9851 = vadd.f32 %v9803, %v9835
    %v9852 = vadd.f32 %v9804, %v9836
    %v9853 = vadd.f32 %v9805, %v9837
    %v9854 = vadd.f32 %v9806, %v9838
    %v9855 = vadd.f32 %v9807, %v9839
    %v9856 = vadd.f32 %v9808, %v9840
    %v9857 = vadd.f32 %v9809, %v9841
    %v9858 = vadd.f32 %v9810, %v9842
    %v9859 = vadd.f32 %v9811, %v9843
    %v9860 = vadd.f32 %v9812, %v9844
    %v9861 = vadd.f32 %v9813, %v9845
    %v9862 = vadd.f32 %v9814, %v9846
    %v9863 = vadd.f32 %v9815, %v9847
    %v9864 = vmax.f32 %v8801, %v9848
    %v9865 = vmax.f32 %v8802, %v9849
    %v9866 = vmax.f32 %v8803, %v9850
    %v9867 = vmax.f32 %v8804, %v9851
    %v9868 = vmax.f32 %v8805, %v9852
    %v9869 = vmax.f32 %v8806, %v9853
    %v9870 = vmax.f32 %v8807, %v9854
    %v9871 = vmax.f32 %v8808, %v9855
    %v9872 = vmax.f32 %v8809, %v9856
    %v9873 = vmax.f32 %v8810, %v9857
    %v9874 = vmax.f32 %v8811, %v9858
    %v9875 = vmax.f32 %v8812, %v9859
    %v9876 = vmax.f32 %v8813, %v9860
    %v9877 = vmax.f32 %v8814, %v9861
    %v9878 = vmax.f32 %v8815, %v9862
    %v9879 = vmax.f32 %v8816, %v9863
    %v9880 = vmax.f32 %v7754, %v9864
    %v9881 = vmax.f32 %v7755, %v9865
    %v9882 = vmax.f32 %v7756, %v9866
    %v9883 = vmax.f32 %v7757, %v9867
    %v9884 = vmax.f32 %v7758, %v9868
    %v9885 = vmax.f32 %v7759, %v9869
    %v9886 = vmax.f32 %v7760, %v9870
    %v9887 = vmax.f32 %v7761, %v9871
    %v9888 = vmax.f32 %v7762, %v9872
    %v9889 = vmax.f32 %v7763, %v9873
    %v9890 = vmax.f32 %v7764, %v9874
    %v9891 = vmax.f32 %v7765, %v9875
    %v9892 = vmax.f32 %v7766, %v9876
    %v9893 = vmax.f32 %v7767, %v9877
    %v9894 = vmax.f32 %v7768, %v9878
    %v9895 = vmax.f32 %v7769, %v9879
    %v9896 = vld [vmem:[#allocation11] sm:$0xff]
    %v9897 = vld [vmem:[#allocation11 + $0x8] sm:$0xff]
    %v9898 = vld [vmem:[#allocation11 + $0x10] sm:$0xff]
    %v9900 = vsel %vm310, %v9896, 0
    %v9903 = vsel %vm310, %v9897, 0
    %v9906 = vsel %vm310, %v9898, 0
    %9908 = vmatpush.msra.mxu0 0.0
    %9909 = vmatpush.msra.mxu0 0.0
    %9910 = vmatpush.msra.mxu0 0.0
    %9911 = vmatpush.msra.mxu0 0.0
    %9912 = vmatpush.msra.mxu0 0.0
    %9913 = vmatpush.msra.mxu0 0.0
    %9914 = vmatpush.msra.mxu0 0.0
    %9915 = vmatpush.msra.mxu0 0.0
    %9916 = vmatpush.msra.mxu0 %v9894
    %9917 = vmatpush.msra.mxu0 %v9892
    %9918 = vmatpush.msra.mxu0 %v9890
    %9919 = vmatpush.msra.mxu0 %v9888
    %9920 = vmatpush.msra.mxu0 %v9886
    %9921 = vmatpush.msra.mxu0 %v9884
    %9922 = vmatpush.msra.mxu0 %v9882
    %9923 = vmatpush.msra.mxu0 %v9880
    %9924 = vmatmul.f32.gmra.mxu0 %v9900
    %v9925 = vpop.f32.mrf.mxu0
    %v9926 = vadd.f32 0.0, %v9925
    %9927 = vmatmul.f32.gmra.mxu0 %v9903
    %v9928 = vpop.f32.mrf.mxu0
    %v9929 = vadd.f32 0.0, %v9928
    %9930 = vmatmul.f32.gmra.mxu0 %v9906
    %v9931 = vpop.f32.mrf.mxu0
    %v9932 = vadd.f32 0.0, %v9931
    %9933 = vdwg.mxu0
    %9934 = vmatpush.msra.mxu0 0.0
    %9935 = vmatpush.msra.mxu0 0.0
    %9936 = vmatpush.msra.mxu0 0.0
    %9937 = vmatpush.msra.mxu0 0.0
    %9938 = vmatpush.msra.mxu0 0.0
    %9939 = vmatpush.msra.mxu0 0.0
    %9940 = vmatpush.msra.mxu0 0.0
    %9941 = vmatpush.msra.mxu0 0.0
    %9942 = vmatpush.msra.mxu0 %v9895
    %9943 = vmatpush.msra.mxu0 %v9893
    %9944 = vmatpush.msra.mxu0 %v9891
    %9945 = vmatpush.msra.mxu0 %v9889
    %9946 = vmatpush.msra.mxu0 %v9887
    %9947 = vmatpush.msra.mxu0 %v9885
    %9948 = vmatpush.msra.mxu0 %v9883
    %9949 = vmatpush.msra.mxu0 %v9881
    %9950 = vmatmul.f32.gmra.mxu0 %v9900
    %v9951 = vpop.f32.mrf.mxu0
    %v9952 = vadd.f32 0.0, %v9951
    %9953 = vmatmul.f32.gmra.mxu0 %v9903
    %v9954 = vpop.f32.mrf.mxu0
    %v9955 = vadd.f32 0.0, %v9954
    %9956 = vmatmul.f32.gmra.mxu0 %v9906
    %v9957 = vpop.f32.mrf.mxu0
    %v9958 = vadd.f32 0.0, %v9957
    %9959 = vdwg.mxu0
    %s9960 = scalar_lea.vmem [#allocation11], 24
    %v9961 = vld [vmem:[%s9960] sm:$0xff]
    %v9962 = vld [vmem:[%s9960 + $0x8] sm:$0xff]
    %v9963 = vld [vmem:[%s9960 + $0x10] sm:$0xff]
    %v9965 = vsel %vm310, %v9961, 0
    %v9968 = vsel %vm310, %v9962, 0
    %v9971 = vsel %vm310, %v9963, 0
    %9973 = vmatpush.msra.mxu0 0.0
    %9974 = vmatpush.msra.mxu0 0.0
    %9975 = vmatpush.msra.mxu0 0.0
    %9976 = vmatpush.msra.mxu0 0.0
    %9977 = vmatpush.msra.mxu0 0.0
    %9978 = vmatpush.msra.mxu0 0.0
    %9979 = vmatpush.msra.mxu0 0.0
    %9980 = vmatpush.msra.mxu0 0.0
    %9981 = vmatpush.msra.mxu0 %v9894
    %9982 = vmatpush.msra.mxu0 %v9892
    %9983 = vmatpush.msra.mxu0 %v9890
    %9984 = vmatpush.msra.mxu0 %v9888
    %9985 = vmatpush.msra.mxu0 %v9886
    %9986 = vmatpush.msra.mxu0 %v9884
    %9987 = vmatpush.msra.mxu0 %v9882
    %9988 = vmatpush.msra.mxu0 %v9880
    %9989 = vmatmul.f32.gmra.mxu0 %v9965
    %v9990 = vpop.f32.mrf.mxu0
    %v9991 = vadd.f32 0.0, %v9990
    %9992 = vmatmul.f32.gmra.mxu0 %v9968
    %v9993 = vpop.f32.mrf.mxu0
    %v9994 = vadd.f32 0.0, %v9993
    %9995 = vmatmul.f32.gmra.mxu0 %v9971
    %v9996 = vpop.f32.mrf.mxu0
    %v9997 = vadd.f32 0.0, %v9996
    %9998 = vdwg.mxu0
    %9999 = vmatpush.msra.mxu0 0.0
    %10000 = vmatpush.msra.mxu0 0.0
    %10001 = vmatpush.msra.mxu0 0.0
    %10002 = vmatpush.msra.mxu0 0.0
    %10003 = vmatpush.msra.mxu0 0.0
    %10004 = vmatpush.msra.mxu0 0.0
    %10005 = vmatpush.msra.mxu0 0.0
    %10006 = vmatpush.msra.mxu0 0.0
    %10007 = vmatpush.msra.mxu0 %v9895
    %10008 = vmatpush.msra.mxu0 %v9893
    %10009 = vmatpush.msra.mxu0 %v9891
    %10010 = vmatpush.msra.mxu0 %v9889
    %10011 = vmatpush.msra.mxu0 %v9887
    %10012 = vmatpush.msra.mxu0 %v9885
    %10013 = vmatpush.msra.mxu0 %v9883
    %10014 = vmatpush.msra.mxu0 %v9881
    %10015 = vmatmul.f32.gmra.mxu0 %v9965
    %v10016 = vpop.f32.mrf.mxu0
    %v10017 = vadd.f32 0.0, %v10016
    %10018 = vmatmul.f32.gmra.mxu0 %v9968
    %v10019 = vpop.f32.mrf.mxu0
    %v10020 = vadd.f32 0.0, %v10019
    %10021 = vmatmul.f32.gmra.mxu0 %v9971
    %v10022 = vpop.f32.mrf.mxu0
    %v10023 = vadd.f32 0.0, %v10022
    %10024 = vdwg.mxu0
    %s10025 = scalar_lea.vmem [#allocation11], 48
    %v10026 = vld [vmem:[%s10025] sm:$0xff]
    %v10027 = vld [vmem:[%s10025 + $0x8] sm:$0xff]
    %v10028 = vld [vmem:[%s10025 + $0x10] sm:$0xff]
    %v10030 = vsel %vm310, %v10026, 0
    %v10033 = vsel %vm310, %v10027, 0
    %v10036 = vsel %vm310, %v10028, 0
    %10038 = vmatpush.msra.mxu0 0.0
    %10039 = vmatpush.msra.mxu0 0.0
    %10040 = vmatpush.msra.mxu0 0.0
    %10041 = vmatpush.msra.mxu0 0.0
    %10042 = vmatpush.msra.mxu0 0.0
    %10043 = vmatpush.msra.mxu0 0.0
    %10044 = vmatpush.msra.mxu0 0.0
    %10045 = vmatpush.msra.mxu0 0.0
    %10046 = vmatpush.msra.mxu0 %v9894
    %10047 = vmatpush.msra.mxu0 %v9892
    %10048 = vmatpush.msra.mxu0 %v9890
    %10049 = vmatpush.msra.mxu0 %v9888
    %10050 = vmatpush.msra.mxu0 %v9886
    %10051 = vmatpush.msra.mxu0 %v9884
    %10052 = vmatpush.msra.mxu0 %v9882
    %10053 = vmatpush.msra.mxu0 %v9880
    %10054 = vmatmul.f32.gmra.mxu0 %v10030
    %v10055 = vpop.f32.mrf.mxu0
    %v10056 = vadd.f32 0.0, %v10055
    %10057 = vmatmul.f32.gmra.mxu0 %v10033
    %v10058 = vpop.f32.mrf.mxu0
    %v10059 = vadd.f32 0.0, %v10058
    %10060 = vmatmul.f32.gmra.mxu0 %v10036
    %v10061 = vpop.f32.mrf.mxu0
    %v10062 = vadd.f32 0.0, %v10061
    %10063 = vdwg.mxu0
    %10064 = vmatpush.msra.mxu0 0.0
    %10065 = vmatpush.msra.mxu0 0.0
    %10066 = vmatpush.msra.mxu0 0.0
    %10067 = vmatpush.msra.mxu0 0.0
    %10068 = vmatpush.msra.mxu0 0.0
    %10069 = vmatpush.msra.mxu0 0.0
    %10070 = vmatpush.msra.mxu0 0.0
    %10071 = vmatpush.msra.mxu0 0.0
    %10072 = vmatpush.msra.mxu0 %v9895
    %10073 = vmatpush.msra.mxu0 %v9893
    %10074 = vmatpush.msra.mxu0 %v9891
    %10075 = vmatpush.msra.mxu0 %v9889
    %10076 = vmatpush.msra.mxu0 %v9887
    %10077 = vmatpush.msra.mxu0 %v9885
    %10078 = vmatpush.msra.mxu0 %v9883
    %10079 = vmatpush.msra.mxu0 %v9881
    %10080 = vmatmul.f32.gmra.mxu0 %v10030
    %v10081 = vpop.f32.mrf.mxu0
    %v10082 = vadd.f32 0.0, %v10081
    %10083 = vmatmul.f32.gmra.mxu0 %v10033
    %v10084 = vpop.f32.mrf.mxu0
    %v10085 = vadd.f32 0.0, %v10084
    %10086 = vmatmul.f32.gmra.mxu0 %v10036
    %v10087 = vpop.f32.mrf.mxu0
    %v10088 = vadd.f32 0.0, %v10087
    %10089 = vdwg.mxu0
    %v10090 = vmax.f32 %v9991, %v10056
    %v10091 = vmax.f32 %v10017, %v10082
    %v10092 = vmax.f32 %v9994, %v10059
    %v10093 = vmax.f32 %v10020, %v10085
    %v10094 = vmax.f32 %v9997, %v10062
    %v10095 = vmax.f32 %v10023, %v10088
    %v10096 = vmax.f32 %v9926, %v10090
    %v10097 = vmax.f32 %v9952, %v10091
    %v10098 = vmax.f32 %v9929, %v10092
    %v10099 = vmax.f32 %v9955, %v10093
    %v10100 = vmax.f32 %v9932, %v10094
    %v10101 = vmax.f32 %v9958, %v10095
    %v10102 = vld [vmem:[#allocation13] sm:$0xff]
    %v10104 = vsel %vm6785, %v10102, 0
    %10106 = vmatpush.msra.mxu0 0.0
    %10107 = vmatpush.msra.mxu0 0.0
    %10108 = vmatpush.msra.mxu0 0.0
    %10109 = vmatpush.msra.mxu0 0.0
    %10110 = vmatpush.msra.mxu0 0.0
    %10111 = vmatpush.msra.mxu0 0.0
    %10112 = vmatpush.msra.mxu0 0.0
    %10113 = vmatpush.msra.mxu0 0.0
    %10114 = vmatpush.msra.mxu0 0.0
    %10115 = vmatpush.msra.mxu0 0.0
    %10116 = vmatpush.msra.mxu0 0.0
    %10117 = vmatpush.msra.mxu0 0.0
    %10118 = vmatpush.msra.mxu0 0.0
    %10119 = vmatpush.msra.mxu0 %v10100
    %10120 = vmatpush.msra.mxu0 %v10098
    %10121 = vmatpush.msra.mxu0 %v10096
    %10122 = vmatmul.f32.gmra.mxu0 %v10104
    %v10123 = vpop.f32.mrf.mxu0
    %v10124 = vadd.f32 0.0, %v10123
    %10125 = vdwg.mxu0
    %10126 = vmatpush.msra.mxu0 0.0
    %10127 = vmatpush.msra.mxu0 0.0
    %10128 = vmatpush.msra.mxu0 0.0
    %10129 = vmatpush.msra.mxu0 0.0
    %10130 = vmatpush.msra.mxu0 0.0
    %10131 = vmatpush.msra.mxu0 0.0
    %10132 = vmatpush.msra.mxu0 0.0
    %10133 = vmatpush.msra.mxu0 0.0
    %10134 = vmatpush.msra.mxu0 0.0
    %10135 = vmatpush.msra.mxu0 0.0
    %10136 = vmatpush.msra.mxu0 0.0
    %10137 = vmatpush.msra.mxu0 0.0
    %10138 = vmatpush.msra.mxu0 0.0
    %10139 = vmatpush.msra.mxu0 %v10101
    %10140 = vmatpush.msra.mxu0 %v10099
    %10141 = vmatpush.msra.mxu0 %v10097
    %10142 = vmatmul.f32.gmra.mxu0 %v10104
    %v10143 = vpop.f32.mrf.mxu0
    %v10144 = vadd.f32 0.0, %v10143
    %10145 = vdwg.mxu0
    %v10146 = vld [vmem:[#allocation14] sm:$0xff]
    %v10147 = vld [vmem:[#allocation14 + $0x8] sm:$0xff]
    %v10148 = vld [vmem:[#allocation14 + $0x10] sm:$0xff]
    %v10149 = vld [vmem:[#allocation14 + $0x18] sm:$0xff]
    %v10150 = vld [vmem:[#allocation14 + $0x20] sm:$0xff]
    %v10151 = vld [vmem:[#allocation14 + $0x28] sm:$0xff]
    %v10152 = vld [vmem:[#allocation14 + $0x30] sm:$0xff]
    %v10153 = vld [vmem:[#allocation14 + $0x38] sm:$0xff]
    %v10154 = vld [vmem:[#allocation14 + $0x40] sm:$0xff]
    %v10155 = vld [vmem:[#allocation14 + $0x48] sm:$0xff]
    %v10156 = vld [vmem:[#allocation14 + $0x50] sm:$0xff]
    %v10157 = vld [vmem:[#allocation14 + $0x58] sm:$0xff]
    %v10158 = vld [vmem:[#allocation14 + $0x60] sm:$0xff]
    %v10159 = vld [vmem:[#allocation14 + $0x68] sm:$0xff]
    %v10160 = vld [vmem:[#allocation14 + $0x70] sm:$0xff]
    %v10161 = vld [vmem:[#allocation14 + $0x78] sm:$0xff]
    %v10162 = vld [vmem:[#allocation14 + $0x80] sm:$0xff]
    %v10163 = vld [vmem:[#allocation14 + $0x88] sm:$0xff]
    %v10164 = vld [vmem:[#allocation14 + $0x90] sm:$0xff]
    %v10165 = vld [vmem:[#allocation14 + $0x98] sm:$0xff]
    %v10166 = vld [vmem:[#allocation14 + $0xa0] sm:$0xff]
    %v10167 = vld [vmem:[#allocation14 + $0xa8] sm:$0xff]
    %v10168 = vld [vmem:[#allocation14 + $0xb0] sm:$0xff]
    %v10169 = vld [vmem:[#allocation14 + $0xb8] sm:$0xff]
    %v10170 = vld [vmem:[#allocation14 + $0xc0] sm:$0xff]
    %v10171 = vld [vmem:[#allocation14 + $0xc8] sm:$0xff]
    %v10172 = vld [vmem:[#allocation14 + $0xd0] sm:$0xff]
    %v10173 = vld [vmem:[#allocation14 + $0xd8] sm:$0xff]
    %v10174 = vld [vmem:[#allocation14 + $0xe0] sm:$0xff]
    %v10175 = vld [vmem:[#allocation14 + $0xe8] sm:$0xff]
    %v10176 = vld [vmem:[#allocation14 + $0xf0] sm:$0xff]
    %v10177 = vld [vmem:[#allocation14 + $0xf8] sm:$0xff]
    %v10178 = vld [vmem:[#allocation14 + $0x100] sm:$0xff]
    %v10179 = vld [vmem:[#allocation14 + $0x108] sm:$0xff]
    %v10180 = vld [vmem:[#allocation14 + $0x110] sm:$0xff]
    %v10181 = vld [vmem:[#allocation14 + $0x118] sm:$0xff]
    %s10182 = scalar_lea.vmem [#allocation13], 8
    %v10183 = vld [vmem:[%s10182] sm:$0xff]
    %v10185 = vsel %vm6785, %v10183, 0
    %10187 = vmatpush.msra.mxu0 0.0
    %10188 = vmatpush.msra.mxu0 0.0
    %10189 = vmatpush.msra.mxu0 0.0
    %10190 = vmatpush.msra.mxu0 0.0
    %10191 = vmatpush.msra.mxu0 0.0
    %10192 = vmatpush.msra.mxu0 0.0
    %10193 = vmatpush.msra.mxu0 0.0
    %10194 = vmatpush.msra.mxu0 0.0
    %10195 = vmatpush.msra.mxu0 0.0
    %10196 = vmatpush.msra.mxu0 0.0
    %10197 = vmatpush.msra.mxu0 0.0
    %10198 = vmatpush.msra.mxu0 0.0
    %10199 = vmatpush.msra.mxu0 0.0
    %10200 = vmatpush.msra.mxu0 %v10100
    %10201 = vmatpush.msra.mxu0 %v10098
    %10202 = vmatpush.msra.mxu0 %v10096
    %10203 = vmatmul.f32.gmra.mxu0 %v10185
    %v10204 = vpop.f32.mrf.mxu0
    %v10205 = vadd.f32 0.0, %v10204
    %10206 = vdwg.mxu0
    %10207 = vmatpush.msra.mxu0 0.0
    %10208 = vmatpush.msra.mxu0 0.0
    %10209 = vmatpush.msra.mxu0 0.0
    %10210 = vmatpush.msra.mxu0 0.0
    %10211 = vmatpush.msra.mxu0 0.0
    %10212 = vmatpush.msra.mxu0 0.0
    %10213 = vmatpush.msra.mxu0 0.0
    %10214 = vmatpush.msra.mxu0 0.0
    %10215 = vmatpush.msra.mxu0 0.0
    %10216 = vmatpush.msra.mxu0 0.0
    %10217 = vmatpush.msra.mxu0 0.0
    %10218 = vmatpush.msra.mxu0 0.0
    %10219 = vmatpush.msra.mxu0 0.0
    %10220 = vmatpush.msra.mxu0 %v10101
    %10221 = vmatpush.msra.mxu0 %v10099
    %10222 = vmatpush.msra.mxu0 %v10097
    %10223 = vmatmul.f32.gmra.mxu0 %v10185
    %v10224 = vpop.f32.mrf.mxu0
    %v10225 = vadd.f32 0.0, %v10224
    %10226 = vdwg.mxu0
    %s10227 = scalar_lea.vmem [#allocation14], 288
    %v10228 = vld [vmem:[%s10227] sm:$0xff]
    %v10229 = vld [vmem:[%s10227 + $0x8] sm:$0xff]
    %v10230 = vld [vmem:[%s10227 + $0x10] sm:$0xff]
    %v10231 = vld [vmem:[%s10227 + $0x18] sm:$0xff]
    %v10232 = vld [vmem:[%s10227 + $0x20] sm:$0xff]
    %v10233 = vld [vmem:[%s10227 + $0x28] sm:$0xff]
    %v10234 = vld [vmem:[%s10227 + $0x30] sm:$0xff]
    %v10235 = vld [vmem:[%s10227 + $0x38] sm:$0xff]
    %v10236 = vld [vmem:[%s10227 + $0x40] sm:$0xff]
    %v10237 = vld [vmem:[%s10227 + $0x48] sm:$0xff]
    %v10238 = vld [vmem:[%s10227 + $0x50] sm:$0xff]
    %v10239 = vld [vmem:[%s10227 + $0x58] sm:$0xff]
    %v10240 = vld [vmem:[%s10227 + $0x60] sm:$0xff]
    %v10241 = vld [vmem:[%s10227 + $0x68] sm:$0xff]
    %v10242 = vld [vmem:[%s10227 + $0x70] sm:$0xff]
    %v10243 = vld [vmem:[%s10227 + $0x78] sm:$0xff]
    %v10244 = vld [vmem:[%s10227 + $0x80] sm:$0xff]
    %v10245 = vld [vmem:[%s10227 + $0x88] sm:$0xff]
    %v10246 = vld [vmem:[%s10227 + $0x90] sm:$0xff]
    %v10247 = vld [vmem:[%s10227 + $0x98] sm:$0xff]
    %v10248 = vld [vmem:[%s10227 + $0xa0] sm:$0xff]
    %v10249 = vld [vmem:[%s10227 + $0xa8] sm:$0xff]
    %v10250 = vld [vmem:[%s10227 + $0xb0] sm:$0xff]
    %v10251 = vld [vmem:[%s10227 + $0xb8] sm:$0xff]
    %v10252 = vld [vmem:[%s10227 + $0xc0] sm:$0xff]
    %v10253 = vld [vmem:[%s10227 + $0xc8] sm:$0xff]
    %v10254 = vld [vmem:[%s10227 + $0xd0] sm:$0xff]
    %v10255 = vld [vmem:[%s10227 + $0xd8] sm:$0xff]
    %v10256 = vld [vmem:[%s10227 + $0xe0] sm:$0xff]
    %v10257 = vld [vmem:[%s10227 + $0xe8] sm:$0xff]
    %v10258 = vld [vmem:[%s10227 + $0xf0] sm:$0xff]
    %v10259 = vld [vmem:[%s10227 + $0xf8] sm:$0xff]
    %v10260 = vld [vmem:[%s10227 + $0x100] sm:$0xff]
    %v10261 = vld [vmem:[%s10227 + $0x108] sm:$0xff]
    %v10262 = vld [vmem:[%s10227 + $0x110] sm:$0xff]
    %v10263 = vld [vmem:[%s10227 + $0x118] sm:$0xff]
    %vm10264 = vcmask 130048
    %v10266 = vsel %vm10264, %v10225, 0
    %10268 = vmatpush.msra.mxu0 %v10258
    %10269 = vmatpush.msra.mxu0 %v10256
    %10270 = vmatpush.msra.mxu0 %v10254
    %10271 = vmatpush.msra.mxu0 %v10252
    %10272 = vmatpush.msra.mxu0 %v10250
    %10273 = vmatpush.msra.mxu0 %v10248
    %10274 = vmatpush.msra.mxu0 %v10246
    %10275 = vmatpush.msra.mxu0 %v10244
    %10276 = vmatpush.msra.mxu0 %v10242
    %10277 = vmatpush.msra.mxu0 %v10240
    %10278 = vmatpush.msra.mxu0 %v10238
    %10279 = vmatpush.msra.mxu0 %v10236
    %10280 = vmatpush.msra.mxu0 %v10234
    %10281 = vmatpush.msra.mxu0 %v10232
    %10282 = vmatpush.msra.mxu0 %v10230
    %10283 = vmatpush.msra.mxu0 %v10228
    %10284 = vmatmul.f32.gmra.mxu0 %v10205
    %v10285 = vpop.f32.mrf.mxu0
    %v10286 = vadd.f32 0.0, %v10285
    %10287 = vdwg.mxu0
    %10288 = vmatpush.msra.mxu0 0.0
    %10289 = vmatpush.msra.mxu0 0.0
    %10290 = vmatpush.msra.mxu0 0.0
    %10291 = vmatpush.msra.mxu0 0.0
    %10292 = vmatpush.msra.mxu0 0.0
    %10293 = vmatpush.msra.mxu0 0.0
    %10294 = vmatpush.msra.mxu0 0.0
    %10295 = vmatpush.msra.mxu0 0.0
    %10296 = vmatpush.msra.mxu0 0.0
    %10297 = vmatpush.msra.mxu0 0.0
    %10298 = vmatpush.msra.mxu0 0.0
    %10299 = vmatpush.msra.mxu0 0.0
    %10300 = vmatpush.msra.mxu0 0.0
    %10301 = vmatpush.msra.mxu0 0.0
    %10302 = vmatpush.msra.mxu0 %v10262
    %10303 = vmatpush.msra.mxu0 %v10260
    %10304 = vmatmul.f32.gmra.mxu0 %v10266
    %v10305 = vpop.f32.mrf.mxu0
    %v10306 = vadd.f32 %v10286, %v10305
    %10307 = vdwg.mxu0
    %10308 = vmatpush.msra.mxu0 %v10259
    %10309 = vmatpush.msra.mxu0 %v10257
    %10310 = vmatpush.msra.mxu0 %v10255
    %10311 = vmatpush.msra.mxu0 %v10253
    %10312 = vmatpush.msra.mxu0 %v10251
    %10313 = vmatpush.msra.mxu0 %v10249
    %10314 = vmatpush.msra.mxu0 %v10247
    %10315 = vmatpush.msra.mxu0 %v10245
    %10316 = vmatpush.msra.mxu0 %v10243
    %10317 = vmatpush.msra.mxu0 %v10241
    %10318 = vmatpush.msra.mxu0 %v10239
    %10319 = vmatpush.msra.mxu0 %v10237
    %10320 = vmatpush.msra.mxu0 %v10235
    %10321 = vmatpush.msra.mxu0 %v10233
    %10322 = vmatpush.msra.mxu0 %v10231
    %10323 = vmatpush.msra.mxu0 %v10229
    %10324 = vmatmul.f32.gmra.mxu0 %v10205
    %v10325 = vpop.f32.mrf.mxu0
    %v10326 = vadd.f32 0.0, %v10325
    %10327 = vdwg.mxu0
    %10328 = vmatpush.msra.mxu0 0.0
    %10329 = vmatpush.msra.mxu0 0.0
    %10330 = vmatpush.msra.mxu0 0.0
    %10331 = vmatpush.msra.mxu0 0.0
    %10332 = vmatpush.msra.mxu0 0.0
    %10333 = vmatpush.msra.mxu0 0.0
    %10334 = vmatpush.msra.mxu0 0.0
    %10335 = vmatpush.msra.mxu0 0.0
    %10336 = vmatpush.msra.mxu0 0.0
    %10337 = vmatpush.msra.mxu0 0.0
    %10338 = vmatpush.msra.mxu0 0.0
    %10339 = vmatpush.msra.mxu0 0.0
    %10340 = vmatpush.msra.mxu0 0.0
    %10341 = vmatpush.msra.mxu0 0.0
    %10342 = vmatpush.msra.mxu0 %v10263
    %10343 = vmatpush.msra.mxu0 %v10261
    %10344 = vmatmul.f32.gmra.mxu0 %v10266
    %v10345 = vpop.f32.mrf.mxu0
    %v10346 = vadd.f32 %v10326, %v10345
    %10347 = vdwg.mxu0
    %v10349 = vsel %vm10264, %v10144, 0
    %10351 = vmatpush.msra.mxu0 %v10176
    %10352 = vmatpush.msra.mxu0 %v10174
    %10353 = vmatpush.msra.mxu0 %v10172
    %10354 = vmatpush.msra.mxu0 %v10170
    %10355 = vmatpush.msra.mxu0 %v10168
    %10356 = vmatpush.msra.mxu0 %v10166
    %10357 = vmatpush.msra.mxu0 %v10164
    %10358 = vmatpush.msra.mxu0 %v10162
    %10359 = vmatpush.msra.mxu0 %v10160
    %10360 = vmatpush.msra.mxu0 %v10158
    %10361 = vmatpush.msra.mxu0 %v10156
    %10362 = vmatpush.msra.mxu0 %v10154
    %10363 = vmatpush.msra.mxu0 %v10152
    %10364 = vmatpush.msra.mxu0 %v10150
    %10365 = vmatpush.msra.mxu0 %v10148
    %10366 = vmatpush.msra.mxu0 %v10146
    %10367 = vmatmul.f32.gmra.mxu0 %v10124
    %v10368 = vpop.f32.mrf.mxu0
    %v10369 = vadd.f32 %v10306, %v10368
    %10370 = vdwg.mxu0
    %10371 = vmatpush.msra.mxu0 0.0
    %10372 = vmatpush.msra.mxu0 0.0
    %10373 = vmatpush.msra.mxu0 0.0
    %10374 = vmatpush.msra.mxu0 0.0
    %10375 = vmatpush.msra.mxu0 0.0
    %10376 = vmatpush.msra.mxu0 0.0
    %10377 = vmatpush.msra.mxu0 0.0
    %10378 = vmatpush.msra.mxu0 0.0
    %10379 = vmatpush.msra.mxu0 0.0
    %10380 = vmatpush.msra.mxu0 0.0
    %10381 = vmatpush.msra.mxu0 0.0
    %10382 = vmatpush.msra.mxu0 0.0
    %10383 = vmatpush.msra.mxu0 0.0
    %10384 = vmatpush.msra.mxu0 0.0
    %10385 = vmatpush.msra.mxu0 %v10180
    %10386 = vmatpush.msra.mxu0 %v10178
    %10387 = vmatmul.f32.gmra.mxu0 %v10349
    %v10388 = vpop.f32.mrf.mxu0
    %v10389 = vadd.f32 %v10369, %v10388
    %10390 = vdwg.mxu0
    %10391 = vmatpush.msra.mxu0 %v10177
    %10392 = vmatpush.msra.mxu0 %v10175
    %10393 = vmatpush.msra.mxu0 %v10173
    %10394 = vmatpush.msra.mxu0 %v10171
    %10395 = vmatpush.msra.mxu0 %v10169
    %10396 = vmatpush.msra.mxu0 %v10167
    %10397 = vmatpush.msra.mxu0 %v10165
    %10398 = vmatpush.msra.mxu0 %v10163
    %10399 = vmatpush.msra.mxu0 %v10161
    %10400 = vmatpush.msra.mxu0 %v10159
    %10401 = vmatpush.msra.mxu0 %v10157
    %10402 = vmatpush.msra.mxu0 %v10155
    %10403 = vmatpush.msra.mxu0 %v10153
    %10404 = vmatpush.msra.mxu0 %v10151
    %10405 = vmatpush.msra.mxu0 %v10149
    %10406 = vmatpush.msra.mxu0 %v10147
    %10407 = vmatmul.f32.gmra.mxu0 %v10124
    %v10408 = vpop.f32.mrf.mxu0
    %v10409 = vadd.f32 %v10346, %v10408
    %10410 = vdwg.mxu0
    %10411 = vmatpush.msra.mxu0 0.0
    %10412 = vmatpush.msra.mxu0 0.0
    %10413 = vmatpush.msra.mxu0 0.0
    %10414 = vmatpush.msra.mxu0 0.0
    %10415 = vmatpush.msra.mxu0 0.0
    %10416 = vmatpush.msra.mxu0 0.0
    %10417 = vmatpush.msra.mxu0 0.0
    %10418 = vmatpush.msra.mxu0 0.0
    %10419 = vmatpush.msra.mxu0 0.0
    %10420 = vmatpush.msra.mxu0 0.0
    %10421 = vmatpush.msra.mxu0 0.0
    %10422 = vmatpush.msra.mxu0 0.0
    %10423 = vmatpush.msra.mxu0 0.0
    %10424 = vmatpush.msra.mxu0 0.0
    %10425 = vmatpush.msra.mxu0 %v10181
    %10426 = vmatpush.msra.mxu0 %v10179
    %10427 = vmatmul.f32.gmra.mxu0 %v10349
    %v10428 = vpop.f32.mrf.mxu0
    %v10429 = vadd.f32 %v10409, %v10428
    %10430 = vdwg.mxu0
    %s10431 = scalar_lea.vmem [#allocation13], 16
    %v10432 = vld [vmem:[%s10431] sm:$0xff]
    %v10434 = vsel %vm6785, %v10432, 0
    %10436 = vmatpush.msra.mxu0 0.0
    %10437 = vmatpush.msra.mxu0 0.0
    %10438 = vmatpush.msra.mxu0 0.0
    %10439 = vmatpush.msra.mxu0 0.0
    %10440 = vmatpush.msra.mxu0 0.0
    %10441 = vmatpush.msra.mxu0 0.0
    %10442 = vmatpush.msra.mxu0 0.0
    %10443 = vmatpush.msra.mxu0 0.0
    %10444 = vmatpush.msra.mxu0 0.0
    %10445 = vmatpush.msra.mxu0 0.0
    %10446 = vmatpush.msra.mxu0 0.0
    %10447 = vmatpush.msra.mxu0 0.0
    %10448 = vmatpush.msra.mxu0 0.0
    %10449 = vmatpush.msra.mxu0 %v10100
    %10450 = vmatpush.msra.mxu0 %v10098
    %10451 = vmatpush.msra.mxu0 %v10096
    %10452 = vmatmul.f32.gmra.mxu0 %v10434
    %v10453 = vpop.f32.mrf.mxu0
    %v10454 = vadd.f32 0.0, %v10453
    %10455 = vdwg.mxu0
    %10456 = vmatpush.msra.mxu0 0.0
    %10457 = vmatpush.msra.mxu0 0.0
    %10458 = vmatpush.msra.mxu0 0.0
    %10459 = vmatpush.msra.mxu0 0.0
    %10460 = vmatpush.msra.mxu0 0.0
    %10461 = vmatpush.msra.mxu0 0.0
    %10462 = vmatpush.msra.mxu0 0.0
    %10463 = vmatpush.msra.mxu0 0.0
    %10464 = vmatpush.msra.mxu0 0.0
    %10465 = vmatpush.msra.mxu0 0.0
    %10466 = vmatpush.msra.mxu0 0.0
    %10467 = vmatpush.msra.mxu0 0.0
    %10468 = vmatpush.msra.mxu0 0.0
    %10469 = vmatpush.msra.mxu0 %v10101
    %10470 = vmatpush.msra.mxu0 %v10099
    %10471 = vmatpush.msra.mxu0 %v10097
    %10472 = vmatmul.f32.gmra.mxu0 %v10434
    %v10473 = vpop.f32.mrf.mxu0
    %v10474 = vadd.f32 0.0, %v10473
    %10475 = vdwg.mxu0
    %s10476 = scalar_lea.vmem [#allocation14], 576
    %v10477 = vld [vmem:[%s10476] sm:$0xff]
    %v10478 = vld [vmem:[%s10476 + $0x8] sm:$0xff]
    %v10479 = vld [vmem:[%s10476 + $0x10] sm:$0xff]
    %v10480 = vld [vmem:[%s10476 + $0x18] sm:$0xff]
    %v10481 = vld [vmem:[%s10476 + $0x20] sm:$0xff]
    %v10482 = vld [vmem:[%s10476 + $0x28] sm:$0xff]
    %v10483 = vld [vmem:[%s10476 + $0x30] sm:$0xff]
    %v10484 = vld [vmem:[%s10476 + $0x38] sm:$0xff]
    %v10485 = vld [vmem:[%s10476 + $0x40] sm:$0xff]
    %v10486 = vld [vmem:[%s10476 + $0x48] sm:$0xff]
    %v10487 = vld [vmem:[%s10476 + $0x50] sm:$0xff]
    %v10488 = vld [vmem:[%s10476 + $0x58] sm:$0xff]
    %v10489 = vld [vmem:[%s10476 + $0x60] sm:$0xff]
    %v10490 = vld [vmem:[%s10476 + $0x68] sm:$0xff]
    %v10491 = vld [vmem:[%s10476 + $0x70] sm:$0xff]
    %v10492 = vld [vmem:[%s10476 + $0x78] sm:$0xff]
    %v10493 = vld [vmem:[%s10476 + $0x80] sm:$0xff]
    %v10494 = vld [vmem:[%s10476 + $0x88] sm:$0xff]
    %v10495 = vld [vmem:[%s10476 + $0x90] sm:$0xff]
    %v10496 = vld [vmem:[%s10476 + $0x98] sm:$0xff]
    %v10497 = vld [vmem:[%s10476 + $0xa0] sm:$0xff]
    %v10498 = vld [vmem:[%s10476 + $0xa8] sm:$0xff]
    %v10499 = vld [vmem:[%s10476 + $0xb0] sm:$0xff]
    %v10500 = vld [vmem:[%s10476 + $0xb8] sm:$0xff]
    %v10501 = vld [vmem:[%s10476 + $0xc0] sm:$0xff]
    %v10502 = vld [vmem:[%s10476 + $0xc8] sm:$0xff]
    %v10503 = vld [vmem:[%s10476 + $0xd0] sm:$0xff]
    %v10504 = vld [vmem:[%s10476 + $0xd8] sm:$0xff]
    %v10505 = vld [vmem:[%s10476 + $0xe0] sm:$0xff]
    %v10506 = vld [vmem:[%s10476 + $0xe8] sm:$0xff]
    %v10507 = vld [vmem:[%s10476 + $0xf0] sm:$0xff]
    %v10508 = vld [vmem:[%s10476 + $0xf8] sm:$0xff]
    %v10509 = vld [vmem:[%s10476 + $0x100] sm:$0xff]
    %v10510 = vld [vmem:[%s10476 + $0x108] sm:$0xff]
    %v10511 = vld [vmem:[%s10476 + $0x110] sm:$0xff]
    %v10512 = vld [vmem:[%s10476 + $0x118] sm:$0xff]
    %v10514 = vsel %vm10264, %v10474, 0
    %10516 = vmatpush.msra.mxu0 %v10507
    %10517 = vmatpush.msra.mxu0 %v10505
    %10518 = vmatpush.msra.mxu0 %v10503
    %10519 = vmatpush.msra.mxu0 %v10501
    %10520 = vmatpush.msra.mxu0 %v10499
    %10521 = vmatpush.msra.mxu0 %v10497
    %10522 = vmatpush.msra.mxu0 %v10495
    %10523 = vmatpush.msra.mxu0 %v10493
    %10524 = vmatpush.msra.mxu0 %v10491
    %10525 = vmatpush.msra.mxu0 %v10489
    %10526 = vmatpush.msra.mxu0 %v10487
    %10527 = vmatpush.msra.mxu0 %v10485
    %10528 = vmatpush.msra.mxu0 %v10483
    %10529 = vmatpush.msra.mxu0 %v10481
    %10530 = vmatpush.msra.mxu0 %v10479
    %10531 = vmatpush.msra.mxu0 %v10477
    %10532 = vmatmul.f32.gmra.mxu0 %v10454
    %v10533 = vpop.f32.mrf.mxu0
    %v10534 = vadd.f32 0.0, %v10533
    %10535 = vdwg.mxu0
    %10536 = vmatpush.msra.mxu0 0.0
    %10537 = vmatpush.msra.mxu0 0.0
    %10538 = vmatpush.msra.mxu0 0.0
    %10539 = vmatpush.msra.mxu0 0.0
    %10540 = vmatpush.msra.mxu0 0.0
    %10541 = vmatpush.msra.mxu0 0.0
    %10542 = vmatpush.msra.mxu0 0.0
    %10543 = vmatpush.msra.mxu0 0.0
    %10544 = vmatpush.msra.mxu0 0.0
    %10545 = vmatpush.msra.mxu0 0.0
    %10546 = vmatpush.msra.mxu0 0.0
    %10547 = vmatpush.msra.mxu0 0.0
    %10548 = vmatpush.msra.mxu0 0.0
    %10549 = vmatpush.msra.mxu0 0.0
    %10550 = vmatpush.msra.mxu0 %v10511
    %10551 = vmatpush.msra.mxu0 %v10509
    %10552 = vmatmul.f32.gmra.mxu0 %v10514
    %v10553 = vpop.f32.mrf.mxu0
    %v10554 = vadd.f32 %v10534, %v10553
    %10555 = vdwg.mxu0
    %10556 = vmatpush.msra.mxu0 %v10508
    %10557 = vmatpush.msra.mxu0 %v10506
    %10558 = vmatpush.msra.mxu0 %v10504
    %10559 = vmatpush.msra.mxu0 %v10502
    %10560 = vmatpush.msra.mxu0 %v10500
    %10561 = vmatpush.msra.mxu0 %v10498
    %10562 = vmatpush.msra.mxu0 %v10496
    %10563 = vmatpush.msra.mxu0 %v10494
    %10564 = vmatpush.msra.mxu0 %v10492
    %10565 = vmatpush.msra.mxu0 %v10490
    %10566 = vmatpush.msra.mxu0 %v10488
    %10567 = vmatpush.msra.mxu0 %v10486
    %10568 = vmatpush.msra.mxu0 %v10484
    %10569 = vmatpush.msra.mxu0 %v10482
    %10570 = vmatpush.msra.mxu0 %v10480
    %10571 = vmatpush.msra.mxu0 %v10478
    %10572 = vmatmul.f32.gmra.mxu0 %v10454
    %v10573 = vpop.f32.mrf.mxu0
    %v10574 = vadd.f32 0.0, %v10573
    %10575 = vdwg.mxu0
    %10576 = vmatpush.msra.mxu0 0.0
    %10577 = vmatpush.msra.mxu0 0.0
    %10578 = vmatpush.msra.mxu0 0.0
    %10579 = vmatpush.msra.mxu0 0.0
    %10580 = vmatpush.msra.mxu0 0.0
    %10581 = vmatpush.msra.mxu0 0.0
    %10582 = vmatpush.msra.mxu0 0.0
    %10583 = vmatpush.msra.mxu0 0.0
    %10584 = vmatpush.msra.mxu0 0.0
    %10585 = vmatpush.msra.mxu0 0.0
    %10586 = vmatpush.msra.mxu0 0.0
    %10587 = vmatpush.msra.mxu0 0.0
    %10588 = vmatpush.msra.mxu0 0.0
    %10589 = vmatpush.msra.mxu0 0.0
    %10590 = vmatpush.msra.mxu0 %v10512
    %10591 = vmatpush.msra.mxu0 %v10510
    %10592 = vmatmul.f32.gmra.mxu0 %v10514
    %v10593 = vpop.f32.mrf.mxu0
    %v10594 = vadd.f32 %v10574, %v10593
    %10595 = vdwg.mxu0
    %v10596 = vadd.f32 %v10389, %v10554
    %v10597 = vadd.f32 %v10429, %v10594
    %v10598 = vld [vmem:[%s11] sm:$0x3]
    %v10600 = vperm.slane %v10598, 0
    %v10601 = vperm.slane %v10598, 1
    %v10604 = vadd.f32 %v10596, %v10600
    %v10605 = vadd.f32 %v10597, %v10601
    %v10606 = vmax.f32 %v10604, 0.0
    %v10607 = vmax.f32 %v10605, 0.0
    %v10608 = vmin.f32 %v10604, 0.0
    %v10609 = vmin.f32 %v10605, 0.0
    %v10610 = vstv %s240
    %v10611 = vmul.f32 %v10610, %v10608
    %v10612 = vmul.f32 %v10610, %v10609
    %v10613 = vadd.f32 %v10606, %v10611
    %v10614 = vadd.f32 %v10607, %v10612
    %v10615 = vld [vmem:[#allocation16] sm:$0xff]
    %v10616 = vld [vmem:[#allocation16 + $0x8] sm:$0xff]
    %v10617 = vld [vmem:[#allocation16 + $0x10] sm:$0xff]
    %v10618 = vld [vmem:[#allocation16 + $0x18] sm:$0xff]
    %v10619 = vld [vmem:[#allocation16 + $0x20] sm:$0xff]
    %v10620 = vld [vmem:[#allocation16 + $0x28] sm:$0xff]
    %v10621 = vld [vmem:[#allocation16 + $0x30] sm:$0xff]
    %v10622 = vld [vmem:[#allocation16 + $0x38] sm:$0xff]
    %v10623 = vld [vmem:[#allocation16 + $0x40] sm:$0xff]
    %v10624 = vld [vmem:[#allocation16 + $0x48] sm:$0xff]
    %v10625 = vld [vmem:[#allocation16 + $0x50] sm:$0xff]
    %v10626 = vld [vmem:[#allocation16 + $0x58] sm:$0xff]
    %v10627 = vld [vmem:[#allocation16 + $0x60] sm:$0xff]
    %v10628 = vld [vmem:[#allocation16 + $0x68] sm:$0xff]
    %v10629 = vld [vmem:[#allocation16 + $0x70] sm:$0xff]
    %v10630 = vld [vmem:[#allocation16 + $0x78] sm:$0xff]
    %v10631 = vld [vmem:[#allocation16 + $0x80] sm:$0xff]
    %v10632 = vld [vmem:[#allocation16 + $0x88] sm:$0xff]
    %v10633 = vld [vmem:[#allocation16 + $0x90] sm:$0xff]
    %v10634 = vld [vmem:[#allocation16 + $0x98] sm:$0xff]
    %v10635 = vld [vmem:[#allocation16 + $0xa0] sm:$0xff]
    %v10636 = vld [vmem:[#allocation16 + $0xa8] sm:$0xff]
    %v10637 = vld [vmem:[#allocation16 + $0xb0] sm:$0xff]
    %v10638 = vld [vmem:[#allocation16 + $0xb8] sm:$0xff]
    %v10639 = vld [vmem:[#allocation16 + $0xc0] sm:$0xff]
    %v10640 = vld [vmem:[#allocation16 + $0xc8] sm:$0xff]
    %v10641 = vld [vmem:[#allocation16 + $0xd0] sm:$0xff]
    %v10642 = vld [vmem:[#allocation16 + $0xd8] sm:$0xff]
    %v10643 = vld [vmem:[#allocation16 + $0xe0] sm:$0xff]
    %v10644 = vld [vmem:[#allocation16 + $0xe8] sm:$0xff]
    %v10645 = vld [vmem:[#allocation16 + $0xf0] sm:$0xff]
    %v10646 = vld [vmem:[#allocation16 + $0xf8] sm:$0xff]
    %v10647 = vld [vmem:[%s13] sm:$0x1]
    %v10649 = vperm.slane %v10647, 0
    %10651 = vmatpush.msra.mxu0 %v10630
    %10652 = vmatpush.msra.mxu0 %v10629
    %10653 = vmatpush.msra.mxu0 %v10628
    %10654 = vmatpush.msra.mxu0 %v10627
    %10655 = vmatpush.msra.mxu0 %v10626
    %10656 = vmatpush.msra.mxu0 %v10625
    %10657 = vmatpush.msra.mxu0 %v10624
    %10658 = vmatpush.msra.mxu0 %v10623
    %10659 = vmatpush.msra.mxu0 %v10622
    %10660 = vmatpush.msra.mxu0 %v10621
    %10661 = vmatpush.msra.mxu0 %v10620
    %10662 = vmatpush.msra.mxu0 %v10619
    %10663 = vmatpush.msra.mxu0 %v10618
    %10664 = vmatpush.msra.mxu0 %v10617
    %10665 = vmatpush.msra.mxu0 %v10616
    %10666 = vmatpush.msra.mxu0 %v10615
    %10667 = vmatmul.f32.gmra.mxu0 %v10613
    %v10668 = vpop.f32.mrf.mxu0
    %v10669 = vadd.f32 %v10649, %v10668
    %10670 = vdwg.mxu0
    %10671 = vmatpush.msra.mxu0 %v10646
    %10672 = vmatpush.msra.mxu0 %v10645
    %10673 = vmatpush.msra.mxu0 %v10644
    %10674 = vmatpush.msra.mxu0 %v10643
    %10675 = vmatpush.msra.mxu0 %v10642
    %10676 = vmatpush.msra.mxu0 %v10641
    %10677 = vmatpush.msra.mxu0 %v10640
    %10678 = vmatpush.msra.mxu0 %v10639
    %10679 = vmatpush.msra.mxu0 %v10638
    %10680 = vmatpush.msra.mxu0 %v10637
    %10681 = vmatpush.msra.mxu0 %v10636
    %10682 = vmatpush.msra.mxu0 %v10635
    %10683 = vmatpush.msra.mxu0 %v10634
    %10684 = vmatpush.msra.mxu0 %v10633
    %10685 = vmatpush.msra.mxu0 %v10632
    %10686 = vmatpush.msra.mxu0 %v10631
    %10687 = vmatmul.f32.gmra.mxu0 %v10614
    %v10688 = vpop.f32.mrf.mxu0
    %v10689 = vadd.f32 %v10669, %v10688
    %10690 = vdwg.mxu0
    %v10691 = vmax.f32 %v10689, 0.0
    %v10692 = vmin.f32 %v10689, 0.0
    %v10693 = vstv %s241
    %v10694 = vmul.f32 %v10693, %v10692
    %v10695 = vadd.f32 %v10691, %v10694
    %v10696 = vld [vmem:[#allocation17] sm:$0xff]
    %v10697 = vld [vmem:[#allocation17 + $0x8] sm:$0xff]
    %v10698 = vld [vmem:[#allocation17 + $0x10] sm:$0xff]
    %v10699 = vld [vmem:[#allocation17 + $0x18] sm:$0xff]
    %v10700 = vld [vmem:[#allocation17 + $0x20] sm:$0xff]
    %v10701 = vld [vmem:[#allocation17 + $0x28] sm:$0xff]
    %v10702 = vld [vmem:[#allocation17 + $0x30] sm:$0xff]
    %v10703 = vld [vmem:[#allocation17 + $0x38] sm:$0xff]
    %v10704 = vld [vmem:[#allocation17 + $0x40] sm:$0xff]
    %v10705 = vld [vmem:[#allocation17 + $0x48] sm:$0xff]
    %v10706 = vld [vmem:[#allocation17 + $0x50] sm:$0xff]
    %v10707 = vld [vmem:[#allocation17 + $0x58] sm:$0xff]
    %v10708 = vld [vmem:[#allocation17 + $0x60] sm:$0xff]
    %v10709 = vld [vmem:[#allocation17 + $0x68] sm:$0xff]
    %v10710 = vld [vmem:[#allocation17 + $0x70] sm:$0xff]
    %v10711 = vld [vmem:[#allocation17 + $0x78] sm:$0xff]
    %v10712 = vld [vmem:[#allocation19] sm:$0x1]
    %v10714 = vperm.slane %v10712, 0
    %10716 = vmatpush.msra.mxu0 %v10711
    %10717 = vmatpush.msra.mxu0 %v10710
    %10718 = vmatpush.msra.mxu0 %v10709
    %10719 = vmatpush.msra.mxu0 %v10708
    %10720 = vmatpush.msra.mxu0 %v10707
    %10721 = vmatpush.msra.mxu0 %v10706
    %10722 = vmatpush.msra.mxu0 %v10705
    %10723 = vmatpush.msra.mxu0 %v10704
    %10724 = vmatpush.msra.mxu0 %v10703
    %10725 = vmatpush.msra.mxu0 %v10702
    %10726 = vmatpush.msra.mxu0 %v10701
    %10727 = vmatpush.msra.mxu0 %v10700
    %10728 = vmatpush.msra.mxu0 %v10699
    %10729 = vmatpush.msra.mxu0 %v10698
    %10730 = vmatpush.msra.mxu0 %v10697
    %10731 = vmatpush.msra.mxu0 %v10696
    %10732 = vmatmul.f32.gmra.mxu0 %v10695
    %v10733 = vpop.f32.mrf.mxu0
    %v10734 = vadd.f32 %v10714, %v10733
    %10735 = vdwg.mxu0
    %v10736 = vsub.f32 0.0, %v10734
    %v10737 = vmul.f32 %v10736, 1.442695
    %v10738 = vpow.pop %v10737
    %v10739 = vadd.f32 %v10738, 1.0
    %v10740 = vrcp.pop %v10739
    %v10741 = vmul.f32 %v10739, %v10740
    %v10742 = vsub.f32 1.0, %v10741
    %v10743 = vmul.f32 %v10740, %v10742
    %v10744 = vadd.f32 %v10740, %v10743
    %vm10745 = vweird.f32 %v10739
    %vm10746 = vweird.f32 %v10740
    %vm10747 = vmor %vm10745, %vm10746
    %v10748 = vsel %vm10747, %v10740, %v10744
    %v10749 = vand.u32 2147483647, %v10739
    %vm10750 = vcmp.eq.f32.partialorder %v10749, 8.507059e+37
    %v10751 = vand.u32 %v10739, 2147483648
    %v10752 = vor.u32 1.1754944e-38, %v10751
    %v10753 = vsel %vm10750, %v10752, %v10748
    %v10754 = vmul.f32 1.0, %v10753
    %v10755 = vlaneseq
    %v10756 = vand.u32 %v10755, 127
    %vm10757 = vcmp.eq.s32.totalorder %v10756, 0
    %v10758 = vsel %vm10757, %v10754, %v10734
    %10759 = vst [vmem:[%s17] sm:$0xff] %v10758
    // Predicated region
    $region118: #{_lambda_.1} parent=1 // pred_check
      _
    $region119: #{_lambda_.1} parent=1 // pred_check_branch
      %10761 = sbr.rel (0) target = $region121
    $region120: #{_lambda_.1} parent=1 // pred_region
      _
    $region121: #{_lambda_.1} parent=1 // pred_fallthru
      _
    // Predicated region
    $region122: #{_lambda_.1} parent=1 // pred_check
      _
    $region123: #{_lambda_.1} parent=1 // pred_check_branch
      %10763 = sbr.rel (0) target = $region125
    $region124: #{_lambda_.1} parent=1 // pred_region
      _
    $region125: #{_lambda_.1} parent=1 // pred_fallthru
      _
    %10764 = vsyncpa [#allocation3], 1
    %10765 = vsyncpa [#allocation6], 1
    %10766 = vsyncpa [#allocation9], 1
    %10767 = vsyncpa [#allocation12], 1
    %10768 = vsyncpa [#allocation15], 1
    %10769 = vsyncpa [#allocation18], 1
    %10770 = vsyncpa [#allocation4], 1

</llo_original>
